<compile_context>
chip_gen: v7x
topology: tpu7x:2x2x1
jax: 0.10.0
libtpu: 0.0.40
codegen_flags: <defaults>
</compile_context>

<pallas_src>
import jax
import jax.numpy as jnp
from jax.experimental import pallas as pl
from jax.experimental.pallas import tpu as pltpu

Z_DIM = 32            # z_dim global in the reference code (chosen small)
POINT_NUM = 2048      # point_num global in the reference code
OUT_DIM = 3 * POINT_NUM            # 6144
HIDDEN = (64, 128, 512, 1024)
TN = 1536             # last-layer output-column tile (6144 / 1536 = 4 tiles)
N_BLOCKS = OUT_DIM // TN


def _netg_kernel(z_ref,
                 w1_ref, b1_ref, w2_ref, b2_ref, w3_ref, b3_ref,
                 w4_ref, b4_ref,
                 w5_ref, b5_ref,
                 out_ref):
    """Fused NetG forward.  Trunk (4 small layers) is recomputed each grid
    step (cheap, resident weights); one bf16 W5 column tile is streamed per
    step and applied with f32 accumulation."""
    h = z_ref[...]
    h = jnp.maximum(
        jnp.dot(h, w1_ref[...], preferred_element_type=jnp.float32)
        + b1_ref[...], 0.0)
    h = jnp.maximum(
        jnp.dot(h, w2_ref[...], preferred_element_type=jnp.float32)
        + b2_ref[...], 0.0)
    h = jnp.maximum(
        jnp.dot(h, w3_ref[...], preferred_element_type=jnp.float32)
        + b3_ref[...], 0.0)
    h = jnp.maximum(
        jnp.dot(h, w4_ref[...], preferred_element_type=jnp.float32)
        + b4_ref[...], 0.0)

    # Last layer: bf16 weights (streamed tile), bf16 activations, f32 acc.
    j = pl.program_id(0)
    col0 = pl.multiple_of(j * TN, 128)
    b5_tile = b5_ref[:, pl.ds(col0, TN)]              # (1, TN) f32, resident
    acc = jnp.dot(h.astype(jnp.bfloat16), w5_ref[...],
                  preferred_element_type=jnp.float32)
    out_ref[...] = (acc + b5_tile).astype(out_ref.dtype)


def prepare_params(params):
    """One-time parameter prep: pack W5 into contiguous bf16 column tiles."""
    (w1, b1), (w2, b2), (w3, b3), (w4, b4), (w5, b5) = params
    w5_packed = (w5.astype(jnp.bfloat16)
                   .reshape(HIDDEN[3], N_BLOCKS, TN)
                   .transpose(1, 0, 2))               # (N_BLOCKS, 1024, TN)
    return (w1, b1, w2, b2, w3, b3, w4, b4, w5_packed, b5)


def netg_forward(z, prepared):
    """z: (B, Z_DIM) float32.  Returns (B, 3, POINT_NUM) float32."""
    w1, b1, w2, b2, w3, b3, w4, b4, w5_packed, b5 = prepared
    B = z.shape[0]

    # Pad batch to a multiple of 8 so vector stores use full sublanes.
    B_pad = ((B + 7) // 8) * 8
    if B_pad != B:
        z = jnp.pad(z, ((0, B_pad - B), (0, 0)))

    def resident(a):
        # Whole-array block, same block every grid step (DMA'd once).
        return pl.BlockSpec(a.shape, lambda j, _nd=a.ndim: (0,) * _nd)

    trunk_flops = 2 * B_pad * (Z_DIM * HIDDEN[0] + HIDDEN[0] * HIDDEN[1]
                               + HIDDEN[1] * HIDDEN[2] + HIDDEN[2] * HIDDEN[3])
    flops = N_BLOCKS * trunk_flops + 2 * B_pad * HIDDEN[3] * OUT_DIM
    bytes_accessed = (
        w5_packed.size * 2                                   # bf16 W5 stream
        + (w1.size + w2.size + w3.size + w4.size) * 4        # resident trunk
        + (b1.size + b2.size + b3.size + b4.size + b5.size) * 4
        + z.size * 4
        + B_pad * OUT_DIM * 4)                               # output

    out = pl.pallas_call(
        _netg_kernel,
        out_shape=jax.ShapeDtypeStruct((B_pad, OUT_DIM), jnp.float32),
        grid_spec=pltpu.PrefetchScalarGridSpec(
            num_scalar_prefetch=0,
            grid=(N_BLOCKS,),
            in_specs=[
                resident(z),
                resident(w1), resident(b1),
                resident(w2), resident(b2),
                resident(w3), resident(b3),
                resident(w4), resident(b4),
                # Contiguous pre-packed bf16 W5 tile; leading dim squeezed.
                pl.BlockSpec((None, HIDDEN[3], TN), lambda j: (j, 0, 0)),
                resident(b5),
            ],
            out_specs=pl.BlockSpec((B_pad, TN), lambda j: (0, j)),
        ),
        compiler_params=pltpu.CompilerParams(
            # Independent output-column tiles: shard across TensorCores
            # (megacore on v7x; no-op on single-TC v5e/v6e).  Safe because
            # the trunk is recomputed on every grid step.
            dimension_semantics=("parallel",),
            # Covers double-buffered 3 MiB bf16 W5 tiles + ~2.4 MiB resident
            # trunk weights on every generation (v5e default is only 16 MiB).
            vmem_limit_bytes=32 * 1024 * 1024,
        ),
        cost_estimate=pl.CostEstimate(
            flops=flops, transcendentals=0, bytes_accessed=bytes_accessed),
    )(z, w1, b1, w2, b2, w3, b3, w4, b4, w5_packed, b5)

    return out[:B].reshape(B, 3, POINT_NUM)


def init_params(key):
    """Deterministic PyTorch-Linear-style init: U(-1/sqrt(fan_in), +1/sqrt(fan_in))."""
    dims = (Z_DIM,) + HIDDEN + (OUT_DIM,)
    params = []
    for i in range(len(dims) - 1):
        fan_in, fan_out = dims[i], dims[i + 1]
        key, kw, kb = jax.random.split(key, 3)
        bound = 1.0 / jnp.sqrt(jnp.float32(fan_in))
        w = jax.random.uniform(kw, (fan_in, fan_out), jnp.float32, -bound, bound)
        b = jax.random.uniform(kb, (1, fan_out), jnp.float32, -bound, bound)
        params.append((w, b))
    return params


def netg_reference(z, params):
    """Pure-JAX reference mirroring the kernel's numerics (bf16 last layer,
    f32 accumulation, f32 trunk)."""
    (w1, b1), (w2, b2), (w3, b3), (w4, b4), (w5, b5) = params
    h = z
    for w, b in ((w1, b1), (w2, b2), (w3, b3), (w4, b4)):
        h = jnp.maximum(h @ w + b, 0.0)
    y = jnp.dot(h.astype(jnp.bfloat16), w5.astype(jnp.bfloat16),
                preferred_element_type=jnp.float32) + b5
    return y.reshape(z.shape[0], 3, POINT_NUM)


if __name__ == "__main__":
    key = jax.random.PRNGKey(0)
    key, kz = jax.random.split(key)

    B = 2
    z = jax.random.normal(kz, (B, Z_DIM), jnp.float32)
    params = init_params(key)
    prepared = prepare_params(params)

    out = netg_forward(z, prepared)
    out = jax.block_until_ready(out)

    ref = netg_reference(z, params)
    assert out.shape == (B, 3, POINT_NUM), out.shape
    assert jnp.allclose(out, ref, rtol=1e-2, atol=1e-2), "mismatch vs reference"

    print("KERNEL_OK")
</pallas_src>

<mosaic_0001>
module attributes {stable_mosaic.version = 11 : i64} {
  func.func @_netg_kernel(%arg0: i32, %arg1: memref<8x32xf32, #tpu.memory_space<vmem>>, %arg2: memref<32x64xf32, #tpu.memory_space<vmem>>, %arg3: memref<1x64xf32, #tpu.memory_space<vmem>>, %arg4: memref<64x128xf32, #tpu.memory_space<vmem>>, %arg5: memref<1x128xf32, #tpu.memory_space<vmem>>, %arg6: memref<128x512xf32, #tpu.memory_space<vmem>>, %arg7: memref<1x512xf32, #tpu.memory_space<vmem>>, %arg8: memref<512x1024xf32, #tpu.memory_space<vmem>>, %arg9: memref<1x1024xf32, #tpu.memory_space<vmem>>, %arg10: memref<1x1024x1536xbf16, #tpu.memory_space<vmem>>, %arg11: memref<1x6144xf32, #tpu.memory_space<vmem>>, %arg12: memref<8x1536xf32, #tpu.memory_space<vmem>>) attributes {dimension_semantics = [#tpu.dimension_semantics<parallel>], iteration_bounds = array<i64: 4>, scalar_prefetch = 0 : i64, scratch_operands = 0 : i64, tpu.core_type = #tpu.core_type<tc>, window_params = [{pipeline_mode = #tpu.pipeline_mode<synchronous>, transform_indices = @transform_0, window_bounds = array<i64: 8, 32>}, {pipeline_mode = #tpu.pipeline_mode<synchronous>, transform_indices = @transform_1, window_bounds = array<i64: 32, 64>}, {pipeline_mode = #tpu.pipeline_mode<synchronous>, transform_indices = @transform_2, window_bounds = array<i64: 1, 64>}, {pipeline_mode = #tpu.pipeline_mode<synchronous>, transform_indices = @transform_3, window_bounds = array<i64: 64, 128>}, {pipeline_mode = #tpu.pipeline_mode<synchronous>, transform_indices = @transform_4, window_bounds = array<i64: 1, 128>}, {pipeline_mode = #tpu.pipeline_mode<synchronous>, transform_indices = @transform_5, window_bounds = array<i64: 128, 512>}, {pipeline_mode = #tpu.pipeline_mode<synchronous>, transform_indices = @transform_6, window_bounds = array<i64: 1, 512>}, {pipeline_mode = #tpu.pipeline_mode<synchronous>, transform_indices = @transform_7, window_bounds = array<i64: 512, 1024>}, {pipeline_mode = #tpu.pipeline_mode<synchronous>, transform_indices = @transform_8, window_bounds = array<i64: 1, 1024>}, {transform_indices = @transform_9, window_bounds = array<i64: 1, 1024, 1536>}, {pipeline_mode = #tpu.pipeline_mode<synchronous>, transform_indices = @transform_10, window_bounds = array<i64: 1, 6144>}, {transform_indices = @transform_11, window_bounds = array<i64: 8, 1536>}]} {
    %c0 = arith.constant 0 : index
    %c0_0 = arith.constant 0 : index
    %0 = vector.load %arg1[%c0, %c0_0] : memref<8x32xf32, #tpu.memory_space<vmem>>, vector<8x32xf32>
    %c0_1 = arith.constant 0 : index
    %c0_2 = arith.constant 0 : index
    %1 = vector.load %arg2[%c0_1, %c0_2] : memref<32x64xf32, #tpu.memory_space<vmem>>, vector<32x64xf32>
    %cst = arith.constant dense<0.000000e+00> : vector<8x64xf32>
    %2 = tpu.matmul %0, %1, %cst {dimension_numbers = #tpu.dot_dimension_numbers<[1], [0], [0], [1], [0, 0, 1, 1], [], []>} : vector<8x32xf32>, vector<32x64xf32>, vector<8x64xf32> -> vector<8x64xf32>
    %c0_3 = arith.constant 0 : index
    %c0_4 = arith.constant 0 : index
    %3 = vector.load %arg3[%c0_3, %c0_4] : memref<1x64xf32, #tpu.memory_space<vmem>>, vector<1x64xf32>
    %4 = vector.broadcast %3 : vector<1x64xf32> to vector<8x64xf32>
    %5 = arith.addf %2, %4 : vector<8x64xf32>
    %cst_5 = arith.constant 0.000000e+00 : f32
    %6 = vector.broadcast %cst_5 : f32 to vector<8x64xf32>
    %7 = arith.maximumf %5, %6 : vector<8x64xf32>
    %c0_6 = arith.constant 0 : index
    %c0_7 = arith.constant 0 : index
    %8 = vector.load %arg4[%c0_6, %c0_7] : memref<64x128xf32, #tpu.memory_space<vmem>>, vector<64x128xf32>
    %cst_8 = arith.constant dense<0.000000e+00> : vector<8x128xf32>
    %9 = tpu.matmul %7, %8, %cst_8 {dimension_numbers = #tpu.dot_dimension_numbers<[1], [0], [0], [1], [0, 0, 1, 1], [], []>} : vector<8x64xf32>, vector<64x128xf32>, vector<8x128xf32> -> vector<8x128xf32>
    %c0_9 = arith.constant 0 : index
    %c0_10 = arith.constant 0 : index
    %10 = vector.load %arg5[%c0_9, %c0_10] : memref<1x128xf32, #tpu.memory_space<vmem>>, vector<1x128xf32>
    %11 = vector.broadcast %10 : vector<1x128xf32> to vector<8x128xf32>
    %12 = arith.addf %9, %11 : vector<8x128xf32>
    %cst_11 = arith.constant 0.000000e+00 : f32
    %13 = vector.broadcast %cst_11 : f32 to vector<8x128xf32>
    %14 = arith.maximumf %12, %13 : vector<8x128xf32>
    %c0_12 = arith.constant 0 : index
    %c0_13 = arith.constant 0 : index
    %15 = vector.load %arg6[%c0_12, %c0_13] : memref<128x512xf32, #tpu.memory_space<vmem>>, vector<128x512xf32>
    %cst_14 = arith.constant dense<0.000000e+00> : vector<8x512xf32>
    %16 = tpu.matmul %14, %15, %cst_14 {dimension_numbers = #tpu.dot_dimension_numbers<[1], [0], [0], [1], [0, 0, 1, 1], [], []>} : vector<8x128xf32>, vector<128x512xf32>, vector<8x512xf32> -> vector<8x512xf32>
    %c0_15 = arith.constant 0 : index
    %c0_16 = arith.constant 0 : index
    %17 = vector.load %arg7[%c0_15, %c0_16] : memref<1x512xf32, #tpu.memory_space<vmem>>, vector<1x512xf32>
    %18 = vector.broadcast %17 : vector<1x512xf32> to vector<8x512xf32>
    %19 = arith.addf %16, %18 : vector<8x512xf32>
    %cst_17 = arith.constant 0.000000e+00 : f32
    %20 = vector.broadcast %cst_17 : f32 to vector<8x512xf32>
    %21 = arith.maximumf %19, %20 : vector<8x512xf32>
    %c0_18 = arith.constant 0 : index
    %c0_19 = arith.constant 0 : index
    %22 = vector.load %arg8[%c0_18, %c0_19] : memref<512x1024xf32, #tpu.memory_space<vmem>>, vector<512x1024xf32>
    %cst_20 = arith.constant dense<0.000000e+00> : vector<8x1024xf32>
    %23 = tpu.matmul %21, %22, %cst_20 {dimension_numbers = #tpu.dot_dimension_numbers<[1], [0], [0], [1], [0, 0, 1, 1], [], []>} : vector<8x512xf32>, vector<512x1024xf32>, vector<8x1024xf32> -> vector<8x1024xf32>
    %c0_21 = arith.constant 0 : index
    %c0_22 = arith.constant 0 : index
    %24 = vector.load %arg9[%c0_21, %c0_22] : memref<1x1024xf32, #tpu.memory_space<vmem>>, vector<1x1024xf32>
    %25 = vector.broadcast %24 : vector<1x1024xf32> to vector<8x1024xf32>
    %26 = arith.addf %23, %25 : vector<8x1024xf32>
    %cst_23 = arith.constant 0.000000e+00 : f32
    %27 = vector.broadcast %cst_23 : f32 to vector<8x1024xf32>
    %28 = arith.maximumf %26, %27 : vector<8x1024xf32>
    %c1536_i32 = arith.constant 1536 : i32
    %29 = arith.muli %arg0, %c1536_i32 : i32
    %30 = tpu.assume_multiple %29, 128 : i32
    %c0_24 = arith.constant 0 : index
    %31 = arith.index_cast %30 : i32 to index
    %32 = vector.load %arg11[%c0_24, %31] : memref<1x6144xf32, #tpu.memory_space<vmem>>, vector<1x1536xf32>
    %33 = arith.truncf %28 : vector<8x1024xf32> to vector<8x1024xbf16>
    %c0_25 = arith.constant 0 : index
    %c0_26 = arith.constant 0 : index
    %c0_27 = arith.constant 0 : index
    %34 = vector.load %arg10[%c0_25, %c0_26, %c0_27] : memref<1x1024x1536xbf16, #tpu.memory_space<vmem>>, vector<1x1024x1536xbf16>
    %35 = vector.shape_cast %34 : vector<1x1024x1536xbf16> to vector<1024x1536xbf16>
    %cst_28 = arith.constant dense<0.000000e+00> : vector<8x1536xf32>
    %36 = tpu.matmul %33, %35, %cst_28 {dimension_numbers = #tpu.dot_dimension_numbers<[1], [0], [0], [1], [0, 0, 1, 1], [], []>} : vector<8x1024xbf16>, vector<1024x1536xbf16>, vector<8x1536xf32> -> vector<8x1536xf32>
    %37 = vector.broadcast %32 : vector<1x1536xf32> to vector<8x1536xf32>
    %38 = arith.addf %36, %37 : vector<8x1536xf32>
    %c0_29 = arith.constant 0 : index
    %c0_30 = arith.constant 0 : index
    %39 = vector.load %arg12[%c0_29, %c0_30] : memref<8x1536xf32, #tpu.memory_space<vmem>>, vector<8x1536xf32>
    tpu.vector_store %arg12[%c0_29, %c0_30], %38 {strides = array<i32>} : memref<8x1536xf32, #tpu.memory_space<vmem>>, vector<8x1536xf32>,
    return
  }
  func.func @transform_0(%arg0: i32) -> (i32, i32) {
    %c0_i32 = arith.constant 0 : i32
    %c0_i32_0 = arith.constant 0 : i32
    %c0_i32_1 = arith.constant 0 : i32
    return %c0_i32, %c0_i32_0 : i32, i32
  }
  func.func @transform_1(%arg0: i32) -> (i32, i32) {
    %c0_i32 = arith.constant 0 : i32
    %c0_i32_0 = arith.constant 0 : i32
    %c0_i32_1 = arith.constant 0 : i32
    return %c0_i32, %c0_i32_0 : i32, i32
  }
  func.func @transform_2(%arg0: i32) -> (i32, i32) {
    %c0_i32 = arith.constant 0 : i32
    %c0_i32_0 = arith.constant 0 : i32
    %c0_i32_1 = arith.constant 0 : i32
    return %c0_i32, %c0_i32_0 : i32, i32
  }
  func.func @transform_3(%arg0: i32) -> (i32, i32) {
    %c0_i32 = arith.constant 0 : i32
    %c0_i32_0 = arith.constant 0 : i32
    %c0_i32_1 = arith.constant 0 : i32
    return %c0_i32, %c0_i32_0 : i32, i32
  }
  func.func @transform_4(%arg0: i32) -> (i32, i32) {
    %c0_i32 = arith.constant 0 : i32
    %c0_i32_0 = arith.constant 0 : i32
    %c0_i32_1 = arith.constant 0 : i32
    return %c0_i32, %c0_i32_0 : i32, i32
  }
  func.func @transform_5(%arg0: i32) -> (i32, i32) {
    %c0_i32 = arith.constant 0 : i32
    %c0_i32_0 = arith.constant 0 : i32
    %c0_i32_1 = arith.constant 0 : i32
    return %c0_i32, %c0_i32_0 : i32, i32
  }
  func.func @transform_6(%arg0: i32) -> (i32, i32) {
    %c0_i32 = arith.constant 0 : i32
    %c0_i32_0 = arith.constant 0 : i32
    %c0_i32_1 = arith.constant 0 : i32
    return %c0_i32, %c0_i32_0 : i32, i32
  }
  func.func @transform_7(%arg0: i32) -> (i32, i32) {
    %c0_i32 = arith.constant 0 : i32
    %c0_i32_0 = arith.constant 0 : i32
    %c0_i32_1 = arith.constant 0 : i32
    return %c0_i32, %c0_i32_0 : i32, i32
  }
  func.func @transform_8(%arg0: i32) -> (i32, i32) {
    %c0_i32 = arith.constant 0 : i32
    %c0_i32_0 = arith.constant 0 : i32
    %c0_i32_1 = arith.constant 0 : i32
    return %c0_i32, %c0_i32_0 : i32, i32
  }
  func.func @transform_9(%arg0: i32) -> (i32, i32, i32) {
    %c0_i32 = arith.constant 0 : i32
    %c0_i32_0 = arith.constant 0 : i32
    %c0_i32_1 = arith.constant 0 : i32
    return %arg0, %c0_i32, %c0_i32_0 : i32, i32, i32
  }
  func.func @transform_10(%arg0: i32) -> (i32, i32) {
    %c0_i32 = arith.constant 0 : i32
    %c0_i32_0 = arith.constant 0 : i32
    %c0_i32_1 = arith.constant 0 : i32
    return %c0_i32, %c0_i32_0 : i32, i32
  }
  func.func @transform_11(%arg0: i32) -> (i32, i32) {
    %c0_i32 = arith.constant 0 : i32
    %c0_i32_0 = arith.constant 0 : i32
    return %c0_i32, %arg0 : i32, i32
  }
}

</mosaic_0001>

<llo_original>
// kernel: tpu_custom_call.1
$region0: #{tpu_custom_call.1}
  #allocation0 [shape = 'u32[]', space=smem, size = 0x4, offset = 0x4, fixed_abs, tag = 'smem constant byte address 0x4 - core index']
  #allocation1 [shape = 'u32[144,128]{1,0:T(1,128)}', space=vmem, size = 0x12000, scoped, tag = 'internal scratch']
  %s0 = inlined_call_operand.hbm [shape: f32[8,32], index: 0, kind: input, shape index: {}]
  %s1 = inlined_call_operand.hbm [shape: f32[32,64], index: 1, kind: input, shape index: {}]
  %s2 = inlined_call_operand.hbm [shape: f32[1,64], index: 2, kind: input, shape index: {}]
  %s3 = inlined_call_operand.hbm [shape: f32[64,128], index: 3, kind: input, shape index: {}]
  %s4 = inlined_call_operand.hbm [shape: f32[1,128], index: 4, kind: input, shape index: {}]
  %s5 = inlined_call_operand.hbm [shape: f32[128,512], index: 5, kind: input, shape index: {}]
  %s6 = inlined_call_operand.hbm [shape: f32[1,512], index: 6, kind: input, shape index: {}]
  %s7 = inlined_call_operand.hbm [shape: f32[512,1024], index: 7, kind: input, shape index: {}]
  %s8 = inlined_call_operand.hbm [shape: f32[1,1024], index: 8, kind: input, shape index: {}]
  %s9 = inlined_call_operand.hbm [shape: bf16[4,1024,1536], index: 9, kind: input, shape index: {}]
  %s10 = inlined_call_operand.hbm [shape: f32[1,6144], index: 10, kind: input, shape index: {}]
  %s11 = inlined_call_operand.hbm [shape: f32[8,6144], index: 11, kind: output, shape index: {}]
  %s12 = sld [smem:[#allocation0]]
  $region121: #{tpu_custom_call.1} parent=0
    _
  %s14 = ssub.s32 1, %s12
  %s15 = scalar_select 0, %s14, %s12
  $region1: #{tpu_custom_call.1} parent=0
    #allocation2 [shape = 'u8[4096]{0}', space=vmem, size = 0x1000, scoped, tag = 'input window, operand 0, single buffered']
    #allocation3 [shape = 's32[2]{0}', space=sflag, size = 0x8, scoped, tag = 'scoped memory for tpu_custom_call.1']
    #allocation4 [shape = 's32[2]{0}', space=sflag, size = 0x8, scoped, tag = 'scoped memory for tpu_custom_call.1']
    #allocation5 [shape = 'u8[16384]{0}', space=vmem, size = 0x4000, scoped, tag = 'input window, operand 1, single buffered']
    #allocation6 [shape = 's32[1]{0}', space=sflag, size = 0x4, scoped, tag = 'scoped memory for tpu_custom_call.1']
    #allocation7 [shape = 'u8[512]{0}', space=vmem, size = 0x400, scoped, tag = 'input window, operand 2, single buffered']
    #allocation8 [shape = 'u8[32768]{0}', space=vmem, size = 0x8000, scoped, tag = 'input window, operand 3, single buffered']
    #allocation9 [shape = 's32[1]{0}', space=sflag, size = 0x4, scoped, tag = 'scoped memory for tpu_custom_call.1']
    #allocation10 [shape = 'u8[512]{0}', space=vmem, size = 0x400, scoped, tag = 'input window, operand 4, single buffered']
    #allocation11 [shape = 'u8[262144]{0}', space=vmem, size = 0x40000, scoped, tag = 'input window, operand 5, single buffered']
    #allocation12 [shape = 's32[1]{0}', space=sflag, size = 0x4, scoped, tag = 'scoped memory for tpu_custom_call.1']
    #allocation13 [shape = 'u8[2048]{0}', space=vmem, size = 0x800, scoped, tag = 'input window, operand 6, single buffered']
    #allocation14 [shape = 'u8[2097152]{0}', space=vmem, size = 0x200000, scoped, tag = 'input window, operand 7, single buffered']
    #allocation15 [shape = 's32[1]{0}', space=sflag, size = 0x4, scoped, tag = 'scoped memory for tpu_custom_call.1']
    #allocation16 [shape = 'u8[4096]{0}', space=vmem, size = 0x1000, scoped, tag = 'input window, operand 8, single buffered']
    #allocation17 [shape = 'u8[6291456]{0}', space=vmem, size = 0x600000, scoped, tag = 'input window, operand 9']
    #allocation18 [shape = 's32[2]{0}', space=sflag, size = 0x8, scoped, tag = 'scoped memory for tpu_custom_call.1']
    #allocation19 [shape = 'u8[24576]{0}', space=vmem, size = 0x6000, scoped, tag = 'input window, operand 10, single buffered']
    #allocation20 [shape = 'u8[98304]{0}', space=vmem, size = 0x18000, scoped, tag = 'output window, operand 0']
    %16 = vsyncpa [#allocation3], 0
    %17 = vsyncpa [#allocation6], 0
    %18 = vsyncpa [#allocation9], 0
    %19 = vsyncpa [#allocation12], 0
    %20 = vsyncpa [#allocation15], 0
    %21 = vsyncpa [#allocation18], 0
    %s22 = scalar_lea.sflag [#allocation18], 1
    %23 = vsyncpa %s22, 0
    %24 = vsyncpa [#allocation4], 0
    %s25 = scalar_lea.sflag [#allocation4], 1
    %26 = vsyncpa %s25, 0
    loop: start=0, step=1, limit=6
    $region2: #{tpu_custom_call.1} parent=1 // loop_pre_header
      _
    $region3: #{tpu_custom_call.1} parent=1 // loop_header
      %s28 = sphi 0, %s32
      %p29 = scmp.ge.s32.totalorder %s28, 6
      %s36 = sphi 0, %s36
      %s38 = sphi 0, %s36
      %s39 = sphi 0, %s38
      %s53 = sphi 0, %s39
      %s57 = sphi 0, %s57
      %s59 = sphi 0, %s57
      %s60 = sphi 0, %s59
      %s74 = sphi 0, %s60
      %s78 = sphi 0, %s78
      %s80 = sphi 0, %s78
      %s81 = sphi 0, %s80
      %s95 = sphi 0, %s81
      %s99 = sphi 0, %s99
      %s101 = sphi 0, %s99
      %s102 = sphi 0, %s101
      %s116 = sphi 0, %s102
      %s120 = sphi 0, %s120
      %s122 = sphi 0, %s120
      %s123 = sphi 0, %s122
      %s137 = sphi 0, %s123
      %s141 = sphi 0, %s141
      %s143 = sphi 0, %s141
      %s144 = sphi 0, %s143
      %s158 = sphi 0, %s144
      %s162 = sphi 0, %s162
      %s164 = sphi 0, %s162
      %s165 = sphi 0, %s164
      %s179 = sphi 0, %s165
      %s183 = sphi 0, %s183
      %s185 = sphi 0, %s183
      %s186 = sphi 0, %s185
      %s200 = sphi 0, %s186
      %s204 = sphi 0, %s204
      %s206 = sphi 0, %s204
      %s207 = sphi 0, %s206
      %s221 = sphi 0, %s207
      %s227 = sphi 0, %s229
      %s230 = sphi 0, %s227
      %s231 = sphi 0, %s230
      %s247 = sphi 0, %s231
      %s251 = sphi 0, %s251
      %s253 = sphi 0, %s251
      %s254 = sphi 0, %s253
      %s268 = sphi 0, %s254
      %s274 = sphi 0, %s276
      %s277 = sphi 0, %s274
      %s278 = sphi 0, %s277
      %s294 = sphi 0, %s278
    $region4: #{tpu_custom_call.1} parent=1 // loop_header_branch
      %31 = sbr.rel (%p29) target = $region8
    $region5: #{tpu_custom_call.1} parent=1 // loop_body
      %s33 = ssub.s32 %s28, 1
      %s34 = ssub.s32 %s28, 2
      %s35 = sadd.s32 %s28, 1
      %s37 = sadd.s32 %s36, 1
      %p40 = scmp.eq.s32.totalorder %s28, 3
      %p41 = scmp.ne.s32.totalorder %s36, %s38
      %p42 = scmp.eq.s32.totalorder %s28, 0
      %p43 = por %p41, %p42
      %p44 = scmp.ne.s32.totalorder %s36, %s38
      %p45 = scmp.eq.s32.totalorder %s33, 3
      %p46 = por %p44, %p45
      %p47 = scmp.ne.s32.totalorder %s38, %s39
      %p48 = scmp.eq.s32.totalorder %s33, 0
      %p49 = por %p47, %p48
      %p50 = scmp.ne.s32.totalorder %s38, %s39
      %p51 = scmp.eq.s32.totalorder %s34, 3
      %p52 = por %p50, %p51
      %p54 = scmp.ne.s32.totalorder %s39, %s53
      %p55 = scmp.eq.s32.totalorder %s34, 0
      %p56 = por %p54, %p55
      %s58 = sadd.s32 %s57, 1
      %p61 = scmp.eq.s32.totalorder %s28, 3
      %p62 = scmp.ne.s32.totalorder %s57, %s59
      %p63 = scmp.eq.s32.totalorder %s28, 0
      %p64 = por %p62, %p63
      %p65 = scmp.ne.s32.totalorder %s57, %s59
      %p66 = scmp.eq.s32.totalorder %s33, 3
      %p67 = por %p65, %p66
      %p68 = scmp.ne.s32.totalorder %s59, %s60
      %p69 = scmp.eq.s32.totalorder %s33, 0
      %p70 = por %p68, %p69
      %p71 = scmp.ne.s32.totalorder %s59, %s60
      %p72 = scmp.eq.s32.totalorder %s34, 3
      %p73 = por %p71, %p72
      %p75 = scmp.ne.s32.totalorder %s60, %s74
      %p76 = scmp.eq.s32.totalorder %s34, 0
      %p77 = por %p75, %p76
      %s79 = sadd.s32 %s78, 1
      %p82 = scmp.eq.s32.totalorder %s28, 3
      %p83 = scmp.ne.s32.totalorder %s78, %s80
      %p84 = scmp.eq.s32.totalorder %s28, 0
      %p85 = por %p83, %p84
      %p86 = scmp.ne.s32.totalorder %s78, %s80
      %p87 = scmp.eq.s32.totalorder %s33, 3
      %p88 = por %p86, %p87
      %p89 = scmp.ne.s32.totalorder %s80, %s81
      %p90 = scmp.eq.s32.totalorder %s33, 0
      %p91 = por %p89, %p90
      %p92 = scmp.ne.s32.totalorder %s80, %s81
      %p93 = scmp.eq.s32.totalorder %s34, 3
      %p94 = por %p92, %p93
      %p96 = scmp.ne.s32.totalorder %s81, %s95
      %p97 = scmp.eq.s32.totalorder %s34, 0
      %p98 = por %p96, %p97
      %s100 = sadd.s32 %s99, 1
      %p103 = scmp.eq.s32.totalorder %s28, 3
      %p104 = scmp.ne.s32.totalorder %s99, %s101
      %p105 = scmp.eq.s32.totalorder %s28, 0
      %p106 = por %p104, %p105
      %p107 = scmp.ne.s32.totalorder %s99, %s101
      %p108 = scmp.eq.s32.totalorder %s33, 3
      %p109 = por %p107, %p108
      %p110 = scmp.ne.s32.totalorder %s101, %s102
      %p111 = scmp.eq.s32.totalorder %s33, 0
      %p112 = por %p110, %p111
      %p113 = scmp.ne.s32.totalorder %s101, %s102
      %p114 = scmp.eq.s32.totalorder %s34, 3
      %p115 = por %p113, %p114
      %p117 = scmp.ne.s32.totalorder %s102, %s116
      %p118 = scmp.eq.s32.totalorder %s34, 0
      %p119 = por %p117, %p118
      %s121 = sadd.s32 %s120, 1
      %p124 = scmp.eq.s32.totalorder %s28, 3
      %p125 = scmp.ne.s32.totalorder %s120, %s122
      %p126 = scmp.eq.s32.totalorder %s28, 0
      %p127 = por %p125, %p126
      %p128 = scmp.ne.s32.totalorder %s120, %s122
      %p129 = scmp.eq.s32.totalorder %s33, 3
      %p130 = por %p128, %p129
      %p131 = scmp.ne.s32.totalorder %s122, %s123
      %p132 = scmp.eq.s32.totalorder %s33, 0
      %p133 = por %p131, %p132
      %p134 = scmp.ne.s32.totalorder %s122, %s123
      %p135 = scmp.eq.s32.totalorder %s34, 3
      %p136 = por %p134, %p135
      %p138 = scmp.ne.s32.totalorder %s123, %s137
      %p139 = scmp.eq.s32.totalorder %s34, 0
      %p140 = por %p138, %p139
      %s142 = sadd.s32 %s141, 1
      %p145 = scmp.eq.s32.totalorder %s28, 3
      %p146 = scmp.ne.s32.totalorder %s141, %s143
      %p147 = scmp.eq.s32.totalorder %s28, 0
      %p148 = por %p146, %p147
      %p149 = scmp.ne.s32.totalorder %s141, %s143
      %p150 = scmp.eq.s32.totalorder %s33, 3
      %p151 = por %p149, %p150
      %p152 = scmp.ne.s32.totalorder %s143, %s144
      %p153 = scmp.eq.s32.totalorder %s33, 0
      %p154 = por %p152, %p153
      %p155 = scmp.ne.s32.totalorder %s143, %s144
      %p156 = scmp.eq.s32.totalorder %s34, 3
      %p157 = por %p155, %p156
      %p159 = scmp.ne.s32.totalorder %s144, %s158
      %p160 = scmp.eq.s32.totalorder %s34, 0
      %p161 = por %p159, %p160
      %s163 = sadd.s32 %s162, 1
      %p166 = scmp.eq.s32.totalorder %s28, 3
      %p167 = scmp.ne.s32.totalorder %s162, %s164
      %p168 = scmp.eq.s32.totalorder %s28, 0
      %p169 = por %p167, %p168
      %p170 = scmp.ne.s32.totalorder %s162, %s164
      %p171 = scmp.eq.s32.totalorder %s33, 3
      %p172 = por %p170, %p171
      %p173 = scmp.ne.s32.totalorder %s164, %s165
      %p174 = scmp.eq.s32.totalorder %s33, 0
      %p175 = por %p173, %p174
      %p176 = scmp.ne.s32.totalorder %s164, %s165
      %p177 = scmp.eq.s32.totalorder %s34, 3
      %p178 = por %p176, %p177
      %p180 = scmp.ne.s32.totalorder %s165, %s179
      %p181 = scmp.eq.s32.totalorder %s34, 0
      %p182 = por %p180, %p181
      %s184 = sadd.s32 %s183, 1
      %p187 = scmp.eq.s32.totalorder %s28, 3
      %p188 = scmp.ne.s32.totalorder %s183, %s185
      %p189 = scmp.eq.s32.totalorder %s28, 0
      %p190 = por %p188, %p189
      %p191 = scmp.ne.s32.totalorder %s183, %s185
      %p192 = scmp.eq.s32.totalorder %s33, 3
      %p193 = por %p191, %p192
      %p194 = scmp.ne.s32.totalorder %s185, %s186
      %p195 = scmp.eq.s32.totalorder %s33, 0
      %p196 = por %p194, %p195
      %p197 = scmp.ne.s32.totalorder %s185, %s186
      %p198 = scmp.eq.s32.totalorder %s34, 3
      %p199 = por %p197, %p198
      %p201 = scmp.ne.s32.totalorder %s186, %s200
      %p202 = scmp.eq.s32.totalorder %s34, 0
      %p203 = por %p201, %p202
      %s205 = sadd.s32 %s204, 1
      %p208 = scmp.eq.s32.totalorder %s28, 3
      %p209 = scmp.ne.s32.totalorder %s204, %s206
      %p210 = scmp.eq.s32.totalorder %s28, 0
      %p211 = por %p209, %p210
      %p212 = scmp.ne.s32.totalorder %s204, %s206
      %p213 = scmp.eq.s32.totalorder %s33, 3
      %p214 = por %p212, %p213
      %p215 = scmp.ne.s32.totalorder %s206, %s207
      %p216 = scmp.eq.s32.totalorder %s33, 0
      %p217 = por %p215, %p216
      %p218 = scmp.ne.s32.totalorder %s206, %s207
      %p219 = scmp.eq.s32.totalorder %s34, 3
      %p220 = por %p218, %p219
      %p222 = scmp.ne.s32.totalorder %s207, %s221
      %p223 = scmp.eq.s32.totalorder %s34, 0
      %p224 = por %p222, %p223
      %s225 = ssub.s32 %s28, %s35
      %p226 = scmp.eq.s32.totalorder %s225, 0
      %s228 = sadd.s32 %s227, 1
      %s229 = scalar_select %p226, %s227, %s228
      %p232 = pneg %p226
      %p233 = scmp.eq.s32.totalorder %s28, 3
      %p234 = por %p232, %p233
      %p235 = scmp.ne.s32.totalorder %s227, %s230
      %p236 = scmp.eq.s32.totalorder %s28, 0
      %p237 = por %p235, %p236
      %p238 = scmp.ne.s32.totalorder %s227, %s230
      %p239 = scmp.eq.s32.totalorder %s33, 3
      %p240 = por %p238, %p239
      %p241 = scmp.ne.s32.totalorder %s230, %s231
      %p242 = scmp.eq.s32.totalorder %s33, 0
      %p243 = por %p241, %p242
      %p244 = scmp.ne.s32.totalorder %s230, %s231
      %p245 = scmp.eq.s32.totalorder %s34, 3
      %p246 = por %p244, %p245
      %p248 = scmp.ne.s32.totalorder %s231, %s247
      %p249 = scmp.eq.s32.totalorder %s34, 0
      %p250 = por %p248, %p249
      %s252 = sadd.s32 %s251, 1
      %p255 = scmp.eq.s32.totalorder %s28, 3
      %p256 = scmp.ne.s32.totalorder %s251, %s253
      %p257 = scmp.eq.s32.totalorder %s28, 0
      %p258 = por %p256, %p257
      %p259 = scmp.ne.s32.totalorder %s251, %s253
      %p260 = scmp.eq.s32.totalorder %s33, 3
      %p261 = por %p259, %p260
      %p262 = scmp.ne.s32.totalorder %s253, %s254
      %p263 = scmp.eq.s32.totalorder %s33, 0
      %p264 = por %p262, %p263
      %p265 = scmp.ne.s32.totalorder %s253, %s254
      %p266 = scmp.eq.s32.totalorder %s34, 3
      %p267 = por %p265, %p266
      %p269 = scmp.ne.s32.totalorder %s254, %s268
      %p270 = scmp.eq.s32.totalorder %s34, 0
      %p271 = por %p269, %p270
      %s272 = ssub.s32 %s28, %s35
      %p273 = scmp.eq.s32.totalorder %s272, 0
      %s275 = sadd.s32 %s274, 1
      %s276 = scalar_select %p273, %s274, %s275
      %p279 = pneg %p273
      %p280 = scmp.eq.s32.totalorder %s28, 3
      %p281 = por %p279, %p280
      %p282 = scmp.ne.s32.totalorder %s274, %s277
      %p283 = scmp.eq.s32.totalorder %s28, 0
      %p284 = por %p282, %p283
      %p285 = scmp.ne.s32.totalorder %s274, %s277
      %p286 = scmp.eq.s32.totalorder %s33, 3
      %p287 = por %p285, %p286
      %p288 = scmp.ne.s32.totalorder %s277, %s278
      %p289 = scmp.eq.s32.totalorder %s33, 0
      %p290 = por %p288, %p289
      %p291 = scmp.ne.s32.totalorder %s277, %s278
      %p292 = scmp.eq.s32.totalorder %s34, 3
      %p293 = por %p291, %p292
      %p295 = scmp.ne.s32.totalorder %s278, %s294
      %p296 = scmp.eq.s32.totalorder %s34, 0
      %p297 = por %p295, %p296
      %p298 = scmp.le.s32.totalorder 1, %s28
      %p299 = scmp.lt.s32.totalorder %s28, 5
      %p300 = pnand %p298, %p299
      %p301 = pneg %p300
      // Predicated region
      $region9: #{tpu_custom_call.1} parent=5 // pred_check
        _
      $region10: #{tpu_custom_call.1} parent=5 // pred_check_branch
        %303 = sbr.rel (%p300) target = $region12
      $region11: #{tpu_custom_call.1} parent=5 // pred_region
        %s304 = ssub.s32 %s28, 1
        // Predicated region
        $region13: #{tpu_custom_call.1} parent=11 // pred_check
          %p305 = pneg %p49
        $region14: #{tpu_custom_call.1} parent=11 // pred_check_branch
          %307 = sbr.rel (%p305) target = $region16
        $region15: #{tpu_custom_call.1} parent=11 // pred_region
          %s309 = ssub.s32 128, 128
          %310 = vsyncadd [#allocation3], %s309
          %s312 = sshll.u32 [#allocation2], 4
          %s313 = int_to_ptr.vmem [resolvable:$true] %s312
          %315 = dma.hbm_to_vmem [thread:$0]  %s0, 128, %s313, [#allocation3]
        $region16: #{tpu_custom_call.1} parent=11 // pred_fallthru
          _
        // Predicated region
        $region17: #{tpu_custom_call.1} parent=11 // pred_check
          %p316 = pneg %p70
        $region18: #{tpu_custom_call.1} parent=11 // pred_check_branch
          %318 = sbr.rel (%p316) target = $region20
        $region19: #{tpu_custom_call.1} parent=11 // pred_region
          %s320 = ssub.s32 512, 512
          %321 = vsyncadd [#allocation6], %s320
          %s322 = sshll.u32 [#allocation5], 4
          %s323 = int_to_ptr.vmem [resolvable:$true] %s322
          %328 = dma.hbm_to_vmem [thread:$0]  %s1, 512, %s323, [#allocation6], 128, 128, 8
        $region20: #{tpu_custom_call.1} parent=11 // pred_fallthru
          _
        // Predicated region
        $region21: #{tpu_custom_call.1} parent=11 // pred_check
          %p329 = pneg %p91
        $region22: #{tpu_custom_call.1} parent=11 // pred_check_branch
          %331 = sbr.rel (%p329) target = $region24
        $region23: #{tpu_custom_call.1} parent=11 // pred_region
          %s333 = ssub.s32 16, 16
          %334 = vsyncadd [#allocation6], %s333
          %s336 = sshll.u32 [#allocation7], 4
          %s337 = int_to_ptr.vmem [resolvable:$true] %s336
          %339 = dma.hbm_to_vmem [thread:$0]  %s2, 16, %s337, [#allocation6]
        $region24: #{tpu_custom_call.1} parent=11 // pred_fallthru
          _
        // Predicated region
        $region25: #{tpu_custom_call.1} parent=11 // pred_check
          %p340 = pneg %p112
        $region26: #{tpu_custom_call.1} parent=11 // pred_check_branch
          %342 = sbr.rel (%p340) target = $region28
        $region27: #{tpu_custom_call.1} parent=11 // pred_region
          %s344 = ssub.s32 1024, 1024
          %345 = vsyncadd [#allocation9], %s344
          %s346 = sshll.u32 [#allocation8], 4
          %s347 = int_to_ptr.vmem [resolvable:$true] %s346
          %352 = dma.hbm_to_vmem [thread:$0]  %s3, 1024, %s347, [#allocation9], 128, 128, 8
        $region28: #{tpu_custom_call.1} parent=11 // pred_fallthru
          _
        // Predicated region
        $region29: #{tpu_custom_call.1} parent=11 // pred_check
          %p353 = pneg %p133
        $region30: #{tpu_custom_call.1} parent=11 // pred_check_branch
          %355 = sbr.rel (%p353) target = $region32
        $region31: #{tpu_custom_call.1} parent=11 // pred_region
          %s357 = ssub.s32 16, 16
          %358 = vsyncadd [#allocation9], %s357
          %s360 = sshll.u32 [#allocation10], 4
          %s361 = int_to_ptr.vmem [resolvable:$true] %s360
          %363 = dma.hbm_to_vmem [thread:$0]  %s4, 16, %s361, [#allocation9]
        $region32: #{tpu_custom_call.1} parent=11 // pred_fallthru
          _
        // Predicated region
        $region33: #{tpu_custom_call.1} parent=11 // pred_check
          %p364 = pneg %p154
        $region34: #{tpu_custom_call.1} parent=11 // pred_check_branch
          %366 = sbr.rel (%p364) target = $region36
        $region35: #{tpu_custom_call.1} parent=11 // pred_region
          %s368 = ssub.s32 8192, 8192
          %369 = vsyncadd [#allocation12], %s368
          %s370 = sshll.u32 [#allocation11], 4
          %s371 = int_to_ptr.vmem [resolvable:$true] %s370
          %376 = dma.hbm_to_vmem [thread:$0]  %s5, 8192, %s371, [#allocation12], 512, 512, 32
        $region36: #{tpu_custom_call.1} parent=11 // pred_fallthru
          _
        // Predicated region
        $region37: #{tpu_custom_call.1} parent=11 // pred_check
          %p377 = pneg %p175
        $region38: #{tpu_custom_call.1} parent=11 // pred_check_branch
          %379 = sbr.rel (%p377) target = $region40
        $region39: #{tpu_custom_call.1} parent=11 // pred_region
          %s381 = ssub.s32 64, 64
          %382 = vsyncadd [#allocation12], %s381
          %s384 = sshll.u32 [#allocation13], 4
          %s385 = int_to_ptr.vmem [resolvable:$true] %s384
          %387 = dma.hbm_to_vmem [thread:$0]  %s6, 64, %s385, [#allocation12]
        $region40: #{tpu_custom_call.1} parent=11 // pred_fallthru
          _
        // Predicated region
        $region41: #{tpu_custom_call.1} parent=11 // pred_check
          %p388 = pneg %p196
        $region42: #{tpu_custom_call.1} parent=11 // pred_check_branch
          %390 = sbr.rel (%p388) target = $region44
        $region43: #{tpu_custom_call.1} parent=11 // pred_region
          %s392 = ssub.s32 65536, 65536
          %393 = vsyncadd [#allocation15], %s392
          %s394 = sshll.u32 [#allocation14], 4
          %s395 = int_to_ptr.vmem [resolvable:$true] %s394
          %400 = dma.hbm_to_vmem [thread:$0]  %s7, 65536, %s395, [#allocation15], 1024, 1024, 64
        $region44: #{tpu_custom_call.1} parent=11 // pred_fallthru
          _
        // Predicated region
        $region45: #{tpu_custom_call.1} parent=11 // pred_check
          %p401 = pneg %p217
        $region46: #{tpu_custom_call.1} parent=11 // pred_check_branch
          %403 = sbr.rel (%p401) target = $region48
        $region47: #{tpu_custom_call.1} parent=11 // pred_region
          %s405 = ssub.s32 128, 128
          %406 = vsyncadd [#allocation15], %s405
          %s408 = sshll.u32 [#allocation16], 4
          %s409 = int_to_ptr.vmem [resolvable:$true] %s408
          %411 = dma.hbm_to_vmem [thread:$0]  %s8, 128, %s409, [#allocation15]
        $region48: #{tpu_custom_call.1} parent=11 // pred_fallthru
          _
        // Predicated region
        $region49: #{tpu_custom_call.1} parent=11 // pred_check
          %p412 = pneg %p264
        $region50: #{tpu_custom_call.1} parent=11 // pred_check_branch
          %414 = sbr.rel (%p412) target = $region52
        $region51: #{tpu_custom_call.1} parent=11 // pred_region
          %s416 = ssub.s32 768, 768
          %417 = vsyncadd [#allocation18], %s416
          %s419 = sshll.u32 [#allocation19], 4
          %s420 = int_to_ptr.vmem [resolvable:$true] %s419
          %422 = dma.hbm_to_vmem [thread:$0]  %s10, 768, %s420, [#allocation18]
        $region52: #{tpu_custom_call.1} parent=11 // pred_fallthru
          _
      $region12: #{tpu_custom_call.1} parent=5 // pred_fallthru
        _
      %p423 = scmp.lt.s32.totalorder %s28, 4
      // Predicated region
      $region53: #{tpu_custom_call.1} parent=5 // pred_check
        %p424 = pneg %p423
      $region54: #{tpu_custom_call.1} parent=5 // pred_check_branch
        %426 = sbr.rel (%p424) target = $region56
      $region55: #{tpu_custom_call.1} parent=5 // pred_region
        // Predicated region
        $region57: #{tpu_custom_call.1} parent=55 // pred_check
          %p427 = pneg %p237
        $region58: #{tpu_custom_call.1} parent=55 // pred_check_branch
          %429 = sbr.rel (%p427) target = $region60
        $region59: #{tpu_custom_call.1} parent=55 // pred_region
          %s430 = sand.u32 %s28, 1
          %s431 = scalar_lea.sflag [#allocation18], %s430
          %s432 = sand.u32 %s227, 1
          %s433 = smul.addr %s432, 6144
          %s434 = scalar_lea.vmem [#allocation17], %s433
          %s436 = ssub.s32 98304, 98304
          %437 = vsyncadd %s431, %s436
          %s438 = smul.addr %s28, 1536
          %s439 = smul.addr %s438, 64
          %s440 = scalar_lea.hbm %s9, %s439
          %s441 = sshll.u32 %s434, 4
          %s442 = int_to_ptr.vmem [resolvable:$true] %s441
          %447 = dma.hbm_to_vmem [thread:$0]  %s440, 98304, %s442, %s431, 768, 768, 48
        $region60: #{tpu_custom_call.1} parent=55 // pred_fallthru
          _
      $region56: #{tpu_custom_call.1} parent=5 // pred_fallthru
        _
      %p448 = scmp.le.s32.totalorder 1, %s28
      %p449 = scmp.lt.s32.totalorder %s28, 5
      %p450 = pnand %p448, %p449
      %p451 = pneg %p450
      // Predicated region
      $region61: #{tpu_custom_call.1} parent=5 // pred_check
        _
      $region62: #{tpu_custom_call.1} parent=5 // pred_check_branch
        %453 = sbr.rel (%p450) target = $region64
      $region63: #{tpu_custom_call.1} parent=5 // pred_region
        %s454 = ssub.s32 %s28, 1
        // Predicated region
        $region65: #{tpu_custom_call.1} parent=63 // pred_check
          %p455 = pneg %p49
        $region66: #{tpu_custom_call.1} parent=63 // pred_check_branch
          %457 = sbr.rel (%p455) target = $region68
        $region67: #{tpu_custom_call.1} parent=63 // pred_region
          %458 = dma.done [#allocation3], 128
        $region68: #{tpu_custom_call.1} parent=63 // pred_fallthru
          _
        // Predicated region
        $region69: #{tpu_custom_call.1} parent=63 // pred_check
          %p459 = pneg %p70
        $region70: #{tpu_custom_call.1} parent=63 // pred_check_branch
          %461 = sbr.rel (%p459) target = $region72
        $region71: #{tpu_custom_call.1} parent=63 // pred_region
          %462 = dma.done [#allocation6], 512
        $region72: #{tpu_custom_call.1} parent=63 // pred_fallthru
          _
        // Predicated region
        $region73: #{tpu_custom_call.1} parent=63 // pred_check
          %p463 = pneg %p91
        $region74: #{tpu_custom_call.1} parent=63 // pred_check_branch
          %465 = sbr.rel (%p463) target = $region76
        $region75: #{tpu_custom_call.1} parent=63 // pred_region
          %466 = dma.done [#allocation6], 16
        $region76: #{tpu_custom_call.1} parent=63 // pred_fallthru
          _
        // Predicated region
        $region77: #{tpu_custom_call.1} parent=63 // pred_check
          %p467 = pneg %p112
        $region78: #{tpu_custom_call.1} parent=63 // pred_check_branch
          %469 = sbr.rel (%p467) target = $region80
        $region79: #{tpu_custom_call.1} parent=63 // pred_region
          %470 = dma.done [#allocation9], 1024
        $region80: #{tpu_custom_call.1} parent=63 // pred_fallthru
          _
        // Predicated region
        $region81: #{tpu_custom_call.1} parent=63 // pred_check
          %p471 = pneg %p133
        $region82: #{tpu_custom_call.1} parent=63 // pred_check_branch
          %473 = sbr.rel (%p471) target = $region84
        $region83: #{tpu_custom_call.1} parent=63 // pred_region
          %474 = dma.done [#allocation9], 16
        $region84: #{tpu_custom_call.1} parent=63 // pred_fallthru
          _
        // Predicated region
        $region85: #{tpu_custom_call.1} parent=63 // pred_check
          %p475 = pneg %p154
        $region86: #{tpu_custom_call.1} parent=63 // pred_check_branch
          %477 = sbr.rel (%p475) target = $region88
        $region87: #{tpu_custom_call.1} parent=63 // pred_region
          %478 = dma.done [#allocation12], 8192
        $region88: #{tpu_custom_call.1} parent=63 // pred_fallthru
          _
        // Predicated region
        $region89: #{tpu_custom_call.1} parent=63 // pred_check
          %p479 = pneg %p175
        $region90: #{tpu_custom_call.1} parent=63 // pred_check_branch
          %481 = sbr.rel (%p479) target = $region92
        $region91: #{tpu_custom_call.1} parent=63 // pred_region
          %482 = dma.done [#allocation12], 64
        $region92: #{tpu_custom_call.1} parent=63 // pred_fallthru
          _
        // Predicated region
        $region93: #{tpu_custom_call.1} parent=63 // pred_check
          %p483 = pneg %p196
        $region94: #{tpu_custom_call.1} parent=63 // pred_check_branch
          %485 = sbr.rel (%p483) target = $region96
        $region95: #{tpu_custom_call.1} parent=63 // pred_region
          %486 = dma.done [#allocation15], 65536
        $region96: #{tpu_custom_call.1} parent=63 // pred_fallthru
          _
        // Predicated region
        $region97: #{tpu_custom_call.1} parent=63 // pred_check
          %p487 = pneg %p217
        $region98: #{tpu_custom_call.1} parent=63 // pred_check_branch
          %489 = sbr.rel (%p487) target = $region100
        $region99: #{tpu_custom_call.1} parent=63 // pred_region
          %490 = dma.done [#allocation15], 128
        $region100: #{tpu_custom_call.1} parent=63 // pred_fallthru
          _
        %s491 = sand.u32 %s33, 1
        %s492 = scalar_lea.sflag [#allocation18], %s491
        %s493 = sand.u32 %s230, 1
        %s494 = smul.addr %s493, 6144
        %s495 = scalar_lea.vmem [#allocation17], %s494
        // Predicated region
        $region101: #{tpu_custom_call.1} parent=63 // pred_check
          %p496 = pneg %p243
        $region102: #{tpu_custom_call.1} parent=63 // pred_check_branch
          %498 = sbr.rel (%p496) target = $region104
        $region103: #{tpu_custom_call.1} parent=63 // pred_region
          %499 = dma.done %s492, 98304
        $region104: #{tpu_custom_call.1} parent=63 // pred_fallthru
          _
        // Predicated region
        $region105: #{tpu_custom_call.1} parent=63 // pred_check
          %p500 = pneg %p264
        $region106: #{tpu_custom_call.1} parent=63 // pred_check_branch
          %502 = sbr.rel (%p500) target = $region108
        $region107: #{tpu_custom_call.1} parent=63 // pred_region
          %503 = dma.done [#allocation18], 768
        $region108: #{tpu_custom_call.1} parent=63 // pred_fallthru
          _
        %p504 = pneg %p49
        %p505 = pneg %p46
        %p506 = pneg %p70
        %p507 = pneg %p67
        %p508 = pneg %p91
        %p509 = pneg %p88
        %p510 = pneg %p112
        %p511 = pneg %p109
        %p512 = pneg %p133
        %p513 = pneg %p130
        %p514 = pneg %p154
        %p515 = pneg %p151
        %p516 = pneg %p175
        %p517 = pneg %p172
        %p518 = pneg %p196
        %p519 = pneg %p193
        %p520 = pneg %p217
        %p521 = pneg %p214
        %s522 = sand.u32 %s33, 1
        %s523 = scalar_lea.sflag [#allocation18], %s522
        %s524 = sand.u32 %s230, 1
        %s525 = smul.addr %s524, 6144
        %s526 = scalar_lea.vmem [#allocation17], %s525
        %p527 = pneg %p243
        %p528 = pneg %p240
        %p529 = pneg %p264
        %p530 = pneg %p261
        %p531 = pneg %p290
        %p532 = pneg %p287
        %s533 = sand.u32 %s277, 1
        %s534 = scalar_lea.sflag [#allocation4], %s533
        %s535 = sand.u32 %s277, 1
        %s536 = smul.addr %s535, 96
        %s537 = scalar_lea.vmem [#allocation20], %s536
        %s538 = smul.u32 12, %s33
        %v539 = vld [vmem:[#allocation2] sm:$0xff]
        %v540 = vld [vmem:[#allocation5] sm:$0xff]
        %v541 = vld [vmem:[#allocation5 + $0x8] sm:$0xff]
        %v542 = vld [vmem:[#allocation5 + $0x10] sm:$0xff]
        %v543 = vld [vmem:[#allocation5 + $0x18] sm:$0xff]
        %v544 = vld [vmem:[#allocation7] sm:$0x1]
        %v546 = vlaneseq
        %v547 = vshrl.u32 %v546, 7
        %v548 = vsub.s32 0, %v547
        %v549 = vrot.slane %v544, %v548
        %vm551 = vcmask 261120
        %v553 = vsel %vm551, %v539, 0
        %555 = vmatprep.subr.mxu0 0.0
        %556 = vmatpush1.msra.mxu0 %v540
        %557 = vmatprep.subr.mxu0 0.0
        %558 = vmatpush1.msra.mxu0 %v541
        %559 = vmatprep.subr.mxu0 0.0
        %560 = vmatpush1.msra.mxu0 %v542
        %561 = vmatprep.subr.mxu0 0.0
        %562 = vmatpush1.msra.mxu0 %v543
        %563 = vmatprep.subr.mxu0 0.0
        %564 = vmatpush1.msra.mxu0 0.0
        %565 = vmatprep.subr.mxu0 0.0
        %566 = vmatpush1.msra.mxu0 0.0
        %567 = vmatprep.subr.mxu0 0.0
        %568 = vmatpush1.msra.mxu0 0.0
        %569 = vmatprep.subr.mxu0 0.0
        %570 = vmatpush1.msra.mxu0 0.0
        %571 = vmatprep.subr.mxu0 0.0
        %572 = vmatpush1.msra.mxu0 0.0
        %573 = vmatprep.subr.mxu0 0.0
        %574 = vmatpush1.msra.mxu0 0.0
        %575 = vmatprep.subr.mxu0 0.0
        %576 = vmatpush1.msra.mxu0 0.0
        %577 = vmatprep.subr.mxu0 0.0
        %578 = vmatpush1.msra.mxu0 0.0
        %579 = vmatprep.subr.mxu0 0.0
        %580 = vmatpush1.msra.mxu0 0.0
        %581 = vmatprep.subr.mxu0 0.0
        %582 = vmatpush1.msra.mxu0 0.0
        %583 = vmatprep.subr.mxu0 0.0
        %584 = vmatpush1.msra.mxu0 0.0
        %585 = vmatprep.subr.mxu0 0.0
        %586 = vmatpush1.msra.mxu0 0.0
        %587 = vmatprep.subr.mxu0 0.0
        %588 = vmatpush1.msra.mxu0 0.0
        %589 = vmatprep.subr.mxu0 0.0
        %590 = vmatpush1.msra.mxu0 0.0
        %591 = vmatprep.subr.mxu0 0.0
        %592 = vmatpush1.msra.mxu0 0.0
        %593 = vmatprep.subr.mxu0 0.0
        %594 = vmatpush1.msra.mxu0 0.0
        %595 = vmatprep.subr.mxu0 0.0
        %596 = vmatpush1.msra.mxu0 0.0
        %597 = vmatprep.subr.mxu0 0.0
        %598 = vmatpush1.msra.mxu0 0.0
        %599 = vmatprep.subr.mxu0 0.0
        %600 = vmatpush1.msra.mxu0 0.0
        %601 = vmatprep.subr.mxu0 0.0
        %602 = vmatpush1.msra.mxu0 0.0
        %603 = vmatprep.subr.mxu0 0.0
        %604 = vmatpush1.msra.mxu0 0.0
        %605 = vmatprep.subr.mxu0 0.0
        %606 = vmatpush1.msra.mxu0 0.0
        %607 = vmatprep.subr.mxu0 0.0
        %608 = vmatpush1.msra.mxu0 0.0
        %609 = vmatprep.subr.mxu0 0.0
        %610 = vmatpush1.msra.mxu0 0.0
        %611 = vmatprep.subr.mxu0 0.0
        %612 = vmatpush1.msra.mxu0 0.0
        %613 = vmatprep.subr.mxu0 0.0
        %614 = vmatpush1.msra.mxu0 0.0
        %615 = vmatprep.subr.mxu0 0.0
        %616 = vmatpush1.msra.mxu0 0.0
        %617 = vmatprep.subr.mxu0 0.0
        %618 = vmatpush1.msra.mxu0 0.0
        %619 = vmatprep.mubr.f32.mxu0 0.0
        %620 = vmatmul.mubr.f32.gmra.mrb[0].mxu0 %v553
        %v621 = vpop.f32.mrb[0].mxu0
        %v622 = vadd.f32 %v549, %v621
        %v623 = vpop.f32.mrb[0].mxu0
        %624 = vdwg.mxu0
        %v625 = vmax.f32 %v622, 0.0
        %v626 = vld [vmem:[#allocation8] sm:$0xff]
        %v627 = vld [vmem:[#allocation8 + $0x8] sm:$0xff]
        %v628 = vld [vmem:[#allocation8 + $0x10] sm:$0xff]
        %v629 = vld [vmem:[#allocation8 + $0x18] sm:$0xff]
        %v630 = vld [vmem:[#allocation8 + $0x20] sm:$0xff]
        %v631 = vld [vmem:[#allocation8 + $0x28] sm:$0xff]
        %v632 = vld [vmem:[#allocation8 + $0x30] sm:$0xff]
        %v633 = vld [vmem:[#allocation8 + $0x38] sm:$0xff]
        %v634 = vld [vmem:[#allocation10] sm:$0x1]
        %v636 = vlaneseq
        %v637 = vshrl.u32 %v636, 7
        %v638 = vsub.s32 0, %v637
        %v639 = vrot.slane %v634, %v638
        %vm641 = vcmask 523264
        %v643 = vsel %vm641, %v625, 0
        %645 = vmatprep.subr.mxu0 0.0
        %646 = vmatpush1.msra.mxu0 %v626
        %647 = vmatprep.subr.mxu0 0.0
        %648 = vmatpush1.msra.mxu0 %v627
        %649 = vmatprep.subr.mxu0 0.0
        %650 = vmatpush1.msra.mxu0 %v628
        %651 = vmatprep.subr.mxu0 0.0
        %652 = vmatpush1.msra.mxu0 %v629
        %653 = vmatprep.subr.mxu0 0.0
        %654 = vmatpush1.msra.mxu0 %v630
        %655 = vmatprep.subr.mxu0 0.0
        %656 = vmatpush1.msra.mxu0 %v631
        %657 = vmatprep.subr.mxu0 0.0
        %658 = vmatpush1.msra.mxu0 %v632
        %659 = vmatprep.subr.mxu0 0.0
        %660 = vmatpush1.msra.mxu0 %v633
        %661 = vmatprep.subr.mxu0 0.0
        %662 = vmatpush1.msra.mxu0 0.0
        %663 = vmatprep.subr.mxu0 0.0
        %664 = vmatpush1.msra.mxu0 0.0
        %665 = vmatprep.subr.mxu0 0.0
        %666 = vmatpush1.msra.mxu0 0.0
        %667 = vmatprep.subr.mxu0 0.0
        %668 = vmatpush1.msra.mxu0 0.0
        %669 = vmatprep.subr.mxu0 0.0
        %670 = vmatpush1.msra.mxu0 0.0
        %671 = vmatprep.subr.mxu0 0.0
        %672 = vmatpush1.msra.mxu0 0.0
        %673 = vmatprep.subr.mxu0 0.0
        %674 = vmatpush1.msra.mxu0 0.0
        %675 = vmatprep.subr.mxu0 0.0
        %676 = vmatpush1.msra.mxu0 0.0
        %677 = vmatprep.subr.mxu0 0.0
        %678 = vmatpush1.msra.mxu0 0.0
        %679 = vmatprep.subr.mxu0 0.0
        %680 = vmatpush1.msra.mxu0 0.0
        %681 = vmatprep.subr.mxu0 0.0
        %682 = vmatpush1.msra.mxu0 0.0
        %683 = vmatprep.subr.mxu0 0.0
        %684 = vmatpush1.msra.mxu0 0.0
        %685 = vmatprep.subr.mxu0 0.0
        %686 = vmatpush1.msra.mxu0 0.0
        %687 = vmatprep.subr.mxu0 0.0
        %688 = vmatpush1.msra.mxu0 0.0
        %689 = vmatprep.subr.mxu0 0.0
        %690 = vmatpush1.msra.mxu0 0.0
        %691 = vmatprep.subr.mxu0 0.0
        %692 = vmatpush1.msra.mxu0 0.0
        %693 = vmatprep.subr.mxu0 0.0
        %694 = vmatpush1.msra.mxu0 0.0
        %695 = vmatprep.subr.mxu0 0.0
        %696 = vmatpush1.msra.mxu0 0.0
        %697 = vmatprep.subr.mxu0 0.0
        %698 = vmatpush1.msra.mxu0 0.0
        %699 = vmatprep.subr.mxu0 0.0
        %700 = vmatpush1.msra.mxu0 0.0
        %701 = vmatprep.subr.mxu0 0.0
        %702 = vmatpush1.msra.mxu0 0.0
        %703 = vmatprep.subr.mxu0 0.0
        %704 = vmatpush1.msra.mxu0 0.0
        %705 = vmatprep.subr.mxu0 0.0
        %706 = vmatpush1.msra.mxu0 0.0
        %707 = vmatprep.subr.mxu0 0.0
        %708 = vmatpush1.msra.mxu0 0.0
        %709 = vmatprep.mubr.f32.mxu0 0.0
        %710 = vmatmul.mubr.f32.gmra.mrb[0].mxu0 %v643
        %v711 = vpop.f32.mrb[0].mxu0
        %v712 = vadd.f32 %v639, %v711
        %v713 = vpop.f32.mrb[0].mxu0
        %714 = vdwg.mxu0
        %v715 = vmax.f32 %v712, 0.0
        %v716 = vld [vmem:[#allocation11] sm:$0xff]
        %v717 = vld [vmem:[#allocation11 + $0x8] sm:$0xff]
        %v718 = vld [vmem:[#allocation11 + $0x10] sm:$0xff]
        %v719 = vld [vmem:[#allocation11 + $0x18] sm:$0xff]
        %v720 = vld [vmem:[#allocation11 + $0x20] sm:$0xff]
        %v721 = vld [vmem:[#allocation11 + $0x28] sm:$0xff]
        %v722 = vld [vmem:[#allocation11 + $0x30] sm:$0xff]
        %v723 = vld [vmem:[#allocation11 + $0x38] sm:$0xff]
        %v724 = vld [vmem:[#allocation11 + $0x40] sm:$0xff]
        %v725 = vld [vmem:[#allocation11 + $0x48] sm:$0xff]
        %v726 = vld [vmem:[#allocation11 + $0x50] sm:$0xff]
        %v727 = vld [vmem:[#allocation11 + $0x58] sm:$0xff]
        %v728 = vld [vmem:[#allocation11 + $0x60] sm:$0xff]
        %v729 = vld [vmem:[#allocation11 + $0x68] sm:$0xff]
        %v730 = vld [vmem:[#allocation11 + $0x70] sm:$0xff]
        %v731 = vld [vmem:[#allocation11 + $0x78] sm:$0xff]
        %v732 = vld [vmem:[#allocation11 + $0x80] sm:$0xff]
        %v733 = vld [vmem:[#allocation11 + $0x88] sm:$0xff]
        %v734 = vld [vmem:[#allocation11 + $0x90] sm:$0xff]
        %v735 = vld [vmem:[#allocation11 + $0x98] sm:$0xff]
        %v736 = vld [vmem:[#allocation11 + $0xa0] sm:$0xff]
        %v737 = vld [vmem:[#allocation11 + $0xa8] sm:$0xff]
        %v738 = vld [vmem:[#allocation11 + $0xb0] sm:$0xff]
        %v739 = vld [vmem:[#allocation11 + $0xb8] sm:$0xff]
        %v740 = vld [vmem:[#allocation11 + $0xc0] sm:$0xff]
        %v741 = vld [vmem:[#allocation11 + $0xc8] sm:$0xff]
        %v742 = vld [vmem:[#allocation11 + $0xd0] sm:$0xff]
        %v743 = vld [vmem:[#allocation11 + $0xd8] sm:$0xff]
        %v744 = vld [vmem:[#allocation11 + $0xe0] sm:$0xff]
        %v745 = vld [vmem:[#allocation11 + $0xe8] sm:$0xff]
        %v746 = vld [vmem:[#allocation11 + $0xf0] sm:$0xff]
        %v747 = vld [vmem:[#allocation11 + $0xf8] sm:$0xff]
        %v748 = vld [vmem:[#allocation11 + $0x100] sm:$0xff]
        %v749 = vld [vmem:[#allocation11 + $0x108] sm:$0xff]
        %v750 = vld [vmem:[#allocation11 + $0x110] sm:$0xff]
        %v751 = vld [vmem:[#allocation11 + $0x118] sm:$0xff]
        %v752 = vld [vmem:[#allocation11 + $0x120] sm:$0xff]
        %v753 = vld [vmem:[#allocation11 + $0x128] sm:$0xff]
        %v754 = vld [vmem:[#allocation11 + $0x130] sm:$0xff]
        %v755 = vld [vmem:[#allocation11 + $0x138] sm:$0xff]
        %v756 = vld [vmem:[#allocation11 + $0x140] sm:$0xff]
        %v757 = vld [vmem:[#allocation11 + $0x148] sm:$0xff]
        %v758 = vld [vmem:[#allocation11 + $0x150] sm:$0xff]
        %v759 = vld [vmem:[#allocation11 + $0x158] sm:$0xff]
        %v760 = vld [vmem:[#allocation11 + $0x160] sm:$0xff]
        %v761 = vld [vmem:[#allocation11 + $0x168] sm:$0xff]
        %v762 = vld [vmem:[#allocation11 + $0x170] sm:$0xff]
        %v763 = vld [vmem:[#allocation11 + $0x178] sm:$0xff]
        %v764 = vld [vmem:[#allocation11 + $0x180] sm:$0xff]
        %v765 = vld [vmem:[#allocation11 + $0x188] sm:$0xff]
        %v766 = vld [vmem:[#allocation11 + $0x190] sm:$0xff]
        %v767 = vld [vmem:[#allocation11 + $0x198] sm:$0xff]
        %v768 = vld [vmem:[#allocation11 + $0x1a0] sm:$0xff]
        %v769 = vld [vmem:[#allocation11 + $0x1a8] sm:$0xff]
        %v770 = vld [vmem:[#allocation11 + $0x1b0] sm:$0xff]
        %v771 = vld [vmem:[#allocation11 + $0x1b8] sm:$0xff]
        %v772 = vld [vmem:[#allocation11 + $0x1c0] sm:$0xff]
        %v773 = vld [vmem:[#allocation11 + $0x1c8] sm:$0xff]
        %v774 = vld [vmem:[#allocation11 + $0x1d0] sm:$0xff]
        %v775 = vld [vmem:[#allocation11 + $0x1d8] sm:$0xff]
        %v776 = vld [vmem:[#allocation11 + $0x1e0] sm:$0xff]
        %v777 = vld [vmem:[#allocation11 + $0x1e8] sm:$0xff]
        %v778 = vld [vmem:[#allocation11 + $0x1f0] sm:$0xff]
        %v779 = vld [vmem:[#allocation11 + $0x1f8] sm:$0xff]
        %v780 = vld [vmem:[#allocation13] sm:$0xf]
        %v782 = vlaneseq
        %v783 = vshrl.u32 %v782, 7
        %v784 = vsub.s32 0, %v783
        %v785 = vrot.slane %v780, %v784
        %v786 = vlaneseq
        %v787 = vshrl.u32 %v786, 7
        %v788 = vsub.s32 1, %v787
        %v789 = vrot.slane %v780, %v788
        %v790 = vlaneseq
        %v791 = vshrl.u32 %v790, 7
        %v792 = vsub.s32 2, %v791
        %v793 = vrot.slane %v780, %v792
        %v794 = vlaneseq
        %v795 = vshrl.u32 %v794, 7
        %v796 = vsub.s32 3, %v795
        %v797 = vrot.slane %v780, %v796
        %802 = vmatprep.subr.mxu0 %v717
        %803 = vmatpush1.msra.mxu0 %v716
        %804 = vmatprep.subr.mxu0 %v721
        %805 = vmatpush1.msra.mxu0 %v720
        %806 = vmatprep.subr.mxu0 %v725
        %807 = vmatpush1.msra.mxu0 %v724
        %808 = vmatprep.subr.mxu0 %v729
        %809 = vmatpush1.msra.mxu0 %v728
        %810 = vmatprep.subr.mxu0 %v733
        %811 = vmatpush1.msra.mxu0 %v732
        %812 = vmatprep.subr.mxu0 %v737
        %813 = vmatpush1.msra.mxu0 %v736
        %814 = vmatprep.subr.mxu0 %v741
        %815 = vmatpush1.msra.mxu0 %v740
        %816 = vmatprep.subr.mxu0 %v745
        %817 = vmatpush1.msra.mxu0 %v744
        %818 = vmatprep.subr.mxu0 %v749
        %819 = vmatpush1.msra.mxu0 %v748
        %820 = vmatprep.subr.mxu0 %v753
        %821 = vmatpush1.msra.mxu0 %v752
        %822 = vmatprep.subr.mxu0 %v757
        %823 = vmatpush1.msra.mxu0 %v756
        %824 = vmatprep.subr.mxu0 %v761
        %825 = vmatpush1.msra.mxu0 %v760
        %826 = vmatprep.subr.mxu0 %v765
        %827 = vmatpush1.msra.mxu0 %v764
        %828 = vmatprep.subr.mxu0 %v769
        %829 = vmatpush1.msra.mxu0 %v768
        %830 = vmatprep.subr.mxu0 %v773
        %831 = vmatpush1.msra.mxu0 %v772
        %832 = vmatprep.subr.mxu0 %v777
        %833 = vmatpush1.msra.mxu0 %v776
        %834 = vmatprep.subr.mxu0 0.0
        %835 = vmatpush1.msra.mxu0 0.0
        %836 = vmatprep.subr.mxu0 0.0
        %837 = vmatpush1.msra.mxu0 0.0
        %838 = vmatprep.subr.mxu0 0.0
        %839 = vmatpush1.msra.mxu0 0.0
        %840 = vmatprep.subr.mxu0 0.0
        %841 = vmatpush1.msra.mxu0 0.0
        %842 = vmatprep.subr.mxu0 0.0
        %843 = vmatpush1.msra.mxu0 0.0
        %844 = vmatprep.subr.mxu0 0.0
        %845 = vmatpush1.msra.mxu0 0.0
        %846 = vmatprep.subr.mxu0 0.0
        %847 = vmatpush1.msra.mxu0 0.0
        %848 = vmatprep.subr.mxu0 0.0
        %849 = vmatpush1.msra.mxu0 0.0
        %850 = vmatprep.subr.mxu0 0.0
        %851 = vmatpush1.msra.mxu0 0.0
        %852 = vmatprep.subr.mxu0 0.0
        %853 = vmatpush1.msra.mxu0 0.0
        %854 = vmatprep.subr.mxu0 0.0
        %855 = vmatpush1.msra.mxu0 0.0
        %856 = vmatprep.subr.mxu0 0.0
        %857 = vmatpush1.msra.mxu0 0.0
        %858 = vmatprep.subr.mxu0 0.0
        %859 = vmatpush1.msra.mxu0 0.0
        %860 = vmatprep.subr.mxu0 0.0
        %861 = vmatpush1.msra.mxu0 0.0
        %862 = vmatprep.subr.mxu0 0.0
        %863 = vmatpush1.msra.mxu0 0.0
        %864 = vmatprep.subr.mxu0 0.0
        %865 = vmatpush1.msra.mxu0 0.0
        %866 = vmatprep.mubr.f32.mxu0 0.0
        %867 = vmatmul.mubr.f32.gmra.mrb[0].mxu0 %v715
        %v868 = vpop.f32.mrb[0].mxu0
        %v869 = vadd.f32 %v785, %v868
        %v870 = vpop.f32.mrb[0].mxu0
        %v871 = vadd.f32 %v789, %v870
        %872 = vdwg.mxu0
        %873 = vmatprep.subr.mxu0 %v719
        %874 = vmatpush1.msra.mxu0 %v718
        %875 = vmatprep.subr.mxu0 %v723
        %876 = vmatpush1.msra.mxu0 %v722
        %877 = vmatprep.subr.mxu0 %v727
        %878 = vmatpush1.msra.mxu0 %v726
        %879 = vmatprep.subr.mxu0 %v731
        %880 = vmatpush1.msra.mxu0 %v730
        %881 = vmatprep.subr.mxu0 %v735
        %882 = vmatpush1.msra.mxu0 %v734
        %883 = vmatprep.subr.mxu0 %v739
        %884 = vmatpush1.msra.mxu0 %v738
        %885 = vmatprep.subr.mxu0 %v743
        %886 = vmatpush1.msra.mxu0 %v742
        %887 = vmatprep.subr.mxu0 %v747
        %888 = vmatpush1.msra.mxu0 %v746
        %889 = vmatprep.subr.mxu0 %v751
        %890 = vmatpush1.msra.mxu0 %v750
        %891 = vmatprep.subr.mxu0 %v755
        %892 = vmatpush1.msra.mxu0 %v754
        %893 = vmatprep.subr.mxu0 %v759
        %894 = vmatpush1.msra.mxu0 %v758
        %895 = vmatprep.subr.mxu0 %v763
        %896 = vmatpush1.msra.mxu0 %v762
        %897 = vmatprep.subr.mxu0 %v767
        %898 = vmatpush1.msra.mxu0 %v766
        %899 = vmatprep.subr.mxu0 %v771
        %900 = vmatpush1.msra.mxu0 %v770
        %901 = vmatprep.subr.mxu0 %v775
        %902 = vmatpush1.msra.mxu0 %v774
        %903 = vmatprep.subr.mxu0 %v779
        %904 = vmatpush1.msra.mxu0 %v778
        %905 = vmatprep.subr.mxu0 0.0
        %906 = vmatpush1.msra.mxu0 0.0
        %907 = vmatprep.subr.mxu0 0.0
        %908 = vmatpush1.msra.mxu0 0.0
        %909 = vmatprep.subr.mxu0 0.0
        %910 = vmatpush1.msra.mxu0 0.0
        %911 = vmatprep.subr.mxu0 0.0
        %912 = vmatpush1.msra.mxu0 0.0
        %913 = vmatprep.subr.mxu0 0.0
        %914 = vmatpush1.msra.mxu0 0.0
        %915 = vmatprep.subr.mxu0 0.0
        %916 = vmatpush1.msra.mxu0 0.0
        %917 = vmatprep.subr.mxu0 0.0
        %918 = vmatpush1.msra.mxu0 0.0
        %919 = vmatprep.subr.mxu0 0.0
        %920 = vmatpush1.msra.mxu0 0.0
        %921 = vmatprep.subr.mxu0 0.0
        %922 = vmatpush1.msra.mxu0 0.0
        %923 = vmatprep.subr.mxu0 0.0
        %924 = vmatpush1.msra.mxu0 0.0
        %925 = vmatprep.subr.mxu0 0.0
        %926 = vmatpush1.msra.mxu0 0.0
        %927 = vmatprep.subr.mxu0 0.0
        %928 = vmatpush1.msra.mxu0 0.0
        %929 = vmatprep.subr.mxu0 0.0
        %930 = vmatpush1.msra.mxu0 0.0
        %931 = vmatprep.subr.mxu0 0.0
        %932 = vmatpush1.msra.mxu0 0.0
        %933 = vmatprep.subr.mxu0 0.0
        %934 = vmatpush1.msra.mxu0 0.0
        %935 = vmatprep.subr.mxu0 0.0
        %936 = vmatpush1.msra.mxu0 0.0
        %937 = vmatprep.mubr.f32.mxu0 0.0
        %938 = vmatmul.mubr.f32.gmra.mrb[0].mxu0 %v715
        %v939 = vpop.f32.mrb[0].mxu0
        %v940 = vadd.f32 %v793, %v939
        %v941 = vpop.f32.mrb[0].mxu0
        %v942 = vadd.f32 %v797, %v941
        %943 = vdwg.mxu0
        %v944 = vmax.f32 %v869, 0.0
        %v945 = vmax.f32 %v871, 0.0
        %v946 = vmax.f32 %v940, 0.0
        %v947 = vmax.f32 %v942, 0.0
        %v948 = vld [vmem:[#allocation14] sm:$0xff]
        %v949 = vld [vmem:[#allocation14 + $0x8] sm:$0xff]
        %v950 = vld [vmem:[#allocation14 + $0x10] sm:$0xff]
        %v951 = vld [vmem:[#allocation14 + $0x18] sm:$0xff]
        %v952 = vld [vmem:[#allocation14 + $0x20] sm:$0xff]
        %v953 = vld [vmem:[#allocation14 + $0x28] sm:$0xff]
        %v954 = vld [vmem:[#allocation14 + $0x30] sm:$0xff]
        %v955 = vld [vmem:[#allocation14 + $0x38] sm:$0xff]
        %v956 = vld [vmem:[#allocation14 + $0x40] sm:$0xff]
        %v957 = vld [vmem:[#allocation14 + $0x48] sm:$0xff]
        %v958 = vld [vmem:[#allocation14 + $0x50] sm:$0xff]
        %v959 = vld [vmem:[#allocation14 + $0x58] sm:$0xff]
        %v960 = vld [vmem:[#allocation14 + $0x60] sm:$0xff]
        %v961 = vld [vmem:[#allocation14 + $0x68] sm:$0xff]
        %v962 = vld [vmem:[#allocation14 + $0x70] sm:$0xff]
        %v963 = vld [vmem:[#allocation14 + $0x78] sm:$0xff]
        %v964 = vld [vmem:[#allocation14 + $0x80] sm:$0xff]
        %v965 = vld [vmem:[#allocation14 + $0x88] sm:$0xff]
        %v966 = vld [vmem:[#allocation14 + $0x90] sm:$0xff]
        %v967 = vld [vmem:[#allocation14 + $0x98] sm:$0xff]
        %v968 = vld [vmem:[#allocation14 + $0xa0] sm:$0xff]
        %v969 = vld [vmem:[#allocation14 + $0xa8] sm:$0xff]
        %v970 = vld [vmem:[#allocation14 + $0xb0] sm:$0xff]
        %v971 = vld [vmem:[#allocation14 + $0xb8] sm:$0xff]
        %v972 = vld [vmem:[#allocation14 + $0xc0] sm:$0xff]
        %v973 = vld [vmem:[#allocation14 + $0xc8] sm:$0xff]
        %v974 = vld [vmem:[#allocation14 + $0xd0] sm:$0xff]
        %v975 = vld [vmem:[#allocation14 + $0xd8] sm:$0xff]
        %v976 = vld [vmem:[#allocation14 + $0xe0] sm:$0xff]
        %v977 = vld [vmem:[#allocation14 + $0xe8] sm:$0xff]
        %v978 = vld [vmem:[#allocation14 + $0xf0] sm:$0xff]
        %v979 = vld [vmem:[#allocation14 + $0xf8] sm:$0xff]
        %v980 = vld [vmem:[#allocation14 + $0x100] sm:$0xff]
        %v981 = vld [vmem:[#allocation14 + $0x108] sm:$0xff]
        %v982 = vld [vmem:[#allocation14 + $0x110] sm:$0xff]
        %v983 = vld [vmem:[#allocation14 + $0x118] sm:$0xff]
        %v984 = vld [vmem:[#allocation14 + $0x120] sm:$0xff]
        %v985 = vld [vmem:[#allocation14 + $0x128] sm:$0xff]
        %v986 = vld [vmem:[#allocation14 + $0x130] sm:$0xff]
        %v987 = vld [vmem:[#allocation14 + $0x138] sm:$0xff]
        %v988 = vld [vmem:[#allocation14 + $0x140] sm:$0xff]
        %v989 = vld [vmem:[#allocation14 + $0x148] sm:$0xff]
        %v990 = vld [vmem:[#allocation14 + $0x150] sm:$0xff]
        %v991 = vld [vmem:[#allocation14 + $0x158] sm:$0xff]
        %v992 = vld [vmem:[#allocation14 + $0x160] sm:$0xff]
        %v993 = vld [vmem:[#allocation14 + $0x168] sm:$0xff]
        %v994 = vld [vmem:[#allocation14 + $0x170] sm:$0xff]
        %v995 = vld [vmem:[#allocation14 + $0x178] sm:$0xff]
        %v996 = vld [vmem:[#allocation14 + $0x180] sm:$0xff]
        %v997 = vld [vmem:[#allocation14 + $0x188] sm:$0xff]
        %v998 = vld [vmem:[#allocation14 + $0x190] sm:$0xff]
        %v999 = vld [vmem:[#allocation14 + $0x198] sm:$0xff]
        %v1000 = vld [vmem:[#allocation14 + $0x1a0] sm:$0xff]
        %v1001 = vld [vmem:[#allocation14 + $0x1a8] sm:$0xff]
        %v1002 = vld [vmem:[#allocation14 + $0x1b0] sm:$0xff]
        %v1003 = vld [vmem:[#allocation14 + $0x1b8] sm:$0xff]
        %v1004 = vld [vmem:[#allocation14 + $0x1c0] sm:$0xff]
        %v1005 = vld [vmem:[#allocation14 + $0x1c8] sm:$0xff]
        %v1006 = vld [vmem:[#allocation14 + $0x1d0] sm:$0xff]
        %v1007 = vld [vmem:[#allocation14 + $0x1d8] sm:$0xff]
        %v1008 = vld [vmem:[#allocation14 + $0x1e0] sm:$0xff]
        %v1009 = vld [vmem:[#allocation14 + $0x1e8] sm:$0xff]
        %v1010 = vld [vmem:[#allocation14 + $0x1f0] sm:$0xff]
        %v1011 = vld [vmem:[#allocation14 + $0x1f8] sm:$0xff]
        %v1012 = vld [vmem:[#allocation14 + $0x200] sm:$0xff]
        %v1013 = vld [vmem:[#allocation14 + $0x208] sm:$0xff]
        %v1014 = vld [vmem:[#allocation14 + $0x210] sm:$0xff]
        %v1015 = vld [vmem:[#allocation14 + $0x218] sm:$0xff]
        %v1016 = vld [vmem:[#allocation14 + $0x220] sm:$0xff]
        %v1017 = vld [vmem:[#allocation14 + $0x228] sm:$0xff]
        %v1018 = vld [vmem:[#allocation14 + $0x230] sm:$0xff]
        %v1019 = vld [vmem:[#allocation14 + $0x238] sm:$0xff]
        %v1020 = vld [vmem:[#allocation14 + $0x240] sm:$0xff]
        %v1021 = vld [vmem:[#allocation14 + $0x248] sm:$0xff]
        %v1022 = vld [vmem:[#allocation14 + $0x250] sm:$0xff]
        %v1023 = vld [vmem:[#allocation14 + $0x258] sm:$0xff]
        %v1024 = vld [vmem:[#allocation14 + $0x260] sm:$0xff]
        %v1025 = vld [vmem:[#allocation14 + $0x268] sm:$0xff]
        %v1026 = vld [vmem:[#allocation14 + $0x270] sm:$0xff]
        %v1027 = vld [vmem:[#allocation14 + $0x278] sm:$0xff]
        %v1028 = vld [vmem:[#allocation14 + $0x280] sm:$0xff]
        %v1029 = vld [vmem:[#allocation14 + $0x288] sm:$0xff]
        %v1030 = vld [vmem:[#allocation14 + $0x290] sm:$0xff]
        %v1031 = vld [vmem:[#allocation14 + $0x298] sm:$0xff]
        %v1032 = vld [vmem:[#allocation14 + $0x2a0] sm:$0xff]
        %v1033 = vld [vmem:[#allocation14 + $0x2a8] sm:$0xff]
        %v1034 = vld [vmem:[#allocation14 + $0x2b0] sm:$0xff]
        %v1035 = vld [vmem:[#allocation14 + $0x2b8] sm:$0xff]
        %v1036 = vld [vmem:[#allocation14 + $0x2c0] sm:$0xff]
        %v1037 = vld [vmem:[#allocation14 + $0x2c8] sm:$0xff]
        %v1038 = vld [vmem:[#allocation14 + $0x2d0] sm:$0xff]
        %v1039 = vld [vmem:[#allocation14 + $0x2d8] sm:$0xff]
        %v1040 = vld [vmem:[#allocation14 + $0x2e0] sm:$0xff]
        %v1041 = vld [vmem:[#allocation14 + $0x2e8] sm:$0xff]
        %v1042 = vld [vmem:[#allocation14 + $0x2f0] sm:$0xff]
        %v1043 = vld [vmem:[#allocation14 + $0x2f8] sm:$0xff]
        %v1044 = vld [vmem:[#allocation14 + $0x300] sm:$0xff]
        %v1045 = vld [vmem:[#allocation14 + $0x308] sm:$0xff]
        %v1046 = vld [vmem:[#allocation14 + $0x310] sm:$0xff]
        %v1047 = vld [vmem:[#allocation14 + $0x318] sm:$0xff]
        %v1048 = vld [vmem:[#allocation14 + $0x320] sm:$0xff]
        %v1049 = vld [vmem:[#allocation14 + $0x328] sm:$0xff]
        %v1050 = vld [vmem:[#allocation14 + $0x330] sm:$0xff]
        %v1051 = vld [vmem:[#allocation14 + $0x338] sm:$0xff]
        %v1052 = vld [vmem:[#allocation14 + $0x340] sm:$0xff]
        %v1053 = vld [vmem:[#allocation14 + $0x348] sm:$0xff]
        %v1054 = vld [vmem:[#allocation14 + $0x350] sm:$0xff]
        %v1055 = vld [vmem:[#allocation14 + $0x358] sm:$0xff]
        %v1056 = vld [vmem:[#allocation14 + $0x360] sm:$0xff]
        %v1057 = vld [vmem:[#allocation14 + $0x368] sm:$0xff]
        %v1058 = vld [vmem:[#allocation14 + $0x370] sm:$0xff]
        %v1059 = vld [vmem:[#allocation14 + $0x378] sm:$0xff]
        %v1060 = vld [vmem:[#allocation14 + $0x380] sm:$0xff]
        %v1061 = vld [vmem:[#allocation14 + $0x388] sm:$0xff]
        %v1062 = vld [vmem:[#allocation14 + $0x390] sm:$0xff]
        %v1063 = vld [vmem:[#allocation14 + $0x398] sm:$0xff]
        %v1064 = vld [vmem:[#allocation14 + $0x3a0] sm:$0xff]
        %v1065 = vld [vmem:[#allocation14 + $0x3a8] sm:$0xff]
        %v1066 = vld [vmem:[#allocation14 + $0x3b0] sm:$0xff]
        %v1067 = vld [vmem:[#allocation14 + $0x3b8] sm:$0xff]
        %v1068 = vld [vmem:[#allocation14 + $0x3c0] sm:$0xff]
        %v1069 = vld [vmem:[#allocation14 + $0x3c8] sm:$0xff]
        %v1070 = vld [vmem:[#allocation14 + $0x3d0] sm:$0xff]
        %v1071 = vld [vmem:[#allocation14 + $0x3d8] sm:$0xff]
        %v1072 = vld [vmem:[#allocation14 + $0x3e0] sm:$0xff]
        %v1073 = vld [vmem:[#allocation14 + $0x3e8] sm:$0xff]
        %v1074 = vld [vmem:[#allocation14 + $0x3f0] sm:$0xff]
        %v1075 = vld [vmem:[#allocation14 + $0x3f8] sm:$0xff]
        %v1076 = vld [vmem:[#allocation14 + $0x400] sm:$0xff]
        %v1077 = vld [vmem:[#allocation14 + $0x408] sm:$0xff]
        %v1078 = vld [vmem:[#allocation14 + $0x410] sm:$0xff]
        %v1079 = vld [vmem:[#allocation14 + $0x418] sm:$0xff]
        %v1080 = vld [vmem:[#allocation14 + $0x420] sm:$0xff]
        %v1081 = vld [vmem:[#allocation14 + $0x428] sm:$0xff]
        %v1082 = vld [vmem:[#allocation14 + $0x430] sm:$0xff]
        %v1083 = vld [vmem:[#allocation14 + $0x438] sm:$0xff]
        %v1084 = vld [vmem:[#allocation14 + $0x440] sm:$0xff]
        %v1085 = vld [vmem:[#allocation14 + $0x448] sm:$0xff]
        %v1086 = vld [vmem:[#allocation14 + $0x450] sm:$0xff]
        %v1087 = vld [vmem:[#allocation14 + $0x458] sm:$0xff]
        %v1088 = vld [vmem:[#allocation14 + $0x460] sm:$0xff]
        %v1089 = vld [vmem:[#allocation14 + $0x468] sm:$0xff]
        %v1090 = vld [vmem:[#allocation14 + $0x470] sm:$0xff]
        %v1091 = vld [vmem:[#allocation14 + $0x478] sm:$0xff]
        %v1092 = vld [vmem:[#allocation14 + $0x480] sm:$0xff]
        %v1093 = vld [vmem:[#allocation14 + $0x488] sm:$0xff]
        %v1094 = vld [vmem:[#allocation14 + $0x490] sm:$0xff]
        %v1095 = vld [vmem:[#allocation14 + $0x498] sm:$0xff]
        %v1096 = vld [vmem:[#allocation14 + $0x4a0] sm:$0xff]
        %v1097 = vld [vmem:[#allocation14 + $0x4a8] sm:$0xff]
        %v1098 = vld [vmem:[#allocation14 + $0x4b0] sm:$0xff]
        %v1099 = vld [vmem:[#allocation14 + $0x4b8] sm:$0xff]
        %v1100 = vld [vmem:[#allocation14 + $0x4c0] sm:$0xff]
        %v1101 = vld [vmem:[#allocation14 + $0x4c8] sm:$0xff]
        %v1102 = vld [vmem:[#allocation14 + $0x4d0] sm:$0xff]
        %v1103 = vld [vmem:[#allocation14 + $0x4d8] sm:$0xff]
        %v1104 = vld [vmem:[#allocation14 + $0x4e0] sm:$0xff]
        %v1105 = vld [vmem:[#allocation14 + $0x4e8] sm:$0xff]
        %v1106 = vld [vmem:[#allocation14 + $0x4f0] sm:$0xff]
        %v1107 = vld [vmem:[#allocation14 + $0x4f8] sm:$0xff]
        %v1108 = vld [vmem:[#allocation14 + $0x500] sm:$0xff]
        %v1109 = vld [vmem:[#allocation14 + $0x508] sm:$0xff]
        %v1110 = vld [vmem:[#allocation14 + $0x510] sm:$0xff]
        %v1111 = vld [vmem:[#allocation14 + $0x518] sm:$0xff]
        %v1112 = vld [vmem:[#allocation14 + $0x520] sm:$0xff]
        %v1113 = vld [vmem:[#allocation14 + $0x528] sm:$0xff]
        %v1114 = vld [vmem:[#allocation14 + $0x530] sm:$0xff]
        %v1115 = vld [vmem:[#allocation14 + $0x538] sm:$0xff]
        %v1116 = vld [vmem:[#allocation14 + $0x540] sm:$0xff]
        %v1117 = vld [vmem:[#allocation14 + $0x548] sm:$0xff]
        %v1118 = vld [vmem:[#allocation14 + $0x550] sm:$0xff]
        %v1119 = vld [vmem:[#allocation14 + $0x558] sm:$0xff]
        %v1120 = vld [vmem:[#allocation14 + $0x560] sm:$0xff]
        %v1121 = vld [vmem:[#allocation14 + $0x568] sm:$0xff]
        %v1122 = vld [vmem:[#allocation14 + $0x570] sm:$0xff]
        %v1123 = vld [vmem:[#allocation14 + $0x578] sm:$0xff]
        %v1124 = vld [vmem:[#allocation14 + $0x580] sm:$0xff]
        %v1125 = vld [vmem:[#allocation14 + $0x588] sm:$0xff]
        %v1126 = vld [vmem:[#allocation14 + $0x590] sm:$0xff]
        %v1127 = vld [vmem:[#allocation14 + $0x598] sm:$0xff]
        %v1128 = vld [vmem:[#allocation14 + $0x5a0] sm:$0xff]
        %v1129 = vld [vmem:[#allocation14 + $0x5a8] sm:$0xff]
        %v1130 = vld [vmem:[#allocation14 + $0x5b0] sm:$0xff]
        %v1131 = vld [vmem:[#allocation14 + $0x5b8] sm:$0xff]
        %v1132 = vld [vmem:[#allocation14 + $0x5c0] sm:$0xff]
        %v1133 = vld [vmem:[#allocation14 + $0x5c8] sm:$0xff]
        %v1134 = vld [vmem:[#allocation14 + $0x5d0] sm:$0xff]
        %v1135 = vld [vmem:[#allocation14 + $0x5d8] sm:$0xff]
        %v1136 = vld [vmem:[#allocation14 + $0x5e0] sm:$0xff]
        %v1137 = vld [vmem:[#allocation14 + $0x5e8] sm:$0xff]
        %v1138 = vld [vmem:[#allocation14 + $0x5f0] sm:$0xff]
        %v1139 = vld [vmem:[#allocation14 + $0x5f8] sm:$0xff]
        %v1140 = vld [vmem:[#allocation14 + $0x600] sm:$0xff]
        %v1141 = vld [vmem:[#allocation14 + $0x608] sm:$0xff]
        %v1142 = vld [vmem:[#allocation14 + $0x610] sm:$0xff]
        %v1143 = vld [vmem:[#allocation14 + $0x618] sm:$0xff]
        %v1144 = vld [vmem:[#allocation14 + $0x620] sm:$0xff]
        %v1145 = vld [vmem:[#allocation14 + $0x628] sm:$0xff]
        %v1146 = vld [vmem:[#allocation14 + $0x630] sm:$0xff]
        %v1147 = vld [vmem:[#allocation14 + $0x638] sm:$0xff]
        %v1148 = vld [vmem:[#allocation14 + $0x640] sm:$0xff]
        %v1149 = vld [vmem:[#allocation14 + $0x648] sm:$0xff]
        %v1150 = vld [vmem:[#allocation14 + $0x650] sm:$0xff]
        %v1151 = vld [vmem:[#allocation14 + $0x658] sm:$0xff]
        %v1152 = vld [vmem:[#allocation14 + $0x660] sm:$0xff]
        %v1153 = vld [vmem:[#allocation14 + $0x668] sm:$0xff]
        %v1154 = vld [vmem:[#allocation14 + $0x670] sm:$0xff]
        %v1155 = vld [vmem:[#allocation14 + $0x678] sm:$0xff]
        %v1156 = vld [vmem:[#allocation14 + $0x680] sm:$0xff]
        %v1157 = vld [vmem:[#allocation14 + $0x688] sm:$0xff]
        %v1158 = vld [vmem:[#allocation14 + $0x690] sm:$0xff]
        %v1159 = vld [vmem:[#allocation14 + $0x698] sm:$0xff]
        %v1160 = vld [vmem:[#allocation14 + $0x6a0] sm:$0xff]
        %v1161 = vld [vmem:[#allocation14 + $0x6a8] sm:$0xff]
        %v1162 = vld [vmem:[#allocation14 + $0x6b0] sm:$0xff]
        %v1163 = vld [vmem:[#allocation14 + $0x6b8] sm:$0xff]
        %v1164 = vld [vmem:[#allocation14 + $0x6c0] sm:$0xff]
        %v1165 = vld [vmem:[#allocation14 + $0x6c8] sm:$0xff]
        %v1166 = vld [vmem:[#allocation14 + $0x6d0] sm:$0xff]
        %v1167 = vld [vmem:[#allocation14 + $0x6d8] sm:$0xff]
        %v1168 = vld [vmem:[#allocation14 + $0x6e0] sm:$0xff]
        %v1169 = vld [vmem:[#allocation14 + $0x6e8] sm:$0xff]
        %v1170 = vld [vmem:[#allocation14 + $0x6f0] sm:$0xff]
        %v1171 = vld [vmem:[#allocation14 + $0x6f8] sm:$0xff]
        %v1172 = vld [vmem:[#allocation14 + $0x700] sm:$0xff]
        %v1173 = vld [vmem:[#allocation14 + $0x708] sm:$0xff]
        %v1174 = vld [vmem:[#allocation14 + $0x710] sm:$0xff]
        %v1175 = vld [vmem:[#allocation14 + $0x718] sm:$0xff]
        %v1176 = vld [vmem:[#allocation14 + $0x720] sm:$0xff]
        %v1177 = vld [vmem:[#allocation14 + $0x728] sm:$0xff]
        %v1178 = vld [vmem:[#allocation14 + $0x730] sm:$0xff]
        %v1179 = vld [vmem:[#allocation14 + $0x738] sm:$0xff]
        %v1180 = vld [vmem:[#allocation14 + $0x740] sm:$0xff]
        %v1181 = vld [vmem:[#allocation14 + $0x748] sm:$0xff]
        %v1182 = vld [vmem:[#allocation14 + $0x750] sm:$0xff]
        %v1183 = vld [vmem:[#allocation14 + $0x758] sm:$0xff]
        %v1184 = vld [vmem:[#allocation14 + $0x760] sm:$0xff]
        %v1185 = vld [vmem:[#allocation14 + $0x768] sm:$0xff]
        %v1186 = vld [vmem:[#allocation14 + $0x770] sm:$0xff]
        %v1187 = vld [vmem:[#allocation14 + $0x778] sm:$0xff]
        %v1188 = vld [vmem:[#allocation14 + $0x780] sm:$0xff]
        %v1189 = vld [vmem:[#allocation14 + $0x788] sm:$0xff]
        %v1190 = vld [vmem:[#allocation14 + $0x790] sm:$0xff]
        %v1191 = vld [vmem:[#allocation14 + $0x798] sm:$0xff]
        %v1192 = vld [vmem:[#allocation14 + $0x7a0] sm:$0xff]
        %v1193 = vld [vmem:[#allocation14 + $0x7a8] sm:$0xff]
        %v1194 = vld [vmem:[#allocation14 + $0x7b0] sm:$0xff]
        %v1195 = vld [vmem:[#allocation14 + $0x7b8] sm:$0xff]
        %v1196 = vld [vmem:[#allocation14 + $0x7c0] sm:$0xff]
        %v1197 = vld [vmem:[#allocation14 + $0x7c8] sm:$0xff]
        %v1198 = vld [vmem:[#allocation14 + $0x7d0] sm:$0xff]
        %v1199 = vld [vmem:[#allocation14 + $0x7d8] sm:$0xff]
        %v1200 = vld [vmem:[#allocation14 + $0x7e0] sm:$0xff]
        %v1201 = vld [vmem:[#allocation14 + $0x7e8] sm:$0xff]
        %v1202 = vld [vmem:[#allocation14 + $0x7f0] sm:$0xff]
        %v1203 = vld [vmem:[#allocation14 + $0x7f8] sm:$0xff]
        %v1204 = vld [vmem:[#allocation14 + $0x800] sm:$0xff]
        %v1205 = vld [vmem:[#allocation14 + $0x808] sm:$0xff]
        %v1206 = vld [vmem:[#allocation14 + $0x810] sm:$0xff]
        %v1207 = vld [vmem:[#allocation14 + $0x818] sm:$0xff]
        %v1208 = vld [vmem:[#allocation14 + $0x820] sm:$0xff]
        %v1209 = vld [vmem:[#allocation14 + $0x828] sm:$0xff]
        %v1210 = vld [vmem:[#allocation14 + $0x830] sm:$0xff]
        %v1211 = vld [vmem:[#allocation14 + $0x838] sm:$0xff]
        %v1212 = vld [vmem:[#allocation14 + $0x840] sm:$0xff]
        %v1213 = vld [vmem:[#allocation14 + $0x848] sm:$0xff]
        %v1214 = vld [vmem:[#allocation14 + $0x850] sm:$0xff]
        %v1215 = vld [vmem:[#allocation14 + $0x858] sm:$0xff]
        %v1216 = vld [vmem:[#allocation14 + $0x860] sm:$0xff]
        %v1217 = vld [vmem:[#allocation14 + $0x868] sm:$0xff]
        %v1218 = vld [vmem:[#allocation14 + $0x870] sm:$0xff]
        %v1219 = vld [vmem:[#allocation14 + $0x878] sm:$0xff]
        %v1220 = vld [vmem:[#allocation14 + $0x880] sm:$0xff]
        %v1221 = vld [vmem:[#allocation14 + $0x888] sm:$0xff]
        %v1222 = vld [vmem:[#allocation14 + $0x890] sm:$0xff]
        %v1223 = vld [vmem:[#allocation14 + $0x898] sm:$0xff]
        %v1224 = vld [vmem:[#allocation14 + $0x8a0] sm:$0xff]
        %v1225 = vld [vmem:[#allocation14 + $0x8a8] sm:$0xff]
        %v1226 = vld [vmem:[#allocation14 + $0x8b0] sm:$0xff]
        %v1227 = vld [vmem:[#allocation14 + $0x8b8] sm:$0xff]
        %v1228 = vld [vmem:[#allocation14 + $0x8c0] sm:$0xff]
        %v1229 = vld [vmem:[#allocation14 + $0x8c8] sm:$0xff]
        %v1230 = vld [vmem:[#allocation14 + $0x8d0] sm:$0xff]
        %v1231 = vld [vmem:[#allocation14 + $0x8d8] sm:$0xff]
        %v1232 = vld [vmem:[#allocation14 + $0x8e0] sm:$0xff]
        %v1233 = vld [vmem:[#allocation14 + $0x8e8] sm:$0xff]
        %v1234 = vld [vmem:[#allocation14 + $0x8f0] sm:$0xff]
        %v1235 = vld [vmem:[#allocation14 + $0x8f8] sm:$0xff]
        %v1236 = vld [vmem:[#allocation14 + $0x900] sm:$0xff]
        %v1237 = vld [vmem:[#allocation14 + $0x908] sm:$0xff]
        %v1238 = vld [vmem:[#allocation14 + $0x910] sm:$0xff]
        %v1239 = vld [vmem:[#allocation14 + $0x918] sm:$0xff]
        %v1240 = vld [vmem:[#allocation14 + $0x920] sm:$0xff]
        %v1241 = vld [vmem:[#allocation14 + $0x928] sm:$0xff]
        %v1242 = vld [vmem:[#allocation14 + $0x930] sm:$0xff]
        %v1243 = vld [vmem:[#allocation14 + $0x938] sm:$0xff]
        %v1244 = vld [vmem:[#allocation14 + $0x940] sm:$0xff]
        %v1245 = vld [vmem:[#allocation14 + $0x948] sm:$0xff]
        %v1246 = vld [vmem:[#allocation14 + $0x950] sm:$0xff]
        %v1247 = vld [vmem:[#allocation14 + $0x958] sm:$0xff]
        %v1248 = vld [vmem:[#allocation14 + $0x960] sm:$0xff]
        %v1249 = vld [vmem:[#allocation14 + $0x968] sm:$0xff]
        %v1250 = vld [vmem:[#allocation14 + $0x970] sm:$0xff]
        %v1251 = vld [vmem:[#allocation14 + $0x978] sm:$0xff]
        %v1252 = vld [vmem:[#allocation14 + $0x980] sm:$0xff]
        %v1253 = vld [vmem:[#allocation14 + $0x988] sm:$0xff]
        %v1254 = vld [vmem:[#allocation14 + $0x990] sm:$0xff]
        %v1255 = vld [vmem:[#allocation14 + $0x998] sm:$0xff]
        %v1256 = vld [vmem:[#allocation14 + $0x9a0] sm:$0xff]
        %v1257 = vld [vmem:[#allocation14 + $0x9a8] sm:$0xff]
        %v1258 = vld [vmem:[#allocation14 + $0x9b0] sm:$0xff]
        %v1259 = vld [vmem:[#allocation14 + $0x9b8] sm:$0xff]
        %v1260 = vld [vmem:[#allocation14 + $0x9c0] sm:$0xff]
        %v1261 = vld [vmem:[#allocation14 + $0x9c8] sm:$0xff]
        %v1262 = vld [vmem:[#allocation14 + $0x9d0] sm:$0xff]
        %v1263 = vld [vmem:[#allocation14 + $0x9d8] sm:$0xff]
        %v1264 = vld [vmem:[#allocation14 + $0x9e0] sm:$0xff]
        %v1265 = vld [vmem:[#allocation14 + $0x9e8] sm:$0xff]
        %v1266 = vld [vmem:[#allocation14 + $0x9f0] sm:$0xff]
        %v1267 = vld [vmem:[#allocation14 + $0x9f8] sm:$0xff]
        %v1268 = vld [vmem:[#allocation14 + $0xa00] sm:$0xff]
        %v1269 = vld [vmem:[#allocation14 + $0xa08] sm:$0xff]
        %v1270 = vld [vmem:[#allocation14 + $0xa10] sm:$0xff]
        %v1271 = vld [vmem:[#allocation14 + $0xa18] sm:$0xff]
        %v1272 = vld [vmem:[#allocation14 + $0xa20] sm:$0xff]
        %v1273 = vld [vmem:[#allocation14 + $0xa28] sm:$0xff]
        %v1274 = vld [vmem:[#allocation14 + $0xa30] sm:$0xff]
        %v1275 = vld [vmem:[#allocation14 + $0xa38] sm:$0xff]
        %v1276 = vld [vmem:[#allocation14 + $0xa40] sm:$0xff]
        %v1277 = vld [vmem:[#allocation14 + $0xa48] sm:$0xff]
        %v1278 = vld [vmem:[#allocation14 + $0xa50] sm:$0xff]
        %v1279 = vld [vmem:[#allocation14 + $0xa58] sm:$0xff]
        %v1280 = vld [vmem:[#allocation14 + $0xa60] sm:$0xff]
        %v1281 = vld [vmem:[#allocation14 + $0xa68] sm:$0xff]
        %v1282 = vld [vmem:[#allocation14 + $0xa70] sm:$0xff]
        %v1283 = vld [vmem:[#allocation14 + $0xa78] sm:$0xff]
        %v1284 = vld [vmem:[#allocation14 + $0xa80] sm:$0xff]
        %v1285 = vld [vmem:[#allocation14 + $0xa88] sm:$0xff]
        %v1286 = vld [vmem:[#allocation14 + $0xa90] sm:$0xff]
        %v1287 = vld [vmem:[#allocation14 + $0xa98] sm:$0xff]
        %v1288 = vld [vmem:[#allocation14 + $0xaa0] sm:$0xff]
        %v1289 = vld [vmem:[#allocation14 + $0xaa8] sm:$0xff]
        %v1290 = vld [vmem:[#allocation14 + $0xab0] sm:$0xff]
        %v1291 = vld [vmem:[#allocation14 + $0xab8] sm:$0xff]
        %v1292 = vld [vmem:[#allocation14 + $0xac0] sm:$0xff]
        %v1293 = vld [vmem:[#allocation14 + $0xac8] sm:$0xff]
        %v1294 = vld [vmem:[#allocation14 + $0xad0] sm:$0xff]
        %v1295 = vld [vmem:[#allocation14 + $0xad8] sm:$0xff]
        %v1296 = vld [vmem:[#allocation14 + $0xae0] sm:$0xff]
        %v1297 = vld [vmem:[#allocation14 + $0xae8] sm:$0xff]
        %v1298 = vld [vmem:[#allocation14 + $0xaf0] sm:$0xff]
        %v1299 = vld [vmem:[#allocation14 + $0xaf8] sm:$0xff]
        %v1300 = vld [vmem:[#allocation14 + $0xb00] sm:$0xff]
        %v1301 = vld [vmem:[#allocation14 + $0xb08] sm:$0xff]
        %v1302 = vld [vmem:[#allocation14 + $0xb10] sm:$0xff]
        %v1303 = vld [vmem:[#allocation14 + $0xb18] sm:$0xff]
        %v1304 = vld [vmem:[#allocation14 + $0xb20] sm:$0xff]
        %v1305 = vld [vmem:[#allocation14 + $0xb28] sm:$0xff]
        %v1306 = vld [vmem:[#allocation14 + $0xb30] sm:$0xff]
        %v1307 = vld [vmem:[#allocation14 + $0xb38] sm:$0xff]
        %v1308 = vld [vmem:[#allocation14 + $0xb40] sm:$0xff]
        %v1309 = vld [vmem:[#allocation14 + $0xb48] sm:$0xff]
        %v1310 = vld [vmem:[#allocation14 + $0xb50] sm:$0xff]
        %v1311 = vld [vmem:[#allocation14 + $0xb58] sm:$0xff]
        %v1312 = vld [vmem:[#allocation14 + $0xb60] sm:$0xff]
        %v1313 = vld [vmem:[#allocation14 + $0xb68] sm:$0xff]
        %v1314 = vld [vmem:[#allocation14 + $0xb70] sm:$0xff]
        %v1315 = vld [vmem:[#allocation14 + $0xb78] sm:$0xff]
        %v1316 = vld [vmem:[#allocation14 + $0xb80] sm:$0xff]
        %v1317 = vld [vmem:[#allocation14 + $0xb88] sm:$0xff]
        %v1318 = vld [vmem:[#allocation14 + $0xb90] sm:$0xff]
        %v1319 = vld [vmem:[#allocation14 + $0xb98] sm:$0xff]
        %v1320 = vld [vmem:[#allocation14 + $0xba0] sm:$0xff]
        %v1321 = vld [vmem:[#allocation14 + $0xba8] sm:$0xff]
        %v1322 = vld [vmem:[#allocation14 + $0xbb0] sm:$0xff]
        %v1323 = vld [vmem:[#allocation14 + $0xbb8] sm:$0xff]
        %v1324 = vld [vmem:[#allocation14 + $0xbc0] sm:$0xff]
        %v1325 = vld [vmem:[#allocation14 + $0xbc8] sm:$0xff]
        %v1326 = vld [vmem:[#allocation14 + $0xbd0] sm:$0xff]
        %v1327 = vld [vmem:[#allocation14 + $0xbd8] sm:$0xff]
        %v1328 = vld [vmem:[#allocation14 + $0xbe0] sm:$0xff]
        %v1329 = vld [vmem:[#allocation14 + $0xbe8] sm:$0xff]
        %v1330 = vld [vmem:[#allocation14 + $0xbf0] sm:$0xff]
        %v1331 = vld [vmem:[#allocation14 + $0xbf8] sm:$0xff]
        %v1332 = vld [vmem:[#allocation14 + $0xc00] sm:$0xff]
        %v1333 = vld [vmem:[#allocation14 + $0xc08] sm:$0xff]
        %v1334 = vld [vmem:[#allocation14 + $0xc10] sm:$0xff]
        %v1335 = vld [vmem:[#allocation14 + $0xc18] sm:$0xff]
        %v1336 = vld [vmem:[#allocation14 + $0xc20] sm:$0xff]
        %v1337 = vld [vmem:[#allocation14 + $0xc28] sm:$0xff]
        %v1338 = vld [vmem:[#allocation14 + $0xc30] sm:$0xff]
        %v1339 = vld [vmem:[#allocation14 + $0xc38] sm:$0xff]
        %v1340 = vld [vmem:[#allocation14 + $0xc40] sm:$0xff]
        %v1341 = vld [vmem:[#allocation14 + $0xc48] sm:$0xff]
        %v1342 = vld [vmem:[#allocation14 + $0xc50] sm:$0xff]
        %v1343 = vld [vmem:[#allocation14 + $0xc58] sm:$0xff]
        %v1344 = vld [vmem:[#allocation14 + $0xc60] sm:$0xff]
        %v1345 = vld [vmem:[#allocation14 + $0xc68] sm:$0xff]
        %v1346 = vld [vmem:[#allocation14 + $0xc70] sm:$0xff]
        %v1347 = vld [vmem:[#allocation14 + $0xc78] sm:$0xff]
        %v1348 = vld [vmem:[#allocation14 + $0xc80] sm:$0xff]
        %v1349 = vld [vmem:[#allocation14 + $0xc88] sm:$0xff]
        %v1350 = vld [vmem:[#allocation14 + $0xc90] sm:$0xff]
        %v1351 = vld [vmem:[#allocation14 + $0xc98] sm:$0xff]
        %v1352 = vld [vmem:[#allocation14 + $0xca0] sm:$0xff]
        %v1353 = vld [vmem:[#allocation14 + $0xca8] sm:$0xff]
        %v1354 = vld [vmem:[#allocation14 + $0xcb0] sm:$0xff]
        %v1355 = vld [vmem:[#allocation14 + $0xcb8] sm:$0xff]
        %v1356 = vld [vmem:[#allocation14 + $0xcc0] sm:$0xff]
        %v1357 = vld [vmem:[#allocation14 + $0xcc8] sm:$0xff]
        %v1358 = vld [vmem:[#allocation14 + $0xcd0] sm:$0xff]
        %v1359 = vld [vmem:[#allocation14 + $0xcd8] sm:$0xff]
        %v1360 = vld [vmem:[#allocation14 + $0xce0] sm:$0xff]
        %v1361 = vld [vmem:[#allocation14 + $0xce8] sm:$0xff]
        %v1362 = vld [vmem:[#allocation14 + $0xcf0] sm:$0xff]
        %v1363 = vld [vmem:[#allocation14 + $0xcf8] sm:$0xff]
        %v1364 = vld [vmem:[#allocation14 + $0xd00] sm:$0xff]
        %v1365 = vld [vmem:[#allocation14 + $0xd08] sm:$0xff]
        %v1366 = vld [vmem:[#allocation14 + $0xd10] sm:$0xff]
        %v1367 = vld [vmem:[#allocation14 + $0xd18] sm:$0xff]
        %v1368 = vld [vmem:[#allocation14 + $0xd20] sm:$0xff]
        %v1369 = vld [vmem:[#allocation14 + $0xd28] sm:$0xff]
        %v1370 = vld [vmem:[#allocation14 + $0xd30] sm:$0xff]
        %v1371 = vld [vmem:[#allocation14 + $0xd38] sm:$0xff]
        %v1372 = vld [vmem:[#allocation14 + $0xd40] sm:$0xff]
        %v1373 = vld [vmem:[#allocation14 + $0xd48] sm:$0xff]
        %v1374 = vld [vmem:[#allocation14 + $0xd50] sm:$0xff]
        %v1375 = vld [vmem:[#allocation14 + $0xd58] sm:$0xff]
        %v1376 = vld [vmem:[#allocation14 + $0xd60] sm:$0xff]
        %v1377 = vld [vmem:[#allocation14 + $0xd68] sm:$0xff]
        %v1378 = vld [vmem:[#allocation14 + $0xd70] sm:$0xff]
        %v1379 = vld [vmem:[#allocation14 + $0xd78] sm:$0xff]
        %v1380 = vld [vmem:[#allocation14 + $0xd80] sm:$0xff]
        %v1381 = vld [vmem:[#allocation14 + $0xd88] sm:$0xff]
        %v1382 = vld [vmem:[#allocation14 + $0xd90] sm:$0xff]
        %v1383 = vld [vmem:[#allocation14 + $0xd98] sm:$0xff]
        %v1384 = vld [vmem:[#allocation14 + $0xda0] sm:$0xff]
        %v1385 = vld [vmem:[#allocation14 + $0xda8] sm:$0xff]
        %v1386 = vld [vmem:[#allocation14 + $0xdb0] sm:$0xff]
        %v1387 = vld [vmem:[#allocation14 + $0xdb8] sm:$0xff]
        %v1388 = vld [vmem:[#allocation14 + $0xdc0] sm:$0xff]
        %v1389 = vld [vmem:[#allocation14 + $0xdc8] sm:$0xff]
        %v1390 = vld [vmem:[#allocation14 + $0xdd0] sm:$0xff]
        %v1391 = vld [vmem:[#allocation14 + $0xdd8] sm:$0xff]
        %v1392 = vld [vmem:[#allocation14 + $0xde0] sm:$0xff]
        %v1393 = vld [vmem:[#allocation14 + $0xde8] sm:$0xff]
        %v1394 = vld [vmem:[#allocation14 + $0xdf0] sm:$0xff]
        %v1395 = vld [vmem:[#allocation14 + $0xdf8] sm:$0xff]
        %v1396 = vld [vmem:[#allocation14 + $0xe00] sm:$0xff]
        %v1397 = vld [vmem:[#allocation14 + $0xe08] sm:$0xff]
        %v1398 = vld [vmem:[#allocation14 + $0xe10] sm:$0xff]
        %v1399 = vld [vmem:[#allocation14 + $0xe18] sm:$0xff]
        %v1400 = vld [vmem:[#allocation14 + $0xe20] sm:$0xff]
        %v1401 = vld [vmem:[#allocation14 + $0xe28] sm:$0xff]
        %v1402 = vld [vmem:[#allocation14 + $0xe30] sm:$0xff]
        %v1403 = vld [vmem:[#allocation14 + $0xe38] sm:$0xff]
        %v1404 = vld [vmem:[#allocation14 + $0xe40] sm:$0xff]
        %v1405 = vld [vmem:[#allocation14 + $0xe48] sm:$0xff]
        %v1406 = vld [vmem:[#allocation14 + $0xe50] sm:$0xff]
        %v1407 = vld [vmem:[#allocation14 + $0xe58] sm:$0xff]
        %v1408 = vld [vmem:[#allocation14 + $0xe60] sm:$0xff]
        %v1409 = vld [vmem:[#allocation14 + $0xe68] sm:$0xff]
        %v1410 = vld [vmem:[#allocation14 + $0xe70] sm:$0xff]
        %v1411 = vld [vmem:[#allocation14 + $0xe78] sm:$0xff]
        %v1412 = vld [vmem:[#allocation14 + $0xe80] sm:$0xff]
        %v1413 = vld [vmem:[#allocation14 + $0xe88] sm:$0xff]
        %v1414 = vld [vmem:[#allocation14 + $0xe90] sm:$0xff]
        %v1415 = vld [vmem:[#allocation14 + $0xe98] sm:$0xff]
        %v1416 = vld [vmem:[#allocation14 + $0xea0] sm:$0xff]
        %v1417 = vld [vmem:[#allocation14 + $0xea8] sm:$0xff]
        %v1418 = vld [vmem:[#allocation14 + $0xeb0] sm:$0xff]
        %v1419 = vld [vmem:[#allocation14 + $0xeb8] sm:$0xff]
        %v1420 = vld [vmem:[#allocation14 + $0xec0] sm:$0xff]
        %v1421 = vld [vmem:[#allocation14 + $0xec8] sm:$0xff]
        %v1422 = vld [vmem:[#allocation14 + $0xed0] sm:$0xff]
        %v1423 = vld [vmem:[#allocation14 + $0xed8] sm:$0xff]
        %v1424 = vld [vmem:[#allocation14 + $0xee0] sm:$0xff]
        %v1425 = vld [vmem:[#allocation14 + $0xee8] sm:$0xff]
        %v1426 = vld [vmem:[#allocation14 + $0xef0] sm:$0xff]
        %v1427 = vld [vmem:[#allocation14 + $0xef8] sm:$0xff]
        %v1428 = vld [vmem:[#allocation14 + $0xf00] sm:$0xff]
        %v1429 = vld [vmem:[#allocation14 + $0xf08] sm:$0xff]
        %v1430 = vld [vmem:[#allocation14 + $0xf10] sm:$0xff]
        %v1431 = vld [vmem:[#allocation14 + $0xf18] sm:$0xff]
        %v1432 = vld [vmem:[#allocation14 + $0xf20] sm:$0xff]
        %v1433 = vld [vmem:[#allocation14 + $0xf28] sm:$0xff]
        %v1434 = vld [vmem:[#allocation14 + $0xf30] sm:$0xff]
        %v1435 = vld [vmem:[#allocation14 + $0xf38] sm:$0xff]
        %v1436 = vld [vmem:[#allocation14 + $0xf40] sm:$0xff]
        %v1437 = vld [vmem:[#allocation14 + $0xf48] sm:$0xff]
        %v1438 = vld [vmem:[#allocation14 + $0xf50] sm:$0xff]
        %v1439 = vld [vmem:[#allocation14 + $0xf58] sm:$0xff]
        %v1440 = vld [vmem:[#allocation14 + $0xf60] sm:$0xff]
        %v1441 = vld [vmem:[#allocation14 + $0xf68] sm:$0xff]
        %v1442 = vld [vmem:[#allocation14 + $0xf70] sm:$0xff]
        %v1443 = vld [vmem:[#allocation14 + $0xf78] sm:$0xff]
        %v1444 = vld [vmem:[#allocation14 + $0xf80] sm:$0xff]
        %v1445 = vld [vmem:[#allocation14 + $0xf88] sm:$0xff]
        %v1446 = vld [vmem:[#allocation14 + $0xf90] sm:$0xff]
        %v1447 = vld [vmem:[#allocation14 + $0xf98] sm:$0xff]
        %v1448 = vld [vmem:[#allocation14 + $0xfa0] sm:$0xff]
        %v1449 = vld [vmem:[#allocation14 + $0xfa8] sm:$0xff]
        %v1450 = vld [vmem:[#allocation14 + $0xfb0] sm:$0xff]
        %v1451 = vld [vmem:[#allocation14 + $0xfb8] sm:$0xff]
        %v1452 = vld [vmem:[#allocation14 + $0xfc0] sm:$0xff]
        %v1453 = vld [vmem:[#allocation14 + $0xfc8] sm:$0xff]
        %v1454 = vld [vmem:[#allocation14 + $0xfd0] sm:$0xff]
        %v1455 = vld [vmem:[#allocation14 + $0xfd8] sm:$0xff]
        %v1456 = vld [vmem:[#allocation14 + $0xfe0] sm:$0xff]
        %v1457 = vld [vmem:[#allocation14 + $0xfe8] sm:$0xff]
        %v1458 = vld [vmem:[#allocation14 + $0xff0] sm:$0xff]
        %v1459 = vld [vmem:[#allocation14 + $0xff8] sm:$0xff]
        %v1460 = vld [vmem:[#allocation16] sm:$0xff]
        %v1462 = vlaneseq
        %v1463 = vshrl.u32 %v1462, 7
        %v1464 = vsub.s32 0, %v1463
        %v1465 = vrot.slane %v1460, %v1464
        %v1466 = vlaneseq
        %v1467 = vshrl.u32 %v1466, 7
        %v1468 = vsub.s32 1, %v1467
        %v1469 = vrot.slane %v1460, %v1468
        %v1470 = vlaneseq
        %v1471 = vshrl.u32 %v1470, 7
        %v1472 = vsub.s32 2, %v1471
        %v1473 = vrot.slane %v1460, %v1472
        %v1474 = vlaneseq
        %v1475 = vshrl.u32 %v1474, 7
        %v1476 = vsub.s32 3, %v1475
        %v1477 = vrot.slane %v1460, %v1476
        %v1478 = vlaneseq
        %v1479 = vshrl.u32 %v1478, 7
        %v1480 = vsub.s32 4, %v1479
        %v1481 = vrot.slane %v1460, %v1480
        %v1482 = vlaneseq
        %v1483 = vshrl.u32 %v1482, 7
        %v1484 = vsub.s32 5, %v1483
        %v1485 = vrot.slane %v1460, %v1484
        %v1486 = vlaneseq
        %v1487 = vshrl.u32 %v1486, 7
        %v1488 = vsub.s32 6, %v1487
        %v1489 = vrot.slane %v1460, %v1488
        %v1490 = vlaneseq
        %v1491 = vshrl.u32 %v1490, 7
        %v1492 = vsub.s32 7, %v1491
        %v1493 = vrot.slane %v1460, %v1492
        %1502 = vmatprep.subr.mxu0 %v949
        %1503 = vmatpush1.msra.mxu0 %v948
        %1504 = vmatprep.subr.mxu0 %v957
        %1505 = vmatpush1.msra.mxu0 %v956
        %1506 = vmatprep.subr.mxu0 %v965
        %1507 = vmatpush1.msra.mxu0 %v964
        %1508 = vmatprep.subr.mxu0 %v973
        %1509 = vmatpush1.msra.mxu0 %v972
        %1510 = vmatprep.subr.mxu0 %v981
        %1511 = vmatpush1.msra.mxu0 %v980
        %1512 = vmatprep.subr.mxu0 %v989
        %1513 = vmatpush1.msra.mxu0 %v988
        %1514 = vmatprep.subr.mxu0 %v997
        %1515 = vmatpush1.msra.mxu0 %v996
        %1516 = vmatprep.subr.mxu0 %v1005
        %1517 = vmatpush1.msra.mxu0 %v1004
        %1518 = vmatprep.subr.mxu0 %v1013
        %1519 = vmatpush1.msra.mxu0 %v1012
        %1520 = vmatprep.subr.mxu0 %v1021
        %1521 = vmatpush1.msra.mxu0 %v1020
        %1522 = vmatprep.subr.mxu0 %v1029
        %1523 = vmatpush1.msra.mxu0 %v1028
        %1524 = vmatprep.subr.mxu0 %v1037
        %1525 = vmatpush1.msra.mxu0 %v1036
        %1526 = vmatprep.subr.mxu0 %v1045
        %1527 = vmatpush1.msra.mxu0 %v1044
        %1528 = vmatprep.subr.mxu0 %v1053
        %1529 = vmatpush1.msra.mxu0 %v1052
        %1530 = vmatprep.subr.mxu0 %v1061
        %1531 = vmatpush1.msra.mxu0 %v1060
        %1532 = vmatprep.subr.mxu0 %v1069
        %1533 = vmatpush1.msra.mxu0 %v1068
        %1534 = vmatprep.subr.mxu0 %v1077
        %1535 = vmatpush1.msra.mxu0 %v1076
        %1536 = vmatprep.subr.mxu0 %v1085
        %1537 = vmatpush1.msra.mxu0 %v1084
        %1538 = vmatprep.subr.mxu0 %v1093
        %1539 = vmatpush1.msra.mxu0 %v1092
        %1540 = vmatprep.subr.mxu0 %v1101
        %1541 = vmatpush1.msra.mxu0 %v1100
        %1542 = vmatprep.subr.mxu0 %v1109
        %1543 = vmatpush1.msra.mxu0 %v1108
        %1544 = vmatprep.subr.mxu0 %v1117
        %1545 = vmatpush1.msra.mxu0 %v1116
        %1546 = vmatprep.subr.mxu0 %v1125
        %1547 = vmatpush1.msra.mxu0 %v1124
        %1548 = vmatprep.subr.mxu0 %v1133
        %1549 = vmatpush1.msra.mxu0 %v1132
        %1550 = vmatprep.subr.mxu0 %v1141
        %1551 = vmatpush1.msra.mxu0 %v1140
        %1552 = vmatprep.subr.mxu0 %v1149
        %1553 = vmatpush1.msra.mxu0 %v1148
        %1554 = vmatprep.subr.mxu0 %v1157
        %1555 = vmatpush1.msra.mxu0 %v1156
        %1556 = vmatprep.subr.mxu0 %v1165
        %1557 = vmatpush1.msra.mxu0 %v1164
        %1558 = vmatprep.subr.mxu0 %v1173
        %1559 = vmatpush1.msra.mxu0 %v1172
        %1560 = vmatprep.subr.mxu0 %v1181
        %1561 = vmatpush1.msra.mxu0 %v1180
        %1562 = vmatprep.subr.mxu0 %v1189
        %1563 = vmatpush1.msra.mxu0 %v1188
        %1564 = vmatprep.subr.mxu0 %v1197
        %1565 = vmatpush1.msra.mxu0 %v1196
        %1566 = vmatprep.mubr.f32.mxu0 %v945
        %1567 = vmatmul.mubr.f32.gmra.mrb[0].mxu0 %v944
        %v1568 = vpop.f32.mrb[0].mxu0
        %v1569 = vadd.f32 %v1465, %v1568
        %v1570 = vpop.f32.mrb[0].mxu0
        %v1571 = vadd.f32 %v1469, %v1570
        %1572 = vdwg.mxu0
        %1573 = vmatprep.subr.mxu0 %v1205
        %1574 = vmatpush1.msra.mxu0 %v1204
        %1575 = vmatprep.subr.mxu0 %v1213
        %1576 = vmatpush1.msra.mxu0 %v1212
        %1577 = vmatprep.subr.mxu0 %v1221
        %1578 = vmatpush1.msra.mxu0 %v1220
        %1579 = vmatprep.subr.mxu0 %v1229
        %1580 = vmatpush1.msra.mxu0 %v1228
        %1581 = vmatprep.subr.mxu0 %v1237
        %1582 = vmatpush1.msra.mxu0 %v1236
        %1583 = vmatprep.subr.mxu0 %v1245
        %1584 = vmatpush1.msra.mxu0 %v1244
        %1585 = vmatprep.subr.mxu0 %v1253
        %1586 = vmatpush1.msra.mxu0 %v1252
        %1587 = vmatprep.subr.mxu0 %v1261
        %1588 = vmatpush1.msra.mxu0 %v1260
        %1589 = vmatprep.subr.mxu0 %v1269
        %1590 = vmatpush1.msra.mxu0 %v1268
        %1591 = vmatprep.subr.mxu0 %v1277
        %1592 = vmatpush1.msra.mxu0 %v1276
        %1593 = vmatprep.subr.mxu0 %v1285
        %1594 = vmatpush1.msra.mxu0 %v1284
        %1595 = vmatprep.subr.mxu0 %v1293
        %1596 = vmatpush1.msra.mxu0 %v1292
        %1597 = vmatprep.subr.mxu0 %v1301
        %1598 = vmatpush1.msra.mxu0 %v1300
        %1599 = vmatprep.subr.mxu0 %v1309
        %1600 = vmatpush1.msra.mxu0 %v1308
        %1601 = vmatprep.subr.mxu0 %v1317
        %1602 = vmatpush1.msra.mxu0 %v1316
        %1603 = vmatprep.subr.mxu0 %v1325
        %1604 = vmatpush1.msra.mxu0 %v1324
        %1605 = vmatprep.subr.mxu0 %v1333
        %1606 = vmatpush1.msra.mxu0 %v1332
        %1607 = vmatprep.subr.mxu0 %v1341
        %1608 = vmatpush1.msra.mxu0 %v1340
        %1609 = vmatprep.subr.mxu0 %v1349
        %1610 = vmatpush1.msra.mxu0 %v1348
        %1611 = vmatprep.subr.mxu0 %v1357
        %1612 = vmatpush1.msra.mxu0 %v1356
        %1613 = vmatprep.subr.mxu0 %v1365
        %1614 = vmatpush1.msra.mxu0 %v1364
        %1615 = vmatprep.subr.mxu0 %v1373
        %1616 = vmatpush1.msra.mxu0 %v1372
        %1617 = vmatprep.subr.mxu0 %v1381
        %1618 = vmatpush1.msra.mxu0 %v1380
        %1619 = vmatprep.subr.mxu0 %v1389
        %1620 = vmatpush1.msra.mxu0 %v1388
        %1621 = vmatprep.subr.mxu0 %v1397
        %1622 = vmatpush1.msra.mxu0 %v1396
        %1623 = vmatprep.subr.mxu0 %v1405
        %1624 = vmatpush1.msra.mxu0 %v1404
        %1625 = vmatprep.subr.mxu0 %v1413
        %1626 = vmatpush1.msra.mxu0 %v1412
        %1627 = vmatprep.subr.mxu0 %v1421
        %1628 = vmatpush1.msra.mxu0 %v1420
        %1629 = vmatprep.subr.mxu0 %v1429
        %1630 = vmatpush1.msra.mxu0 %v1428
        %1631 = vmatprep.subr.mxu0 %v1437
        %1632 = vmatpush1.msra.mxu0 %v1436
        %1633 = vmatprep.subr.mxu0 %v1445
        %1634 = vmatpush1.msra.mxu0 %v1444
        %1635 = vmatprep.subr.mxu0 %v1453
        %1636 = vmatpush1.msra.mxu0 %v1452
        %1637 = vmatprep.mubr.f32.mxu0 %v947
        %1638 = vmatmul.mubr.f32.gmra.mrb[0].mxu0 %v946
        %v1639 = vpop.f32.mrb[0].mxu0
        %v1640 = vadd.f32 %v1569, %v1639
        %v1641 = vpop.f32.mrb[0].mxu0
        %v1642 = vadd.f32 %v1571, %v1641
        %1643 = vdwg.mxu0
        %1644 = vmatprep.subr.mxu0 %v951
        %1645 = vmatpush1.msra.mxu0 %v950
        %1646 = vmatprep.subr.mxu0 %v959
        %1647 = vmatpush1.msra.mxu0 %v958
        %1648 = vmatprep.subr.mxu0 %v967
        %1649 = vmatpush1.msra.mxu0 %v966
        %1650 = vmatprep.subr.mxu0 %v975
        %1651 = vmatpush1.msra.mxu0 %v974
        %1652 = vmatprep.subr.mxu0 %v983
        %1653 = vmatpush1.msra.mxu0 %v982
        %1654 = vmatprep.subr.mxu0 %v991
        %1655 = vmatpush1.msra.mxu0 %v990
        %1656 = vmatprep.subr.mxu0 %v999
        %1657 = vmatpush1.msra.mxu0 %v998
        %1658 = vmatprep.subr.mxu0 %v1007
        %1659 = vmatpush1.msra.mxu0 %v1006
        %1660 = vmatprep.subr.mxu0 %v1015
        %1661 = vmatpush1.msra.mxu0 %v1014
        %1662 = vmatprep.subr.mxu0 %v1023
        %1663 = vmatpush1.msra.mxu0 %v1022
        %1664 = vmatprep.subr.mxu0 %v1031
        %1665 = vmatpush1.msra.mxu0 %v1030
        %1666 = vmatprep.subr.mxu0 %v1039
        %1667 = vmatpush1.msra.mxu0 %v1038
        %1668 = vmatprep.subr.mxu0 %v1047
        %1669 = vmatpush1.msra.mxu0 %v1046
        %1670 = vmatprep.subr.mxu0 %v1055
        %1671 = vmatpush1.msra.mxu0 %v1054
        %1672 = vmatprep.subr.mxu0 %v1063
        %1673 = vmatpush1.msra.mxu0 %v1062
        %1674 = vmatprep.subr.mxu0 %v1071
        %1675 = vmatpush1.msra.mxu0 %v1070
        %1676 = vmatprep.subr.mxu0 %v1079
        %1677 = vmatpush1.msra.mxu0 %v1078
        %1678 = vmatprep.subr.mxu0 %v1087
        %1679 = vmatpush1.msra.mxu0 %v1086
        %1680 = vmatprep.subr.mxu0 %v1095
        %1681 = vmatpush1.msra.mxu0 %v1094
        %1682 = vmatprep.subr.mxu0 %v1103
        %1683 = vmatpush1.msra.mxu0 %v1102
        %1684 = vmatprep.subr.mxu0 %v1111
        %1685 = vmatpush1.msra.mxu0 %v1110
        %1686 = vmatprep.subr.mxu0 %v1119
        %1687 = vmatpush1.msra.mxu0 %v1118
        %1688 = vmatprep.subr.mxu0 %v1127
        %1689 = vmatpush1.msra.mxu0 %v1126
        %1690 = vmatprep.subr.mxu0 %v1135
        %1691 = vmatpush1.msra.mxu0 %v1134
        %1692 = vmatprep.subr.mxu0 %v1143
        %1693 = vmatpush1.msra.mxu0 %v1142
        %1694 = vmatprep.subr.mxu0 %v1151
        %1695 = vmatpush1.msra.mxu0 %v1150
        %1696 = vmatprep.subr.mxu0 %v1159
        %1697 = vmatpush1.msra.mxu0 %v1158
        %1698 = vmatprep.subr.mxu0 %v1167
        %1699 = vmatpush1.msra.mxu0 %v1166
        %1700 = vmatprep.subr.mxu0 %v1175
        %1701 = vmatpush1.msra.mxu0 %v1174
        %1702 = vmatprep.subr.mxu0 %v1183
        %1703 = vmatpush1.msra.mxu0 %v1182
        %1704 = vmatprep.subr.mxu0 %v1191
        %1705 = vmatpush1.msra.mxu0 %v1190
        %1706 = vmatprep.subr.mxu0 %v1199
        %1707 = vmatpush1.msra.mxu0 %v1198
        %1708 = vmatprep.mubr.f32.mxu0 %v945
        %1709 = vmatmul.mubr.f32.gmra.mrb[0].mxu0 %v944
        %v1710 = vpop.f32.mrb[0].mxu0
        %v1711 = vadd.f32 %v1473, %v1710
        %v1712 = vpop.f32.mrb[0].mxu0
        %v1713 = vadd.f32 %v1477, %v1712
        %1714 = vdwg.mxu0
        %1715 = vmatprep.subr.mxu0 %v1207
        %1716 = vmatpush1.msra.mxu0 %v1206
        %1717 = vmatprep.subr.mxu0 %v1215
        %1718 = vmatpush1.msra.mxu0 %v1214
        %1719 = vmatprep.subr.mxu0 %v1223
        %1720 = vmatpush1.msra.mxu0 %v1222
        %1721 = vmatprep.subr.mxu0 %v1231
        %1722 = vmatpush1.msra.mxu0 %v1230
        %1723 = vmatprep.subr.mxu0 %v1239
        %1724 = vmatpush1.msra.mxu0 %v1238
        %1725 = vmatprep.subr.mxu0 %v1247
        %1726 = vmatpush1.msra.mxu0 %v1246
        %1727 = vmatprep.subr.mxu0 %v1255
        %1728 = vmatpush1.msra.mxu0 %v1254
        %1729 = vmatprep.subr.mxu0 %v1263
        %1730 = vmatpush1.msra.mxu0 %v1262
        %1731 = vmatprep.subr.mxu0 %v1271
        %1732 = vmatpush1.msra.mxu0 %v1270
        %1733 = vmatprep.subr.mxu0 %v1279
        %1734 = vmatpush1.msra.mxu0 %v1278
        %1735 = vmatprep.subr.mxu0 %v1287
        %1736 = vmatpush1.msra.mxu0 %v1286
        %1737 = vmatprep.subr.mxu0 %v1295
        %1738 = vmatpush1.msra.mxu0 %v1294
        %1739 = vmatprep.subr.mxu0 %v1303
        %1740 = vmatpush1.msra.mxu0 %v1302
        %1741 = vmatprep.subr.mxu0 %v1311
        %1742 = vmatpush1.msra.mxu0 %v1310
        %1743 = vmatprep.subr.mxu0 %v1319
        %1744 = vmatpush1.msra.mxu0 %v1318
        %1745 = vmatprep.subr.mxu0 %v1327
        %1746 = vmatpush1.msra.mxu0 %v1326
        %1747 = vmatprep.subr.mxu0 %v1335
        %1748 = vmatpush1.msra.mxu0 %v1334
        %1749 = vmatprep.subr.mxu0 %v1343
        %1750 = vmatpush1.msra.mxu0 %v1342
        %1751 = vmatprep.subr.mxu0 %v1351
        %1752 = vmatpush1.msra.mxu0 %v1350
        %1753 = vmatprep.subr.mxu0 %v1359
        %1754 = vmatpush1.msra.mxu0 %v1358
        %1755 = vmatprep.subr.mxu0 %v1367
        %1756 = vmatpush1.msra.mxu0 %v1366
        %1757 = vmatprep.subr.mxu0 %v1375
        %1758 = vmatpush1.msra.mxu0 %v1374
        %1759 = vmatprep.subr.mxu0 %v1383
        %1760 = vmatpush1.msra.mxu0 %v1382
        %1761 = vmatprep.subr.mxu0 %v1391
        %1762 = vmatpush1.msra.mxu0 %v1390
        %1763 = vmatprep.subr.mxu0 %v1399
        %1764 = vmatpush1.msra.mxu0 %v1398
        %1765 = vmatprep.subr.mxu0 %v1407
        %1766 = vmatpush1.msra.mxu0 %v1406
        %1767 = vmatprep.subr.mxu0 %v1415
        %1768 = vmatpush1.msra.mxu0 %v1414
        %1769 = vmatprep.subr.mxu0 %v1423
        %1770 = vmatpush1.msra.mxu0 %v1422
        %1771 = vmatprep.subr.mxu0 %v1431
        %1772 = vmatpush1.msra.mxu0 %v1430
        %1773 = vmatprep.subr.mxu0 %v1439
        %1774 = vmatpush1.msra.mxu0 %v1438
        %1775 = vmatprep.subr.mxu0 %v1447
        %1776 = vmatpush1.msra.mxu0 %v1446
        %1777 = vmatprep.subr.mxu0 %v1455
        %1778 = vmatpush1.msra.mxu0 %v1454
        %1779 = vmatprep.mubr.f32.mxu0 %v947
        %1780 = vmatmul.mubr.f32.gmra.mrb[0].mxu0 %v946
        %v1781 = vpop.f32.mrb[0].mxu0
        %v1782 = vadd.f32 %v1711, %v1781
        %v1783 = vpop.f32.mrb[0].mxu0
        %v1784 = vadd.f32 %v1713, %v1783
        %1785 = vdwg.mxu0
        %1786 = vmatprep.subr.mxu0 %v953
        %1787 = vmatpush1.msra.mxu0 %v952
        %1788 = vmatprep.subr.mxu0 %v961
        %1789 = vmatpush1.msra.mxu0 %v960
        %1790 = vmatprep.subr.mxu0 %v969
        %1791 = vmatpush1.msra.mxu0 %v968
        %1792 = vmatprep.subr.mxu0 %v977
        %1793 = vmatpush1.msra.mxu0 %v976
        %1794 = vmatprep.subr.mxu0 %v985
        %1795 = vmatpush1.msra.mxu0 %v984
        %1796 = vmatprep.subr.mxu0 %v993
        %1797 = vmatpush1.msra.mxu0 %v992
        %1798 = vmatprep.subr.mxu0 %v1001
        %1799 = vmatpush1.msra.mxu0 %v1000
        %1800 = vmatprep.subr.mxu0 %v1009
        %1801 = vmatpush1.msra.mxu0 %v1008
        %1802 = vmatprep.subr.mxu0 %v1017
        %1803 = vmatpush1.msra.mxu0 %v1016
        %1804 = vmatprep.subr.mxu0 %v1025
        %1805 = vmatpush1.msra.mxu0 %v1024
        %1806 = vmatprep.subr.mxu0 %v1033
        %1807 = vmatpush1.msra.mxu0 %v1032
        %1808 = vmatprep.subr.mxu0 %v1041
        %1809 = vmatpush1.msra.mxu0 %v1040
        %1810 = vmatprep.subr.mxu0 %v1049
        %1811 = vmatpush1.msra.mxu0 %v1048
        %1812 = vmatprep.subr.mxu0 %v1057
        %1813 = vmatpush1.msra.mxu0 %v1056
        %1814 = vmatprep.subr.mxu0 %v1065
        %1815 = vmatpush1.msra.mxu0 %v1064
        %1816 = vmatprep.subr.mxu0 %v1073
        %1817 = vmatpush1.msra.mxu0 %v1072
        %1818 = vmatprep.subr.mxu0 %v1081
        %1819 = vmatpush1.msra.mxu0 %v1080
        %1820 = vmatprep.subr.mxu0 %v1089
        %1821 = vmatpush1.msra.mxu0 %v1088
        %1822 = vmatprep.subr.mxu0 %v1097
        %1823 = vmatpush1.msra.mxu0 %v1096
        %1824 = vmatprep.subr.mxu0 %v1105
        %1825 = vmatpush1.msra.mxu0 %v1104
        %1826 = vmatprep.subr.mxu0 %v1113
        %1827 = vmatpush1.msra.mxu0 %v1112
        %1828 = vmatprep.subr.mxu0 %v1121
        %1829 = vmatpush1.msra.mxu0 %v1120
        %1830 = vmatprep.subr.mxu0 %v1129
        %1831 = vmatpush1.msra.mxu0 %v1128
        %1832 = vmatprep.subr.mxu0 %v1137
        %1833 = vmatpush1.msra.mxu0 %v1136
        %1834 = vmatprep.subr.mxu0 %v1145
        %1835 = vmatpush1.msra.mxu0 %v1144
        %1836 = vmatprep.subr.mxu0 %v1153
        %1837 = vmatpush1.msra.mxu0 %v1152
        %1838 = vmatprep.subr.mxu0 %v1161
        %1839 = vmatpush1.msra.mxu0 %v1160
        %1840 = vmatprep.subr.mxu0 %v1169
        %1841 = vmatpush1.msra.mxu0 %v1168
        %1842 = vmatprep.subr.mxu0 %v1177
        %1843 = vmatpush1.msra.mxu0 %v1176
        %1844 = vmatprep.subr.mxu0 %v1185
        %1845 = vmatpush1.msra.mxu0 %v1184
        %1846 = vmatprep.subr.mxu0 %v1193
        %1847 = vmatpush1.msra.mxu0 %v1192
        %1848 = vmatprep.subr.mxu0 %v1201
        %1849 = vmatpush1.msra.mxu0 %v1200
        %1850 = vmatprep.mubr.f32.mxu0 %v945
        %1851 = vmatmul.mubr.f32.gmra.mrb[0].mxu0 %v944
        %v1852 = vpop.f32.mrb[0].mxu0
        %v1853 = vadd.f32 %v1481, %v1852
        %v1854 = vpop.f32.mrb[0].mxu0
        %v1855 = vadd.f32 %v1485, %v1854
        %1856 = vdwg.mxu0
        %1857 = vmatprep.subr.mxu0 %v1209
        %1858 = vmatpush1.msra.mxu0 %v1208
        %1859 = vmatprep.subr.mxu0 %v1217
        %1860 = vmatpush1.msra.mxu0 %v1216
        %1861 = vmatprep.subr.mxu0 %v1225
        %1862 = vmatpush1.msra.mxu0 %v1224
        %1863 = vmatprep.subr.mxu0 %v1233
        %1864 = vmatpush1.msra.mxu0 %v1232
        %1865 = vmatprep.subr.mxu0 %v1241
        %1866 = vmatpush1.msra.mxu0 %v1240
        %1867 = vmatprep.subr.mxu0 %v1249
        %1868 = vmatpush1.msra.mxu0 %v1248
        %1869 = vmatprep.subr.mxu0 %v1257
        %1870 = vmatpush1.msra.mxu0 %v1256
        %1871 = vmatprep.subr.mxu0 %v1265
        %1872 = vmatpush1.msra.mxu0 %v1264
        %1873 = vmatprep.subr.mxu0 %v1273
        %1874 = vmatpush1.msra.mxu0 %v1272
        %1875 = vmatprep.subr.mxu0 %v1281
        %1876 = vmatpush1.msra.mxu0 %v1280
        %1877 = vmatprep.subr.mxu0 %v1289
        %1878 = vmatpush1.msra.mxu0 %v1288
        %1879 = vmatprep.subr.mxu0 %v1297
        %1880 = vmatpush1.msra.mxu0 %v1296
        %1881 = vmatprep.subr.mxu0 %v1305
        %1882 = vmatpush1.msra.mxu0 %v1304
        %1883 = vmatprep.subr.mxu0 %v1313
        %1884 = vmatpush1.msra.mxu0 %v1312
        %1885 = vmatprep.subr.mxu0 %v1321
        %1886 = vmatpush1.msra.mxu0 %v1320
        %1887 = vmatprep.subr.mxu0 %v1329
        %1888 = vmatpush1.msra.mxu0 %v1328
        %1889 = vmatprep.subr.mxu0 %v1337
        %1890 = vmatpush1.msra.mxu0 %v1336
        %1891 = vmatprep.subr.mxu0 %v1345
        %1892 = vmatpush1.msra.mxu0 %v1344
        %1893 = vmatprep.subr.mxu0 %v1353
        %1894 = vmatpush1.msra.mxu0 %v1352
        %1895 = vmatprep.subr.mxu0 %v1361
        %1896 = vmatpush1.msra.mxu0 %v1360
        %1897 = vmatprep.subr.mxu0 %v1369
        %1898 = vmatpush1.msra.mxu0 %v1368
        %1899 = vmatprep.subr.mxu0 %v1377
        %1900 = vmatpush1.msra.mxu0 %v1376
        %1901 = vmatprep.subr.mxu0 %v1385
        %1902 = vmatpush1.msra.mxu0 %v1384
        %1903 = vmatprep.subr.mxu0 %v1393
        %1904 = vmatpush1.msra.mxu0 %v1392
        %1905 = vmatprep.subr.mxu0 %v1401
        %1906 = vmatpush1.msra.mxu0 %v1400
        %1907 = vmatprep.subr.mxu0 %v1409
        %1908 = vmatpush1.msra.mxu0 %v1408
        %1909 = vmatprep.subr.mxu0 %v1417
        %1910 = vmatpush1.msra.mxu0 %v1416
        %1911 = vmatprep.subr.mxu0 %v1425
        %1912 = vmatpush1.msra.mxu0 %v1424
        %1913 = vmatprep.subr.mxu0 %v1433
        %1914 = vmatpush1.msra.mxu0 %v1432
        %1915 = vmatprep.subr.mxu0 %v1441
        %1916 = vmatpush1.msra.mxu0 %v1440
        %1917 = vmatprep.subr.mxu0 %v1449
        %1918 = vmatpush1.msra.mxu0 %v1448
        %1919 = vmatprep.subr.mxu0 %v1457
        %1920 = vmatpush1.msra.mxu0 %v1456
        %1921 = vmatprep.mubr.f32.mxu0 %v947
        %1922 = vmatmul.mubr.f32.gmra.mrb[0].mxu0 %v946
        %v1923 = vpop.f32.mrb[0].mxu0
        %v1924 = vadd.f32 %v1853, %v1923
        %v1925 = vpop.f32.mrb[0].mxu0
        %v1926 = vadd.f32 %v1855, %v1925
        %1927 = vdwg.mxu0
        %1928 = vmatprep.subr.mxu0 %v955
        %1929 = vmatpush1.msra.mxu0 %v954
        %1930 = vmatprep.subr.mxu0 %v963
        %1931 = vmatpush1.msra.mxu0 %v962
        %1932 = vmatprep.subr.mxu0 %v971
        %1933 = vmatpush1.msra.mxu0 %v970
        %1934 = vmatprep.subr.mxu0 %v979
        %1935 = vmatpush1.msra.mxu0 %v978
        %1936 = vmatprep.subr.mxu0 %v987
        %1937 = vmatpush1.msra.mxu0 %v986
        %1938 = vmatprep.subr.mxu0 %v995
        %1939 = vmatpush1.msra.mxu0 %v994
        %1940 = vmatprep.subr.mxu0 %v1003
        %1941 = vmatpush1.msra.mxu0 %v1002
        %1942 = vmatprep.subr.mxu0 %v1011
        %1943 = vmatpush1.msra.mxu0 %v1010
        %1944 = vmatprep.subr.mxu0 %v1019
        %1945 = vmatpush1.msra.mxu0 %v1018
        %1946 = vmatprep.subr.mxu0 %v1027
        %1947 = vmatpush1.msra.mxu0 %v1026
        %1948 = vmatprep.subr.mxu0 %v1035
        %1949 = vmatpush1.msra.mxu0 %v1034
        %1950 = vmatprep.subr.mxu0 %v1043
        %1951 = vmatpush1.msra.mxu0 %v1042
        %1952 = vmatprep.subr.mxu0 %v1051
        %1953 = vmatpush1.msra.mxu0 %v1050
        %1954 = vmatprep.subr.mxu0 %v1059
        %1955 = vmatpush1.msra.mxu0 %v1058
        %1956 = vmatprep.subr.mxu0 %v1067
        %1957 = vmatpush1.msra.mxu0 %v1066
        %1958 = vmatprep.subr.mxu0 %v1075
        %1959 = vmatpush1.msra.mxu0 %v1074
        %1960 = vmatprep.subr.mxu0 %v1083
        %1961 = vmatpush1.msra.mxu0 %v1082
        %1962 = vmatprep.subr.mxu0 %v1091
        %1963 = vmatpush1.msra.mxu0 %v1090
        %1964 = vmatprep.subr.mxu0 %v1099
        %1965 = vmatpush1.msra.mxu0 %v1098
        %1966 = vmatprep.subr.mxu0 %v1107
        %1967 = vmatpush1.msra.mxu0 %v1106
        %1968 = vmatprep.subr.mxu0 %v1115
        %1969 = vmatpush1.msra.mxu0 %v1114
        %1970 = vmatprep.subr.mxu0 %v1123
        %1971 = vmatpush1.msra.mxu0 %v1122
        %1972 = vmatprep.subr.mxu0 %v1131
        %1973 = vmatpush1.msra.mxu0 %v1130
        %1974 = vmatprep.subr.mxu0 %v1139
        %1975 = vmatpush1.msra.mxu0 %v1138
        %1976 = vmatprep.subr.mxu0 %v1147
        %1977 = vmatpush1.msra.mxu0 %v1146
        %1978 = vmatprep.subr.mxu0 %v1155
        %1979 = vmatpush1.msra.mxu0 %v1154
        %1980 = vmatprep.subr.mxu0 %v1163
        %1981 = vmatpush1.msra.mxu0 %v1162
        %1982 = vmatprep.subr.mxu0 %v1171
        %1983 = vmatpush1.msra.mxu0 %v1170
        %1984 = vmatprep.subr.mxu0 %v1179
        %1985 = vmatpush1.msra.mxu0 %v1178
        %1986 = vmatprep.subr.mxu0 %v1187
        %1987 = vmatpush1.msra.mxu0 %v1186
        %1988 = vmatprep.subr.mxu0 %v1195
        %1989 = vmatpush1.msra.mxu0 %v1194
        %1990 = vmatprep.subr.mxu0 %v1203
        %1991 = vmatpush1.msra.mxu0 %v1202
        %1992 = vmatprep.mubr.f32.mxu0 %v945
        %1993 = vmatmul.mubr.f32.gmra.mrb[0].mxu0 %v944
        %v1994 = vpop.f32.mrb[0].mxu0
        %v1995 = vadd.f32 %v1489, %v1994
        %v1996 = vpop.f32.mrb[0].mxu0
        %v1997 = vadd.f32 %v1493, %v1996
        %1998 = vdwg.mxu0
        %1999 = vmatprep.subr.mxu0 %v1211
        %2000 = vmatpush1.msra.mxu0 %v1210
        %2001 = vmatprep.subr.mxu0 %v1219
        %2002 = vmatpush1.msra.mxu0 %v1218
        %2003 = vmatprep.subr.mxu0 %v1227
        %2004 = vmatpush1.msra.mxu0 %v1226
        %2005 = vmatprep.subr.mxu0 %v1235
        %2006 = vmatpush1.msra.mxu0 %v1234
        %2007 = vmatprep.subr.mxu0 %v1243
        %2008 = vmatpush1.msra.mxu0 %v1242
        %2009 = vmatprep.subr.mxu0 %v1251
        %2010 = vmatpush1.msra.mxu0 %v1250
        %2011 = vmatprep.subr.mxu0 %v1259
        %2012 = vmatpush1.msra.mxu0 %v1258
        %2013 = vmatprep.subr.mxu0 %v1267
        %2014 = vmatpush1.msra.mxu0 %v1266
        %2015 = vmatprep.subr.mxu0 %v1275
        %2016 = vmatpush1.msra.mxu0 %v1274
        %2017 = vmatprep.subr.mxu0 %v1283
        %2018 = vmatpush1.msra.mxu0 %v1282
        %2019 = vmatprep.subr.mxu0 %v1291
        %2020 = vmatpush1.msra.mxu0 %v1290
        %2021 = vmatprep.subr.mxu0 %v1299
        %2022 = vmatpush1.msra.mxu0 %v1298
        %2023 = vmatprep.subr.mxu0 %v1307
        %2024 = vmatpush1.msra.mxu0 %v1306
        %2025 = vmatprep.subr.mxu0 %v1315
        %2026 = vmatpush1.msra.mxu0 %v1314
        %2027 = vmatprep.subr.mxu0 %v1323
        %2028 = vmatpush1.msra.mxu0 %v1322
        %2029 = vmatprep.subr.mxu0 %v1331
        %2030 = vmatpush1.msra.mxu0 %v1330
        %2031 = vmatprep.subr.mxu0 %v1339
        %2032 = vmatpush1.msra.mxu0 %v1338
        %2033 = vmatprep.subr.mxu0 %v1347
        %2034 = vmatpush1.msra.mxu0 %v1346
        %2035 = vmatprep.subr.mxu0 %v1355
        %2036 = vmatpush1.msra.mxu0 %v1354
        %2037 = vmatprep.subr.mxu0 %v1363
        %2038 = vmatpush1.msra.mxu0 %v1362
        %2039 = vmatprep.subr.mxu0 %v1371
        %2040 = vmatpush1.msra.mxu0 %v1370
        %2041 = vmatprep.subr.mxu0 %v1379
        %2042 = vmatpush1.msra.mxu0 %v1378
        %2043 = vmatprep.subr.mxu0 %v1387
        %2044 = vmatpush1.msra.mxu0 %v1386
        %2045 = vmatprep.subr.mxu0 %v1395
        %2046 = vmatpush1.msra.mxu0 %v1394
        %2047 = vmatprep.subr.mxu0 %v1403
        %2048 = vmatpush1.msra.mxu0 %v1402
        %2049 = vmatprep.subr.mxu0 %v1411
        %2050 = vmatpush1.msra.mxu0 %v1410
        %2051 = vmatprep.subr.mxu0 %v1419
        %2052 = vmatpush1.msra.mxu0 %v1418
        %2053 = vmatprep.subr.mxu0 %v1427
        %2054 = vmatpush1.msra.mxu0 %v1426
        %2055 = vmatprep.subr.mxu0 %v1435
        %2056 = vmatpush1.msra.mxu0 %v1434
        %2057 = vmatprep.subr.mxu0 %v1443
        %2058 = vmatpush1.msra.mxu0 %v1442
        %2059 = vmatprep.subr.mxu0 %v1451
        %2060 = vmatpush1.msra.mxu0 %v1450
        %2061 = vmatprep.subr.mxu0 %v1459
        %2062 = vmatpush1.msra.mxu0 %v1458
        %2063 = vmatprep.mubr.f32.mxu0 %v947
        %2064 = vmatmul.mubr.f32.gmra.mrb[0].mxu0 %v946
        %v2065 = vpop.f32.mrb[0].mxu0
        %v2066 = vadd.f32 %v1995, %v2065
        %v2067 = vpop.f32.mrb[0].mxu0
        %v2068 = vadd.f32 %v1997, %v2067
        %2069 = vdwg.mxu0
        %v2070 = vmax.f32 %v1640, 0.0
        %v2071 = vmax.f32 %v1642, 0.0
        %v2072 = vmax.f32 %v1782, 0.0
        %v2073 = vmax.f32 %v1784, 0.0
        %v2074 = vmax.f32 %v1924, 0.0
        %v2075 = vmax.f32 %v1926, 0.0
        %v2076 = vmax.f32 %v2066, 0.0
        %v2077 = vmax.f32 %v2068, 0.0
        %s2078 = smul.u32 %s33, 1536
        %s2079 = sshra.s32 %s2078, 7
        %s2080 = sand.u32 %s2078, 127
        %s2081 = scalar_lea.vmem [#allocation19], %s2079
        %v2082 = vld [vmem:[%s2081] sm:$0xff]
        %v2083 = vld [vmem:[%s2081 + $0x8] sm:$0xf]
        %v2084 = vpack.c.bf16 %v2070, %v2070
        %v2085 = vpack.c.bf16 %v2071, %v2071
        %v2086 = vpack.c.bf16 %v2072, %v2072
        %v2087 = vpack.c.bf16 %v2073, %v2073
        %v2088 = vpack.c.bf16 %v2074, %v2074
        %v2089 = vpack.c.bf16 %v2075, %v2075
        %v2090 = vpack.c.bf16 %v2076, %v2076
        %v2091 = vpack.c.bf16 %v2077, %v2077
        %v2092 = vld [vmem:[%s495] sm:$0xff]
        %v2093 = vld [vmem:[%s495 + $0x8] sm:$0xff]
        %v2094 = vld [vmem:[%s495 + $0x10] sm:$0xff]
        %v2095 = vld [vmem:[%s495 + $0x18] sm:$0xff]
        %v2096 = vld [vmem:[%s495 + $0x20] sm:$0xff]
        %v2097 = vld [vmem:[%s495 + $0x28] sm:$0xff]
        %v2098 = vld [vmem:[%s495 + $0x30] sm:$0xff]
        %v2099 = vld [vmem:[%s495 + $0x38] sm:$0xff]
        %v2100 = vld [vmem:[%s495 + $0x40] sm:$0xff]
        %v2101 = vld [vmem:[%s495 + $0x48] sm:$0xff]
        %v2102 = vld [vmem:[%s495 + $0x50] sm:$0xff]
        %v2103 = vld [vmem:[%s495 + $0x58] sm:$0xff]
        %v2104 = vld [vmem:[%s495 + $0x60] sm:$0xff]
        %v2105 = vld [vmem:[%s495 + $0x68] sm:$0xff]
        %v2106 = vld [vmem:[%s495 + $0x70] sm:$0xff]
        %v2107 = vld [vmem:[%s495 + $0x78] sm:$0xff]
        %v2108 = vld [vmem:[%s495 + $0x80] sm:$0xff]
        %v2109 = vld [vmem:[%s495 + $0x88] sm:$0xff]
        %v2110 = vld [vmem:[%s495 + $0x90] sm:$0xff]
        %v2111 = vld [vmem:[%s495 + $0x98] sm:$0xff]
        %v2112 = vld [vmem:[%s495 + $0xa0] sm:$0xff]
        %v2113 = vld [vmem:[%s495 + $0xa8] sm:$0xff]
        %v2114 = vld [vmem:[%s495 + $0xb0] sm:$0xff]
        %v2115 = vld [vmem:[%s495 + $0xb8] sm:$0xff]
        %v2116 = vld [vmem:[%s495 + $0xc0] sm:$0xff]
        %v2117 = vld [vmem:[%s495 + $0xc8] sm:$0xff]
        %v2118 = vld [vmem:[%s495 + $0xd0] sm:$0xff]
        %v2119 = vld [vmem:[%s495 + $0xd8] sm:$0xff]
        %v2120 = vld [vmem:[%s495 + $0xe0] sm:$0xff]
        %v2121 = vld [vmem:[%s495 + $0xe8] sm:$0xff]
        %v2122 = vld [vmem:[%s495 + $0xf0] sm:$0xff]
        %v2123 = vld [vmem:[%s495 + $0xf8] sm:$0xff]
        %v2124 = vld [vmem:[%s495 + $0x100] sm:$0xff]
        %v2125 = vld [vmem:[%s495 + $0x108] sm:$0xff]
        %v2126 = vld [vmem:[%s495 + $0x110] sm:$0xff]
        %v2127 = vld [vmem:[%s495 + $0x118] sm:$0xff]
        %v2128 = vld [vmem:[%s495 + $0x120] sm:$0xff]
        %v2129 = vld [vmem:[%s495 + $0x128] sm:$0xff]
        %v2130 = vld [vmem:[%s495 + $0x130] sm:$0xff]
        %v2131 = vld [vmem:[%s495 + $0x138] sm:$0xff]
        %v2132 = vld [vmem:[%s495 + $0x140] sm:$0xff]
        %v2133 = vld [vmem:[%s495 + $0x148] sm:$0xff]
        %v2134 = vld [vmem:[%s495 + $0x150] sm:$0xff]
        %v2135 = vld [vmem:[%s495 + $0x158] sm:$0xff]
        %v2136 = vld [vmem:[%s495 + $0x160] sm:$0xff]
        %v2137 = vld [vmem:[%s495 + $0x168] sm:$0xff]
        %v2138 = vld [vmem:[%s495 + $0x170] sm:$0xff]
        %v2139 = vld [vmem:[%s495 + $0x178] sm:$0xff]
        %v2140 = vld [vmem:[%s495 + $0x180] sm:$0xff]
        %v2141 = vld [vmem:[%s495 + $0x188] sm:$0xff]
        %v2142 = vld [vmem:[%s495 + $0x190] sm:$0xff]
        %v2143 = vld [vmem:[%s495 + $0x198] sm:$0xff]
        %v2144 = vld [vmem:[%s495 + $0x1a0] sm:$0xff]
        %v2145 = vld [vmem:[%s495 + $0x1a8] sm:$0xff]
        %v2146 = vld [vmem:[%s495 + $0x1b0] sm:$0xff]
        %v2147 = vld [vmem:[%s495 + $0x1b8] sm:$0xff]
        %v2148 = vld [vmem:[%s495 + $0x1c0] sm:$0xff]
        %v2149 = vld [vmem:[%s495 + $0x1c8] sm:$0xff]
        %v2150 = vld [vmem:[%s495 + $0x1d0] sm:$0xff]
        %v2151 = vld [vmem:[%s495 + $0x1d8] sm:$0xff]
        %v2152 = vld [vmem:[%s495 + $0x1e0] sm:$0xff]
        %v2153 = vld [vmem:[%s495 + $0x1e8] sm:$0xff]
        %v2154 = vld [vmem:[%s495 + $0x1f0] sm:$0xff]
        %v2155 = vld [vmem:[%s495 + $0x1f8] sm:$0xff]
        %v2156 = vld [vmem:[%s495 + $0x200] sm:$0xff]
        %v2157 = vld [vmem:[%s495 + $0x208] sm:$0xff]
        %v2158 = vld [vmem:[%s495 + $0x210] sm:$0xff]
        %v2159 = vld [vmem:[%s495 + $0x218] sm:$0xff]
        %v2160 = vld [vmem:[%s495 + $0x220] sm:$0xff]
        %v2161 = vld [vmem:[%s495 + $0x228] sm:$0xff]
        %v2162 = vld [vmem:[%s495 + $0x230] sm:$0xff]
        %v2163 = vld [vmem:[%s495 + $0x238] sm:$0xff]
        %v2164 = vld [vmem:[%s495 + $0x240] sm:$0xff]
        %v2165 = vld [vmem:[%s495 + $0x248] sm:$0xff]
        %v2166 = vld [vmem:[%s495 + $0x250] sm:$0xff]
        %v2167 = vld [vmem:[%s495 + $0x258] sm:$0xff]
        %v2168 = vld [vmem:[%s495 + $0x260] sm:$0xff]
        %v2169 = vld [vmem:[%s495 + $0x268] sm:$0xff]
        %v2170 = vld [vmem:[%s495 + $0x270] sm:$0xff]
        %v2171 = vld [vmem:[%s495 + $0x278] sm:$0xff]
        %v2172 = vld [vmem:[%s495 + $0x280] sm:$0xff]
        %v2173 = vld [vmem:[%s495 + $0x288] sm:$0xff]
        %v2174 = vld [vmem:[%s495 + $0x290] sm:$0xff]
        %v2175 = vld [vmem:[%s495 + $0x298] sm:$0xff]
        %v2176 = vld [vmem:[%s495 + $0x2a0] sm:$0xff]
        %v2177 = vld [vmem:[%s495 + $0x2a8] sm:$0xff]
        %v2178 = vld [vmem:[%s495 + $0x2b0] sm:$0xff]
        %v2179 = vld [vmem:[%s495 + $0x2b8] sm:$0xff]
        %v2180 = vld [vmem:[%s495 + $0x2c0] sm:$0xff]
        %v2181 = vld [vmem:[%s495 + $0x2c8] sm:$0xff]
        %v2182 = vld [vmem:[%s495 + $0x2d0] sm:$0xff]
        %v2183 = vld [vmem:[%s495 + $0x2d8] sm:$0xff]
        %v2184 = vld [vmem:[%s495 + $0x2e0] sm:$0xff]
        %v2185 = vld [vmem:[%s495 + $0x2e8] sm:$0xff]
        %v2186 = vld [vmem:[%s495 + $0x2f0] sm:$0xff]
        %v2187 = vld [vmem:[%s495 + $0x2f8] sm:$0xff]
        %v2188 = vld [vmem:[%s495 + $0x300] sm:$0xff]
        %v2189 = vld [vmem:[%s495 + $0x308] sm:$0xff]
        %v2190 = vld [vmem:[%s495 + $0x310] sm:$0xff]
        %v2191 = vld [vmem:[%s495 + $0x318] sm:$0xff]
        %v2192 = vld [vmem:[%s495 + $0x320] sm:$0xff]
        %v2193 = vld [vmem:[%s495 + $0x328] sm:$0xff]
        %v2194 = vld [vmem:[%s495 + $0x330] sm:$0xff]
        %v2195 = vld [vmem:[%s495 + $0x338] sm:$0xff]
        %v2196 = vld [vmem:[%s495 + $0x340] sm:$0xff]
        %v2197 = vld [vmem:[%s495 + $0x348] sm:$0xff]
        %v2198 = vld [vmem:[%s495 + $0x350] sm:$0xff]
        %v2199 = vld [vmem:[%s495 + $0x358] sm:$0xff]
        %v2200 = vld [vmem:[%s495 + $0x360] sm:$0xff]
        %v2201 = vld [vmem:[%s495 + $0x368] sm:$0xff]
        %v2202 = vld [vmem:[%s495 + $0x370] sm:$0xff]
        %v2203 = vld [vmem:[%s495 + $0x378] sm:$0xff]
        %v2204 = vld [vmem:[%s495 + $0x380] sm:$0xff]
        %v2205 = vld [vmem:[%s495 + $0x388] sm:$0xff]
        %v2206 = vld [vmem:[%s495 + $0x390] sm:$0xff]
        %v2207 = vld [vmem:[%s495 + $0x398] sm:$0xff]
        %v2208 = vld [vmem:[%s495 + $0x3a0] sm:$0xff]
        %v2209 = vld [vmem:[%s495 + $0x3a8] sm:$0xff]
        %v2210 = vld [vmem:[%s495 + $0x3b0] sm:$0xff]
        %v2211 = vld [vmem:[%s495 + $0x3b8] sm:$0xff]
        %v2212 = vld [vmem:[%s495 + $0x3c0] sm:$0xff]
        %v2213 = vld [vmem:[%s495 + $0x3c8] sm:$0xff]
        %v2214 = vld [vmem:[%s495 + $0x3d0] sm:$0xff]
        %v2215 = vld [vmem:[%s495 + $0x3d8] sm:$0xff]
        %v2216 = vld [vmem:[%s495 + $0x3e0] sm:$0xff]
        %v2217 = vld [vmem:[%s495 + $0x3e8] sm:$0xff]
        %v2218 = vld [vmem:[%s495 + $0x3f0] sm:$0xff]
        %v2219 = vld [vmem:[%s495 + $0x3f8] sm:$0xff]
        %v2220 = vld [vmem:[%s495 + $0x400] sm:$0xff]
        %v2221 = vld [vmem:[%s495 + $0x408] sm:$0xff]
        %v2222 = vld [vmem:[%s495 + $0x410] sm:$0xff]
        %v2223 = vld [vmem:[%s495 + $0x418] sm:$0xff]
        %v2224 = vld [vmem:[%s495 + $0x420] sm:$0xff]
        %v2225 = vld [vmem:[%s495 + $0x428] sm:$0xff]
        %v2226 = vld [vmem:[%s495 + $0x430] sm:$0xff]
        %v2227 = vld [vmem:[%s495 + $0x438] sm:$0xff]
        %v2228 = vld [vmem:[%s495 + $0x440] sm:$0xff]
        %v2229 = vld [vmem:[%s495 + $0x448] sm:$0xff]
        %v2230 = vld [vmem:[%s495 + $0x450] sm:$0xff]
        %v2231 = vld [vmem:[%s495 + $0x458] sm:$0xff]
        %v2232 = vld [vmem:[%s495 + $0x460] sm:$0xff]
        %v2233 = vld [vmem:[%s495 + $0x468] sm:$0xff]
        %v2234 = vld [vmem:[%s495 + $0x470] sm:$0xff]
        %v2235 = vld [vmem:[%s495 + $0x478] sm:$0xff]
        %v2236 = vld [vmem:[%s495 + $0x480] sm:$0xff]
        %v2237 = vld [vmem:[%s495 + $0x488] sm:$0xff]
        %v2238 = vld [vmem:[%s495 + $0x490] sm:$0xff]
        %v2239 = vld [vmem:[%s495 + $0x498] sm:$0xff]
        %v2240 = vld [vmem:[%s495 + $0x4a0] sm:$0xff]
        %v2241 = vld [vmem:[%s495 + $0x4a8] sm:$0xff]
        %v2242 = vld [vmem:[%s495 + $0x4b0] sm:$0xff]
        %v2243 = vld [vmem:[%s495 + $0x4b8] sm:$0xff]
        %v2244 = vld [vmem:[%s495 + $0x4c0] sm:$0xff]
        %v2245 = vld [vmem:[%s495 + $0x4c8] sm:$0xff]
        %v2246 = vld [vmem:[%s495 + $0x4d0] sm:$0xff]
        %v2247 = vld [vmem:[%s495 + $0x4d8] sm:$0xff]
        %v2248 = vld [vmem:[%s495 + $0x4e0] sm:$0xff]
        %v2249 = vld [vmem:[%s495 + $0x4e8] sm:$0xff]
        %v2250 = vld [vmem:[%s495 + $0x4f0] sm:$0xff]
        %v2251 = vld [vmem:[%s495 + $0x4f8] sm:$0xff]
        %v2252 = vld [vmem:[%s495 + $0x500] sm:$0xff]
        %v2253 = vld [vmem:[%s495 + $0x508] sm:$0xff]
        %v2254 = vld [vmem:[%s495 + $0x510] sm:$0xff]
        %v2255 = vld [vmem:[%s495 + $0x518] sm:$0xff]
        %v2256 = vld [vmem:[%s495 + $0x520] sm:$0xff]
        %v2257 = vld [vmem:[%s495 + $0x528] sm:$0xff]
        %v2258 = vld [vmem:[%s495 + $0x530] sm:$0xff]
        %v2259 = vld [vmem:[%s495 + $0x538] sm:$0xff]
        %v2260 = vld [vmem:[%s495 + $0x540] sm:$0xff]
        %v2261 = vld [vmem:[%s495 + $0x548] sm:$0xff]
        %v2262 = vld [vmem:[%s495 + $0x550] sm:$0xff]
        %v2263 = vld [vmem:[%s495 + $0x558] sm:$0xff]
        %v2264 = vld [vmem:[%s495 + $0x560] sm:$0xff]
        %v2265 = vld [vmem:[%s495 + $0x568] sm:$0xff]
        %v2266 = vld [vmem:[%s495 + $0x570] sm:$0xff]
        %v2267 = vld [vmem:[%s495 + $0x578] sm:$0xff]
        %v2268 = vld [vmem:[%s495 + $0x580] sm:$0xff]
        %v2269 = vld [vmem:[%s495 + $0x588] sm:$0xff]
        %v2270 = vld [vmem:[%s495 + $0x590] sm:$0xff]
        %v2271 = vld [vmem:[%s495 + $0x598] sm:$0xff]
        %v2272 = vld [vmem:[%s495 + $0x5a0] sm:$0xff]
        %v2273 = vld [vmem:[%s495 + $0x5a8] sm:$0xff]
        %v2274 = vld [vmem:[%s495 + $0x5b0] sm:$0xff]
        %v2275 = vld [vmem:[%s495 + $0x5b8] sm:$0xff]
        %v2276 = vld [vmem:[%s495 + $0x5c0] sm:$0xff]
        %v2277 = vld [vmem:[%s495 + $0x5c8] sm:$0xff]
        %v2278 = vld [vmem:[%s495 + $0x5d0] sm:$0xff]
        %v2279 = vld [vmem:[%s495 + $0x5d8] sm:$0xff]
        %v2280 = vld [vmem:[%s495 + $0x5e0] sm:$0xff]
        %v2281 = vld [vmem:[%s495 + $0x5e8] sm:$0xff]
        %v2282 = vld [vmem:[%s495 + $0x5f0] sm:$0xff]
        %v2283 = vld [vmem:[%s495 + $0x5f8] sm:$0xff]
        %v2284 = vld [vmem:[%s495 + $0x600] sm:$0xff]
        %v2285 = vld [vmem:[%s495 + $0x608] sm:$0xff]
        %v2286 = vld [vmem:[%s495 + $0x610] sm:$0xff]
        %v2287 = vld [vmem:[%s495 + $0x618] sm:$0xff]
        %v2288 = vld [vmem:[%s495 + $0x620] sm:$0xff]
        %v2289 = vld [vmem:[%s495 + $0x628] sm:$0xff]
        %v2290 = vld [vmem:[%s495 + $0x630] sm:$0xff]
        %v2291 = vld [vmem:[%s495 + $0x638] sm:$0xff]
        %v2292 = vld [vmem:[%s495 + $0x640] sm:$0xff]
        %v2293 = vld [vmem:[%s495 + $0x648] sm:$0xff]
        %v2294 = vld [vmem:[%s495 + $0x650] sm:$0xff]
        %v2295 = vld [vmem:[%s495 + $0x658] sm:$0xff]
        %v2296 = vld [vmem:[%s495 + $0x660] sm:$0xff]
        %v2297 = vld [vmem:[%s495 + $0x668] sm:$0xff]
        %v2298 = vld [vmem:[%s495 + $0x670] sm:$0xff]
        %v2299 = vld [vmem:[%s495 + $0x678] sm:$0xff]
        %v2300 = vld [vmem:[%s495 + $0x680] sm:$0xff]
        %v2301 = vld [vmem:[%s495 + $0x688] sm:$0xff]
        %v2302 = vld [vmem:[%s495 + $0x690] sm:$0xff]
        %v2303 = vld [vmem:[%s495 + $0x698] sm:$0xff]
        %v2304 = vld [vmem:[%s495 + $0x6a0] sm:$0xff]
        %v2305 = vld [vmem:[%s495 + $0x6a8] sm:$0xff]
        %v2306 = vld [vmem:[%s495 + $0x6b0] sm:$0xff]
        %v2307 = vld [vmem:[%s495 + $0x6b8] sm:$0xff]
        %v2308 = vld [vmem:[%s495 + $0x6c0] sm:$0xff]
        %v2309 = vld [vmem:[%s495 + $0x6c8] sm:$0xff]
        %v2310 = vld [vmem:[%s495 + $0x6d0] sm:$0xff]
        %v2311 = vld [vmem:[%s495 + $0x6d8] sm:$0xff]
        %v2312 = vld [vmem:[%s495 + $0x6e0] sm:$0xff]
        %v2313 = vld [vmem:[%s495 + $0x6e8] sm:$0xff]
        %v2314 = vld [vmem:[%s495 + $0x6f0] sm:$0xff]
        %v2315 = vld [vmem:[%s495 + $0x6f8] sm:$0xff]
        %v2316 = vld [vmem:[%s495 + $0x700] sm:$0xff]
        %v2317 = vld [vmem:[%s495 + $0x708] sm:$0xff]
        %v2318 = vld [vmem:[%s495 + $0x710] sm:$0xff]
        %v2319 = vld [vmem:[%s495 + $0x718] sm:$0xff]
        %v2320 = vld [vmem:[%s495 + $0x720] sm:$0xff]
        %v2321 = vld [vmem:[%s495 + $0x728] sm:$0xff]
        %v2322 = vld [vmem:[%s495 + $0x730] sm:$0xff]
        %v2323 = vld [vmem:[%s495 + $0x738] sm:$0xff]
        %v2324 = vld [vmem:[%s495 + $0x740] sm:$0xff]
        %v2325 = vld [vmem:[%s495 + $0x748] sm:$0xff]
        %v2326 = vld [vmem:[%s495 + $0x750] sm:$0xff]
        %v2327 = vld [vmem:[%s495 + $0x758] sm:$0xff]
        %v2328 = vld [vmem:[%s495 + $0x760] sm:$0xff]
        %v2329 = vld [vmem:[%s495 + $0x768] sm:$0xff]
        %v2330 = vld [vmem:[%s495 + $0x770] sm:$0xff]
        %v2331 = vld [vmem:[%s495 + $0x778] sm:$0xff]
        %v2332 = vld [vmem:[%s495 + $0x780] sm:$0xff]
        %v2333 = vld [vmem:[%s495 + $0x788] sm:$0xff]
        %v2334 = vld [vmem:[%s495 + $0x790] sm:$0xff]
        %v2335 = vld [vmem:[%s495 + $0x798] sm:$0xff]
        %v2336 = vld [vmem:[%s495 + $0x7a0] sm:$0xff]
        %v2337 = vld [vmem:[%s495 + $0x7a8] sm:$0xff]
        %v2338 = vld [vmem:[%s495 + $0x7b0] sm:$0xff]
        %v2339 = vld [vmem:[%s495 + $0x7b8] sm:$0xff]
        %v2340 = vld [vmem:[%s495 + $0x7c0] sm:$0xff]
        %v2341 = vld [vmem:[%s495 + $0x7c8] sm:$0xff]
        %v2342 = vld [vmem:[%s495 + $0x7d0] sm:$0xff]
        %v2343 = vld [vmem:[%s495 + $0x7d8] sm:$0xff]
        %v2344 = vld [vmem:[%s495 + $0x7e0] sm:$0xff]
        %v2345 = vld [vmem:[%s495 + $0x7e8] sm:$0xff]
        %v2346 = vld [vmem:[%s495 + $0x7f0] sm:$0xff]
        %v2347 = vld [vmem:[%s495 + $0x7f8] sm:$0xff]
        %v2348 = vld [vmem:[%s495 + $0x800] sm:$0xff]
        %v2349 = vld [vmem:[%s495 + $0x808] sm:$0xff]
        %v2350 = vld [vmem:[%s495 + $0x810] sm:$0xff]
        %v2351 = vld [vmem:[%s495 + $0x818] sm:$0xff]
        %v2352 = vld [vmem:[%s495 + $0x820] sm:$0xff]
        %v2353 = vld [vmem:[%s495 + $0x828] sm:$0xff]
        %v2354 = vld [vmem:[%s495 + $0x830] sm:$0xff]
        %v2355 = vld [vmem:[%s495 + $0x838] sm:$0xff]
        %v2356 = vld [vmem:[%s495 + $0x840] sm:$0xff]
        %v2357 = vld [vmem:[%s495 + $0x848] sm:$0xff]
        %v2358 = vld [vmem:[%s495 + $0x850] sm:$0xff]
        %v2359 = vld [vmem:[%s495 + $0x858] sm:$0xff]
        %v2360 = vld [vmem:[%s495 + $0x860] sm:$0xff]
        %v2361 = vld [vmem:[%s495 + $0x868] sm:$0xff]
        %v2362 = vld [vmem:[%s495 + $0x870] sm:$0xff]
        %v2363 = vld [vmem:[%s495 + $0x878] sm:$0xff]
        %v2364 = vld [vmem:[%s495 + $0x880] sm:$0xff]
        %v2365 = vld [vmem:[%s495 + $0x888] sm:$0xff]
        %v2366 = vld [vmem:[%s495 + $0x890] sm:$0xff]
        %v2367 = vld [vmem:[%s495 + $0x898] sm:$0xff]
        %v2368 = vld [vmem:[%s495 + $0x8a0] sm:$0xff]
        %v2369 = vld [vmem:[%s495 + $0x8a8] sm:$0xff]
        %v2370 = vld [vmem:[%s495 + $0x8b0] sm:$0xff]
        %v2371 = vld [vmem:[%s495 + $0x8b8] sm:$0xff]
        %v2372 = vld [vmem:[%s495 + $0x8c0] sm:$0xff]
        %v2373 = vld [vmem:[%s495 + $0x8c8] sm:$0xff]
        %v2374 = vld [vmem:[%s495 + $0x8d0] sm:$0xff]
        %v2375 = vld [vmem:[%s495 + $0x8d8] sm:$0xff]
        %v2376 = vld [vmem:[%s495 + $0x8e0] sm:$0xff]
        %v2377 = vld [vmem:[%s495 + $0x8e8] sm:$0xff]
        %v2378 = vld [vmem:[%s495 + $0x8f0] sm:$0xff]
        %v2379 = vld [vmem:[%s495 + $0x8f8] sm:$0xff]
        %v2380 = vld [vmem:[%s495 + $0x900] sm:$0xff]
        %v2381 = vld [vmem:[%s495 + $0x908] sm:$0xff]
        %v2382 = vld [vmem:[%s495 + $0x910] sm:$0xff]
        %v2383 = vld [vmem:[%s495 + $0x918] sm:$0xff]
        %v2384 = vld [vmem:[%s495 + $0x920] sm:$0xff]
        %v2385 = vld [vmem:[%s495 + $0x928] sm:$0xff]
        %v2386 = vld [vmem:[%s495 + $0x930] sm:$0xff]
        %v2387 = vld [vmem:[%s495 + $0x938] sm:$0xff]
        %v2388 = vld [vmem:[%s495 + $0x940] sm:$0xff]
        %v2389 = vld [vmem:[%s495 + $0x948] sm:$0xff]
        %v2390 = vld [vmem:[%s495 + $0x950] sm:$0xff]
        %v2391 = vld [vmem:[%s495 + $0x958] sm:$0xff]
        %v2392 = vld [vmem:[%s495 + $0x960] sm:$0xff]
        %v2393 = vld [vmem:[%s495 + $0x968] sm:$0xff]
        %v2394 = vld [vmem:[%s495 + $0x970] sm:$0xff]
        %v2395 = vld [vmem:[%s495 + $0x978] sm:$0xff]
        %v2396 = vld [vmem:[%s495 + $0x980] sm:$0xff]
        %v2397 = vld [vmem:[%s495 + $0x988] sm:$0xff]
        %v2398 = vld [vmem:[%s495 + $0x990] sm:$0xff]
        %v2399 = vld [vmem:[%s495 + $0x998] sm:$0xff]
        %v2400 = vld [vmem:[%s495 + $0x9a0] sm:$0xff]
        %v2401 = vld [vmem:[%s495 + $0x9a8] sm:$0xff]
        %v2402 = vld [vmem:[%s495 + $0x9b0] sm:$0xff]
        %v2403 = vld [vmem:[%s495 + $0x9b8] sm:$0xff]
        %v2404 = vld [vmem:[%s495 + $0x9c0] sm:$0xff]
        %v2405 = vld [vmem:[%s495 + $0x9c8] sm:$0xff]
        %v2406 = vld [vmem:[%s495 + $0x9d0] sm:$0xff]
        %v2407 = vld [vmem:[%s495 + $0x9d8] sm:$0xff]
        %v2408 = vld [vmem:[%s495 + $0x9e0] sm:$0xff]
        %v2409 = vld [vmem:[%s495 + $0x9e8] sm:$0xff]
        %v2410 = vld [vmem:[%s495 + $0x9f0] sm:$0xff]
        %v2411 = vld [vmem:[%s495 + $0x9f8] sm:$0xff]
        %v2412 = vld [vmem:[%s495 + $0xa00] sm:$0xff]
        %v2413 = vld [vmem:[%s495 + $0xa08] sm:$0xff]
        %v2414 = vld [vmem:[%s495 + $0xa10] sm:$0xff]
        %v2415 = vld [vmem:[%s495 + $0xa18] sm:$0xff]
        %v2416 = vld [vmem:[%s495 + $0xa20] sm:$0xff]
        %v2417 = vld [vmem:[%s495 + $0xa28] sm:$0xff]
        %v2418 = vld [vmem:[%s495 + $0xa30] sm:$0xff]
        %v2419 = vld [vmem:[%s495 + $0xa38] sm:$0xff]
        %v2420 = vld [vmem:[%s495 + $0xa40] sm:$0xff]
        %v2421 = vld [vmem:[%s495 + $0xa48] sm:$0xff]
        %v2422 = vld [vmem:[%s495 + $0xa50] sm:$0xff]
        %v2423 = vld [vmem:[%s495 + $0xa58] sm:$0xff]
        %v2424 = vld [vmem:[%s495 + $0xa60] sm:$0xff]
        %v2425 = vld [vmem:[%s495 + $0xa68] sm:$0xff]
        %v2426 = vld [vmem:[%s495 + $0xa70] sm:$0xff]
        %v2427 = vld [vmem:[%s495 + $0xa78] sm:$0xff]
        %v2428 = vld [vmem:[%s495 + $0xa80] sm:$0xff]
        %v2429 = vld [vmem:[%s495 + $0xa88] sm:$0xff]
        %v2430 = vld [vmem:[%s495 + $0xa90] sm:$0xff]
        %v2431 = vld [vmem:[%s495 + $0xa98] sm:$0xff]
        %v2432 = vld [vmem:[%s495 + $0xaa0] sm:$0xff]
        %v2433 = vld [vmem:[%s495 + $0xaa8] sm:$0xff]
        %v2434 = vld [vmem:[%s495 + $0xab0] sm:$0xff]
        %v2435 = vld [vmem:[%s495 + $0xab8] sm:$0xff]
        %v2436 = vld [vmem:[%s495 + $0xac0] sm:$0xff]
        %v2437 = vld [vmem:[%s495 + $0xac8] sm:$0xff]
        %v2438 = vld [vmem:[%s495 + $0xad0] sm:$0xff]
        %v2439 = vld [vmem:[%s495 + $0xad8] sm:$0xff]
        %v2440 = vld [vmem:[%s495 + $0xae0] sm:$0xff]
        %v2441 = vld [vmem:[%s495 + $0xae8] sm:$0xff]
        %v2442 = vld [vmem:[%s495 + $0xaf0] sm:$0xff]
        %v2443 = vld [vmem:[%s495 + $0xaf8] sm:$0xff]
        %v2444 = vld [vmem:[%s495 + $0xb00] sm:$0xff]
        %v2445 = vld [vmem:[%s495 + $0xb08] sm:$0xff]
        %v2446 = vld [vmem:[%s495 + $0xb10] sm:$0xff]
        %v2447 = vld [vmem:[%s495 + $0xb18] sm:$0xff]
        %v2448 = vld [vmem:[%s495 + $0xb20] sm:$0xff]
        %v2449 = vld [vmem:[%s495 + $0xb28] sm:$0xff]
        %v2450 = vld [vmem:[%s495 + $0xb30] sm:$0xff]
        %v2451 = vld [vmem:[%s495 + $0xb38] sm:$0xff]
        %v2452 = vld [vmem:[%s495 + $0xb40] sm:$0xff]
        %v2453 = vld [vmem:[%s495 + $0xb48] sm:$0xff]
        %v2454 = vld [vmem:[%s495 + $0xb50] sm:$0xff]
        %v2455 = vld [vmem:[%s495 + $0xb58] sm:$0xff]
        %v2456 = vld [vmem:[%s495 + $0xb60] sm:$0xff]
        %v2457 = vld [vmem:[%s495 + $0xb68] sm:$0xff]
        %v2458 = vld [vmem:[%s495 + $0xb70] sm:$0xff]
        %v2459 = vld [vmem:[%s495 + $0xb78] sm:$0xff]
        %v2460 = vld [vmem:[%s495 + $0xb80] sm:$0xff]
        %v2461 = vld [vmem:[%s495 + $0xb88] sm:$0xff]
        %v2462 = vld [vmem:[%s495 + $0xb90] sm:$0xff]
        %v2463 = vld [vmem:[%s495 + $0xb98] sm:$0xff]
        %v2464 = vld [vmem:[%s495 + $0xba0] sm:$0xff]
        %v2465 = vld [vmem:[%s495 + $0xba8] sm:$0xff]
        %v2466 = vld [vmem:[%s495 + $0xbb0] sm:$0xff]
        %v2467 = vld [vmem:[%s495 + $0xbb8] sm:$0xff]
        %v2468 = vld [vmem:[%s495 + $0xbc0] sm:$0xff]
        %v2469 = vld [vmem:[%s495 + $0xbc8] sm:$0xff]
        %v2470 = vld [vmem:[%s495 + $0xbd0] sm:$0xff]
        %v2471 = vld [vmem:[%s495 + $0xbd8] sm:$0xff]
        %v2472 = vld [vmem:[%s495 + $0xbe0] sm:$0xff]
        %v2473 = vld [vmem:[%s495 + $0xbe8] sm:$0xff]
        %v2474 = vld [vmem:[%s495 + $0xbf0] sm:$0xff]
        %v2475 = vld [vmem:[%s495 + $0xbf8] sm:$0xff]
        %v2476 = vld [vmem:[%s495 + $0xc00] sm:$0xff]
        %v2477 = vld [vmem:[%s495 + $0xc08] sm:$0xff]
        %v2478 = vld [vmem:[%s495 + $0xc10] sm:$0xff]
        %v2479 = vld [vmem:[%s495 + $0xc18] sm:$0xff]
        %v2480 = vld [vmem:[%s495 + $0xc20] sm:$0xff]
        %v2481 = vld [vmem:[%s495 + $0xc28] sm:$0xff]
        %v2482 = vld [vmem:[%s495 + $0xc30] sm:$0xff]
        %v2483 = vld [vmem:[%s495 + $0xc38] sm:$0xff]
        %v2484 = vld [vmem:[%s495 + $0xc40] sm:$0xff]
        %v2485 = vld [vmem:[%s495 + $0xc48] sm:$0xff]
        %v2486 = vld [vmem:[%s495 + $0xc50] sm:$0xff]
        %v2487 = vld [vmem:[%s495 + $0xc58] sm:$0xff]
        %v2488 = vld [vmem:[%s495 + $0xc60] sm:$0xff]
        %v2489 = vld [vmem:[%s495 + $0xc68] sm:$0xff]
        %v2490 = vld [vmem:[%s495 + $0xc70] sm:$0xff]
        %v2491 = vld [vmem:[%s495 + $0xc78] sm:$0xff]
        %v2492 = vld [vmem:[%s495 + $0xc80] sm:$0xff]
        %v2493 = vld [vmem:[%s495 + $0xc88] sm:$0xff]
        %v2494 = vld [vmem:[%s495 + $0xc90] sm:$0xff]
        %v2495 = vld [vmem:[%s495 + $0xc98] sm:$0xff]
        %v2496 = vld [vmem:[%s495 + $0xca0] sm:$0xff]
        %v2497 = vld [vmem:[%s495 + $0xca8] sm:$0xff]
        %v2498 = vld [vmem:[%s495 + $0xcb0] sm:$0xff]
        %v2499 = vld [vmem:[%s495 + $0xcb8] sm:$0xff]
        %v2500 = vld [vmem:[%s495 + $0xcc0] sm:$0xff]
        %v2501 = vld [vmem:[%s495 + $0xcc8] sm:$0xff]
        %v2502 = vld [vmem:[%s495 + $0xcd0] sm:$0xff]
        %v2503 = vld [vmem:[%s495 + $0xcd8] sm:$0xff]
        %v2504 = vld [vmem:[%s495 + $0xce0] sm:$0xff]
        %v2505 = vld [vmem:[%s495 + $0xce8] sm:$0xff]
        %v2506 = vld [vmem:[%s495 + $0xcf0] sm:$0xff]
        %v2507 = vld [vmem:[%s495 + $0xcf8] sm:$0xff]
        %v2508 = vld [vmem:[%s495 + $0xd00] sm:$0xff]
        %v2509 = vld [vmem:[%s495 + $0xd08] sm:$0xff]
        %v2510 = vld [vmem:[%s495 + $0xd10] sm:$0xff]
        %v2511 = vld [vmem:[%s495 + $0xd18] sm:$0xff]
        %v2512 = vld [vmem:[%s495 + $0xd20] sm:$0xff]
        %v2513 = vld [vmem:[%s495 + $0xd28] sm:$0xff]
        %v2514 = vld [vmem:[%s495 + $0xd30] sm:$0xff]
        %v2515 = vld [vmem:[%s495 + $0xd38] sm:$0xff]
        %v2516 = vld [vmem:[%s495 + $0xd40] sm:$0xff]
        %v2517 = vld [vmem:[%s495 + $0xd48] sm:$0xff]
        %v2518 = vld [vmem:[%s495 + $0xd50] sm:$0xff]
        %v2519 = vld [vmem:[%s495 + $0xd58] sm:$0xff]
        %v2520 = vld [vmem:[%s495 + $0xd60] sm:$0xff]
        %v2521 = vld [vmem:[%s495 + $0xd68] sm:$0xff]
        %v2522 = vld [vmem:[%s495 + $0xd70] sm:$0xff]
        %v2523 = vld [vmem:[%s495 + $0xd78] sm:$0xff]
        %v2524 = vld [vmem:[%s495 + $0xd80] sm:$0xff]
        %v2525 = vld [vmem:[%s495 + $0xd88] sm:$0xff]
        %v2526 = vld [vmem:[%s495 + $0xd90] sm:$0xff]
        %v2527 = vld [vmem:[%s495 + $0xd98] sm:$0xff]
        %v2528 = vld [vmem:[%s495 + $0xda0] sm:$0xff]
        %v2529 = vld [vmem:[%s495 + $0xda8] sm:$0xff]
        %v2530 = vld [vmem:[%s495 + $0xdb0] sm:$0xff]
        %v2531 = vld [vmem:[%s495 + $0xdb8] sm:$0xff]
        %v2532 = vld [vmem:[%s495 + $0xdc0] sm:$0xff]
        %v2533 = vld [vmem:[%s495 + $0xdc8] sm:$0xff]
        %v2534 = vld [vmem:[%s495 + $0xdd0] sm:$0xff]
        %v2535 = vld [vmem:[%s495 + $0xdd8] sm:$0xff]
        %v2536 = vld [vmem:[%s495 + $0xde0] sm:$0xff]
        %v2537 = vld [vmem:[%s495 + $0xde8] sm:$0xff]
        %v2538 = vld [vmem:[%s495 + $0xdf0] sm:$0xff]
        %v2539 = vld [vmem:[%s495 + $0xdf8] sm:$0xff]
        %v2540 = vld [vmem:[%s495 + $0xe00] sm:$0xff]
        %v2541 = vld [vmem:[%s495 + $0xe08] sm:$0xff]
        %v2542 = vld [vmem:[%s495 + $0xe10] sm:$0xff]
        %v2543 = vld [vmem:[%s495 + $0xe18] sm:$0xff]
        %v2544 = vld [vmem:[%s495 + $0xe20] sm:$0xff]
        %v2545 = vld [vmem:[%s495 + $0xe28] sm:$0xff]
        %v2546 = vld [vmem:[%s495 + $0xe30] sm:$0xff]
        %v2547 = vld [vmem:[%s495 + $0xe38] sm:$0xff]
        %v2548 = vld [vmem:[%s495 + $0xe40] sm:$0xff]
        %v2549 = vld [vmem:[%s495 + $0xe48] sm:$0xff]
        %v2550 = vld [vmem:[%s495 + $0xe50] sm:$0xff]
        %v2551 = vld [vmem:[%s495 + $0xe58] sm:$0xff]
        %v2552 = vld [vmem:[%s495 + $0xe60] sm:$0xff]
        %v2553 = vld [vmem:[%s495 + $0xe68] sm:$0xff]
        %v2554 = vld [vmem:[%s495 + $0xe70] sm:$0xff]
        %v2555 = vld [vmem:[%s495 + $0xe78] sm:$0xff]
        %v2556 = vld [vmem:[%s495 + $0xe80] sm:$0xff]
        %v2557 = vld [vmem:[%s495 + $0xe88] sm:$0xff]
        %v2558 = vld [vmem:[%s495 + $0xe90] sm:$0xff]
        %v2559 = vld [vmem:[%s495 + $0xe98] sm:$0xff]
        %v2560 = vld [vmem:[%s495 + $0xea0] sm:$0xff]
        %v2561 = vld [vmem:[%s495 + $0xea8] sm:$0xff]
        %v2562 = vld [vmem:[%s495 + $0xeb0] sm:$0xff]
        %v2563 = vld [vmem:[%s495 + $0xeb8] sm:$0xff]
        %v2564 = vld [vmem:[%s495 + $0xec0] sm:$0xff]
        %v2565 = vld [vmem:[%s495 + $0xec8] sm:$0xff]
        %v2566 = vld [vmem:[%s495 + $0xed0] sm:$0xff]
        %v2567 = vld [vmem:[%s495 + $0xed8] sm:$0xff]
        %v2568 = vld [vmem:[%s495 + $0xee0] sm:$0xff]
        %v2569 = vld [vmem:[%s495 + $0xee8] sm:$0xff]
        %v2570 = vld [vmem:[%s495 + $0xef0] sm:$0xff]
        %v2571 = vld [vmem:[%s495 + $0xef8] sm:$0xff]
        %v2572 = vld [vmem:[%s495 + $0xf00] sm:$0xff]
        %v2573 = vld [vmem:[%s495 + $0xf08] sm:$0xff]
        %v2574 = vld [vmem:[%s495 + $0xf10] sm:$0xff]
        %v2575 = vld [vmem:[%s495 + $0xf18] sm:$0xff]
        %v2576 = vld [vmem:[%s495 + $0xf20] sm:$0xff]
        %v2577 = vld [vmem:[%s495 + $0xf28] sm:$0xff]
        %v2578 = vld [vmem:[%s495 + $0xf30] sm:$0xff]
        %v2579 = vld [vmem:[%s495 + $0xf38] sm:$0xff]
        %v2580 = vld [vmem:[%s495 + $0xf40] sm:$0xff]
        %v2581 = vld [vmem:[%s495 + $0xf48] sm:$0xff]
        %v2582 = vld [vmem:[%s495 + $0xf50] sm:$0xff]
        %v2583 = vld [vmem:[%s495 + $0xf58] sm:$0xff]
        %v2584 = vld [vmem:[%s495 + $0xf60] sm:$0xff]
        %v2585 = vld [vmem:[%s495 + $0xf68] sm:$0xff]
        %v2586 = vld [vmem:[%s495 + $0xf70] sm:$0xff]
        %v2587 = vld [vmem:[%s495 + $0xf78] sm:$0xff]
        %v2588 = vld [vmem:[%s495 + $0xf80] sm:$0xff]
        %v2589 = vld [vmem:[%s495 + $0xf88] sm:$0xff]
        %v2590 = vld [vmem:[%s495 + $0xf90] sm:$0xff]
        %v2591 = vld [vmem:[%s495 + $0xf98] sm:$0xff]
        %v2592 = vld [vmem:[%s495 + $0xfa0] sm:$0xff]
        %v2593 = vld [vmem:[%s495 + $0xfa8] sm:$0xff]
        %v2594 = vld [vmem:[%s495 + $0xfb0] sm:$0xff]
        %v2595 = vld [vmem:[%s495 + $0xfb8] sm:$0xff]
        %v2596 = vld [vmem:[%s495 + $0xfc0] sm:$0xff]
        %v2597 = vld [vmem:[%s495 + $0xfc8] sm:$0xff]
        %v2598 = vld [vmem:[%s495 + $0xfd0] sm:$0xff]
        %v2599 = vld [vmem:[%s495 + $0xfd8] sm:$0xff]
        %v2600 = vld [vmem:[%s495 + $0xfe0] sm:$0xff]
        %v2601 = vld [vmem:[%s495 + $0xfe8] sm:$0xff]
        %v2602 = vld [vmem:[%s495 + $0xff0] sm:$0xff]
        %v2603 = vld [vmem:[%s495 + $0xff8] sm:$0xff]
        %v2604 = vld [vmem:[%s495 + $0x1000] sm:$0xff]
        %v2605 = vld [vmem:[%s495 + $0x1008] sm:$0xff]
        %v2606 = vld [vmem:[%s495 + $0x1010] sm:$0xff]
        %v2607 = vld [vmem:[%s495 + $0x1018] sm:$0xff]
        %v2608 = vld [vmem:[%s495 + $0x1020] sm:$0xff]
        %v2609 = vld [vmem:[%s495 + $0x1028] sm:$0xff]
        %v2610 = vld [vmem:[%s495 + $0x1030] sm:$0xff]
        %v2611 = vld [vmem:[%s495 + $0x1038] sm:$0xff]
        %v2612 = vld [vmem:[%s495 + $0x1040] sm:$0xff]
        %v2613 = vld [vmem:[%s495 + $0x1048] sm:$0xff]
        %v2614 = vld [vmem:[%s495 + $0x1050] sm:$0xff]
        %v2615 = vld [vmem:[%s495 + $0x1058] sm:$0xff]
        %v2616 = vld [vmem:[%s495 + $0x1060] sm:$0xff]
        %v2617 = vld [vmem:[%s495 + $0x1068] sm:$0xff]
        %v2618 = vld [vmem:[%s495 + $0x1070] sm:$0xff]
        %v2619 = vld [vmem:[%s495 + $0x1078] sm:$0xff]
        %v2620 = vld [vmem:[%s495 + $0x1080] sm:$0xff]
        %v2621 = vld [vmem:[%s495 + $0x1088] sm:$0xff]
        %v2622 = vld [vmem:[%s495 + $0x1090] sm:$0xff]
        %v2623 = vld [vmem:[%s495 + $0x1098] sm:$0xff]
        %v2624 = vld [vmem:[%s495 + $0x10a0] sm:$0xff]
        %v2625 = vld [vmem:[%s495 + $0x10a8] sm:$0xff]
        %v2626 = vld [vmem:[%s495 + $0x10b0] sm:$0xff]
        %v2627 = vld [vmem:[%s495 + $0x10b8] sm:$0xff]
        %v2628 = vld [vmem:[%s495 + $0x10c0] sm:$0xff]
        %v2629 = vld [vmem:[%s495 + $0x10c8] sm:$0xff]
        %v2630 = vld [vmem:[%s495 + $0x10d0] sm:$0xff]
        %v2631 = vld [vmem:[%s495 + $0x10d8] sm:$0xff]
        %v2632 = vld [vmem:[%s495 + $0x10e0] sm:$0xff]
        %v2633 = vld [vmem:[%s495 + $0x10e8] sm:$0xff]
        %v2634 = vld [vmem:[%s495 + $0x10f0] sm:$0xff]
        %v2635 = vld [vmem:[%s495 + $0x10f8] sm:$0xff]
        %v2636 = vld [vmem:[%s495 + $0x1100] sm:$0xff]
        %v2637 = vld [vmem:[%s495 + $0x1108] sm:$0xff]
        %v2638 = vld [vmem:[%s495 + $0x1110] sm:$0xff]
        %v2639 = vld [vmem:[%s495 + $0x1118] sm:$0xff]
        %v2640 = vld [vmem:[%s495 + $0x1120] sm:$0xff]
        %v2641 = vld [vmem:[%s495 + $0x1128] sm:$0xff]
        %v2642 = vld [vmem:[%s495 + $0x1130] sm:$0xff]
        %v2643 = vld [vmem:[%s495 + $0x1138] sm:$0xff]
        %v2644 = vld [vmem:[%s495 + $0x1140] sm:$0xff]
        %v2645 = vld [vmem:[%s495 + $0x1148] sm:$0xff]
        %v2646 = vld [vmem:[%s495 + $0x1150] sm:$0xff]
        %v2647 = vld [vmem:[%s495 + $0x1158] sm:$0xff]
        %v2648 = vld [vmem:[%s495 + $0x1160] sm:$0xff]
        %v2649 = vld [vmem:[%s495 + $0x1168] sm:$0xff]
        %v2650 = vld [vmem:[%s495 + $0x1170] sm:$0xff]
        %v2651 = vld [vmem:[%s495 + $0x1178] sm:$0xff]
        %v2652 = vld [vmem:[%s495 + $0x1180] sm:$0xff]
        %v2653 = vld [vmem:[%s495 + $0x1188] sm:$0xff]
        %v2654 = vld [vmem:[%s495 + $0x1190] sm:$0xff]
        %v2655 = vld [vmem:[%s495 + $0x1198] sm:$0xff]
        %v2656 = vld [vmem:[%s495 + $0x11a0] sm:$0xff]
        %v2657 = vld [vmem:[%s495 + $0x11a8] sm:$0xff]
        %v2658 = vld [vmem:[%s495 + $0x11b0] sm:$0xff]
        %v2659 = vld [vmem:[%s495 + $0x11b8] sm:$0xff]
        %v2660 = vld [vmem:[%s495 + $0x11c0] sm:$0xff]
        %v2661 = vld [vmem:[%s495 + $0x11c8] sm:$0xff]
        %v2662 = vld [vmem:[%s495 + $0x11d0] sm:$0xff]
        %v2663 = vld [vmem:[%s495 + $0x11d8] sm:$0xff]
        %v2664 = vld [vmem:[%s495 + $0x11e0] sm:$0xff]
        %v2665 = vld [vmem:[%s495 + $0x11e8] sm:$0xff]
        %v2666 = vld [vmem:[%s495 + $0x11f0] sm:$0xff]
        %v2667 = vld [vmem:[%s495 + $0x11f8] sm:$0xff]
        %v2668 = vld [vmem:[%s495 + $0x1200] sm:$0xff]
        %v2669 = vld [vmem:[%s495 + $0x1208] sm:$0xff]
        %v2670 = vld [vmem:[%s495 + $0x1210] sm:$0xff]
        %v2671 = vld [vmem:[%s495 + $0x1218] sm:$0xff]
        %v2672 = vld [vmem:[%s495 + $0x1220] sm:$0xff]
        %v2673 = vld [vmem:[%s495 + $0x1228] sm:$0xff]
        %v2674 = vld [vmem:[%s495 + $0x1230] sm:$0xff]
        %v2675 = vld [vmem:[%s495 + $0x1238] sm:$0xff]
        %v2676 = vld [vmem:[%s495 + $0x1240] sm:$0xff]
        %v2677 = vld [vmem:[%s495 + $0x1248] sm:$0xff]
        %v2678 = vld [vmem:[%s495 + $0x1250] sm:$0xff]
        %v2679 = vld [vmem:[%s495 + $0x1258] sm:$0xff]
        %v2680 = vld [vmem:[%s495 + $0x1260] sm:$0xff]
        %v2681 = vld [vmem:[%s495 + $0x1268] sm:$0xff]
        %v2682 = vld [vmem:[%s495 + $0x1270] sm:$0xff]
        %v2683 = vld [vmem:[%s495 + $0x1278] sm:$0xff]
        %v2684 = vld [vmem:[%s495 + $0x1280] sm:$0xff]
        %v2685 = vld [vmem:[%s495 + $0x1288] sm:$0xff]
        %v2686 = vld [vmem:[%s495 + $0x1290] sm:$0xff]
        %v2687 = vld [vmem:[%s495 + $0x1298] sm:$0xff]
        %v2688 = vld [vmem:[%s495 + $0x12a0] sm:$0xff]
        %v2689 = vld [vmem:[%s495 + $0x12a8] sm:$0xff]
        %v2690 = vld [vmem:[%s495 + $0x12b0] sm:$0xff]
        %v2691 = vld [vmem:[%s495 + $0x12b8] sm:$0xff]
        %v2692 = vld [vmem:[%s495 + $0x12c0] sm:$0xff]
        %v2693 = vld [vmem:[%s495 + $0x12c8] sm:$0xff]
        %v2694 = vld [vmem:[%s495 + $0x12d0] sm:$0xff]
        %v2695 = vld [vmem:[%s495 + $0x12d8] sm:$0xff]
        %v2696 = vld [vmem:[%s495 + $0x12e0] sm:$0xff]
        %v2697 = vld [vmem:[%s495 + $0x12e8] sm:$0xff]
        %v2698 = vld [vmem:[%s495 + $0x12f0] sm:$0xff]
        %v2699 = vld [vmem:[%s495 + $0x12f8] sm:$0xff]
        %v2700 = vld [vmem:[%s495 + $0x1300] sm:$0xff]
        %v2701 = vld [vmem:[%s495 + $0x1308] sm:$0xff]
        %v2702 = vld [vmem:[%s495 + $0x1310] sm:$0xff]
        %v2703 = vld [vmem:[%s495 + $0x1318] sm:$0xff]
        %v2704 = vld [vmem:[%s495 + $0x1320] sm:$0xff]
        %v2705 = vld [vmem:[%s495 + $0x1328] sm:$0xff]
        %v2706 = vld [vmem:[%s495 + $0x1330] sm:$0xff]
        %v2707 = vld [vmem:[%s495 + $0x1338] sm:$0xff]
        %v2708 = vld [vmem:[%s495 + $0x1340] sm:$0xff]
        %v2709 = vld [vmem:[%s495 + $0x1348] sm:$0xff]
        %v2710 = vld [vmem:[%s495 + $0x1350] sm:$0xff]
        %v2711 = vld [vmem:[%s495 + $0x1358] sm:$0xff]
        %v2712 = vld [vmem:[%s495 + $0x1360] sm:$0xff]
        %v2713 = vld [vmem:[%s495 + $0x1368] sm:$0xff]
        %v2714 = vld [vmem:[%s495 + $0x1370] sm:$0xff]
        %v2715 = vld [vmem:[%s495 + $0x1378] sm:$0xff]
        %v2716 = vld [vmem:[%s495 + $0x1380] sm:$0xff]
        %v2717 = vld [vmem:[%s495 + $0x1388] sm:$0xff]
        %v2718 = vld [vmem:[%s495 + $0x1390] sm:$0xff]
        %v2719 = vld [vmem:[%s495 + $0x1398] sm:$0xff]
        %v2720 = vld [vmem:[%s495 + $0x13a0] sm:$0xff]
        %v2721 = vld [vmem:[%s495 + $0x13a8] sm:$0xff]
        %v2722 = vld [vmem:[%s495 + $0x13b0] sm:$0xff]
        %v2723 = vld [vmem:[%s495 + $0x13b8] sm:$0xff]
        %v2724 = vld [vmem:[%s495 + $0x13c0] sm:$0xff]
        %v2725 = vld [vmem:[%s495 + $0x13c8] sm:$0xff]
        %v2726 = vld [vmem:[%s495 + $0x13d0] sm:$0xff]
        %v2727 = vld [vmem:[%s495 + $0x13d8] sm:$0xff]
        %v2728 = vld [vmem:[%s495 + $0x13e0] sm:$0xff]
        %v2729 = vld [vmem:[%s495 + $0x13e8] sm:$0xff]
        %v2730 = vld [vmem:[%s495 + $0x13f0] sm:$0xff]
        %v2731 = vld [vmem:[%s495 + $0x13f8] sm:$0xff]
        %v2732 = vld [vmem:[%s495 + $0x1400] sm:$0xff]
        %v2733 = vld [vmem:[%s495 + $0x1408] sm:$0xff]
        %v2734 = vld [vmem:[%s495 + $0x1410] sm:$0xff]
        %v2735 = vld [vmem:[%s495 + $0x1418] sm:$0xff]
        %v2736 = vld [vmem:[%s495 + $0x1420] sm:$0xff]
        %v2737 = vld [vmem:[%s495 + $0x1428] sm:$0xff]
        %v2738 = vld [vmem:[%s495 + $0x1430] sm:$0xff]
        %v2739 = vld [vmem:[%s495 + $0x1438] sm:$0xff]
        %v2740 = vld [vmem:[%s495 + $0x1440] sm:$0xff]
        %v2741 = vld [vmem:[%s495 + $0x1448] sm:$0xff]
        %v2742 = vld [vmem:[%s495 + $0x1450] sm:$0xff]
        %v2743 = vld [vmem:[%s495 + $0x1458] sm:$0xff]
        %v2744 = vld [vmem:[%s495 + $0x1460] sm:$0xff]
        %v2745 = vld [vmem:[%s495 + $0x1468] sm:$0xff]
        %v2746 = vld [vmem:[%s495 + $0x1470] sm:$0xff]
        %v2747 = vld [vmem:[%s495 + $0x1478] sm:$0xff]
        %v2748 = vld [vmem:[%s495 + $0x1480] sm:$0xff]
        %v2749 = vld [vmem:[%s495 + $0x1488] sm:$0xff]
        %v2750 = vld [vmem:[%s495 + $0x1490] sm:$0xff]
        %v2751 = vld [vmem:[%s495 + $0x1498] sm:$0xff]
        %v2752 = vld [vmem:[%s495 + $0x14a0] sm:$0xff]
        %v2753 = vld [vmem:[%s495 + $0x14a8] sm:$0xff]
        %v2754 = vld [vmem:[%s495 + $0x14b0] sm:$0xff]
        %v2755 = vld [vmem:[%s495 + $0x14b8] sm:$0xff]
        %v2756 = vld [vmem:[%s495 + $0x14c0] sm:$0xff]
        %v2757 = vld [vmem:[%s495 + $0x14c8] sm:$0xff]
        %v2758 = vld [vmem:[%s495 + $0x14d0] sm:$0xff]
        %v2759 = vld [vmem:[%s495 + $0x14d8] sm:$0xff]
        %v2760 = vld [vmem:[%s495 + $0x14e0] sm:$0xff]
        %v2761 = vld [vmem:[%s495 + $0x14e8] sm:$0xff]
        %v2762 = vld [vmem:[%s495 + $0x14f0] sm:$0xff]
        %v2763 = vld [vmem:[%s495 + $0x14f8] sm:$0xff]
        %v2764 = vld [vmem:[%s495 + $0x1500] sm:$0xff]
        %v2765 = vld [vmem:[%s495 + $0x1508] sm:$0xff]
        %v2766 = vld [vmem:[%s495 + $0x1510] sm:$0xff]
        %v2767 = vld [vmem:[%s495 + $0x1518] sm:$0xff]
        %v2768 = vld [vmem:[%s495 + $0x1520] sm:$0xff]
        %v2769 = vld [vmem:[%s495 + $0x1528] sm:$0xff]
        %v2770 = vld [vmem:[%s495 + $0x1530] sm:$0xff]
        %v2771 = vld [vmem:[%s495 + $0x1538] sm:$0xff]
        %v2772 = vld [vmem:[%s495 + $0x1540] sm:$0xff]
        %v2773 = vld [vmem:[%s495 + $0x1548] sm:$0xff]
        %v2774 = vld [vmem:[%s495 + $0x1550] sm:$0xff]
        %v2775 = vld [vmem:[%s495 + $0x1558] sm:$0xff]
        %v2776 = vld [vmem:[%s495 + $0x1560] sm:$0xff]
        %v2777 = vld [vmem:[%s495 + $0x1568] sm:$0xff]
        %v2778 = vld [vmem:[%s495 + $0x1570] sm:$0xff]
        %v2779 = vld [vmem:[%s495 + $0x1578] sm:$0xff]
        %v2780 = vld [vmem:[%s495 + $0x1580] sm:$0xff]
        %v2781 = vld [vmem:[%s495 + $0x1588] sm:$0xff]
        %v2782 = vld [vmem:[%s495 + $0x1590] sm:$0xff]
        %v2783 = vld [vmem:[%s495 + $0x1598] sm:$0xff]
        %v2784 = vld [vmem:[%s495 + $0x15a0] sm:$0xff]
        %v2785 = vld [vmem:[%s495 + $0x15a8] sm:$0xff]
        %v2786 = vld [vmem:[%s495 + $0x15b0] sm:$0xff]
        %v2787 = vld [vmem:[%s495 + $0x15b8] sm:$0xff]
        %v2788 = vld [vmem:[%s495 + $0x15c0] sm:$0xff]
        %v2789 = vld [vmem:[%s495 + $0x15c8] sm:$0xff]
        %v2790 = vld [vmem:[%s495 + $0x15d0] sm:$0xff]
        %v2791 = vld [vmem:[%s495 + $0x15d8] sm:$0xff]
        %v2792 = vld [vmem:[%s495 + $0x15e0] sm:$0xff]
        %v2793 = vld [vmem:[%s495 + $0x15e8] sm:$0xff]
        %v2794 = vld [vmem:[%s495 + $0x15f0] sm:$0xff]
        %v2795 = vld [vmem:[%s495 + $0x15f8] sm:$0xff]
        %v2796 = vld [vmem:[%s495 + $0x1600] sm:$0xff]
        %v2797 = vld [vmem:[%s495 + $0x1608] sm:$0xff]
        %v2798 = vld [vmem:[%s495 + $0x1610] sm:$0xff]
        %v2799 = vld [vmem:[%s495 + $0x1618] sm:$0xff]
        %v2800 = vld [vmem:[%s495 + $0x1620] sm:$0xff]
        %v2801 = vld [vmem:[%s495 + $0x1628] sm:$0xff]
        %v2802 = vld [vmem:[%s495 + $0x1630] sm:$0xff]
        %v2803 = vld [vmem:[%s495 + $0x1638] sm:$0xff]
        %v2804 = vld [vmem:[%s495 + $0x1640] sm:$0xff]
        %v2805 = vld [vmem:[%s495 + $0x1648] sm:$0xff]
        %v2806 = vld [vmem:[%s495 + $0x1650] sm:$0xff]
        %v2807 = vld [vmem:[%s495 + $0x1658] sm:$0xff]
        %v2808 = vld [vmem:[%s495 + $0x1660] sm:$0xff]
        %v2809 = vld [vmem:[%s495 + $0x1668] sm:$0xff]
        %v2810 = vld [vmem:[%s495 + $0x1670] sm:$0xff]
        %v2811 = vld [vmem:[%s495 + $0x1678] sm:$0xff]
        %v2812 = vld [vmem:[%s495 + $0x1680] sm:$0xff]
        %v2813 = vld [vmem:[%s495 + $0x1688] sm:$0xff]
        %v2814 = vld [vmem:[%s495 + $0x1690] sm:$0xff]
        %v2815 = vld [vmem:[%s495 + $0x1698] sm:$0xff]
        %v2816 = vld [vmem:[%s495 + $0x16a0] sm:$0xff]
        %v2817 = vld [vmem:[%s495 + $0x16a8] sm:$0xff]
        %v2818 = vld [vmem:[%s495 + $0x16b0] sm:$0xff]
        %v2819 = vld [vmem:[%s495 + $0x16b8] sm:$0xff]
        %v2820 = vld [vmem:[%s495 + $0x16c0] sm:$0xff]
        %v2821 = vld [vmem:[%s495 + $0x16c8] sm:$0xff]
        %v2822 = vld [vmem:[%s495 + $0x16d0] sm:$0xff]
        %v2823 = vld [vmem:[%s495 + $0x16d8] sm:$0xff]
        %v2824 = vld [vmem:[%s495 + $0x16e0] sm:$0xff]
        %v2825 = vld [vmem:[%s495 + $0x16e8] sm:$0xff]
        %v2826 = vld [vmem:[%s495 + $0x16f0] sm:$0xff]
        %v2827 = vld [vmem:[%s495 + $0x16f8] sm:$0xff]
        %v2828 = vld [vmem:[%s495 + $0x1700] sm:$0xff]
        %v2829 = vld [vmem:[%s495 + $0x1708] sm:$0xff]
        %v2830 = vld [vmem:[%s495 + $0x1710] sm:$0xff]
        %v2831 = vld [vmem:[%s495 + $0x1718] sm:$0xff]
        %v2832 = vld [vmem:[%s495 + $0x1720] sm:$0xff]
        %v2833 = vld [vmem:[%s495 + $0x1728] sm:$0xff]
        %v2834 = vld [vmem:[%s495 + $0x1730] sm:$0xff]
        %v2835 = vld [vmem:[%s495 + $0x1738] sm:$0xff]
        %v2836 = vld [vmem:[%s495 + $0x1740] sm:$0xff]
        %v2837 = vld [vmem:[%s495 + $0x1748] sm:$0xff]
        %v2838 = vld [vmem:[%s495 + $0x1750] sm:$0xff]
        %v2839 = vld [vmem:[%s495 + $0x1758] sm:$0xff]
        %v2840 = vld [vmem:[%s495 + $0x1760] sm:$0xff]
        %v2841 = vld [vmem:[%s495 + $0x1768] sm:$0xff]
        %v2842 = vld [vmem:[%s495 + $0x1770] sm:$0xff]
        %v2843 = vld [vmem:[%s495 + $0x1778] sm:$0xff]
        %v2844 = vld [vmem:[%s495 + $0x1780] sm:$0xff]
        %v2845 = vld [vmem:[%s495 + $0x1788] sm:$0xff]
        %v2846 = vld [vmem:[%s495 + $0x1790] sm:$0xff]
        %v2847 = vld [vmem:[%s495 + $0x1798] sm:$0xff]
        %v2848 = vld [vmem:[%s495 + $0x17a0] sm:$0xff]
        %v2849 = vld [vmem:[%s495 + $0x17a8] sm:$0xff]
        %v2850 = vld [vmem:[%s495 + $0x17b0] sm:$0xff]
        %v2851 = vld [vmem:[%s495 + $0x17b8] sm:$0xff]
        %v2852 = vld [vmem:[%s495 + $0x17c0] sm:$0xff]
        %v2853 = vld [vmem:[%s495 + $0x17c8] sm:$0xff]
        %v2854 = vld [vmem:[%s495 + $0x17d0] sm:$0xff]
        %v2855 = vld [vmem:[%s495 + $0x17d8] sm:$0xff]
        %v2856 = vld [vmem:[%s495 + $0x17e0] sm:$0xff]
        %v2857 = vld [vmem:[%s495 + $0x17e8] sm:$0xff]
        %v2858 = vld [vmem:[%s495 + $0x17f0] sm:$0xff]
        %v2859 = vld [vmem:[%s495 + $0x17f8] sm:$0xff]
        %v2862 = vlaneseq
        %v2863 = vshrl.u32 %v2862, 7
        %v2864 = vsub.s32 0, %v2863
        %v2865 = vrot.slane %v2082, %v2864
        %v2866 = vlaneseq
        %v2867 = vshrl.u32 %v2866, 7
        %v2868 = vsub.s32 1, %v2867
        %v2869 = vrot.slane %v2082, %v2868
        %v2870 = vlaneseq
        %v2871 = vshrl.u32 %v2870, 7
        %v2872 = vsub.s32 2, %v2871
        %v2873 = vrot.slane %v2082, %v2872
        %v2874 = vlaneseq
        %v2875 = vshrl.u32 %v2874, 7
        %v2876 = vsub.s32 3, %v2875
        %v2877 = vrot.slane %v2082, %v2876
        %v2878 = vlaneseq
        %v2879 = vshrl.u32 %v2878, 7
        %v2880 = vsub.s32 4, %v2879
        %v2881 = vrot.slane %v2082, %v2880
        %v2882 = vlaneseq
        %v2883 = vshrl.u32 %v2882, 7
        %v2884 = vsub.s32 5, %v2883
        %v2885 = vrot.slane %v2082, %v2884
        %v2886 = vlaneseq
        %v2887 = vshrl.u32 %v2886, 7
        %v2888 = vsub.s32 6, %v2887
        %v2889 = vrot.slane %v2082, %v2888
        %v2890 = vlaneseq
        %v2891 = vshrl.u32 %v2890, 7
        %v2892 = vsub.s32 7, %v2891
        %v2893 = vrot.slane %v2082, %v2892
        %v2894 = vlaneseq
        %v2895 = vshrl.u32 %v2894, 7
        %v2896 = vsub.s32 0, %v2895
        %v2897 = vrot.slane %v2083, %v2896
        %v2898 = vlaneseq
        %v2899 = vshrl.u32 %v2898, 7
        %v2900 = vsub.s32 1, %v2899
        %v2901 = vrot.slane %v2083, %v2900
        %v2902 = vlaneseq
        %v2903 = vshrl.u32 %v2902, 7
        %v2904 = vsub.s32 2, %v2903
        %v2905 = vrot.slane %v2083, %v2904
        %v2906 = vlaneseq
        %v2907 = vshrl.u32 %v2906, 7
        %v2908 = vsub.s32 3, %v2907
        %v2909 = vrot.slane %v2083, %v2908
        %v3690 = vunpack.c.l.b16 %v2092
        %v3691 = vunpack.c.h.b16 %v2092
        %v3692 = vunpack.c.l.b16 %v2093
        %v3693 = vunpack.c.h.b16 %v2093
        %v3694 = vunpack.c.l.b16 %v2094
        %v3695 = vunpack.c.h.b16 %v2094
        %v3696 = vunpack.c.l.b16 %v2095
        %v3697 = vunpack.c.h.b16 %v2095
        %v3698 = vunpack.c.l.b16 %v2096
        %v3699 = vunpack.c.h.b16 %v2096
        %v3700 = vunpack.c.l.b16 %v2097
        %v3701 = vunpack.c.h.b16 %v2097
        %v3702 = vunpack.c.l.b16 %v2098
        %v3703 = vunpack.c.h.b16 %v2098
        %v3704 = vunpack.c.l.b16 %v2099
        %v3705 = vunpack.c.h.b16 %v2099
        %v3706 = vunpack.c.l.b16 %v2100
        %v3707 = vunpack.c.h.b16 %v2100
        %v3708 = vunpack.c.l.b16 %v2101
        %v3709 = vunpack.c.h.b16 %v2101
        %v3710 = vunpack.c.l.b16 %v2102
        %v3711 = vunpack.c.h.b16 %v2102
        %v3712 = vunpack.c.l.b16 %v2103
        %v3713 = vunpack.c.h.b16 %v2103
        %v3714 = vunpack.c.l.b16 %v2104
        %v3715 = vunpack.c.h.b16 %v2104
        %v3716 = vunpack.c.l.b16 %v2105
        %v3717 = vunpack.c.h.b16 %v2105
        %v3718 = vunpack.c.l.b16 %v2106
        %v3719 = vunpack.c.h.b16 %v2106
        %v3720 = vunpack.c.l.b16 %v2107
        %v3721 = vunpack.c.h.b16 %v2107
        %v3722 = vunpack.c.l.b16 %v2108
        %v3723 = vunpack.c.h.b16 %v2108
        %v3724 = vunpack.c.l.b16 %v2109
        %v3725 = vunpack.c.h.b16 %v2109
        %v3726 = vunpack.c.l.b16 %v2110
        %v3727 = vunpack.c.h.b16 %v2110
        %v3728 = vunpack.c.l.b16 %v2111
        %v3729 = vunpack.c.h.b16 %v2111
        %v3730 = vunpack.c.l.b16 %v2112
        %v3731 = vunpack.c.h.b16 %v2112
        %v3732 = vunpack.c.l.b16 %v2113
        %v3733 = vunpack.c.h.b16 %v2113
        %v3734 = vunpack.c.l.b16 %v2114
        %v3735 = vunpack.c.h.b16 %v2114
        %v3736 = vunpack.c.l.b16 %v2115
        %v3737 = vunpack.c.h.b16 %v2115
        %v3738 = vunpack.c.l.b16 %v2116
        %v3739 = vunpack.c.h.b16 %v2116
        %v3740 = vunpack.c.l.b16 %v2117
        %v3741 = vunpack.c.h.b16 %v2117
        %v3742 = vunpack.c.l.b16 %v2118
        %v3743 = vunpack.c.h.b16 %v2118
        %v3744 = vunpack.c.l.b16 %v2119
        %v3745 = vunpack.c.h.b16 %v2119
        %v3746 = vunpack.c.l.b16 %v2120
        %v3747 = vunpack.c.h.b16 %v2120
        %v3748 = vunpack.c.l.b16 %v2121
        %v3749 = vunpack.c.h.b16 %v2121
        %v3750 = vunpack.c.l.b16 %v2122
        %v3751 = vunpack.c.h.b16 %v2122
        %v3752 = vunpack.c.l.b16 %v2123
        %v3753 = vunpack.c.h.b16 %v2123
        %v3754 = vunpack.c.l.b16 %v2124
        %v3755 = vunpack.c.h.b16 %v2124
        %v3756 = vunpack.c.l.b16 %v2125
        %v3757 = vunpack.c.h.b16 %v2125
        %v3758 = vunpack.c.l.b16 %v2126
        %v3759 = vunpack.c.h.b16 %v2126
        %v3760 = vunpack.c.l.b16 %v2127
        %v3761 = vunpack.c.h.b16 %v2127
        %v3762 = vunpack.c.l.b16 %v2128
        %v3763 = vunpack.c.h.b16 %v2128
        %v3764 = vunpack.c.l.b16 %v2129
        %v3765 = vunpack.c.h.b16 %v2129
        %v3766 = vunpack.c.l.b16 %v2130
        %v3767 = vunpack.c.h.b16 %v2130
        %v3768 = vunpack.c.l.b16 %v2131
        %v3769 = vunpack.c.h.b16 %v2131
        %v3770 = vunpack.c.l.b16 %v2132
        %v3771 = vunpack.c.h.b16 %v2132
        %v3772 = vunpack.c.l.b16 %v2133
        %v3773 = vunpack.c.h.b16 %v2133
        %v3774 = vunpack.c.l.b16 %v2134
        %v3775 = vunpack.c.h.b16 %v2134
        %v3776 = vunpack.c.l.b16 %v2135
        %v3777 = vunpack.c.h.b16 %v2135
        %v3778 = vunpack.c.l.b16 %v2136
        %v3779 = vunpack.c.h.b16 %v2136
        %v3780 = vunpack.c.l.b16 %v2137
        %v3781 = vunpack.c.h.b16 %v2137
        %v3782 = vunpack.c.l.b16 %v2138
        %v3783 = vunpack.c.h.b16 %v2138
        %v3784 = vunpack.c.l.b16 %v2139
        %v3785 = vunpack.c.h.b16 %v2139
        %v3786 = vunpack.c.l.b16 %v2140
        %v3787 = vunpack.c.h.b16 %v2140
        %v3788 = vunpack.c.l.b16 %v2141
        %v3789 = vunpack.c.h.b16 %v2141
        %v3790 = vunpack.c.l.b16 %v2142
        %v3791 = vunpack.c.h.b16 %v2142
        %v3792 = vunpack.c.l.b16 %v2143
        %v3793 = vunpack.c.h.b16 %v2143
        %v3794 = vunpack.c.l.b16 %v2144
        %v3795 = vunpack.c.h.b16 %v2144
        %v3796 = vunpack.c.l.b16 %v2145
        %v3797 = vunpack.c.h.b16 %v2145
        %v3798 = vunpack.c.l.b16 %v2146
        %v3799 = vunpack.c.h.b16 %v2146
        %v3800 = vunpack.c.l.b16 %v2147
        %v3801 = vunpack.c.h.b16 %v2147
        %v3802 = vunpack.c.l.b16 %v2148
        %v3803 = vunpack.c.h.b16 %v2148
        %v3804 = vunpack.c.l.b16 %v2149
        %v3805 = vunpack.c.h.b16 %v2149
        %v3806 = vunpack.c.l.b16 %v2150
        %v3807 = vunpack.c.h.b16 %v2150
        %v3808 = vunpack.c.l.b16 %v2151
        %v3809 = vunpack.c.h.b16 %v2151
        %v3810 = vunpack.c.l.b16 %v2152
        %v3811 = vunpack.c.h.b16 %v2152
        %v3812 = vunpack.c.l.b16 %v2153
        %v3813 = vunpack.c.h.b16 %v2153
        %v3814 = vunpack.c.l.b16 %v2154
        %v3815 = vunpack.c.h.b16 %v2154
        %v3816 = vunpack.c.l.b16 %v2155
        %v3817 = vunpack.c.h.b16 %v2155
        %v3818 = vunpack.c.l.b16 %v2156
        %v3819 = vunpack.c.h.b16 %v2156
        %v3820 = vunpack.c.l.b16 %v2157
        %v3821 = vunpack.c.h.b16 %v2157
        %v3822 = vunpack.c.l.b16 %v2158
        %v3823 = vunpack.c.h.b16 %v2158
        %v3824 = vunpack.c.l.b16 %v2159
        %v3825 = vunpack.c.h.b16 %v2159
        %v3826 = vunpack.c.l.b16 %v2160
        %v3827 = vunpack.c.h.b16 %v2160
        %v3828 = vunpack.c.l.b16 %v2161
        %v3829 = vunpack.c.h.b16 %v2161
        %v3830 = vunpack.c.l.b16 %v2162
        %v3831 = vunpack.c.h.b16 %v2162
        %v3832 = vunpack.c.l.b16 %v2163
        %v3833 = vunpack.c.h.b16 %v2163
        %v3834 = vunpack.c.l.b16 %v2164
        %v3835 = vunpack.c.h.b16 %v2164
        %v3836 = vunpack.c.l.b16 %v2165
        %v3837 = vunpack.c.h.b16 %v2165
        %v3838 = vunpack.c.l.b16 %v2166
        %v3839 = vunpack.c.h.b16 %v2166
        %v3840 = vunpack.c.l.b16 %v2167
        %v3841 = vunpack.c.h.b16 %v2167
        %v3842 = vunpack.c.l.b16 %v2168
        %v3843 = vunpack.c.h.b16 %v2168
        %v3844 = vunpack.c.l.b16 %v2169
        %v3845 = vunpack.c.h.b16 %v2169
        %v3846 = vunpack.c.l.b16 %v2170
        %v3847 = vunpack.c.h.b16 %v2170
        %v3848 = vunpack.c.l.b16 %v2171
        %v3849 = vunpack.c.h.b16 %v2171
        %v3850 = vunpack.c.l.b16 %v2172
        %v3851 = vunpack.c.h.b16 %v2172
        %v3852 = vunpack.c.l.b16 %v2173
        %v3853 = vunpack.c.h.b16 %v2173
        %v3854 = vunpack.c.l.b16 %v2174
        %v3855 = vunpack.c.h.b16 %v2174
        %v3856 = vunpack.c.l.b16 %v2175
        %v3857 = vunpack.c.h.b16 %v2175
        %v3858 = vunpack.c.l.b16 %v2176
        %v3859 = vunpack.c.h.b16 %v2176
        %v3860 = vunpack.c.l.b16 %v2177
        %v3861 = vunpack.c.h.b16 %v2177
        %v3862 = vunpack.c.l.b16 %v2178
        %v3863 = vunpack.c.h.b16 %v2178
        %v3864 = vunpack.c.l.b16 %v2179
        %v3865 = vunpack.c.h.b16 %v2179
        %v3866 = vunpack.c.l.b16 %v2180
        %v3867 = vunpack.c.h.b16 %v2180
        %v3868 = vunpack.c.l.b16 %v2181
        %v3869 = vunpack.c.h.b16 %v2181
        %v3870 = vunpack.c.l.b16 %v2182
        %v3871 = vunpack.c.h.b16 %v2182
        %v3872 = vunpack.c.l.b16 %v2183
        %v3873 = vunpack.c.h.b16 %v2183
        %v3874 = vunpack.c.l.b16 %v2184
        %v3875 = vunpack.c.h.b16 %v2184
        %v3876 = vunpack.c.l.b16 %v2185
        %v3877 = vunpack.c.h.b16 %v2185
        %v3878 = vunpack.c.l.b16 %v2186
        %v3879 = vunpack.c.h.b16 %v2186
        %v3880 = vunpack.c.l.b16 %v2187
        %v3881 = vunpack.c.h.b16 %v2187
        %v3882 = vunpack.c.l.b16 %v2188
        %v3883 = vunpack.c.h.b16 %v2188
        %v3884 = vunpack.c.l.b16 %v2189
        %v3885 = vunpack.c.h.b16 %v2189
        %v3886 = vunpack.c.l.b16 %v2190
        %v3887 = vunpack.c.h.b16 %v2190
        %v3888 = vunpack.c.l.b16 %v2191
        %v3889 = vunpack.c.h.b16 %v2191
        %v3890 = vunpack.c.l.b16 %v2192
        %v3891 = vunpack.c.h.b16 %v2192
        %v3892 = vunpack.c.l.b16 %v2193
        %v3893 = vunpack.c.h.b16 %v2193
        %v3894 = vunpack.c.l.b16 %v2194
        %v3895 = vunpack.c.h.b16 %v2194
        %v3896 = vunpack.c.l.b16 %v2195
        %v3897 = vunpack.c.h.b16 %v2195
        %v3898 = vunpack.c.l.b16 %v2196
        %v3899 = vunpack.c.h.b16 %v2196
        %v3900 = vunpack.c.l.b16 %v2197
        %v3901 = vunpack.c.h.b16 %v2197
        %v3902 = vunpack.c.l.b16 %v2198
        %v3903 = vunpack.c.h.b16 %v2198
        %v3904 = vunpack.c.l.b16 %v2199
        %v3905 = vunpack.c.h.b16 %v2199
        %v3906 = vunpack.c.l.b16 %v2200
        %v3907 = vunpack.c.h.b16 %v2200
        %v3908 = vunpack.c.l.b16 %v2201
        %v3909 = vunpack.c.h.b16 %v2201
        %v3910 = vunpack.c.l.b16 %v2202
        %v3911 = vunpack.c.h.b16 %v2202
        %v3912 = vunpack.c.l.b16 %v2203
        %v3913 = vunpack.c.h.b16 %v2203
        %v3914 = vunpack.c.l.b16 %v2204
        %v3915 = vunpack.c.h.b16 %v2204
        %v3916 = vunpack.c.l.b16 %v2205
        %v3917 = vunpack.c.h.b16 %v2205
        %v3918 = vunpack.c.l.b16 %v2206
        %v3919 = vunpack.c.h.b16 %v2206
        %v3920 = vunpack.c.l.b16 %v2207
        %v3921 = vunpack.c.h.b16 %v2207
        %v3922 = vunpack.c.l.b16 %v2208
        %v3923 = vunpack.c.h.b16 %v2208
        %v3924 = vunpack.c.l.b16 %v2209
        %v3925 = vunpack.c.h.b16 %v2209
        %v3926 = vunpack.c.l.b16 %v2210
        %v3927 = vunpack.c.h.b16 %v2210
        %v3928 = vunpack.c.l.b16 %v2211
        %v3929 = vunpack.c.h.b16 %v2211
        %v3930 = vunpack.c.l.b16 %v2212
        %v3931 = vunpack.c.h.b16 %v2212
        %v3932 = vunpack.c.l.b16 %v2213
        %v3933 = vunpack.c.h.b16 %v2213
        %v3934 = vunpack.c.l.b16 %v2214
        %v3935 = vunpack.c.h.b16 %v2214
        %v3936 = vunpack.c.l.b16 %v2215
        %v3937 = vunpack.c.h.b16 %v2215
        %v3938 = vunpack.c.l.b16 %v2216
        %v3939 = vunpack.c.h.b16 %v2216
        %v3940 = vunpack.c.l.b16 %v2217
        %v3941 = vunpack.c.h.b16 %v2217
        %v3942 = vunpack.c.l.b16 %v2218
        %v3943 = vunpack.c.h.b16 %v2218
        %v3944 = vunpack.c.l.b16 %v2219
        %v3945 = vunpack.c.h.b16 %v2219
        %v3946 = vunpack.c.l.b16 %v2220
        %v3947 = vunpack.c.h.b16 %v2220
        %v3948 = vunpack.c.l.b16 %v2221
        %v3949 = vunpack.c.h.b16 %v2221
        %v3950 = vunpack.c.l.b16 %v2222
        %v3951 = vunpack.c.h.b16 %v2222
        %v3952 = vunpack.c.l.b16 %v2223
        %v3953 = vunpack.c.h.b16 %v2223
        %v3954 = vunpack.c.l.b16 %v2224
        %v3955 = vunpack.c.h.b16 %v2224
        %v3956 = vunpack.c.l.b16 %v2225
        %v3957 = vunpack.c.h.b16 %v2225
        %v3958 = vunpack.c.l.b16 %v2226
        %v3959 = vunpack.c.h.b16 %v2226
        %v3960 = vunpack.c.l.b16 %v2227
        %v3961 = vunpack.c.h.b16 %v2227
        %v3962 = vunpack.c.l.b16 %v2228
        %v3963 = vunpack.c.h.b16 %v2228
        %v3964 = vunpack.c.l.b16 %v2229
        %v3965 = vunpack.c.h.b16 %v2229
        %v3966 = vunpack.c.l.b16 %v2230
        %v3967 = vunpack.c.h.b16 %v2230
        %v3968 = vunpack.c.l.b16 %v2231
        %v3969 = vunpack.c.h.b16 %v2231
        %v3970 = vunpack.c.l.b16 %v2232
        %v3971 = vunpack.c.h.b16 %v2232
        %v3972 = vunpack.c.l.b16 %v2233
        %v3973 = vunpack.c.h.b16 %v2233
        %v3974 = vunpack.c.l.b16 %v2234
        %v3975 = vunpack.c.h.b16 %v2234
        %v3976 = vunpack.c.l.b16 %v2235
        %v3977 = vunpack.c.h.b16 %v2235
        %v3978 = vunpack.c.l.b16 %v2236
        %v3979 = vunpack.c.h.b16 %v2236
        %v3980 = vunpack.c.l.b16 %v2237
        %v3981 = vunpack.c.h.b16 %v2237
        %v3982 = vunpack.c.l.b16 %v2238
        %v3983 = vunpack.c.h.b16 %v2238
        %v3984 = vunpack.c.l.b16 %v2239
        %v3985 = vunpack.c.h.b16 %v2239
        %v3986 = vunpack.c.l.b16 %v2240
        %v3987 = vunpack.c.h.b16 %v2240
        %v3988 = vunpack.c.l.b16 %v2241
        %v3989 = vunpack.c.h.b16 %v2241
        %v3990 = vunpack.c.l.b16 %v2242
        %v3991 = vunpack.c.h.b16 %v2242
        %v3992 = vunpack.c.l.b16 %v2243
        %v3993 = vunpack.c.h.b16 %v2243
        %v3994 = vunpack.c.l.b16 %v2244
        %v3995 = vunpack.c.h.b16 %v2244
        %v3996 = vunpack.c.l.b16 %v2245
        %v3997 = vunpack.c.h.b16 %v2245
        %v3998 = vunpack.c.l.b16 %v2246
        %v3999 = vunpack.c.h.b16 %v2246
        %v4000 = vunpack.c.l.b16 %v2247
        %v4001 = vunpack.c.h.b16 %v2247
        %v4002 = vunpack.c.l.b16 %v2248
        %v4003 = vunpack.c.h.b16 %v2248
        %v4004 = vunpack.c.l.b16 %v2249
        %v4005 = vunpack.c.h.b16 %v2249
        %v4006 = vunpack.c.l.b16 %v2250
        %v4007 = vunpack.c.h.b16 %v2250
        %v4008 = vunpack.c.l.b16 %v2251
        %v4009 = vunpack.c.h.b16 %v2251
        %v4010 = vunpack.c.l.b16 %v2252
        %v4011 = vunpack.c.h.b16 %v2252
        %v4012 = vunpack.c.l.b16 %v2253
        %v4013 = vunpack.c.h.b16 %v2253
        %v4014 = vunpack.c.l.b16 %v2254
        %v4015 = vunpack.c.h.b16 %v2254
        %v4016 = vunpack.c.l.b16 %v2255
        %v4017 = vunpack.c.h.b16 %v2255
        %v4018 = vunpack.c.l.b16 %v2256
        %v4019 = vunpack.c.h.b16 %v2256
        %v4020 = vunpack.c.l.b16 %v2257
        %v4021 = vunpack.c.h.b16 %v2257
        %v4022 = vunpack.c.l.b16 %v2258
        %v4023 = vunpack.c.h.b16 %v2258
        %v4024 = vunpack.c.l.b16 %v2259
        %v4025 = vunpack.c.h.b16 %v2259
        %v4026 = vunpack.c.l.b16 %v2260
        %v4027 = vunpack.c.h.b16 %v2260
        %v4028 = vunpack.c.l.b16 %v2261
        %v4029 = vunpack.c.h.b16 %v2261
        %v4030 = vunpack.c.l.b16 %v2262
        %v4031 = vunpack.c.h.b16 %v2262
        %v4032 = vunpack.c.l.b16 %v2263
        %v4033 = vunpack.c.h.b16 %v2263
        %v4034 = vunpack.c.l.b16 %v2264
        %v4035 = vunpack.c.h.b16 %v2264
        %v4036 = vunpack.c.l.b16 %v2265
        %v4037 = vunpack.c.h.b16 %v2265
        %v4038 = vunpack.c.l.b16 %v2266
        %v4039 = vunpack.c.h.b16 %v2266
        %v4040 = vunpack.c.l.b16 %v2267
        %v4041 = vunpack.c.h.b16 %v2267
        %v4042 = vunpack.c.l.b16 %v2268
        %v4043 = vunpack.c.h.b16 %v2268
        %v4044 = vunpack.c.l.b16 %v2269
        %v4045 = vunpack.c.h.b16 %v2269
        %v4046 = vunpack.c.l.b16 %v2270
        %v4047 = vunpack.c.h.b16 %v2270
        %v4048 = vunpack.c.l.b16 %v2271
        %v4049 = vunpack.c.h.b16 %v2271
        %v4050 = vunpack.c.l.b16 %v2272
        %v4051 = vunpack.c.h.b16 %v2272
        %v4052 = vunpack.c.l.b16 %v2273
        %v4053 = vunpack.c.h.b16 %v2273
        %v4054 = vunpack.c.l.b16 %v2274
        %v4055 = vunpack.c.h.b16 %v2274
        %v4056 = vunpack.c.l.b16 %v2275
        %v4057 = vunpack.c.h.b16 %v2275
        %v4058 = vunpack.c.l.b16 %v2276
        %v4059 = vunpack.c.h.b16 %v2276
        %v4060 = vunpack.c.l.b16 %v2277
        %v4061 = vunpack.c.h.b16 %v2277
        %v4062 = vunpack.c.l.b16 %v2278
        %v4063 = vunpack.c.h.b16 %v2278
        %v4064 = vunpack.c.l.b16 %v2279
        %v4065 = vunpack.c.h.b16 %v2279
        %v4066 = vunpack.c.l.b16 %v2280
        %v4067 = vunpack.c.h.b16 %v2280
        %v4068 = vunpack.c.l.b16 %v2281
        %v4069 = vunpack.c.h.b16 %v2281
        %v4070 = vunpack.c.l.b16 %v2282
        %v4071 = vunpack.c.h.b16 %v2282
        %v4072 = vunpack.c.l.b16 %v2283
        %v4073 = vunpack.c.h.b16 %v2283
        %v4074 = vunpack.c.l.b16 %v2284
        %v4075 = vunpack.c.h.b16 %v2284
        %v4076 = vunpack.c.l.b16 %v2285
        %v4077 = vunpack.c.h.b16 %v2285
        %v4078 = vunpack.c.l.b16 %v2286
        %v4079 = vunpack.c.h.b16 %v2286
        %v4080 = vunpack.c.l.b16 %v2287
        %v4081 = vunpack.c.h.b16 %v2287
        %v4082 = vunpack.c.l.b16 %v2288
        %v4083 = vunpack.c.h.b16 %v2288
        %v4084 = vunpack.c.l.b16 %v2289
        %v4085 = vunpack.c.h.b16 %v2289
        %v4086 = vunpack.c.l.b16 %v2290
        %v4087 = vunpack.c.h.b16 %v2290
        %v4088 = vunpack.c.l.b16 %v2291
        %v4089 = vunpack.c.h.b16 %v2291
        %v4090 = vunpack.c.l.b16 %v2292
        %v4091 = vunpack.c.h.b16 %v2292
        %v4092 = vunpack.c.l.b16 %v2293
        %v4093 = vunpack.c.h.b16 %v2293
        %v4094 = vunpack.c.l.b16 %v2294
        %v4095 = vunpack.c.h.b16 %v2294
        %v4096 = vunpack.c.l.b16 %v2295
        %v4097 = vunpack.c.h.b16 %v2295
        %v4098 = vunpack.c.l.b16 %v2296
        %v4099 = vunpack.c.h.b16 %v2296
        %v4100 = vunpack.c.l.b16 %v2297
        %v4101 = vunpack.c.h.b16 %v2297
        %v4102 = vunpack.c.l.b16 %v2298
        %v4103 = vunpack.c.h.b16 %v2298
        %v4104 = vunpack.c.l.b16 %v2299
        %v4105 = vunpack.c.h.b16 %v2299
        %v4106 = vunpack.c.l.b16 %v2300
        %v4107 = vunpack.c.h.b16 %v2300
        %v4108 = vunpack.c.l.b16 %v2301
        %v4109 = vunpack.c.h.b16 %v2301
        %v4110 = vunpack.c.l.b16 %v2302
        %v4111 = vunpack.c.h.b16 %v2302
        %v4112 = vunpack.c.l.b16 %v2303
        %v4113 = vunpack.c.h.b16 %v2303
        %v4114 = vunpack.c.l.b16 %v2304
        %v4115 = vunpack.c.h.b16 %v2304
        %v4116 = vunpack.c.l.b16 %v2305
        %v4117 = vunpack.c.h.b16 %v2305
        %v4118 = vunpack.c.l.b16 %v2306
        %v4119 = vunpack.c.h.b16 %v2306
        %v4120 = vunpack.c.l.b16 %v2307
        %v4121 = vunpack.c.h.b16 %v2307
        %v4122 = vunpack.c.l.b16 %v2308
        %v4123 = vunpack.c.h.b16 %v2308
        %v4124 = vunpack.c.l.b16 %v2309
        %v4125 = vunpack.c.h.b16 %v2309
        %v4126 = vunpack.c.l.b16 %v2310
        %v4127 = vunpack.c.h.b16 %v2310
        %v4128 = vunpack.c.l.b16 %v2311
        %v4129 = vunpack.c.h.b16 %v2311
        %v4130 = vunpack.c.l.b16 %v2312
        %v4131 = vunpack.c.h.b16 %v2312
        %v4132 = vunpack.c.l.b16 %v2313
        %v4133 = vunpack.c.h.b16 %v2313
        %v4134 = vunpack.c.l.b16 %v2314
        %v4135 = vunpack.c.h.b16 %v2314
        %v4136 = vunpack.c.l.b16 %v2315
        %v4137 = vunpack.c.h.b16 %v2315
        %v4138 = vunpack.c.l.b16 %v2316
        %v4139 = vunpack.c.h.b16 %v2316
        %v4140 = vunpack.c.l.b16 %v2317
        %v4141 = vunpack.c.h.b16 %v2317
        %v4142 = vunpack.c.l.b16 %v2318
        %v4143 = vunpack.c.h.b16 %v2318
        %v4144 = vunpack.c.l.b16 %v2319
        %v4145 = vunpack.c.h.b16 %v2319
        %v4146 = vunpack.c.l.b16 %v2320
        %v4147 = vunpack.c.h.b16 %v2320
        %v4148 = vunpack.c.l.b16 %v2321
        %v4149 = vunpack.c.h.b16 %v2321
        %v4150 = vunpack.c.l.b16 %v2322
        %v4151 = vunpack.c.h.b16 %v2322
        %v4152 = vunpack.c.l.b16 %v2323
        %v4153 = vunpack.c.h.b16 %v2323
        %v4154 = vunpack.c.l.b16 %v2324
        %v4155 = vunpack.c.h.b16 %v2324
        %v4156 = vunpack.c.l.b16 %v2325
        %v4157 = vunpack.c.h.b16 %v2325
        %v4158 = vunpack.c.l.b16 %v2326
        %v4159 = vunpack.c.h.b16 %v2326
        %v4160 = vunpack.c.l.b16 %v2327
        %v4161 = vunpack.c.h.b16 %v2327
        %v4162 = vunpack.c.l.b16 %v2328
        %v4163 = vunpack.c.h.b16 %v2328
        %v4164 = vunpack.c.l.b16 %v2329
        %v4165 = vunpack.c.h.b16 %v2329
        %v4166 = vunpack.c.l.b16 %v2330
        %v4167 = vunpack.c.h.b16 %v2330
        %v4168 = vunpack.c.l.b16 %v2331
        %v4169 = vunpack.c.h.b16 %v2331
        %v4170 = vunpack.c.l.b16 %v2332
        %v4171 = vunpack.c.h.b16 %v2332
        %v4172 = vunpack.c.l.b16 %v2333
        %v4173 = vunpack.c.h.b16 %v2333
        %v4174 = vunpack.c.l.b16 %v2334
        %v4175 = vunpack.c.h.b16 %v2334
        %v4176 = vunpack.c.l.b16 %v2335
        %v4177 = vunpack.c.h.b16 %v2335
        %v4178 = vunpack.c.l.b16 %v2336
        %v4179 = vunpack.c.h.b16 %v2336
        %v4180 = vunpack.c.l.b16 %v2337
        %v4181 = vunpack.c.h.b16 %v2337
        %v4182 = vunpack.c.l.b16 %v2338
        %v4183 = vunpack.c.h.b16 %v2338
        %v4184 = vunpack.c.l.b16 %v2339
        %v4185 = vunpack.c.h.b16 %v2339
        %v4186 = vunpack.c.l.b16 %v2340
        %v4187 = vunpack.c.h.b16 %v2340
        %v4188 = vunpack.c.l.b16 %v2341
        %v4189 = vunpack.c.h.b16 %v2341
        %v4190 = vunpack.c.l.b16 %v2342
        %v4191 = vunpack.c.h.b16 %v2342
        %v4192 = vunpack.c.l.b16 %v2343
        %v4193 = vunpack.c.h.b16 %v2343
        %v4194 = vunpack.c.l.b16 %v2344
        %v4195 = vunpack.c.h.b16 %v2344
        %v4196 = vunpack.c.l.b16 %v2345
        %v4197 = vunpack.c.h.b16 %v2345
        %v4198 = vunpack.c.l.b16 %v2346
        %v4199 = vunpack.c.h.b16 %v2346
        %v4200 = vunpack.c.l.b16 %v2347
        %v4201 = vunpack.c.h.b16 %v2347
        %v4202 = vunpack.c.l.b16 %v2348
        %v4203 = vunpack.c.h.b16 %v2348
        %v4204 = vunpack.c.l.b16 %v2349
        %v4205 = vunpack.c.h.b16 %v2349
        %v4206 = vunpack.c.l.b16 %v2350
        %v4207 = vunpack.c.h.b16 %v2350
        %v4208 = vunpack.c.l.b16 %v2351
        %v4209 = vunpack.c.h.b16 %v2351
        %v4210 = vunpack.c.l.b16 %v2352
        %v4211 = vunpack.c.h.b16 %v2352
        %v4212 = vunpack.c.l.b16 %v2353
        %v4213 = vunpack.c.h.b16 %v2353
        %v4214 = vunpack.c.l.b16 %v2354
        %v4215 = vunpack.c.h.b16 %v2354
        %v4216 = vunpack.c.l.b16 %v2355
        %v4217 = vunpack.c.h.b16 %v2355
        %v4218 = vunpack.c.l.b16 %v2356
        %v4219 = vunpack.c.h.b16 %v2356
        %v4220 = vunpack.c.l.b16 %v2357
        %v4221 = vunpack.c.h.b16 %v2357
        %v4222 = vunpack.c.l.b16 %v2358
        %v4223 = vunpack.c.h.b16 %v2358
        %v4224 = vunpack.c.l.b16 %v2359
        %v4225 = vunpack.c.h.b16 %v2359
        %v4226 = vunpack.c.l.b16 %v2360
        %v4227 = vunpack.c.h.b16 %v2360
        %v4228 = vunpack.c.l.b16 %v2361
        %v4229 = vunpack.c.h.b16 %v2361
        %v4230 = vunpack.c.l.b16 %v2362
        %v4231 = vunpack.c.h.b16 %v2362
        %v4232 = vunpack.c.l.b16 %v2363
        %v4233 = vunpack.c.h.b16 %v2363
        %v4234 = vunpack.c.l.b16 %v2364
        %v4235 = vunpack.c.h.b16 %v2364
        %v4236 = vunpack.c.l.b16 %v2365
        %v4237 = vunpack.c.h.b16 %v2365
        %v4238 = vunpack.c.l.b16 %v2366
        %v4239 = vunpack.c.h.b16 %v2366
        %v4240 = vunpack.c.l.b16 %v2367
        %v4241 = vunpack.c.h.b16 %v2367
        %v4242 = vunpack.c.l.b16 %v2368
        %v4243 = vunpack.c.h.b16 %v2368
        %v4244 = vunpack.c.l.b16 %v2369
        %v4245 = vunpack.c.h.b16 %v2369
        %v4246 = vunpack.c.l.b16 %v2370
        %v4247 = vunpack.c.h.b16 %v2370
        %v4248 = vunpack.c.l.b16 %v2371
        %v4249 = vunpack.c.h.b16 %v2371
        %v4250 = vunpack.c.l.b16 %v2372
        %v4251 = vunpack.c.h.b16 %v2372
        %v4252 = vunpack.c.l.b16 %v2373
        %v4253 = vunpack.c.h.b16 %v2373
        %v4254 = vunpack.c.l.b16 %v2374
        %v4255 = vunpack.c.h.b16 %v2374
        %v4256 = vunpack.c.l.b16 %v2375
        %v4257 = vunpack.c.h.b16 %v2375
        %v4258 = vunpack.c.l.b16 %v2376
        %v4259 = vunpack.c.h.b16 %v2376
        %v4260 = vunpack.c.l.b16 %v2377
        %v4261 = vunpack.c.h.b16 %v2377
        %v4262 = vunpack.c.l.b16 %v2378
        %v4263 = vunpack.c.h.b16 %v2378
        %v4264 = vunpack.c.l.b16 %v2379
        %v4265 = vunpack.c.h.b16 %v2379
        %v4266 = vunpack.c.l.b16 %v2380
        %v4267 = vunpack.c.h.b16 %v2380
        %v4268 = vunpack.c.l.b16 %v2381
        %v4269 = vunpack.c.h.b16 %v2381
        %v4270 = vunpack.c.l.b16 %v2382
        %v4271 = vunpack.c.h.b16 %v2382
        %v4272 = vunpack.c.l.b16 %v2383
        %v4273 = vunpack.c.h.b16 %v2383
        %v4274 = vunpack.c.l.b16 %v2384
        %v4275 = vunpack.c.h.b16 %v2384
        %v4276 = vunpack.c.l.b16 %v2385
        %v4277 = vunpack.c.h.b16 %v2385
        %v4278 = vunpack.c.l.b16 %v2386
        %v4279 = vunpack.c.h.b16 %v2386
        %v4280 = vunpack.c.l.b16 %v2387
        %v4281 = vunpack.c.h.b16 %v2387
        %v4282 = vunpack.c.l.b16 %v2388
        %v4283 = vunpack.c.h.b16 %v2388
        %v4284 = vunpack.c.l.b16 %v2389
        %v4285 = vunpack.c.h.b16 %v2389
        %v4286 = vunpack.c.l.b16 %v2390
        %v4287 = vunpack.c.h.b16 %v2390
        %v4288 = vunpack.c.l.b16 %v2391
        %v4289 = vunpack.c.h.b16 %v2391
        %v4290 = vunpack.c.l.b16 %v2392
        %v4291 = vunpack.c.h.b16 %v2392
        %v4292 = vunpack.c.l.b16 %v2393
        %v4293 = vunpack.c.h.b16 %v2393
        %v4294 = vunpack.c.l.b16 %v2394
        %v4295 = vunpack.c.h.b16 %v2394
        %v4296 = vunpack.c.l.b16 %v2395
        %v4297 = vunpack.c.h.b16 %v2395
        %v4298 = vunpack.c.l.b16 %v2396
        %v4299 = vunpack.c.h.b16 %v2396
        %v4300 = vunpack.c.l.b16 %v2397
        %v4301 = vunpack.c.h.b16 %v2397
        %v4302 = vunpack.c.l.b16 %v2398
        %v4303 = vunpack.c.h.b16 %v2398
        %v4304 = vunpack.c.l.b16 %v2399
        %v4305 = vunpack.c.h.b16 %v2399
        %v4306 = vunpack.c.l.b16 %v2400
        %v4307 = vunpack.c.h.b16 %v2400
        %v4308 = vunpack.c.l.b16 %v2401
        %v4309 = vunpack.c.h.b16 %v2401
        %v4310 = vunpack.c.l.b16 %v2402
        %v4311 = vunpack.c.h.b16 %v2402
        %v4312 = vunpack.c.l.b16 %v2403
        %v4313 = vunpack.c.h.b16 %v2403
        %v4314 = vunpack.c.l.b16 %v2404
        %v4315 = vunpack.c.h.b16 %v2404
        %v4316 = vunpack.c.l.b16 %v2405
        %v4317 = vunpack.c.h.b16 %v2405
        %v4318 = vunpack.c.l.b16 %v2406
        %v4319 = vunpack.c.h.b16 %v2406
        %v4320 = vunpack.c.l.b16 %v2407
        %v4321 = vunpack.c.h.b16 %v2407
        %v4322 = vunpack.c.l.b16 %v2408
        %v4323 = vunpack.c.h.b16 %v2408
        %v4324 = vunpack.c.l.b16 %v2409
        %v4325 = vunpack.c.h.b16 %v2409
        %v4326 = vunpack.c.l.b16 %v2410
        %v4327 = vunpack.c.h.b16 %v2410
        %v4328 = vunpack.c.l.b16 %v2411
        %v4329 = vunpack.c.h.b16 %v2411
        %v4330 = vunpack.c.l.b16 %v2412
        %v4331 = vunpack.c.h.b16 %v2412
        %v4332 = vunpack.c.l.b16 %v2413
        %v4333 = vunpack.c.h.b16 %v2413
        %v4334 = vunpack.c.l.b16 %v2414
        %v4335 = vunpack.c.h.b16 %v2414
        %v4336 = vunpack.c.l.b16 %v2415
        %v4337 = vunpack.c.h.b16 %v2415
        %v4338 = vunpack.c.l.b16 %v2416
        %v4339 = vunpack.c.h.b16 %v2416
        %v4340 = vunpack.c.l.b16 %v2417
        %v4341 = vunpack.c.h.b16 %v2417
        %v4342 = vunpack.c.l.b16 %v2418
        %v4343 = vunpack.c.h.b16 %v2418
        %v4344 = vunpack.c.l.b16 %v2419
        %v4345 = vunpack.c.h.b16 %v2419
        %v4346 = vunpack.c.l.b16 %v2420
        %v4347 = vunpack.c.h.b16 %v2420
        %v4348 = vunpack.c.l.b16 %v2421
        %v4349 = vunpack.c.h.b16 %v2421
        %v4350 = vunpack.c.l.b16 %v2422
        %v4351 = vunpack.c.h.b16 %v2422
        %v4352 = vunpack.c.l.b16 %v2423
        %v4353 = vunpack.c.h.b16 %v2423
        %v4354 = vunpack.c.l.b16 %v2424
        %v4355 = vunpack.c.h.b16 %v2424
        %v4356 = vunpack.c.l.b16 %v2425
        %v4357 = vunpack.c.h.b16 %v2425
        %v4358 = vunpack.c.l.b16 %v2426
        %v4359 = vunpack.c.h.b16 %v2426
        %v4360 = vunpack.c.l.b16 %v2427
        %v4361 = vunpack.c.h.b16 %v2427
        %v4362 = vunpack.c.l.b16 %v2428
        %v4363 = vunpack.c.h.b16 %v2428
        %v4364 = vunpack.c.l.b16 %v2429
        %v4365 = vunpack.c.h.b16 %v2429
        %v4366 = vunpack.c.l.b16 %v2430
        %v4367 = vunpack.c.h.b16 %v2430
        %v4368 = vunpack.c.l.b16 %v2431
        %v4369 = vunpack.c.h.b16 %v2431
        %v4370 = vunpack.c.l.b16 %v2432
        %v4371 = vunpack.c.h.b16 %v2432
        %v4372 = vunpack.c.l.b16 %v2433
        %v4373 = vunpack.c.h.b16 %v2433
        %v4374 = vunpack.c.l.b16 %v2434
        %v4375 = vunpack.c.h.b16 %v2434
        %v4376 = vunpack.c.l.b16 %v2435
        %v4377 = vunpack.c.h.b16 %v2435
        %v4378 = vunpack.c.l.b16 %v2436
        %v4379 = vunpack.c.h.b16 %v2436
        %v4380 = vunpack.c.l.b16 %v2437
        %v4381 = vunpack.c.h.b16 %v2437
        %v4382 = vunpack.c.l.b16 %v2438
        %v4383 = vunpack.c.h.b16 %v2438
        %v4384 = vunpack.c.l.b16 %v2439
        %v4385 = vunpack.c.h.b16 %v2439
        %v4386 = vunpack.c.l.b16 %v2440
        %v4387 = vunpack.c.h.b16 %v2440
        %v4388 = vunpack.c.l.b16 %v2441
        %v4389 = vunpack.c.h.b16 %v2441
        %v4390 = vunpack.c.l.b16 %v2442
        %v4391 = vunpack.c.h.b16 %v2442
        %v4392 = vunpack.c.l.b16 %v2443
        %v4393 = vunpack.c.h.b16 %v2443
        %v4394 = vunpack.c.l.b16 %v2444
        %v4395 = vunpack.c.h.b16 %v2444
        %v4396 = vunpack.c.l.b16 %v2445
        %v4397 = vunpack.c.h.b16 %v2445
        %v4398 = vunpack.c.l.b16 %v2446
        %v4399 = vunpack.c.h.b16 %v2446
        %v4400 = vunpack.c.l.b16 %v2447
        %v4401 = vunpack.c.h.b16 %v2447
        %v4402 = vunpack.c.l.b16 %v2448
        %v4403 = vunpack.c.h.b16 %v2448
        %v4404 = vunpack.c.l.b16 %v2449
        %v4405 = vunpack.c.h.b16 %v2449
        %v4406 = vunpack.c.l.b16 %v2450
        %v4407 = vunpack.c.h.b16 %v2450
        %v4408 = vunpack.c.l.b16 %v2451
        %v4409 = vunpack.c.h.b16 %v2451
        %v4410 = vunpack.c.l.b16 %v2452
        %v4411 = vunpack.c.h.b16 %v2452
        %v4412 = vunpack.c.l.b16 %v2453
        %v4413 = vunpack.c.h.b16 %v2453
        %v4414 = vunpack.c.l.b16 %v2454
        %v4415 = vunpack.c.h.b16 %v2454
        %v4416 = vunpack.c.l.b16 %v2455
        %v4417 = vunpack.c.h.b16 %v2455
        %v4418 = vunpack.c.l.b16 %v2456
        %v4419 = vunpack.c.h.b16 %v2456
        %v4420 = vunpack.c.l.b16 %v2457
        %v4421 = vunpack.c.h.b16 %v2457
        %v4422 = vunpack.c.l.b16 %v2458
        %v4423 = vunpack.c.h.b16 %v2458
        %v4424 = vunpack.c.l.b16 %v2459
        %v4425 = vunpack.c.h.b16 %v2459
        %v4426 = vunpack.c.l.b16 %v2460
        %v4427 = vunpack.c.h.b16 %v2460
        %v4428 = vunpack.c.l.b16 %v2461
        %v4429 = vunpack.c.h.b16 %v2461
        %v4430 = vunpack.c.l.b16 %v2462
        %v4431 = vunpack.c.h.b16 %v2462
        %v4432 = vunpack.c.l.b16 %v2463
        %v4433 = vunpack.c.h.b16 %v2463
        %v4434 = vunpack.c.l.b16 %v2464
        %v4435 = vunpack.c.h.b16 %v2464
        %v4436 = vunpack.c.l.b16 %v2465
        %v4437 = vunpack.c.h.b16 %v2465
        %v4438 = vunpack.c.l.b16 %v2466
        %v4439 = vunpack.c.h.b16 %v2466
        %v4440 = vunpack.c.l.b16 %v2467
        %v4441 = vunpack.c.h.b16 %v2467
        %v4442 = vunpack.c.l.b16 %v2468
        %v4443 = vunpack.c.h.b16 %v2468
        %v4444 = vunpack.c.l.b16 %v2469
        %v4445 = vunpack.c.h.b16 %v2469
        %v4446 = vunpack.c.l.b16 %v2470
        %v4447 = vunpack.c.h.b16 %v2470
        %v4448 = vunpack.c.l.b16 %v2471
        %v4449 = vunpack.c.h.b16 %v2471
        %v4450 = vunpack.c.l.b16 %v2472
        %v4451 = vunpack.c.h.b16 %v2472
        %v4452 = vunpack.c.l.b16 %v2473
        %v4453 = vunpack.c.h.b16 %v2473
        %v4454 = vunpack.c.l.b16 %v2474
        %v4455 = vunpack.c.h.b16 %v2474
        %v4456 = vunpack.c.l.b16 %v2475
        %v4457 = vunpack.c.h.b16 %v2475
        %v4458 = vunpack.c.l.b16 %v2476
        %v4459 = vunpack.c.h.b16 %v2476
        %v4460 = vunpack.c.l.b16 %v2477
        %v4461 = vunpack.c.h.b16 %v2477
        %v4462 = vunpack.c.l.b16 %v2478
        %v4463 = vunpack.c.h.b16 %v2478
        %v4464 = vunpack.c.l.b16 %v2479
        %v4465 = vunpack.c.h.b16 %v2479
        %v4466 = vunpack.c.l.b16 %v2480
        %v4467 = vunpack.c.h.b16 %v2480
        %v4468 = vunpack.c.l.b16 %v2481
        %v4469 = vunpack.c.h.b16 %v2481
        %v4470 = vunpack.c.l.b16 %v2482
        %v4471 = vunpack.c.h.b16 %v2482
        %v4472 = vunpack.c.l.b16 %v2483
        %v4473 = vunpack.c.h.b16 %v2483
        %v4474 = vunpack.c.l.b16 %v2484
        %v4475 = vunpack.c.h.b16 %v2484
        %v4476 = vunpack.c.l.b16 %v2485
        %v4477 = vunpack.c.h.b16 %v2485
        %v4478 = vunpack.c.l.b16 %v2486
        %v4479 = vunpack.c.h.b16 %v2486
        %v4480 = vunpack.c.l.b16 %v2487
        %v4481 = vunpack.c.h.b16 %v2487
        %v4482 = vunpack.c.l.b16 %v2488
        %v4483 = vunpack.c.h.b16 %v2488
        %v4484 = vunpack.c.l.b16 %v2489
        %v4485 = vunpack.c.h.b16 %v2489
        %v4486 = vunpack.c.l.b16 %v2490
        %v4487 = vunpack.c.h.b16 %v2490
        %v4488 = vunpack.c.l.b16 %v2491
        %v4489 = vunpack.c.h.b16 %v2491
        %v4490 = vunpack.c.l.b16 %v2492
        %v4491 = vunpack.c.h.b16 %v2492
        %v4492 = vunpack.c.l.b16 %v2493
        %v4493 = vunpack.c.h.b16 %v2493
        %v4494 = vunpack.c.l.b16 %v2494
        %v4495 = vunpack.c.h.b16 %v2494
        %v4496 = vunpack.c.l.b16 %v2495
        %v4497 = vunpack.c.h.b16 %v2495
        %v4498 = vunpack.c.l.b16 %v2496
        %v4499 = vunpack.c.h.b16 %v2496
        %v4500 = vunpack.c.l.b16 %v2497
        %v4501 = vunpack.c.h.b16 %v2497
        %v4502 = vunpack.c.l.b16 %v2498
        %v4503 = vunpack.c.h.b16 %v2498
        %v4504 = vunpack.c.l.b16 %v2499
        %v4505 = vunpack.c.h.b16 %v2499
        %v4506 = vunpack.c.l.b16 %v2500
        %v4507 = vunpack.c.h.b16 %v2500
        %v4508 = vunpack.c.l.b16 %v2501
        %v4509 = vunpack.c.h.b16 %v2501
        %v4510 = vunpack.c.l.b16 %v2502
        %v4511 = vunpack.c.h.b16 %v2502
        %v4512 = vunpack.c.l.b16 %v2503
        %v4513 = vunpack.c.h.b16 %v2503
        %v4514 = vunpack.c.l.b16 %v2504
        %v4515 = vunpack.c.h.b16 %v2504
        %v4516 = vunpack.c.l.b16 %v2505
        %v4517 = vunpack.c.h.b16 %v2505
        %v4518 = vunpack.c.l.b16 %v2506
        %v4519 = vunpack.c.h.b16 %v2506
        %v4520 = vunpack.c.l.b16 %v2507
        %v4521 = vunpack.c.h.b16 %v2507
        %v4522 = vunpack.c.l.b16 %v2508
        %v4523 = vunpack.c.h.b16 %v2508
        %v4524 = vunpack.c.l.b16 %v2509
        %v4525 = vunpack.c.h.b16 %v2509
        %v4526 = vunpack.c.l.b16 %v2510
        %v4527 = vunpack.c.h.b16 %v2510
        %v4528 = vunpack.c.l.b16 %v2511
        %v4529 = vunpack.c.h.b16 %v2511
        %v4530 = vunpack.c.l.b16 %v2512
        %v4531 = vunpack.c.h.b16 %v2512
        %v4532 = vunpack.c.l.b16 %v2513
        %v4533 = vunpack.c.h.b16 %v2513
        %v4534 = vunpack.c.l.b16 %v2514
        %v4535 = vunpack.c.h.b16 %v2514
        %v4536 = vunpack.c.l.b16 %v2515
        %v4537 = vunpack.c.h.b16 %v2515
        %v4538 = vunpack.c.l.b16 %v2516
        %v4539 = vunpack.c.h.b16 %v2516
        %v4540 = vunpack.c.l.b16 %v2517
        %v4541 = vunpack.c.h.b16 %v2517
        %v4542 = vunpack.c.l.b16 %v2518
        %v4543 = vunpack.c.h.b16 %v2518
        %v4544 = vunpack.c.l.b16 %v2519
        %v4545 = vunpack.c.h.b16 %v2519
        %v4546 = vunpack.c.l.b16 %v2520
        %v4547 = vunpack.c.h.b16 %v2520
        %v4548 = vunpack.c.l.b16 %v2521
        %v4549 = vunpack.c.h.b16 %v2521
        %v4550 = vunpack.c.l.b16 %v2522
        %v4551 = vunpack.c.h.b16 %v2522
        %v4552 = vunpack.c.l.b16 %v2523
        %v4553 = vunpack.c.h.b16 %v2523
        %v4554 = vunpack.c.l.b16 %v2524
        %v4555 = vunpack.c.h.b16 %v2524
        %v4556 = vunpack.c.l.b16 %v2525
        %v4557 = vunpack.c.h.b16 %v2525
        %v4558 = vunpack.c.l.b16 %v2526
        %v4559 = vunpack.c.h.b16 %v2526
        %v4560 = vunpack.c.l.b16 %v2527
        %v4561 = vunpack.c.h.b16 %v2527
        %v4562 = vunpack.c.l.b16 %v2528
        %v4563 = vunpack.c.h.b16 %v2528
        %v4564 = vunpack.c.l.b16 %v2529
        %v4565 = vunpack.c.h.b16 %v2529
        %v4566 = vunpack.c.l.b16 %v2530
        %v4567 = vunpack.c.h.b16 %v2530
        %v4568 = vunpack.c.l.b16 %v2531
        %v4569 = vunpack.c.h.b16 %v2531
        %v4570 = vunpack.c.l.b16 %v2532
        %v4571 = vunpack.c.h.b16 %v2532
        %v4572 = vunpack.c.l.b16 %v2533
        %v4573 = vunpack.c.h.b16 %v2533
        %v4574 = vunpack.c.l.b16 %v2534
        %v4575 = vunpack.c.h.b16 %v2534
        %v4576 = vunpack.c.l.b16 %v2535
        %v4577 = vunpack.c.h.b16 %v2535
        %v4578 = vunpack.c.l.b16 %v2536
        %v4579 = vunpack.c.h.b16 %v2536
        %v4580 = vunpack.c.l.b16 %v2537
        %v4581 = vunpack.c.h.b16 %v2537
        %v4582 = vunpack.c.l.b16 %v2538
        %v4583 = vunpack.c.h.b16 %v2538
        %v4584 = vunpack.c.l.b16 %v2539
        %v4585 = vunpack.c.h.b16 %v2539
        %v4586 = vunpack.c.l.b16 %v2540
        %v4587 = vunpack.c.h.b16 %v2540
        %v4588 = vunpack.c.l.b16 %v2541
        %v4589 = vunpack.c.h.b16 %v2541
        %v4590 = vunpack.c.l.b16 %v2542
        %v4591 = vunpack.c.h.b16 %v2542
        %v4592 = vunpack.c.l.b16 %v2543
        %v4593 = vunpack.c.h.b16 %v2543
        %v4594 = vunpack.c.l.b16 %v2544
        %v4595 = vunpack.c.h.b16 %v2544
        %v4596 = vunpack.c.l.b16 %v2545
        %v4597 = vunpack.c.h.b16 %v2545
        %v4598 = vunpack.c.l.b16 %v2546
        %v4599 = vunpack.c.h.b16 %v2546
        %v4600 = vunpack.c.l.b16 %v2547
        %v4601 = vunpack.c.h.b16 %v2547
        %v4602 = vunpack.c.l.b16 %v2548
        %v4603 = vunpack.c.h.b16 %v2548
        %v4604 = vunpack.c.l.b16 %v2549
        %v4605 = vunpack.c.h.b16 %v2549
        %v4606 = vunpack.c.l.b16 %v2550
        %v4607 = vunpack.c.h.b16 %v2550
        %v4608 = vunpack.c.l.b16 %v2551
        %v4609 = vunpack.c.h.b16 %v2551
        %v4610 = vunpack.c.l.b16 %v2552
        %v4611 = vunpack.c.h.b16 %v2552
        %v4612 = vunpack.c.l.b16 %v2553
        %v4613 = vunpack.c.h.b16 %v2553
        %v4614 = vunpack.c.l.b16 %v2554
        %v4615 = vunpack.c.h.b16 %v2554
        %v4616 = vunpack.c.l.b16 %v2555
        %v4617 = vunpack.c.h.b16 %v2555
        %v4618 = vunpack.c.l.b16 %v2556
        %v4619 = vunpack.c.h.b16 %v2556
        %v4620 = vunpack.c.l.b16 %v2557
        %v4621 = vunpack.c.h.b16 %v2557
        %v4622 = vunpack.c.l.b16 %v2558
        %v4623 = vunpack.c.h.b16 %v2558
        %v4624 = vunpack.c.l.b16 %v2559
        %v4625 = vunpack.c.h.b16 %v2559
        %v4626 = vunpack.c.l.b16 %v2560
        %v4627 = vunpack.c.h.b16 %v2560
        %v4628 = vunpack.c.l.b16 %v2561
        %v4629 = vunpack.c.h.b16 %v2561
        %v4630 = vunpack.c.l.b16 %v2562
        %v4631 = vunpack.c.h.b16 %v2562
        %v4632 = vunpack.c.l.b16 %v2563
        %v4633 = vunpack.c.h.b16 %v2563
        %v4634 = vunpack.c.l.b16 %v2564
        %v4635 = vunpack.c.h.b16 %v2564
        %v4636 = vunpack.c.l.b16 %v2565
        %v4637 = vunpack.c.h.b16 %v2565
        %v4638 = vunpack.c.l.b16 %v2566
        %v4639 = vunpack.c.h.b16 %v2566
        %v4640 = vunpack.c.l.b16 %v2567
        %v4641 = vunpack.c.h.b16 %v2567
        %v4642 = vunpack.c.l.b16 %v2568
        %v4643 = vunpack.c.h.b16 %v2568
        %v4644 = vunpack.c.l.b16 %v2569
        %v4645 = vunpack.c.h.b16 %v2569
        %v4646 = vunpack.c.l.b16 %v2570
        %v4647 = vunpack.c.h.b16 %v2570
        %v4648 = vunpack.c.l.b16 %v2571
        %v4649 = vunpack.c.h.b16 %v2571
        %v4650 = vunpack.c.l.b16 %v2572
        %v4651 = vunpack.c.h.b16 %v2572
        %v4652 = vunpack.c.l.b16 %v2573
        %v4653 = vunpack.c.h.b16 %v2573
        %v4654 = vunpack.c.l.b16 %v2574
        %v4655 = vunpack.c.h.b16 %v2574
        %v4656 = vunpack.c.l.b16 %v2575
        %v4657 = vunpack.c.h.b16 %v2575
        %v4658 = vunpack.c.l.b16 %v2576
        %v4659 = vunpack.c.h.b16 %v2576
        %v4660 = vunpack.c.l.b16 %v2577
        %v4661 = vunpack.c.h.b16 %v2577
        %v4662 = vunpack.c.l.b16 %v2578
        %v4663 = vunpack.c.h.b16 %v2578
        %v4664 = vunpack.c.l.b16 %v2579
        %v4665 = vunpack.c.h.b16 %v2579
        %v4666 = vunpack.c.l.b16 %v2580
        %v4667 = vunpack.c.h.b16 %v2580
        %v4668 = vunpack.c.l.b16 %v2581
        %v4669 = vunpack.c.h.b16 %v2581
        %v4670 = vunpack.c.l.b16 %v2582
        %v4671 = vunpack.c.h.b16 %v2582
        %v4672 = vunpack.c.l.b16 %v2583
        %v4673 = vunpack.c.h.b16 %v2583
        %v4674 = vunpack.c.l.b16 %v2584
        %v4675 = vunpack.c.h.b16 %v2584
        %v4676 = vunpack.c.l.b16 %v2585
        %v4677 = vunpack.c.h.b16 %v2585
        %v4678 = vunpack.c.l.b16 %v2586
        %v4679 = vunpack.c.h.b16 %v2586
        %v4680 = vunpack.c.l.b16 %v2587
        %v4681 = vunpack.c.h.b16 %v2587
        %v4682 = vunpack.c.l.b16 %v2588
        %v4683 = vunpack.c.h.b16 %v2588
        %v4684 = vunpack.c.l.b16 %v2589
        %v4685 = vunpack.c.h.b16 %v2589
        %v4686 = vunpack.c.l.b16 %v2590
        %v4687 = vunpack.c.h.b16 %v2590
        %v4688 = vunpack.c.l.b16 %v2591
        %v4689 = vunpack.c.h.b16 %v2591
        %v4690 = vunpack.c.l.b16 %v2592
        %v4691 = vunpack.c.h.b16 %v2592
        %v4692 = vunpack.c.l.b16 %v2593
        %v4693 = vunpack.c.h.b16 %v2593
        %v4694 = vunpack.c.l.b16 %v2594
        %v4695 = vunpack.c.h.b16 %v2594
        %v4696 = vunpack.c.l.b16 %v2595
        %v4697 = vunpack.c.h.b16 %v2595
        %v4698 = vunpack.c.l.b16 %v2596
        %v4699 = vunpack.c.h.b16 %v2596
        %v4700 = vunpack.c.l.b16 %v2597
        %v4701 = vunpack.c.h.b16 %v2597
        %v4702 = vunpack.c.l.b16 %v2598
        %v4703 = vunpack.c.h.b16 %v2598
        %v4704 = vunpack.c.l.b16 %v2599
        %v4705 = vunpack.c.h.b16 %v2599
        %v4706 = vunpack.c.l.b16 %v2600
        %v4707 = vunpack.c.h.b16 %v2600
        %v4708 = vunpack.c.l.b16 %v2601
        %v4709 = vunpack.c.h.b16 %v2601
        %v4710 = vunpack.c.l.b16 %v2602
        %v4711 = vunpack.c.h.b16 %v2602
        %v4712 = vunpack.c.l.b16 %v2603
        %v4713 = vunpack.c.h.b16 %v2603
        %v4714 = vunpack.c.l.b16 %v2604
        %v4715 = vunpack.c.h.b16 %v2604
        %v4716 = vunpack.c.l.b16 %v2605
        %v4717 = vunpack.c.h.b16 %v2605
        %v4718 = vunpack.c.l.b16 %v2606
        %v4719 = vunpack.c.h.b16 %v2606
        %v4720 = vunpack.c.l.b16 %v2607
        %v4721 = vunpack.c.h.b16 %v2607
        %v4722 = vunpack.c.l.b16 %v2608
        %v4723 = vunpack.c.h.b16 %v2608
        %v4724 = vunpack.c.l.b16 %v2609
        %v4725 = vunpack.c.h.b16 %v2609
        %v4726 = vunpack.c.l.b16 %v2610
        %v4727 = vunpack.c.h.b16 %v2610
        %v4728 = vunpack.c.l.b16 %v2611
        %v4729 = vunpack.c.h.b16 %v2611
        %v4730 = vunpack.c.l.b16 %v2612
        %v4731 = vunpack.c.h.b16 %v2612
        %v4732 = vunpack.c.l.b16 %v2613
        %v4733 = vunpack.c.h.b16 %v2613
        %v4734 = vunpack.c.l.b16 %v2614
        %v4735 = vunpack.c.h.b16 %v2614
        %v4736 = vunpack.c.l.b16 %v2615
        %v4737 = vunpack.c.h.b16 %v2615
        %v4738 = vunpack.c.l.b16 %v2616
        %v4739 = vunpack.c.h.b16 %v2616
        %v4740 = vunpack.c.l.b16 %v2617
        %v4741 = vunpack.c.h.b16 %v2617
        %v4742 = vunpack.c.l.b16 %v2618
        %v4743 = vunpack.c.h.b16 %v2618
        %v4744 = vunpack.c.l.b16 %v2619
        %v4745 = vunpack.c.h.b16 %v2619
        %v4746 = vunpack.c.l.b16 %v2620
        %v4747 = vunpack.c.h.b16 %v2620
        %v4748 = vunpack.c.l.b16 %v2621
        %v4749 = vunpack.c.h.b16 %v2621
        %v4750 = vunpack.c.l.b16 %v2622
        %v4751 = vunpack.c.h.b16 %v2622
        %v4752 = vunpack.c.l.b16 %v2623
        %v4753 = vunpack.c.h.b16 %v2623
        %v4754 = vunpack.c.l.b16 %v2624
        %v4755 = vunpack.c.h.b16 %v2624
        %v4756 = vunpack.c.l.b16 %v2625
        %v4757 = vunpack.c.h.b16 %v2625
        %v4758 = vunpack.c.l.b16 %v2626
        %v4759 = vunpack.c.h.b16 %v2626
        %v4760 = vunpack.c.l.b16 %v2627
        %v4761 = vunpack.c.h.b16 %v2627
        %v4762 = vunpack.c.l.b16 %v2628
        %v4763 = vunpack.c.h.b16 %v2628
        %v4764 = vunpack.c.l.b16 %v2629
        %v4765 = vunpack.c.h.b16 %v2629
        %v4766 = vunpack.c.l.b16 %v2630
        %v4767 = vunpack.c.h.b16 %v2630
        %v4768 = vunpack.c.l.b16 %v2631
        %v4769 = vunpack.c.h.b16 %v2631
        %v4770 = vunpack.c.l.b16 %v2632
        %v4771 = vunpack.c.h.b16 %v2632
        %v4772 = vunpack.c.l.b16 %v2633
        %v4773 = vunpack.c.h.b16 %v2633
        %v4774 = vunpack.c.l.b16 %v2634
        %v4775 = vunpack.c.h.b16 %v2634
        %v4776 = vunpack.c.l.b16 %v2635
        %v4777 = vunpack.c.h.b16 %v2635
        %v4778 = vunpack.c.l.b16 %v2636
        %v4779 = vunpack.c.h.b16 %v2636
        %v4780 = vunpack.c.l.b16 %v2637
        %v4781 = vunpack.c.h.b16 %v2637
        %v4782 = vunpack.c.l.b16 %v2638
        %v4783 = vunpack.c.h.b16 %v2638
        %v4784 = vunpack.c.l.b16 %v2639
        %v4785 = vunpack.c.h.b16 %v2639
        %v4786 = vunpack.c.l.b16 %v2640
        %v4787 = vunpack.c.h.b16 %v2640
        %v4788 = vunpack.c.l.b16 %v2641
        %v4789 = vunpack.c.h.b16 %v2641
        %v4790 = vunpack.c.l.b16 %v2642
        %v4791 = vunpack.c.h.b16 %v2642
        %v4792 = vunpack.c.l.b16 %v2643
        %v4793 = vunpack.c.h.b16 %v2643
        %v4794 = vunpack.c.l.b16 %v2644
        %v4795 = vunpack.c.h.b16 %v2644
        %v4796 = vunpack.c.l.b16 %v2645
        %v4797 = vunpack.c.h.b16 %v2645
        %v4798 = vunpack.c.l.b16 %v2646
        %v4799 = vunpack.c.h.b16 %v2646
        %v4800 = vunpack.c.l.b16 %v2647
        %v4801 = vunpack.c.h.b16 %v2647
        %v4802 = vunpack.c.l.b16 %v2648
        %v4803 = vunpack.c.h.b16 %v2648
        %v4804 = vunpack.c.l.b16 %v2649
        %v4805 = vunpack.c.h.b16 %v2649
        %v4806 = vunpack.c.l.b16 %v2650
        %v4807 = vunpack.c.h.b16 %v2650
        %v4808 = vunpack.c.l.b16 %v2651
        %v4809 = vunpack.c.h.b16 %v2651
        %v4810 = vunpack.c.l.b16 %v2652
        %v4811 = vunpack.c.h.b16 %v2652
        %v4812 = vunpack.c.l.b16 %v2653
        %v4813 = vunpack.c.h.b16 %v2653
        %v4814 = vunpack.c.l.b16 %v2654
        %v4815 = vunpack.c.h.b16 %v2654
        %v4816 = vunpack.c.l.b16 %v2655
        %v4817 = vunpack.c.h.b16 %v2655
        %v4818 = vunpack.c.l.b16 %v2656
        %v4819 = vunpack.c.h.b16 %v2656
        %v4820 = vunpack.c.l.b16 %v2657
        %v4821 = vunpack.c.h.b16 %v2657
        %v4822 = vunpack.c.l.b16 %v2658
        %v4823 = vunpack.c.h.b16 %v2658
        %v4824 = vunpack.c.l.b16 %v2659
        %v4825 = vunpack.c.h.b16 %v2659
        %v4826 = vunpack.c.l.b16 %v2660
        %v4827 = vunpack.c.h.b16 %v2660
        %v4828 = vunpack.c.l.b16 %v2661
        %v4829 = vunpack.c.h.b16 %v2661
        %v4830 = vunpack.c.l.b16 %v2662
        %v4831 = vunpack.c.h.b16 %v2662
        %v4832 = vunpack.c.l.b16 %v2663
        %v4833 = vunpack.c.h.b16 %v2663
        %v4834 = vunpack.c.l.b16 %v2664
        %v4835 = vunpack.c.h.b16 %v2664
        %v4836 = vunpack.c.l.b16 %v2665
        %v4837 = vunpack.c.h.b16 %v2665
        %v4838 = vunpack.c.l.b16 %v2666
        %v4839 = vunpack.c.h.b16 %v2666
        %v4840 = vunpack.c.l.b16 %v2667
        %v4841 = vunpack.c.h.b16 %v2667
        %v4842 = vunpack.c.l.b16 %v2668
        %v4843 = vunpack.c.h.b16 %v2668
        %v4844 = vunpack.c.l.b16 %v2669
        %v4845 = vunpack.c.h.b16 %v2669
        %v4846 = vunpack.c.l.b16 %v2670
        %v4847 = vunpack.c.h.b16 %v2670
        %v4848 = vunpack.c.l.b16 %v2671
        %v4849 = vunpack.c.h.b16 %v2671
        %v4850 = vunpack.c.l.b16 %v2672
        %v4851 = vunpack.c.h.b16 %v2672
        %v4852 = vunpack.c.l.b16 %v2673
        %v4853 = vunpack.c.h.b16 %v2673
        %v4854 = vunpack.c.l.b16 %v2674
        %v4855 = vunpack.c.h.b16 %v2674
        %v4856 = vunpack.c.l.b16 %v2675
        %v4857 = vunpack.c.h.b16 %v2675
        %v4858 = vunpack.c.l.b16 %v2676
        %v4859 = vunpack.c.h.b16 %v2676
        %v4860 = vunpack.c.l.b16 %v2677
        %v4861 = vunpack.c.h.b16 %v2677
        %v4862 = vunpack.c.l.b16 %v2678
        %v4863 = vunpack.c.h.b16 %v2678
        %v4864 = vunpack.c.l.b16 %v2679
        %v4865 = vunpack.c.h.b16 %v2679
        %v4866 = vunpack.c.l.b16 %v2680
        %v4867 = vunpack.c.h.b16 %v2680
        %v4868 = vunpack.c.l.b16 %v2681
        %v4869 = vunpack.c.h.b16 %v2681
        %v4870 = vunpack.c.l.b16 %v2682
        %v4871 = vunpack.c.h.b16 %v2682
        %v4872 = vunpack.c.l.b16 %v2683
        %v4873 = vunpack.c.h.b16 %v2683
        %v4874 = vunpack.c.l.b16 %v2684
        %v4875 = vunpack.c.h.b16 %v2684
        %v4876 = vunpack.c.l.b16 %v2685
        %v4877 = vunpack.c.h.b16 %v2685
        %v4878 = vunpack.c.l.b16 %v2686
        %v4879 = vunpack.c.h.b16 %v2686
        %v4880 = vunpack.c.l.b16 %v2687
        %v4881 = vunpack.c.h.b16 %v2687
        %v4882 = vunpack.c.l.b16 %v2688
        %v4883 = vunpack.c.h.b16 %v2688
        %v4884 = vunpack.c.l.b16 %v2689
        %v4885 = vunpack.c.h.b16 %v2689
        %v4886 = vunpack.c.l.b16 %v2690
        %v4887 = vunpack.c.h.b16 %v2690
        %v4888 = vunpack.c.l.b16 %v2691
        %v4889 = vunpack.c.h.b16 %v2691
        %v4890 = vunpack.c.l.b16 %v2692
        %v4891 = vunpack.c.h.b16 %v2692
        %v4892 = vunpack.c.l.b16 %v2693
        %v4893 = vunpack.c.h.b16 %v2693
        %v4894 = vunpack.c.l.b16 %v2694
        %v4895 = vunpack.c.h.b16 %v2694
        %v4896 = vunpack.c.l.b16 %v2695
        %v4897 = vunpack.c.h.b16 %v2695
        %v4898 = vunpack.c.l.b16 %v2696
        %v4899 = vunpack.c.h.b16 %v2696
        %v4900 = vunpack.c.l.b16 %v2697
        %v4901 = vunpack.c.h.b16 %v2697
        %v4902 = vunpack.c.l.b16 %v2698
        %v4903 = vunpack.c.h.b16 %v2698
        %v4904 = vunpack.c.l.b16 %v2699
        %v4905 = vunpack.c.h.b16 %v2699
        %v4906 = vunpack.c.l.b16 %v2700
        %v4907 = vunpack.c.h.b16 %v2700
        %v4908 = vunpack.c.l.b16 %v2701
        %v4909 = vunpack.c.h.b16 %v2701
        %v4910 = vunpack.c.l.b16 %v2702
        %v4911 = vunpack.c.h.b16 %v2702
        %v4912 = vunpack.c.l.b16 %v2703
        %v4913 = vunpack.c.h.b16 %v2703
        %v4914 = vunpack.c.l.b16 %v2704
        %v4915 = vunpack.c.h.b16 %v2704
        %v4916 = vunpack.c.l.b16 %v2705
        %v4917 = vunpack.c.h.b16 %v2705
        %v4918 = vunpack.c.l.b16 %v2706
        %v4919 = vunpack.c.h.b16 %v2706
        %v4920 = vunpack.c.l.b16 %v2707
        %v4921 = vunpack.c.h.b16 %v2707
        %v4922 = vunpack.c.l.b16 %v2708
        %v4923 = vunpack.c.h.b16 %v2708
        %v4924 = vunpack.c.l.b16 %v2709
        %v4925 = vunpack.c.h.b16 %v2709
        %v4926 = vunpack.c.l.b16 %v2710
        %v4927 = vunpack.c.h.b16 %v2710
        %v4928 = vunpack.c.l.b16 %v2711
        %v4929 = vunpack.c.h.b16 %v2711
        %v4930 = vunpack.c.l.b16 %v2712
        %v4931 = vunpack.c.h.b16 %v2712
        %v4932 = vunpack.c.l.b16 %v2713
        %v4933 = vunpack.c.h.b16 %v2713
        %v4934 = vunpack.c.l.b16 %v2714
        %v4935 = vunpack.c.h.b16 %v2714
        %v4936 = vunpack.c.l.b16 %v2715
        %v4937 = vunpack.c.h.b16 %v2715
        %v4938 = vunpack.c.l.b16 %v2716
        %v4939 = vunpack.c.h.b16 %v2716
        %v4940 = vunpack.c.l.b16 %v2717
        %v4941 = vunpack.c.h.b16 %v2717
        %v4942 = vunpack.c.l.b16 %v2718
        %v4943 = vunpack.c.h.b16 %v2718
        %v4944 = vunpack.c.l.b16 %v2719
        %v4945 = vunpack.c.h.b16 %v2719
        %v4946 = vunpack.c.l.b16 %v2720
        %v4947 = vunpack.c.h.b16 %v2720
        %v4948 = vunpack.c.l.b16 %v2721
        %v4949 = vunpack.c.h.b16 %v2721
        %v4950 = vunpack.c.l.b16 %v2722
        %v4951 = vunpack.c.h.b16 %v2722
        %v4952 = vunpack.c.l.b16 %v2723
        %v4953 = vunpack.c.h.b16 %v2723
        %v4954 = vunpack.c.l.b16 %v2724
        %v4955 = vunpack.c.h.b16 %v2724
        %v4956 = vunpack.c.l.b16 %v2725
        %v4957 = vunpack.c.h.b16 %v2725
        %v4958 = vunpack.c.l.b16 %v2726
        %v4959 = vunpack.c.h.b16 %v2726
        %v4960 = vunpack.c.l.b16 %v2727
        %v4961 = vunpack.c.h.b16 %v2727
        %v4962 = vunpack.c.l.b16 %v2728
        %v4963 = vunpack.c.h.b16 %v2728
        %v4964 = vunpack.c.l.b16 %v2729
        %v4965 = vunpack.c.h.b16 %v2729
        %v4966 = vunpack.c.l.b16 %v2730
        %v4967 = vunpack.c.h.b16 %v2730
        %v4968 = vunpack.c.l.b16 %v2731
        %v4969 = vunpack.c.h.b16 %v2731
        %v4970 = vunpack.c.l.b16 %v2732
        %v4971 = vunpack.c.h.b16 %v2732
        %v4972 = vunpack.c.l.b16 %v2733
        %v4973 = vunpack.c.h.b16 %v2733
        %v4974 = vunpack.c.l.b16 %v2734
        %v4975 = vunpack.c.h.b16 %v2734
        %v4976 = vunpack.c.l.b16 %v2735
        %v4977 = vunpack.c.h.b16 %v2735
        %v4978 = vunpack.c.l.b16 %v2736
        %v4979 = vunpack.c.h.b16 %v2736
        %v4980 = vunpack.c.l.b16 %v2737
        %v4981 = vunpack.c.h.b16 %v2737
        %v4982 = vunpack.c.l.b16 %v2738
        %v4983 = vunpack.c.h.b16 %v2738
        %v4984 = vunpack.c.l.b16 %v2739
        %v4985 = vunpack.c.h.b16 %v2739
        %v4986 = vunpack.c.l.b16 %v2740
        %v4987 = vunpack.c.h.b16 %v2740
        %v4988 = vunpack.c.l.b16 %v2741
        %v4989 = vunpack.c.h.b16 %v2741
        %v4990 = vunpack.c.l.b16 %v2742
        %v4991 = vunpack.c.h.b16 %v2742
        %v4992 = vunpack.c.l.b16 %v2743
        %v4993 = vunpack.c.h.b16 %v2743
        %v4994 = vunpack.c.l.b16 %v2744
        %v4995 = vunpack.c.h.b16 %v2744
        %v4996 = vunpack.c.l.b16 %v2745
        %v4997 = vunpack.c.h.b16 %v2745
        %v4998 = vunpack.c.l.b16 %v2746
        %v4999 = vunpack.c.h.b16 %v2746
        %v5000 = vunpack.c.l.b16 %v2747
        %v5001 = vunpack.c.h.b16 %v2747
        %v5002 = vunpack.c.l.b16 %v2748
        %v5003 = vunpack.c.h.b16 %v2748
        %v5004 = vunpack.c.l.b16 %v2749
        %v5005 = vunpack.c.h.b16 %v2749
        %v5006 = vunpack.c.l.b16 %v2750
        %v5007 = vunpack.c.h.b16 %v2750
        %v5008 = vunpack.c.l.b16 %v2751
        %v5009 = vunpack.c.h.b16 %v2751
        %v5010 = vunpack.c.l.b16 %v2752
        %v5011 = vunpack.c.h.b16 %v2752
        %v5012 = vunpack.c.l.b16 %v2753
        %v5013 = vunpack.c.h.b16 %v2753
        %v5014 = vunpack.c.l.b16 %v2754
        %v5015 = vunpack.c.h.b16 %v2754
        %v5016 = vunpack.c.l.b16 %v2755
        %v5017 = vunpack.c.h.b16 %v2755
        %v5018 = vunpack.c.l.b16 %v2756
        %v5019 = vunpack.c.h.b16 %v2756
        %v5020 = vunpack.c.l.b16 %v2757
        %v5021 = vunpack.c.h.b16 %v2757
        %v5022 = vunpack.c.l.b16 %v2758
        %v5023 = vunpack.c.h.b16 %v2758
        %v5024 = vunpack.c.l.b16 %v2759
        %v5025 = vunpack.c.h.b16 %v2759
        %v5026 = vunpack.c.l.b16 %v2760
        %v5027 = vunpack.c.h.b16 %v2760
        %v5028 = vunpack.c.l.b16 %v2761
        %v5029 = vunpack.c.h.b16 %v2761
        %v5030 = vunpack.c.l.b16 %v2762
        %v5031 = vunpack.c.h.b16 %v2762
        %v5032 = vunpack.c.l.b16 %v2763
        %v5033 = vunpack.c.h.b16 %v2763
        %v5034 = vunpack.c.l.b16 %v2764
        %v5035 = vunpack.c.h.b16 %v2764
        %v5036 = vunpack.c.l.b16 %v2765
        %v5037 = vunpack.c.h.b16 %v2765
        %v5038 = vunpack.c.l.b16 %v2766
        %v5039 = vunpack.c.h.b16 %v2766
        %v5040 = vunpack.c.l.b16 %v2767
        %v5041 = vunpack.c.h.b16 %v2767
        %v5042 = vunpack.c.l.b16 %v2768
        %v5043 = vunpack.c.h.b16 %v2768
        %v5044 = vunpack.c.l.b16 %v2769
        %v5045 = vunpack.c.h.b16 %v2769
        %v5046 = vunpack.c.l.b16 %v2770
        %v5047 = vunpack.c.h.b16 %v2770
        %v5048 = vunpack.c.l.b16 %v2771
        %v5049 = vunpack.c.h.b16 %v2771
        %v5050 = vunpack.c.l.b16 %v2772
        %v5051 = vunpack.c.h.b16 %v2772
        %v5052 = vunpack.c.l.b16 %v2773
        %v5053 = vunpack.c.h.b16 %v2773
        %v5054 = vunpack.c.l.b16 %v2774
        %v5055 = vunpack.c.h.b16 %v2774
        %v5056 = vunpack.c.l.b16 %v2775
        %v5057 = vunpack.c.h.b16 %v2775
        %v5058 = vunpack.c.l.b16 %v2776
        %v5059 = vunpack.c.h.b16 %v2776
        %v5060 = vunpack.c.l.b16 %v2777
        %v5061 = vunpack.c.h.b16 %v2777
        %v5062 = vunpack.c.l.b16 %v2778
        %v5063 = vunpack.c.h.b16 %v2778
        %v5064 = vunpack.c.l.b16 %v2779
        %v5065 = vunpack.c.h.b16 %v2779
        %v5066 = vunpack.c.l.b16 %v2780
        %v5067 = vunpack.c.h.b16 %v2780
        %v5068 = vunpack.c.l.b16 %v2781
        %v5069 = vunpack.c.h.b16 %v2781
        %v5070 = vunpack.c.l.b16 %v2782
        %v5071 = vunpack.c.h.b16 %v2782
        %v5072 = vunpack.c.l.b16 %v2783
        %v5073 = vunpack.c.h.b16 %v2783
        %v5074 = vunpack.c.l.b16 %v2784
        %v5075 = vunpack.c.h.b16 %v2784
        %v5076 = vunpack.c.l.b16 %v2785
        %v5077 = vunpack.c.h.b16 %v2785
        %v5078 = vunpack.c.l.b16 %v2786
        %v5079 = vunpack.c.h.b16 %v2786
        %v5080 = vunpack.c.l.b16 %v2787
        %v5081 = vunpack.c.h.b16 %v2787
        %v5082 = vunpack.c.l.b16 %v2788
        %v5083 = vunpack.c.h.b16 %v2788
        %v5084 = vunpack.c.l.b16 %v2789
        %v5085 = vunpack.c.h.b16 %v2789
        %v5086 = vunpack.c.l.b16 %v2790
        %v5087 = vunpack.c.h.b16 %v2790
        %v5088 = vunpack.c.l.b16 %v2791
        %v5089 = vunpack.c.h.b16 %v2791
        %v5090 = vunpack.c.l.b16 %v2792
        %v5091 = vunpack.c.h.b16 %v2792
        %v5092 = vunpack.c.l.b16 %v2793
        %v5093 = vunpack.c.h.b16 %v2793
        %v5094 = vunpack.c.l.b16 %v2794
        %v5095 = vunpack.c.h.b16 %v2794
        %v5096 = vunpack.c.l.b16 %v2795
        %v5097 = vunpack.c.h.b16 %v2795
        %v5098 = vunpack.c.l.b16 %v2796
        %v5099 = vunpack.c.h.b16 %v2796
        %v5100 = vunpack.c.l.b16 %v2797
        %v5101 = vunpack.c.h.b16 %v2797
        %v5102 = vunpack.c.l.b16 %v2798
        %v5103 = vunpack.c.h.b16 %v2798
        %v5104 = vunpack.c.l.b16 %v2799
        %v5105 = vunpack.c.h.b16 %v2799
        %v5106 = vunpack.c.l.b16 %v2800
        %v5107 = vunpack.c.h.b16 %v2800
        %v5108 = vunpack.c.l.b16 %v2801
        %v5109 = vunpack.c.h.b16 %v2801
        %v5110 = vunpack.c.l.b16 %v2802
        %v5111 = vunpack.c.h.b16 %v2802
        %v5112 = vunpack.c.l.b16 %v2803
        %v5113 = vunpack.c.h.b16 %v2803
        %v5114 = vunpack.c.l.b16 %v2804
        %v5115 = vunpack.c.h.b16 %v2804
        %v5116 = vunpack.c.l.b16 %v2805
        %v5117 = vunpack.c.h.b16 %v2805
        %v5118 = vunpack.c.l.b16 %v2806
        %v5119 = vunpack.c.h.b16 %v2806
        %v5120 = vunpack.c.l.b16 %v2807
        %v5121 = vunpack.c.h.b16 %v2807
        %v5122 = vunpack.c.l.b16 %v2808
        %v5123 = vunpack.c.h.b16 %v2808
        %v5124 = vunpack.c.l.b16 %v2809
        %v5125 = vunpack.c.h.b16 %v2809
        %v5126 = vunpack.c.l.b16 %v2810
        %v5127 = vunpack.c.h.b16 %v2810
        %v5128 = vunpack.c.l.b16 %v2811
        %v5129 = vunpack.c.h.b16 %v2811
        %v5130 = vunpack.c.l.b16 %v2812
        %v5131 = vunpack.c.h.b16 %v2812
        %v5132 = vunpack.c.l.b16 %v2813
        %v5133 = vunpack.c.h.b16 %v2813
        %v5134 = vunpack.c.l.b16 %v2814
        %v5135 = vunpack.c.h.b16 %v2814
        %v5136 = vunpack.c.l.b16 %v2815
        %v5137 = vunpack.c.h.b16 %v2815
        %v5138 = vunpack.c.l.b16 %v2816
        %v5139 = vunpack.c.h.b16 %v2816
        %v5140 = vunpack.c.l.b16 %v2817
        %v5141 = vunpack.c.h.b16 %v2817
        %v5142 = vunpack.c.l.b16 %v2818
        %v5143 = vunpack.c.h.b16 %v2818
        %v5144 = vunpack.c.l.b16 %v2819
        %v5145 = vunpack.c.h.b16 %v2819
        %v5146 = vunpack.c.l.b16 %v2820
        %v5147 = vunpack.c.h.b16 %v2820
        %v5148 = vunpack.c.l.b16 %v2821
        %v5149 = vunpack.c.h.b16 %v2821
        %v5150 = vunpack.c.l.b16 %v2822
        %v5151 = vunpack.c.h.b16 %v2822
        %v5152 = vunpack.c.l.b16 %v2823
        %v5153 = vunpack.c.h.b16 %v2823
        %v5154 = vunpack.c.l.b16 %v2824
        %v5155 = vunpack.c.h.b16 %v2824
        %v5156 = vunpack.c.l.b16 %v2825
        %v5157 = vunpack.c.h.b16 %v2825
        %v5158 = vunpack.c.l.b16 %v2826
        %v5159 = vunpack.c.h.b16 %v2826
        %v5160 = vunpack.c.l.b16 %v2827
        %v5161 = vunpack.c.h.b16 %v2827
        %v5162 = vunpack.c.l.b16 %v2828
        %v5163 = vunpack.c.h.b16 %v2828
        %v5164 = vunpack.c.l.b16 %v2829
        %v5165 = vunpack.c.h.b16 %v2829
        %v5166 = vunpack.c.l.b16 %v2830
        %v5167 = vunpack.c.h.b16 %v2830
        %v5168 = vunpack.c.l.b16 %v2831
        %v5169 = vunpack.c.h.b16 %v2831
        %v5170 = vunpack.c.l.b16 %v2832
        %v5171 = vunpack.c.h.b16 %v2832
        %v5172 = vunpack.c.l.b16 %v2833
        %v5173 = vunpack.c.h.b16 %v2833
        %v5174 = vunpack.c.l.b16 %v2834
        %v5175 = vunpack.c.h.b16 %v2834
        %v5176 = vunpack.c.l.b16 %v2835
        %v5177 = vunpack.c.h.b16 %v2835
        %v5178 = vunpack.c.l.b16 %v2836
        %v5179 = vunpack.c.h.b16 %v2836
        %v5180 = vunpack.c.l.b16 %v2837
        %v5181 = vunpack.c.h.b16 %v2837
        %v5182 = vunpack.c.l.b16 %v2838
        %v5183 = vunpack.c.h.b16 %v2838
        %v5184 = vunpack.c.l.b16 %v2839
        %v5185 = vunpack.c.h.b16 %v2839
        %v5186 = vunpack.c.l.b16 %v2840
        %v5187 = vunpack.c.h.b16 %v2840
        %v5188 = vunpack.c.l.b16 %v2841
        %v5189 = vunpack.c.h.b16 %v2841
        %v5190 = vunpack.c.l.b16 %v2842
        %v5191 = vunpack.c.h.b16 %v2842
        %v5192 = vunpack.c.l.b16 %v2843
        %v5193 = vunpack.c.h.b16 %v2843
        %v5194 = vunpack.c.l.b16 %v2844
        %v5195 = vunpack.c.h.b16 %v2844
        %v5196 = vunpack.c.l.b16 %v2845
        %v5197 = vunpack.c.h.b16 %v2845
        %v5198 = vunpack.c.l.b16 %v2846
        %v5199 = vunpack.c.h.b16 %v2846
        %v5200 = vunpack.c.l.b16 %v2847
        %v5201 = vunpack.c.h.b16 %v2847
        %v5202 = vunpack.c.l.b16 %v2848
        %v5203 = vunpack.c.h.b16 %v2848
        %v5204 = vunpack.c.l.b16 %v2849
        %v5205 = vunpack.c.h.b16 %v2849
        %v5206 = vunpack.c.l.b16 %v2850
        %v5207 = vunpack.c.h.b16 %v2850
        %v5208 = vunpack.c.l.b16 %v2851
        %v5209 = vunpack.c.h.b16 %v2851
        %v5210 = vunpack.c.l.b16 %v2852
        %v5211 = vunpack.c.h.b16 %v2852
        %v5212 = vunpack.c.l.b16 %v2853
        %v5213 = vunpack.c.h.b16 %v2853
        %v5214 = vunpack.c.l.b16 %v2854
        %v5215 = vunpack.c.h.b16 %v2854
        %v5216 = vunpack.c.l.b16 %v2855
        %v5217 = vunpack.c.h.b16 %v2855
        %v5218 = vunpack.c.l.b16 %v2856
        %v5219 = vunpack.c.h.b16 %v2856
        %v5220 = vunpack.c.l.b16 %v2857
        %v5221 = vunpack.c.h.b16 %v2857
        %v5222 = vunpack.c.l.b16 %v2858
        %v5223 = vunpack.c.h.b16 %v2858
        %v5224 = vunpack.c.l.b16 %v2859
        %v5225 = vunpack.c.h.b16 %v2859
        %v5226 = vpack.c.b16 %v3702, %v3690
        %v5227 = vpack.c.b16 %v3703, %v3691
        %v5228 = vpack.c.b16 %v3704, %v3692
        %v5229 = vpack.c.b16 %v3705, %v3693
        %v5230 = vpack.c.b16 %v3706, %v3694
        %v5231 = vpack.c.b16 %v3707, %v3695
        %v5232 = vpack.c.b16 %v3708, %v3696
        %v5233 = vpack.c.b16 %v3709, %v3697
        %v5234 = vpack.c.b16 %v3710, %v3698
        %v5235 = vpack.c.b16 %v3711, %v3699
        %v5236 = vpack.c.b16 %v3712, %v3700
        %v5237 = vpack.c.b16 %v3713, %v3701
        %v5238 = vpack.c.b16 %v3726, %v3714
        %v5239 = vpack.c.b16 %v3727, %v3715
        %v5240 = vpack.c.b16 %v3728, %v3716
        %v5241 = vpack.c.b16 %v3729, %v3717
        %v5242 = vpack.c.b16 %v3730, %v3718
        %v5243 = vpack.c.b16 %v3731, %v3719
        %v5244 = vpack.c.b16 %v3732, %v3720
        %v5245 = vpack.c.b16 %v3733, %v3721
        %v5246 = vpack.c.b16 %v3734, %v3722
        %v5247 = vpack.c.b16 %v3735, %v3723
        %v5248 = vpack.c.b16 %v3736, %v3724
        %v5249 = vpack.c.b16 %v3737, %v3725
        %v5250 = vpack.c.b16 %v3750, %v3738
        %v5251 = vpack.c.b16 %v3751, %v3739
        %v5252 = vpack.c.b16 %v3752, %v3740
        %v5253 = vpack.c.b16 %v3753, %v3741
        %v5254 = vpack.c.b16 %v3754, %v3742
        %v5255 = vpack.c.b16 %v3755, %v3743
        %v5256 = vpack.c.b16 %v3756, %v3744
        %v5257 = vpack.c.b16 %v3757, %v3745
        %v5258 = vpack.c.b16 %v3758, %v3746
        %v5259 = vpack.c.b16 %v3759, %v3747
        %v5260 = vpack.c.b16 %v3760, %v3748
        %v5261 = vpack.c.b16 %v3761, %v3749
        %v5262 = vpack.c.b16 %v3774, %v3762
        %v5263 = vpack.c.b16 %v3775, %v3763
        %v5264 = vpack.c.b16 %v3776, %v3764
        %v5265 = vpack.c.b16 %v3777, %v3765
        %v5266 = vpack.c.b16 %v3778, %v3766
        %v5267 = vpack.c.b16 %v3779, %v3767
        %v5268 = vpack.c.b16 %v3780, %v3768
        %v5269 = vpack.c.b16 %v3781, %v3769
        %v5270 = vpack.c.b16 %v3782, %v3770
        %v5271 = vpack.c.b16 %v3783, %v3771
        %v5272 = vpack.c.b16 %v3784, %v3772
        %v5273 = vpack.c.b16 %v3785, %v3773
        %v5274 = vpack.c.b16 %v3798, %v3786
        %v5275 = vpack.c.b16 %v3799, %v3787
        %v5276 = vpack.c.b16 %v3800, %v3788
        %v5277 = vpack.c.b16 %v3801, %v3789
        %v5278 = vpack.c.b16 %v3802, %v3790
        %v5279 = vpack.c.b16 %v3803, %v3791
        %v5280 = vpack.c.b16 %v3804, %v3792
        %v5281 = vpack.c.b16 %v3805, %v3793
        %v5282 = vpack.c.b16 %v3806, %v3794
        %v5283 = vpack.c.b16 %v3807, %v3795
        %v5284 = vpack.c.b16 %v3808, %v3796
        %v5285 = vpack.c.b16 %v3809, %v3797
        %v5286 = vpack.c.b16 %v3822, %v3810
        %v5287 = vpack.c.b16 %v3823, %v3811
        %v5288 = vpack.c.b16 %v3824, %v3812
        %v5289 = vpack.c.b16 %v3825, %v3813
        %v5290 = vpack.c.b16 %v3826, %v3814
        %v5291 = vpack.c.b16 %v3827, %v3815
        %v5292 = vpack.c.b16 %v3828, %v3816
        %v5293 = vpack.c.b16 %v3829, %v3817
        %v5294 = vpack.c.b16 %v3830, %v3818
        %v5295 = vpack.c.b16 %v3831, %v3819
        %v5296 = vpack.c.b16 %v3832, %v3820
        %v5297 = vpack.c.b16 %v3833, %v3821
        %v5298 = vpack.c.b16 %v3846, %v3834
        %v5299 = vpack.c.b16 %v3847, %v3835
        %v5300 = vpack.c.b16 %v3848, %v3836
        %v5301 = vpack.c.b16 %v3849, %v3837
        %v5302 = vpack.c.b16 %v3850, %v3838
        %v5303 = vpack.c.b16 %v3851, %v3839
        %v5304 = vpack.c.b16 %v3852, %v3840
        %v5305 = vpack.c.b16 %v3853, %v3841
        %v5306 = vpack.c.b16 %v3854, %v3842
        %v5307 = vpack.c.b16 %v3855, %v3843
        %v5308 = vpack.c.b16 %v3856, %v3844
        %v5309 = vpack.c.b16 %v3857, %v3845
        %v5310 = vpack.c.b16 %v3870, %v3858
        %v5311 = vpack.c.b16 %v3871, %v3859
        %v5312 = vpack.c.b16 %v3872, %v3860
        %v5313 = vpack.c.b16 %v3873, %v3861
        %v5314 = vpack.c.b16 %v3874, %v3862
        %v5315 = vpack.c.b16 %v3875, %v3863
        %v5316 = vpack.c.b16 %v3876, %v3864
        %v5317 = vpack.c.b16 %v3877, %v3865
        %v5318 = vpack.c.b16 %v3878, %v3866
        %v5319 = vpack.c.b16 %v3879, %v3867
        %v5320 = vpack.c.b16 %v3880, %v3868
        %v5321 = vpack.c.b16 %v3881, %v3869
        %v5322 = vpack.c.b16 %v3894, %v3882
        %v5323 = vpack.c.b16 %v3895, %v3883
        %v5324 = vpack.c.b16 %v3896, %v3884
        %v5325 = vpack.c.b16 %v3897, %v3885
        %v5326 = vpack.c.b16 %v3898, %v3886
        %v5327 = vpack.c.b16 %v3899, %v3887
        %v5328 = vpack.c.b16 %v3900, %v3888
        %v5329 = vpack.c.b16 %v3901, %v3889
        %v5330 = vpack.c.b16 %v3902, %v3890
        %v5331 = vpack.c.b16 %v3903, %v3891
        %v5332 = vpack.c.b16 %v3904, %v3892
        %v5333 = vpack.c.b16 %v3905, %v3893
        %v5334 = vpack.c.b16 %v3918, %v3906
        %v5335 = vpack.c.b16 %v3919, %v3907
        %v5336 = vpack.c.b16 %v3920, %v3908
        %v5337 = vpack.c.b16 %v3921, %v3909
        %v5338 = vpack.c.b16 %v3922, %v3910
        %v5339 = vpack.c.b16 %v3923, %v3911
        %v5340 = vpack.c.b16 %v3924, %v3912
        %v5341 = vpack.c.b16 %v3925, %v3913
        %v5342 = vpack.c.b16 %v3926, %v3914
        %v5343 = vpack.c.b16 %v3927, %v3915
        %v5344 = vpack.c.b16 %v3928, %v3916
        %v5345 = vpack.c.b16 %v3929, %v3917
        %v5346 = vpack.c.b16 %v3942, %v3930
        %v5347 = vpack.c.b16 %v3943, %v3931
        %v5348 = vpack.c.b16 %v3944, %v3932
        %v5349 = vpack.c.b16 %v3945, %v3933
        %v5350 = vpack.c.b16 %v3946, %v3934
        %v5351 = vpack.c.b16 %v3947, %v3935
        %v5352 = vpack.c.b16 %v3948, %v3936
        %v5353 = vpack.c.b16 %v3949, %v3937
        %v5354 = vpack.c.b16 %v3950, %v3938
        %v5355 = vpack.c.b16 %v3951, %v3939
        %v5356 = vpack.c.b16 %v3952, %v3940
        %v5357 = vpack.c.b16 %v3953, %v3941
        %v5358 = vpack.c.b16 %v3966, %v3954
        %v5359 = vpack.c.b16 %v3967, %v3955
        %v5360 = vpack.c.b16 %v3968, %v3956
        %v5361 = vpack.c.b16 %v3969, %v3957
        %v5362 = vpack.c.b16 %v3970, %v3958
        %v5363 = vpack.c.b16 %v3971, %v3959
        %v5364 = vpack.c.b16 %v3972, %v3960
        %v5365 = vpack.c.b16 %v3973, %v3961
        %v5366 = vpack.c.b16 %v3974, %v3962
        %v5367 = vpack.c.b16 %v3975, %v3963
        %v5368 = vpack.c.b16 %v3976, %v3964
        %v5369 = vpack.c.b16 %v3977, %v3965
        %v5370 = vpack.c.b16 %v3990, %v3978
        %v5371 = vpack.c.b16 %v3991, %v3979
        %v5372 = vpack.c.b16 %v3992, %v3980
        %v5373 = vpack.c.b16 %v3993, %v3981
        %v5374 = vpack.c.b16 %v3994, %v3982
        %v5375 = vpack.c.b16 %v3995, %v3983
        %v5376 = vpack.c.b16 %v3996, %v3984
        %v5377 = vpack.c.b16 %v3997, %v3985
        %v5378 = vpack.c.b16 %v3998, %v3986
        %v5379 = vpack.c.b16 %v3999, %v3987
        %v5380 = vpack.c.b16 %v4000, %v3988
        %v5381 = vpack.c.b16 %v4001, %v3989
        %v5382 = vpack.c.b16 %v4014, %v4002
        %v5383 = vpack.c.b16 %v4015, %v4003
        %v5384 = vpack.c.b16 %v4016, %v4004
        %v5385 = vpack.c.b16 %v4017, %v4005
        %v5386 = vpack.c.b16 %v4018, %v4006
        %v5387 = vpack.c.b16 %v4019, %v4007
        %v5388 = vpack.c.b16 %v4020, %v4008
        %v5389 = vpack.c.b16 %v4021, %v4009
        %v5390 = vpack.c.b16 %v4022, %v4010
        %v5391 = vpack.c.b16 %v4023, %v4011
        %v5392 = vpack.c.b16 %v4024, %v4012
        %v5393 = vpack.c.b16 %v4025, %v4013
        %v5394 = vpack.c.b16 %v4038, %v4026
        %v5395 = vpack.c.b16 %v4039, %v4027
        %v5396 = vpack.c.b16 %v4040, %v4028
        %v5397 = vpack.c.b16 %v4041, %v4029
        %v5398 = vpack.c.b16 %v4042, %v4030
        %v5399 = vpack.c.b16 %v4043, %v4031
        %v5400 = vpack.c.b16 %v4044, %v4032
        %v5401 = vpack.c.b16 %v4045, %v4033
        %v5402 = vpack.c.b16 %v4046, %v4034
        %v5403 = vpack.c.b16 %v4047, %v4035
        %v5404 = vpack.c.b16 %v4048, %v4036
        %v5405 = vpack.c.b16 %v4049, %v4037
        %v5406 = vpack.c.b16 %v4062, %v4050
        %v5407 = vpack.c.b16 %v4063, %v4051
        %v5408 = vpack.c.b16 %v4064, %v4052
        %v5409 = vpack.c.b16 %v4065, %v4053
        %v5410 = vpack.c.b16 %v4066, %v4054
        %v5411 = vpack.c.b16 %v4067, %v4055
        %v5412 = vpack.c.b16 %v4068, %v4056
        %v5413 = vpack.c.b16 %v4069, %v4057
        %v5414 = vpack.c.b16 %v4070, %v4058
        %v5415 = vpack.c.b16 %v4071, %v4059
        %v5416 = vpack.c.b16 %v4072, %v4060
        %v5417 = vpack.c.b16 %v4073, %v4061
        %v5418 = vpack.c.b16 %v4086, %v4074
        %v5419 = vpack.c.b16 %v4087, %v4075
        %v5420 = vpack.c.b16 %v4088, %v4076
        %v5421 = vpack.c.b16 %v4089, %v4077
        %v5422 = vpack.c.b16 %v4090, %v4078
        %v5423 = vpack.c.b16 %v4091, %v4079
        %v5424 = vpack.c.b16 %v4092, %v4080
        %v5425 = vpack.c.b16 %v4093, %v4081
        %v5426 = vpack.c.b16 %v4094, %v4082
        %v5427 = vpack.c.b16 %v4095, %v4083
        %v5428 = vpack.c.b16 %v4096, %v4084
        %v5429 = vpack.c.b16 %v4097, %v4085
        %v5430 = vpack.c.b16 %v4110, %v4098
        %v5431 = vpack.c.b16 %v4111, %v4099
        %v5432 = vpack.c.b16 %v4112, %v4100
        %v5433 = vpack.c.b16 %v4113, %v4101
        %v5434 = vpack.c.b16 %v4114, %v4102
        %v5435 = vpack.c.b16 %v4115, %v4103
        %v5436 = vpack.c.b16 %v4116, %v4104
        %v5437 = vpack.c.b16 %v4117, %v4105
        %v5438 = vpack.c.b16 %v4118, %v4106
        %v5439 = vpack.c.b16 %v4119, %v4107
        %v5440 = vpack.c.b16 %v4120, %v4108
        %v5441 = vpack.c.b16 %v4121, %v4109
        %v5442 = vpack.c.b16 %v4134, %v4122
        %v5443 = vpack.c.b16 %v4135, %v4123
        %v5444 = vpack.c.b16 %v4136, %v4124
        %v5445 = vpack.c.b16 %v4137, %v4125
        %v5446 = vpack.c.b16 %v4138, %v4126
        %v5447 = vpack.c.b16 %v4139, %v4127
        %v5448 = vpack.c.b16 %v4140, %v4128
        %v5449 = vpack.c.b16 %v4141, %v4129
        %v5450 = vpack.c.b16 %v4142, %v4130
        %v5451 = vpack.c.b16 %v4143, %v4131
        %v5452 = vpack.c.b16 %v4144, %v4132
        %v5453 = vpack.c.b16 %v4145, %v4133
        %v5454 = vpack.c.b16 %v4158, %v4146
        %v5455 = vpack.c.b16 %v4159, %v4147
        %v5456 = vpack.c.b16 %v4160, %v4148
        %v5457 = vpack.c.b16 %v4161, %v4149
        %v5458 = vpack.c.b16 %v4162, %v4150
        %v5459 = vpack.c.b16 %v4163, %v4151
        %v5460 = vpack.c.b16 %v4164, %v4152
        %v5461 = vpack.c.b16 %v4165, %v4153
        %v5462 = vpack.c.b16 %v4166, %v4154
        %v5463 = vpack.c.b16 %v4167, %v4155
        %v5464 = vpack.c.b16 %v4168, %v4156
        %v5465 = vpack.c.b16 %v4169, %v4157
        %v5466 = vpack.c.b16 %v4182, %v4170
        %v5467 = vpack.c.b16 %v4183, %v4171
        %v5468 = vpack.c.b16 %v4184, %v4172
        %v5469 = vpack.c.b16 %v4185, %v4173
        %v5470 = vpack.c.b16 %v4186, %v4174
        %v5471 = vpack.c.b16 %v4187, %v4175
        %v5472 = vpack.c.b16 %v4188, %v4176
        %v5473 = vpack.c.b16 %v4189, %v4177
        %v5474 = vpack.c.b16 %v4190, %v4178
        %v5475 = vpack.c.b16 %v4191, %v4179
        %v5476 = vpack.c.b16 %v4192, %v4180
        %v5477 = vpack.c.b16 %v4193, %v4181
        %v5478 = vpack.c.b16 %v4206, %v4194
        %v5479 = vpack.c.b16 %v4207, %v4195
        %v5480 = vpack.c.b16 %v4208, %v4196
        %v5481 = vpack.c.b16 %v4209, %v4197
        %v5482 = vpack.c.b16 %v4210, %v4198
        %v5483 = vpack.c.b16 %v4211, %v4199
        %v5484 = vpack.c.b16 %v4212, %v4200
        %v5485 = vpack.c.b16 %v4213, %v4201
        %v5486 = vpack.c.b16 %v4214, %v4202
        %v5487 = vpack.c.b16 %v4215, %v4203
        %v5488 = vpack.c.b16 %v4216, %v4204
        %v5489 = vpack.c.b16 %v4217, %v4205
        %v5490 = vpack.c.b16 %v4230, %v4218
        %v5491 = vpack.c.b16 %v4231, %v4219
        %v5492 = vpack.c.b16 %v4232, %v4220
        %v5493 = vpack.c.b16 %v4233, %v4221
        %v5494 = vpack.c.b16 %v4234, %v4222
        %v5495 = vpack.c.b16 %v4235, %v4223
        %v5496 = vpack.c.b16 %v4236, %v4224
        %v5497 = vpack.c.b16 %v4237, %v4225
        %v5498 = vpack.c.b16 %v4238, %v4226
        %v5499 = vpack.c.b16 %v4239, %v4227
        %v5500 = vpack.c.b16 %v4240, %v4228
        %v5501 = vpack.c.b16 %v4241, %v4229
        %v5502 = vpack.c.b16 %v4254, %v4242
        %v5503 = vpack.c.b16 %v4255, %v4243
        %v5504 = vpack.c.b16 %v4256, %v4244
        %v5505 = vpack.c.b16 %v4257, %v4245
        %v5506 = vpack.c.b16 %v4258, %v4246
        %v5507 = vpack.c.b16 %v4259, %v4247
        %v5508 = vpack.c.b16 %v4260, %v4248
        %v5509 = vpack.c.b16 %v4261, %v4249
        %v5510 = vpack.c.b16 %v4262, %v4250
        %v5511 = vpack.c.b16 %v4263, %v4251
        %v5512 = vpack.c.b16 %v4264, %v4252
        %v5513 = vpack.c.b16 %v4265, %v4253
        %v5514 = vpack.c.b16 %v4278, %v4266
        %v5515 = vpack.c.b16 %v4279, %v4267
        %v5516 = vpack.c.b16 %v4280, %v4268
        %v5517 = vpack.c.b16 %v4281, %v4269
        %v5518 = vpack.c.b16 %v4282, %v4270
        %v5519 = vpack.c.b16 %v4283, %v4271
        %v5520 = vpack.c.b16 %v4284, %v4272
        %v5521 = vpack.c.b16 %v4285, %v4273
        %v5522 = vpack.c.b16 %v4286, %v4274
        %v5523 = vpack.c.b16 %v4287, %v4275
        %v5524 = vpack.c.b16 %v4288, %v4276
        %v5525 = vpack.c.b16 %v4289, %v4277
        %v5526 = vpack.c.b16 %v4302, %v4290
        %v5527 = vpack.c.b16 %v4303, %v4291
        %v5528 = vpack.c.b16 %v4304, %v4292
        %v5529 = vpack.c.b16 %v4305, %v4293
        %v5530 = vpack.c.b16 %v4306, %v4294
        %v5531 = vpack.c.b16 %v4307, %v4295
        %v5532 = vpack.c.b16 %v4308, %v4296
        %v5533 = vpack.c.b16 %v4309, %v4297
        %v5534 = vpack.c.b16 %v4310, %v4298
        %v5535 = vpack.c.b16 %v4311, %v4299
        %v5536 = vpack.c.b16 %v4312, %v4300
        %v5537 = vpack.c.b16 %v4313, %v4301
        %v5538 = vpack.c.b16 %v4326, %v4314
        %v5539 = vpack.c.b16 %v4327, %v4315
        %v5540 = vpack.c.b16 %v4328, %v4316
        %v5541 = vpack.c.b16 %v4329, %v4317
        %v5542 = vpack.c.b16 %v4330, %v4318
        %v5543 = vpack.c.b16 %v4331, %v4319
        %v5544 = vpack.c.b16 %v4332, %v4320
        %v5545 = vpack.c.b16 %v4333, %v4321
        %v5546 = vpack.c.b16 %v4334, %v4322
        %v5547 = vpack.c.b16 %v4335, %v4323
        %v5548 = vpack.c.b16 %v4336, %v4324
        %v5549 = vpack.c.b16 %v4337, %v4325
        %v5550 = vpack.c.b16 %v4350, %v4338
        %v5551 = vpack.c.b16 %v4351, %v4339
        %v5552 = vpack.c.b16 %v4352, %v4340
        %v5553 = vpack.c.b16 %v4353, %v4341
        %v5554 = vpack.c.b16 %v4354, %v4342
        %v5555 = vpack.c.b16 %v4355, %v4343
        %v5556 = vpack.c.b16 %v4356, %v4344
        %v5557 = vpack.c.b16 %v4357, %v4345
        %v5558 = vpack.c.b16 %v4358, %v4346
        %v5559 = vpack.c.b16 %v4359, %v4347
        %v5560 = vpack.c.b16 %v4360, %v4348
        %v5561 = vpack.c.b16 %v4361, %v4349
        %v5562 = vpack.c.b16 %v4374, %v4362
        %v5563 = vpack.c.b16 %v4375, %v4363
        %v5564 = vpack.c.b16 %v4376, %v4364
        %v5565 = vpack.c.b16 %v4377, %v4365
        %v5566 = vpack.c.b16 %v4378, %v4366
        %v5567 = vpack.c.b16 %v4379, %v4367
        %v5568 = vpack.c.b16 %v4380, %v4368
        %v5569 = vpack.c.b16 %v4381, %v4369
        %v5570 = vpack.c.b16 %v4382, %v4370
        %v5571 = vpack.c.b16 %v4383, %v4371
        %v5572 = vpack.c.b16 %v4384, %v4372
        %v5573 = vpack.c.b16 %v4385, %v4373
        %v5574 = vpack.c.b16 %v4398, %v4386
        %v5575 = vpack.c.b16 %v4399, %v4387
        %v5576 = vpack.c.b16 %v4400, %v4388
        %v5577 = vpack.c.b16 %v4401, %v4389
        %v5578 = vpack.c.b16 %v4402, %v4390
        %v5579 = vpack.c.b16 %v4403, %v4391
        %v5580 = vpack.c.b16 %v4404, %v4392
        %v5581 = vpack.c.b16 %v4405, %v4393
        %v5582 = vpack.c.b16 %v4406, %v4394
        %v5583 = vpack.c.b16 %v4407, %v4395
        %v5584 = vpack.c.b16 %v4408, %v4396
        %v5585 = vpack.c.b16 %v4409, %v4397
        %v5586 = vpack.c.b16 %v4422, %v4410
        %v5587 = vpack.c.b16 %v4423, %v4411
        %v5588 = vpack.c.b16 %v4424, %v4412
        %v5589 = vpack.c.b16 %v4425, %v4413
        %v5590 = vpack.c.b16 %v4426, %v4414
        %v5591 = vpack.c.b16 %v4427, %v4415
        %v5592 = vpack.c.b16 %v4428, %v4416
        %v5593 = vpack.c.b16 %v4429, %v4417
        %v5594 = vpack.c.b16 %v4430, %v4418
        %v5595 = vpack.c.b16 %v4431, %v4419
        %v5596 = vpack.c.b16 %v4432, %v4420
        %v5597 = vpack.c.b16 %v4433, %v4421
        %v5598 = vpack.c.b16 %v4446, %v4434
        %v5599 = vpack.c.b16 %v4447, %v4435
        %v5600 = vpack.c.b16 %v4448, %v4436
        %v5601 = vpack.c.b16 %v4449, %v4437
        %v5602 = vpack.c.b16 %v4450, %v4438
        %v5603 = vpack.c.b16 %v4451, %v4439
        %v5604 = vpack.c.b16 %v4452, %v4440
        %v5605 = vpack.c.b16 %v4453, %v4441
        %v5606 = vpack.c.b16 %v4454, %v4442
        %v5607 = vpack.c.b16 %v4455, %v4443
        %v5608 = vpack.c.b16 %v4456, %v4444
        %v5609 = vpack.c.b16 %v4457, %v4445
        %v5610 = vpack.c.b16 %v4470, %v4458
        %v5611 = vpack.c.b16 %v4471, %v4459
        %v5612 = vpack.c.b16 %v4472, %v4460
        %v5613 = vpack.c.b16 %v4473, %v4461
        %v5614 = vpack.c.b16 %v4474, %v4462
        %v5615 = vpack.c.b16 %v4475, %v4463
        %v5616 = vpack.c.b16 %v4476, %v4464
        %v5617 = vpack.c.b16 %v4477, %v4465
        %v5618 = vpack.c.b16 %v4478, %v4466
        %v5619 = vpack.c.b16 %v4479, %v4467
        %v5620 = vpack.c.b16 %v4480, %v4468
        %v5621 = vpack.c.b16 %v4481, %v4469
        %v5622 = vpack.c.b16 %v4494, %v4482
        %v5623 = vpack.c.b16 %v4495, %v4483
        %v5624 = vpack.c.b16 %v4496, %v4484
        %v5625 = vpack.c.b16 %v4497, %v4485
        %v5626 = vpack.c.b16 %v4498, %v4486
        %v5627 = vpack.c.b16 %v4499, %v4487
        %v5628 = vpack.c.b16 %v4500, %v4488
        %v5629 = vpack.c.b16 %v4501, %v4489
        %v5630 = vpack.c.b16 %v4502, %v4490
        %v5631 = vpack.c.b16 %v4503, %v4491
        %v5632 = vpack.c.b16 %v4504, %v4492
        %v5633 = vpack.c.b16 %v4505, %v4493
        %v5634 = vpack.c.b16 %v4518, %v4506
        %v5635 = vpack.c.b16 %v4519, %v4507
        %v5636 = vpack.c.b16 %v4520, %v4508
        %v5637 = vpack.c.b16 %v4521, %v4509
        %v5638 = vpack.c.b16 %v4522, %v4510
        %v5639 = vpack.c.b16 %v4523, %v4511
        %v5640 = vpack.c.b16 %v4524, %v4512
        %v5641 = vpack.c.b16 %v4525, %v4513
        %v5642 = vpack.c.b16 %v4526, %v4514
        %v5643 = vpack.c.b16 %v4527, %v4515
        %v5644 = vpack.c.b16 %v4528, %v4516
        %v5645 = vpack.c.b16 %v4529, %v4517
        %v5646 = vpack.c.b16 %v4542, %v4530
        %v5647 = vpack.c.b16 %v4543, %v4531
        %v5648 = vpack.c.b16 %v4544, %v4532
        %v5649 = vpack.c.b16 %v4545, %v4533
        %v5650 = vpack.c.b16 %v4546, %v4534
        %v5651 = vpack.c.b16 %v4547, %v4535
        %v5652 = vpack.c.b16 %v4548, %v4536
        %v5653 = vpack.c.b16 %v4549, %v4537
        %v5654 = vpack.c.b16 %v4550, %v4538
        %v5655 = vpack.c.b16 %v4551, %v4539
        %v5656 = vpack.c.b16 %v4552, %v4540
        %v5657 = vpack.c.b16 %v4553, %v4541
        %v5658 = vpack.c.b16 %v4566, %v4554
        %v5659 = vpack.c.b16 %v4567, %v4555
        %v5660 = vpack.c.b16 %v4568, %v4556
        %v5661 = vpack.c.b16 %v4569, %v4557
        %v5662 = vpack.c.b16 %v4570, %v4558
        %v5663 = vpack.c.b16 %v4571, %v4559
        %v5664 = vpack.c.b16 %v4572, %v4560
        %v5665 = vpack.c.b16 %v4573, %v4561
        %v5666 = vpack.c.b16 %v4574, %v4562
        %v5667 = vpack.c.b16 %v4575, %v4563
        %v5668 = vpack.c.b16 %v4576, %v4564
        %v5669 = vpack.c.b16 %v4577, %v4565
        %v5670 = vpack.c.b16 %v4590, %v4578
        %v5671 = vpack.c.b16 %v4591, %v4579
        %v5672 = vpack.c.b16 %v4592, %v4580
        %v5673 = vpack.c.b16 %v4593, %v4581
        %v5674 = vpack.c.b16 %v4594, %v4582
        %v5675 = vpack.c.b16 %v4595, %v4583
        %v5676 = vpack.c.b16 %v4596, %v4584
        %v5677 = vpack.c.b16 %v4597, %v4585
        %v5678 = vpack.c.b16 %v4598, %v4586
        %v5679 = vpack.c.b16 %v4599, %v4587
        %v5680 = vpack.c.b16 %v4600, %v4588
        %v5681 = vpack.c.b16 %v4601, %v4589
        %v5682 = vpack.c.b16 %v4614, %v4602
        %v5683 = vpack.c.b16 %v4615, %v4603
        %v5684 = vpack.c.b16 %v4616, %v4604
        %v5685 = vpack.c.b16 %v4617, %v4605
        %v5686 = vpack.c.b16 %v4618, %v4606
        %v5687 = vpack.c.b16 %v4619, %v4607
        %v5688 = vpack.c.b16 %v4620, %v4608
        %v5689 = vpack.c.b16 %v4621, %v4609
        %v5690 = vpack.c.b16 %v4622, %v4610
        %v5691 = vpack.c.b16 %v4623, %v4611
        %v5692 = vpack.c.b16 %v4624, %v4612
        %v5693 = vpack.c.b16 %v4625, %v4613
        %v5694 = vpack.c.b16 %v4638, %v4626
        %v5695 = vpack.c.b16 %v4639, %v4627
        %v5696 = vpack.c.b16 %v4640, %v4628
        %v5697 = vpack.c.b16 %v4641, %v4629
        %v5698 = vpack.c.b16 %v4642, %v4630
        %v5699 = vpack.c.b16 %v4643, %v4631
        %v5700 = vpack.c.b16 %v4644, %v4632
        %v5701 = vpack.c.b16 %v4645, %v4633
        %v5702 = vpack.c.b16 %v4646, %v4634
        %v5703 = vpack.c.b16 %v4647, %v4635
        %v5704 = vpack.c.b16 %v4648, %v4636
        %v5705 = vpack.c.b16 %v4649, %v4637
        %v5706 = vpack.c.b16 %v4662, %v4650
        %v5707 = vpack.c.b16 %v4663, %v4651
        %v5708 = vpack.c.b16 %v4664, %v4652
        %v5709 = vpack.c.b16 %v4665, %v4653
        %v5710 = vpack.c.b16 %v4666, %v4654
        %v5711 = vpack.c.b16 %v4667, %v4655
        %v5712 = vpack.c.b16 %v4668, %v4656
        %v5713 = vpack.c.b16 %v4669, %v4657
        %v5714 = vpack.c.b16 %v4670, %v4658
        %v5715 = vpack.c.b16 %v4671, %v4659
        %v5716 = vpack.c.b16 %v4672, %v4660
        %v5717 = vpack.c.b16 %v4673, %v4661
        %v5718 = vpack.c.b16 %v4686, %v4674
        %v5719 = vpack.c.b16 %v4687, %v4675
        %v5720 = vpack.c.b16 %v4688, %v4676
        %v5721 = vpack.c.b16 %v4689, %v4677
        %v5722 = vpack.c.b16 %v4690, %v4678
        %v5723 = vpack.c.b16 %v4691, %v4679
        %v5724 = vpack.c.b16 %v4692, %v4680
        %v5725 = vpack.c.b16 %v4693, %v4681
        %v5726 = vpack.c.b16 %v4694, %v4682
        %v5727 = vpack.c.b16 %v4695, %v4683
        %v5728 = vpack.c.b16 %v4696, %v4684
        %v5729 = vpack.c.b16 %v4697, %v4685
        %v5730 = vpack.c.b16 %v4710, %v4698
        %v5731 = vpack.c.b16 %v4711, %v4699
        %v5732 = vpack.c.b16 %v4712, %v4700
        %v5733 = vpack.c.b16 %v4713, %v4701
        %v5734 = vpack.c.b16 %v4714, %v4702
        %v5735 = vpack.c.b16 %v4715, %v4703
        %v5736 = vpack.c.b16 %v4716, %v4704
        %v5737 = vpack.c.b16 %v4717, %v4705
        %v5738 = vpack.c.b16 %v4718, %v4706
        %v5739 = vpack.c.b16 %v4719, %v4707
        %v5740 = vpack.c.b16 %v4720, %v4708
        %v5741 = vpack.c.b16 %v4721, %v4709
        %v5742 = vpack.c.b16 %v4734, %v4722
        %v5743 = vpack.c.b16 %v4735, %v4723
        %v5744 = vpack.c.b16 %v4736, %v4724
        %v5745 = vpack.c.b16 %v4737, %v4725
        %v5746 = vpack.c.b16 %v4738, %v4726
        %v5747 = vpack.c.b16 %v4739, %v4727
        %v5748 = vpack.c.b16 %v4740, %v4728
        %v5749 = vpack.c.b16 %v4741, %v4729
        %v5750 = vpack.c.b16 %v4742, %v4730
        %v5751 = vpack.c.b16 %v4743, %v4731
        %v5752 = vpack.c.b16 %v4744, %v4732
        %v5753 = vpack.c.b16 %v4745, %v4733
        %v5754 = vpack.c.b16 %v4758, %v4746
        %v5755 = vpack.c.b16 %v4759, %v4747
        %v5756 = vpack.c.b16 %v4760, %v4748
        %v5757 = vpack.c.b16 %v4761, %v4749
        %v5758 = vpack.c.b16 %v4762, %v4750
        %v5759 = vpack.c.b16 %v4763, %v4751
        %v5760 = vpack.c.b16 %v4764, %v4752
        %v5761 = vpack.c.b16 %v4765, %v4753
        %v5762 = vpack.c.b16 %v4766, %v4754
        %v5763 = vpack.c.b16 %v4767, %v4755
        %v5764 = vpack.c.b16 %v4768, %v4756
        %v5765 = vpack.c.b16 %v4769, %v4757
        %v5766 = vpack.c.b16 %v4782, %v4770
        %v5767 = vpack.c.b16 %v4783, %v4771
        %v5768 = vpack.c.b16 %v4784, %v4772
        %v5769 = vpack.c.b16 %v4785, %v4773
        %v5770 = vpack.c.b16 %v4786, %v4774
        %v5771 = vpack.c.b16 %v4787, %v4775
        %v5772 = vpack.c.b16 %v4788, %v4776
        %v5773 = vpack.c.b16 %v4789, %v4777
        %v5774 = vpack.c.b16 %v4790, %v4778
        %v5775 = vpack.c.b16 %v4791, %v4779
        %v5776 = vpack.c.b16 %v4792, %v4780
        %v5777 = vpack.c.b16 %v4793, %v4781
        %v5778 = vpack.c.b16 %v4806, %v4794
        %v5779 = vpack.c.b16 %v4807, %v4795
        %v5780 = vpack.c.b16 %v4808, %v4796
        %v5781 = vpack.c.b16 %v4809, %v4797
        %v5782 = vpack.c.b16 %v4810, %v4798
        %v5783 = vpack.c.b16 %v4811, %v4799
        %v5784 = vpack.c.b16 %v4812, %v4800
        %v5785 = vpack.c.b16 %v4813, %v4801
        %v5786 = vpack.c.b16 %v4814, %v4802
        %v5787 = vpack.c.b16 %v4815, %v4803
        %v5788 = vpack.c.b16 %v4816, %v4804
        %v5789 = vpack.c.b16 %v4817, %v4805
        %v5790 = vpack.c.b16 %v4830, %v4818
        %v5791 = vpack.c.b16 %v4831, %v4819
        %v5792 = vpack.c.b16 %v4832, %v4820
        %v5793 = vpack.c.b16 %v4833, %v4821
        %v5794 = vpack.c.b16 %v4834, %v4822
        %v5795 = vpack.c.b16 %v4835, %v4823
        %v5796 = vpack.c.b16 %v4836, %v4824
        %v5797 = vpack.c.b16 %v4837, %v4825
        %v5798 = vpack.c.b16 %v4838, %v4826
        %v5799 = vpack.c.b16 %v4839, %v4827
        %v5800 = vpack.c.b16 %v4840, %v4828
        %v5801 = vpack.c.b16 %v4841, %v4829
        %v5802 = vpack.c.b16 %v4854, %v4842
        %v5803 = vpack.c.b16 %v4855, %v4843
        %v5804 = vpack.c.b16 %v4856, %v4844
        %v5805 = vpack.c.b16 %v4857, %v4845
        %v5806 = vpack.c.b16 %v4858, %v4846
        %v5807 = vpack.c.b16 %v4859, %v4847
        %v5808 = vpack.c.b16 %v4860, %v4848
        %v5809 = vpack.c.b16 %v4861, %v4849
        %v5810 = vpack.c.b16 %v4862, %v4850
        %v5811 = vpack.c.b16 %v4863, %v4851
        %v5812 = vpack.c.b16 %v4864, %v4852
        %v5813 = vpack.c.b16 %v4865, %v4853
        %v5814 = vpack.c.b16 %v4878, %v4866
        %v5815 = vpack.c.b16 %v4879, %v4867
        %v5816 = vpack.c.b16 %v4880, %v4868
        %v5817 = vpack.c.b16 %v4881, %v4869
        %v5818 = vpack.c.b16 %v4882, %v4870
        %v5819 = vpack.c.b16 %v4883, %v4871
        %v5820 = vpack.c.b16 %v4884, %v4872
        %v5821 = vpack.c.b16 %v4885, %v4873
        %v5822 = vpack.c.b16 %v4886, %v4874
        %v5823 = vpack.c.b16 %v4887, %v4875
        %v5824 = vpack.c.b16 %v4888, %v4876
        %v5825 = vpack.c.b16 %v4889, %v4877
        %v5826 = vpack.c.b16 %v4902, %v4890
        %v5827 = vpack.c.b16 %v4903, %v4891
        %v5828 = vpack.c.b16 %v4904, %v4892
        %v5829 = vpack.c.b16 %v4905, %v4893
        %v5830 = vpack.c.b16 %v4906, %v4894
        %v5831 = vpack.c.b16 %v4907, %v4895
        %v5832 = vpack.c.b16 %v4908, %v4896
        %v5833 = vpack.c.b16 %v4909, %v4897
        %v5834 = vpack.c.b16 %v4910, %v4898
        %v5835 = vpack.c.b16 %v4911, %v4899
        %v5836 = vpack.c.b16 %v4912, %v4900
        %v5837 = vpack.c.b16 %v4913, %v4901
        %v5838 = vpack.c.b16 %v4926, %v4914
        %v5839 = vpack.c.b16 %v4927, %v4915
        %v5840 = vpack.c.b16 %v4928, %v4916
        %v5841 = vpack.c.b16 %v4929, %v4917
        %v5842 = vpack.c.b16 %v4930, %v4918
        %v5843 = vpack.c.b16 %v4931, %v4919
        %v5844 = vpack.c.b16 %v4932, %v4920
        %v5845 = vpack.c.b16 %v4933, %v4921
        %v5846 = vpack.c.b16 %v4934, %v4922
        %v5847 = vpack.c.b16 %v4935, %v4923
        %v5848 = vpack.c.b16 %v4936, %v4924
        %v5849 = vpack.c.b16 %v4937, %v4925
        %v5850 = vpack.c.b16 %v4950, %v4938
        %v5851 = vpack.c.b16 %v4951, %v4939
        %v5852 = vpack.c.b16 %v4952, %v4940
        %v5853 = vpack.c.b16 %v4953, %v4941
        %v5854 = vpack.c.b16 %v4954, %v4942
        %v5855 = vpack.c.b16 %v4955, %v4943
        %v5856 = vpack.c.b16 %v4956, %v4944
        %v5857 = vpack.c.b16 %v4957, %v4945
        %v5858 = vpack.c.b16 %v4958, %v4946
        %v5859 = vpack.c.b16 %v4959, %v4947
        %v5860 = vpack.c.b16 %v4960, %v4948
        %v5861 = vpack.c.b16 %v4961, %v4949
        %v5862 = vpack.c.b16 %v4974, %v4962
        %v5863 = vpack.c.b16 %v4975, %v4963
        %v5864 = vpack.c.b16 %v4976, %v4964
        %v5865 = vpack.c.b16 %v4977, %v4965
        %v5866 = vpack.c.b16 %v4978, %v4966
        %v5867 = vpack.c.b16 %v4979, %v4967
        %v5868 = vpack.c.b16 %v4980, %v4968
        %v5869 = vpack.c.b16 %v4981, %v4969
        %v5870 = vpack.c.b16 %v4982, %v4970
        %v5871 = vpack.c.b16 %v4983, %v4971
        %v5872 = vpack.c.b16 %v4984, %v4972
        %v5873 = vpack.c.b16 %v4985, %v4973
        %v5874 = vpack.c.b16 %v4998, %v4986
        %v5875 = vpack.c.b16 %v4999, %v4987
        %v5876 = vpack.c.b16 %v5000, %v4988
        %v5877 = vpack.c.b16 %v5001, %v4989
        %v5878 = vpack.c.b16 %v5002, %v4990
        %v5879 = vpack.c.b16 %v5003, %v4991
        %v5880 = vpack.c.b16 %v5004, %v4992
        %v5881 = vpack.c.b16 %v5005, %v4993
        %v5882 = vpack.c.b16 %v5006, %v4994
        %v5883 = vpack.c.b16 %v5007, %v4995
        %v5884 = vpack.c.b16 %v5008, %v4996
        %v5885 = vpack.c.b16 %v5009, %v4997
        %v5886 = vpack.c.b16 %v5022, %v5010
        %v5887 = vpack.c.b16 %v5023, %v5011
        %v5888 = vpack.c.b16 %v5024, %v5012
        %v5889 = vpack.c.b16 %v5025, %v5013
        %v5890 = vpack.c.b16 %v5026, %v5014
        %v5891 = vpack.c.b16 %v5027, %v5015
        %v5892 = vpack.c.b16 %v5028, %v5016
        %v5893 = vpack.c.b16 %v5029, %v5017
        %v5894 = vpack.c.b16 %v5030, %v5018
        %v5895 = vpack.c.b16 %v5031, %v5019
        %v5896 = vpack.c.b16 %v5032, %v5020
        %v5897 = vpack.c.b16 %v5033, %v5021
        %v5898 = vpack.c.b16 %v5046, %v5034
        %v5899 = vpack.c.b16 %v5047, %v5035
        %v5900 = vpack.c.b16 %v5048, %v5036
        %v5901 = vpack.c.b16 %v5049, %v5037
        %v5902 = vpack.c.b16 %v5050, %v5038
        %v5903 = vpack.c.b16 %v5051, %v5039
        %v5904 = vpack.c.b16 %v5052, %v5040
        %v5905 = vpack.c.b16 %v5053, %v5041
        %v5906 = vpack.c.b16 %v5054, %v5042
        %v5907 = vpack.c.b16 %v5055, %v5043
        %v5908 = vpack.c.b16 %v5056, %v5044
        %v5909 = vpack.c.b16 %v5057, %v5045
        %v5910 = vpack.c.b16 %v5070, %v5058
        %v5911 = vpack.c.b16 %v5071, %v5059
        %v5912 = vpack.c.b16 %v5072, %v5060
        %v5913 = vpack.c.b16 %v5073, %v5061
        %v5914 = vpack.c.b16 %v5074, %v5062
        %v5915 = vpack.c.b16 %v5075, %v5063
        %v5916 = vpack.c.b16 %v5076, %v5064
        %v5917 = vpack.c.b16 %v5077, %v5065
        %v5918 = vpack.c.b16 %v5078, %v5066
        %v5919 = vpack.c.b16 %v5079, %v5067
        %v5920 = vpack.c.b16 %v5080, %v5068
        %v5921 = vpack.c.b16 %v5081, %v5069
        %v5922 = vpack.c.b16 %v5094, %v5082
        %v5923 = vpack.c.b16 %v5095, %v5083
        %v5924 = vpack.c.b16 %v5096, %v5084
        %v5925 = vpack.c.b16 %v5097, %v5085
        %v5926 = vpack.c.b16 %v5098, %v5086
        %v5927 = vpack.c.b16 %v5099, %v5087
        %v5928 = vpack.c.b16 %v5100, %v5088
        %v5929 = vpack.c.b16 %v5101, %v5089
        %v5930 = vpack.c.b16 %v5102, %v5090
        %v5931 = vpack.c.b16 %v5103, %v5091
        %v5932 = vpack.c.b16 %v5104, %v5092
        %v5933 = vpack.c.b16 %v5105, %v5093
        %v5934 = vpack.c.b16 %v5118, %v5106
        %v5935 = vpack.c.b16 %v5119, %v5107
        %v5936 = vpack.c.b16 %v5120, %v5108
        %v5937 = vpack.c.b16 %v5121, %v5109
        %v5938 = vpack.c.b16 %v5122, %v5110
        %v5939 = vpack.c.b16 %v5123, %v5111
        %v5940 = vpack.c.b16 %v5124, %v5112
        %v5941 = vpack.c.b16 %v5125, %v5113
        %v5942 = vpack.c.b16 %v5126, %v5114
        %v5943 = vpack.c.b16 %v5127, %v5115
        %v5944 = vpack.c.b16 %v5128, %v5116
        %v5945 = vpack.c.b16 %v5129, %v5117
        %v5946 = vpack.c.b16 %v5142, %v5130
        %v5947 = vpack.c.b16 %v5143, %v5131
        %v5948 = vpack.c.b16 %v5144, %v5132
        %v5949 = vpack.c.b16 %v5145, %v5133
        %v5950 = vpack.c.b16 %v5146, %v5134
        %v5951 = vpack.c.b16 %v5147, %v5135
        %v5952 = vpack.c.b16 %v5148, %v5136
        %v5953 = vpack.c.b16 %v5149, %v5137
        %v5954 = vpack.c.b16 %v5150, %v5138
        %v5955 = vpack.c.b16 %v5151, %v5139
        %v5956 = vpack.c.b16 %v5152, %v5140
        %v5957 = vpack.c.b16 %v5153, %v5141
        %v5958 = vpack.c.b16 %v5166, %v5154
        %v5959 = vpack.c.b16 %v5167, %v5155
        %v5960 = vpack.c.b16 %v5168, %v5156
        %v5961 = vpack.c.b16 %v5169, %v5157
        %v5962 = vpack.c.b16 %v5170, %v5158
        %v5963 = vpack.c.b16 %v5171, %v5159
        %v5964 = vpack.c.b16 %v5172, %v5160
        %v5965 = vpack.c.b16 %v5173, %v5161
        %v5966 = vpack.c.b16 %v5174, %v5162
        %v5967 = vpack.c.b16 %v5175, %v5163
        %v5968 = vpack.c.b16 %v5176, %v5164
        %v5969 = vpack.c.b16 %v5177, %v5165
        %v5970 = vpack.c.b16 %v5190, %v5178
        %v5971 = vpack.c.b16 %v5191, %v5179
        %v5972 = vpack.c.b16 %v5192, %v5180
        %v5973 = vpack.c.b16 %v5193, %v5181
        %v5974 = vpack.c.b16 %v5194, %v5182
        %v5975 = vpack.c.b16 %v5195, %v5183
        %v5976 = vpack.c.b16 %v5196, %v5184
        %v5977 = vpack.c.b16 %v5197, %v5185
        %v5978 = vpack.c.b16 %v5198, %v5186
        %v5979 = vpack.c.b16 %v5199, %v5187
        %v5980 = vpack.c.b16 %v5200, %v5188
        %v5981 = vpack.c.b16 %v5201, %v5189
        %v5982 = vpack.c.b16 %v5214, %v5202
        %v5983 = vpack.c.b16 %v5215, %v5203
        %v5984 = vpack.c.b16 %v5216, %v5204
        %v5985 = vpack.c.b16 %v5217, %v5205
        %v5986 = vpack.c.b16 %v5218, %v5206
        %v5987 = vpack.c.b16 %v5219, %v5207
        %v5988 = vpack.c.b16 %v5220, %v5208
        %v5989 = vpack.c.b16 %v5221, %v5209
        %v5990 = vpack.c.b16 %v5222, %v5210
        %v5991 = vpack.c.b16 %v5223, %v5211
        %v5992 = vpack.c.b16 %v5224, %v5212
        %v5993 = vpack.c.b16 %v5225, %v5213
        %6762 = vmatprep.subr.bf16.mxu0 %v5227
        %6763 = vmatpush1.bf16.msra.mxu0 %v5226
        %6764 = vmatprep.subr.bf16.mxu0 %v5239
        %6765 = vmatpush1.bf16.msra.mxu0 %v5238
        %6766 = vmatprep.subr.bf16.mxu0 %v5251
        %6767 = vmatpush1.bf16.msra.mxu0 %v5250
        %6768 = vmatprep.subr.bf16.mxu0 %v5263
        %6769 = vmatpush1.bf16.msra.mxu0 %v5262
        %6770 = vmatprep.subr.bf16.mxu0 %v5275
        %6771 = vmatpush1.bf16.msra.mxu0 %v5274
        %6772 = vmatprep.subr.bf16.mxu0 %v5287
        %6773 = vmatpush1.bf16.msra.mxu0 %v5286
        %6774 = vmatprep.subr.bf16.mxu0 %v5299
        %6775 = vmatpush1.bf16.msra.mxu0 %v5298
        %6776 = vmatprep.subr.bf16.mxu0 %v5311
        %6777 = vmatpush1.bf16.msra.mxu0 %v5310
        %6778 = vmatprep.subr.bf16.mxu0 %v5323
        %6779 = vmatpush1.bf16.msra.mxu0 %v5322
        %6780 = vmatprep.subr.bf16.mxu0 %v5335
        %6781 = vmatpush1.bf16.msra.mxu0 %v5334
        %6782 = vmatprep.subr.bf16.mxu0 %v5347
        %6783 = vmatpush1.bf16.msra.mxu0 %v5346
        %6784 = vmatprep.subr.bf16.mxu0 %v5359
        %6785 = vmatpush1.bf16.msra.mxu0 %v5358
        %6786 = vmatprep.subr.bf16.mxu0 %v5371
        %6787 = vmatpush1.bf16.msra.mxu0 %v5370
        %6788 = vmatprep.subr.bf16.mxu0 %v5383
        %6789 = vmatpush1.bf16.msra.mxu0 %v5382
        %6790 = vmatprep.subr.bf16.mxu0 %v5395
        %6791 = vmatpush1.bf16.msra.mxu0 %v5394
        %6792 = vmatprep.subr.bf16.mxu0 %v5407
        %6793 = vmatpush1.bf16.msra.mxu0 %v5406
        %6794 = vmatprep.mubr.bf16.mxu0 %v2085
        %6795 = vmatmul.mubr.bf16.gmra.mrb[0].mxu0 %v2084
        %v6796 = vpop.f32.mrb[0].mxu0
        %v6797 = vadd.f32 %v2865, %v6796
        %v6798 = vpop.f32.mrb[0].mxu0
        %v6799 = vadd.f32 %v2869, %v6798
        %v6800 = vpop.f32.mrb[0].mxu0
        %v6801 = vpop.f32.mrb[0].mxu0
        %6802 = vdwg.mxu0
        %6803 = vmatprep.subr.bf16.mxu0 %v5419
        %6804 = vmatpush1.bf16.msra.mxu0 %v5418
        %6805 = vmatprep.subr.bf16.mxu0 %v5431
        %6806 = vmatpush1.bf16.msra.mxu0 %v5430
        %6807 = vmatprep.subr.bf16.mxu0 %v5443
        %6808 = vmatpush1.bf16.msra.mxu0 %v5442
        %6809 = vmatprep.subr.bf16.mxu0 %v5455
        %6810 = vmatpush1.bf16.msra.mxu0 %v5454
        %6811 = vmatprep.subr.bf16.mxu0 %v5467
        %6812 = vmatpush1.bf16.msra.mxu0 %v5466
        %6813 = vmatprep.subr.bf16.mxu0 %v5479
        %6814 = vmatpush1.bf16.msra.mxu0 %v5478
        %6815 = vmatprep.subr.bf16.mxu0 %v5491
        %6816 = vmatpush1.bf16.msra.mxu0 %v5490
        %6817 = vmatprep.subr.bf16.mxu0 %v5503
        %6818 = vmatpush1.bf16.msra.mxu0 %v5502
        %6819 = vmatprep.subr.bf16.mxu0 %v5515
        %6820 = vmatpush1.bf16.msra.mxu0 %v5514
        %6821 = vmatprep.subr.bf16.mxu0 %v5527
        %6822 = vmatpush1.bf16.msra.mxu0 %v5526
        %6823 = vmatprep.subr.bf16.mxu0 %v5539
        %6824 = vmatpush1.bf16.msra.mxu0 %v5538
        %6825 = vmatprep.subr.bf16.mxu0 %v5551
        %6826 = vmatpush1.bf16.msra.mxu0 %v5550
        %6827 = vmatprep.subr.bf16.mxu0 %v5563
        %6828 = vmatpush1.bf16.msra.mxu0 %v5562
        %6829 = vmatprep.subr.bf16.mxu0 %v5575
        %6830 = vmatpush1.bf16.msra.mxu0 %v5574
        %6831 = vmatprep.subr.bf16.mxu0 %v5587
        %6832 = vmatpush1.bf16.msra.mxu0 %v5586
        %6833 = vmatprep.subr.bf16.mxu0 %v5599
        %6834 = vmatpush1.bf16.msra.mxu0 %v5598
        %6835 = vmatprep.mubr.bf16.mxu0 %v2087
        %6836 = vmatmul.mubr.bf16.gmra.mrb[0].mxu0 %v2086
        %v6837 = vpop.f32.mrb[0].mxu0
        %v6838 = vadd.f32 %v6797, %v6837
        %v6839 = vpop.f32.mrb[0].mxu0
        %v6840 = vadd.f32 %v6799, %v6839
        %v6841 = vpop.f32.mrb[0].mxu0
        %v6842 = vpop.f32.mrb[0].mxu0
        %6843 = vdwg.mxu0
        %6844 = vmatprep.subr.bf16.mxu0 %v5611
        %6845 = vmatpush1.bf16.msra.mxu0 %v5610
        %6846 = vmatprep.subr.bf16.mxu0 %v5623
        %6847 = vmatpush1.bf16.msra.mxu0 %v5622
        %6848 = vmatprep.subr.bf16.mxu0 %v5635
        %6849 = vmatpush1.bf16.msra.mxu0 %v5634
        %6850 = vmatprep.subr.bf16.mxu0 %v5647
        %6851 = vmatpush1.bf16.msra.mxu0 %v5646
        %6852 = vmatprep.subr.bf16.mxu0 %v5659
        %6853 = vmatpush1.bf16.msra.mxu0 %v5658
        %6854 = vmatprep.subr.bf16.mxu0 %v5671
        %6855 = vmatpush1.bf16.msra.mxu0 %v5670
        %6856 = vmatprep.subr.bf16.mxu0 %v5683
        %6857 = vmatpush1.bf16.msra.mxu0 %v5682
        %6858 = vmatprep.subr.bf16.mxu0 %v5695
        %6859 = vmatpush1.bf16.msra.mxu0 %v5694
        %6860 = vmatprep.subr.bf16.mxu0 %v5707
        %6861 = vmatpush1.bf16.msra.mxu0 %v5706
        %6862 = vmatprep.subr.bf16.mxu0 %v5719
        %6863 = vmatpush1.bf16.msra.mxu0 %v5718
        %6864 = vmatprep.subr.bf16.mxu0 %v5731
        %6865 = vmatpush1.bf16.msra.mxu0 %v5730
        %6866 = vmatprep.subr.bf16.mxu0 %v5743
        %6867 = vmatpush1.bf16.msra.mxu0 %v5742
        %6868 = vmatprep.subr.bf16.mxu0 %v5755
        %6869 = vmatpush1.bf16.msra.mxu0 %v5754
        %6870 = vmatprep.subr.bf16.mxu0 %v5767
        %6871 = vmatpush1.bf16.msra.mxu0 %v5766
        %6872 = vmatprep.subr.bf16.mxu0 %v5779
        %6873 = vmatpush1.bf16.msra.mxu0 %v5778
        %6874 = vmatprep.subr.bf16.mxu0 %v5791
        %6875 = vmatpush1.bf16.msra.mxu0 %v5790
        %6876 = vmatprep.mubr.bf16.mxu0 %v2089
        %6877 = vmatmul.mubr.bf16.gmra.mrb[0].mxu0 %v2088
        %v6878 = vpop.f32.mrb[0].mxu0
        %v6879 = vadd.f32 %v6838, %v6878
        %v6880 = vpop.f32.mrb[0].mxu0
        %v6881 = vadd.f32 %v6840, %v6880
        %v6882 = vpop.f32.mrb[0].mxu0
        %v6883 = vpop.f32.mrb[0].mxu0
        %6884 = vdwg.mxu0
        %6885 = vmatprep.subr.bf16.mxu0 %v5803
        %6886 = vmatpush1.bf16.msra.mxu0 %v5802
        %6887 = vmatprep.subr.bf16.mxu0 %v5815
        %6888 = vmatpush1.bf16.msra.mxu0 %v5814
        %6889 = vmatprep.subr.bf16.mxu0 %v5827
        %6890 = vmatpush1.bf16.msra.mxu0 %v5826
        %6891 = vmatprep.subr.bf16.mxu0 %v5839
        %6892 = vmatpush1.bf16.msra.mxu0 %v5838
        %6893 = vmatprep.subr.bf16.mxu0 %v5851
        %6894 = vmatpush1.bf16.msra.mxu0 %v5850
        %6895 = vmatprep.subr.bf16.mxu0 %v5863
        %6896 = vmatpush1.bf16.msra.mxu0 %v5862
        %6897 = vmatprep.subr.bf16.mxu0 %v5875
        %6898 = vmatpush1.bf16.msra.mxu0 %v5874
        %6899 = vmatprep.subr.bf16.mxu0 %v5887
        %6900 = vmatpush1.bf16.msra.mxu0 %v5886
        %6901 = vmatprep.subr.bf16.mxu0 %v5899
        %6902 = vmatpush1.bf16.msra.mxu0 %v5898
        %6903 = vmatprep.subr.bf16.mxu0 %v5911
        %6904 = vmatpush1.bf16.msra.mxu0 %v5910
        %6905 = vmatprep.subr.bf16.mxu0 %v5923
        %6906 = vmatpush1.bf16.msra.mxu0 %v5922
        %6907 = vmatprep.subr.bf16.mxu0 %v5935
        %6908 = vmatpush1.bf16.msra.mxu0 %v5934
        %6909 = vmatprep.subr.bf16.mxu0 %v5947
        %6910 = vmatpush1.bf16.msra.mxu0 %v5946
        %6911 = vmatprep.subr.bf16.mxu0 %v5959
        %6912 = vmatpush1.bf16.msra.mxu0 %v5958
        %6913 = vmatprep.subr.bf16.mxu0 %v5971
        %6914 = vmatpush1.bf16.msra.mxu0 %v5970
        %6915 = vmatprep.subr.bf16.mxu0 %v5983
        %6916 = vmatpush1.bf16.msra.mxu0 %v5982
        %6917 = vmatprep.mubr.bf16.mxu0 %v2091
        %6918 = vmatmul.mubr.bf16.gmra.mrb[0].mxu0 %v2090
        %v6919 = vpop.f32.mrb[0].mxu0
        %v6920 = vadd.f32 %v6879, %v6919
        %v6921 = vpop.f32.mrb[0].mxu0
        %v6922 = vadd.f32 %v6881, %v6921
        %v6923 = vpop.f32.mrb[0].mxu0
        %v6924 = vpop.f32.mrb[0].mxu0
        %6925 = vdwg.mxu0
        %6926 = vmatprep.subr.bf16.mxu0 %v5229
        %6927 = vmatpush1.bf16.msra.mxu0 %v5228
        %6928 = vmatprep.subr.bf16.mxu0 %v5241
        %6929 = vmatpush1.bf16.msra.mxu0 %v5240
        %6930 = vmatprep.subr.bf16.mxu0 %v5253
        %6931 = vmatpush1.bf16.msra.mxu0 %v5252
        %6932 = vmatprep.subr.bf16.mxu0 %v5265
        %6933 = vmatpush1.bf16.msra.mxu0 %v5264
        %6934 = vmatprep.subr.bf16.mxu0 %v5277
        %6935 = vmatpush1.bf16.msra.mxu0 %v5276
        %6936 = vmatprep.subr.bf16.mxu0 %v5289
        %6937 = vmatpush1.bf16.msra.mxu0 %v5288
        %6938 = vmatprep.subr.bf16.mxu0 %v5301
        %6939 = vmatpush1.bf16.msra.mxu0 %v5300
        %6940 = vmatprep.subr.bf16.mxu0 %v5313
        %6941 = vmatpush1.bf16.msra.mxu0 %v5312
        %6942 = vmatprep.subr.bf16.mxu0 %v5325
        %6943 = vmatpush1.bf16.msra.mxu0 %v5324
        %6944 = vmatprep.subr.bf16.mxu0 %v5337
        %6945 = vmatpush1.bf16.msra.mxu0 %v5336
        %6946 = vmatprep.subr.bf16.mxu0 %v5349
        %6947 = vmatpush1.bf16.msra.mxu0 %v5348
        %6948 = vmatprep.subr.bf16.mxu0 %v5361
        %6949 = vmatpush1.bf16.msra.mxu0 %v5360
        %6950 = vmatprep.subr.bf16.mxu0 %v5373
        %6951 = vmatpush1.bf16.msra.mxu0 %v5372
        %6952 = vmatprep.subr.bf16.mxu0 %v5385
        %6953 = vmatpush1.bf16.msra.mxu0 %v5384
        %6954 = vmatprep.subr.bf16.mxu0 %v5397
        %6955 = vmatpush1.bf16.msra.mxu0 %v5396
        %6956 = vmatprep.subr.bf16.mxu0 %v5409
        %6957 = vmatpush1.bf16.msra.mxu0 %v5408
        %6958 = vmatprep.mubr.bf16.mxu0 %v2085
        %6959 = vmatmul.mubr.bf16.gmra.mrb[0].mxu0 %v2084
        %v6960 = vpop.f32.mrb[0].mxu0
        %v6961 = vadd.f32 %v2873, %v6960
        %v6962 = vpop.f32.mrb[0].mxu0
        %v6963 = vadd.f32 %v2877, %v6962
        %v6964 = vpop.f32.mrb[0].mxu0
        %v6965 = vpop.f32.mrb[0].mxu0
        %6966 = vdwg.mxu0
        %6967 = vmatprep.subr.bf16.mxu0 %v5421
        %6968 = vmatpush1.bf16.msra.mxu0 %v5420
        %6969 = vmatprep.subr.bf16.mxu0 %v5433
        %6970 = vmatpush1.bf16.msra.mxu0 %v5432
        %6971 = vmatprep.subr.bf16.mxu0 %v5445
        %6972 = vmatpush1.bf16.msra.mxu0 %v5444
        %6973 = vmatprep.subr.bf16.mxu0 %v5457
        %6974 = vmatpush1.bf16.msra.mxu0 %v5456
        %6975 = vmatprep.subr.bf16.mxu0 %v5469
        %6976 = vmatpush1.bf16.msra.mxu0 %v5468
        %6977 = vmatprep.subr.bf16.mxu0 %v5481
        %6978 = vmatpush1.bf16.msra.mxu0 %v5480
        %6979 = vmatprep.subr.bf16.mxu0 %v5493
        %6980 = vmatpush1.bf16.msra.mxu0 %v5492
        %6981 = vmatprep.subr.bf16.mxu0 %v5505
        %6982 = vmatpush1.bf16.msra.mxu0 %v5504
        %6983 = vmatprep.subr.bf16.mxu0 %v5517
        %6984 = vmatpush1.bf16.msra.mxu0 %v5516
        %6985 = vmatprep.subr.bf16.mxu0 %v5529
        %6986 = vmatpush1.bf16.msra.mxu0 %v5528
        %6987 = vmatprep.subr.bf16.mxu0 %v5541
        %6988 = vmatpush1.bf16.msra.mxu0 %v5540
        %6989 = vmatprep.subr.bf16.mxu0 %v5553
        %6990 = vmatpush1.bf16.msra.mxu0 %v5552
        %6991 = vmatprep.subr.bf16.mxu0 %v5565
        %6992 = vmatpush1.bf16.msra.mxu0 %v5564
        %6993 = vmatprep.subr.bf16.mxu0 %v5577
        %6994 = vmatpush1.bf16.msra.mxu0 %v5576
        %6995 = vmatprep.subr.bf16.mxu0 %v5589
        %6996 = vmatpush1.bf16.msra.mxu0 %v5588
        %6997 = vmatprep.subr.bf16.mxu0 %v5601
        %6998 = vmatpush1.bf16.msra.mxu0 %v5600
        %6999 = vmatprep.mubr.bf16.mxu0 %v2087
        %7000 = vmatmul.mubr.bf16.gmra.mrb[0].mxu0 %v2086
        %v7001 = vpop.f32.mrb[0].mxu0
        %v7002 = vadd.f32 %v6961, %v7001
        %v7003 = vpop.f32.mrb[0].mxu0
        %v7004 = vadd.f32 %v6963, %v7003
        %v7005 = vpop.f32.mrb[0].mxu0
        %v7006 = vpop.f32.mrb[0].mxu0
        %7007 = vdwg.mxu0
        %7008 = vmatprep.subr.bf16.mxu0 %v5613
        %7009 = vmatpush1.bf16.msra.mxu0 %v5612
        %7010 = vmatprep.subr.bf16.mxu0 %v5625
        %7011 = vmatpush1.bf16.msra.mxu0 %v5624
        %7012 = vmatprep.subr.bf16.mxu0 %v5637
        %7013 = vmatpush1.bf16.msra.mxu0 %v5636
        %7014 = vmatprep.subr.bf16.mxu0 %v5649
        %7015 = vmatpush1.bf16.msra.mxu0 %v5648
        %7016 = vmatprep.subr.bf16.mxu0 %v5661
        %7017 = vmatpush1.bf16.msra.mxu0 %v5660
        %7018 = vmatprep.subr.bf16.mxu0 %v5673
        %7019 = vmatpush1.bf16.msra.mxu0 %v5672
        %7020 = vmatprep.subr.bf16.mxu0 %v5685
        %7021 = vmatpush1.bf16.msra.mxu0 %v5684
        %7022 = vmatprep.subr.bf16.mxu0 %v5697
        %7023 = vmatpush1.bf16.msra.mxu0 %v5696
        %7024 = vmatprep.subr.bf16.mxu0 %v5709
        %7025 = vmatpush1.bf16.msra.mxu0 %v5708
        %7026 = vmatprep.subr.bf16.mxu0 %v5721
        %7027 = vmatpush1.bf16.msra.mxu0 %v5720
        %7028 = vmatprep.subr.bf16.mxu0 %v5733
        %7029 = vmatpush1.bf16.msra.mxu0 %v5732
        %7030 = vmatprep.subr.bf16.mxu0 %v5745
        %7031 = vmatpush1.bf16.msra.mxu0 %v5744
        %7032 = vmatprep.subr.bf16.mxu0 %v5757
        %7033 = vmatpush1.bf16.msra.mxu0 %v5756
        %7034 = vmatprep.subr.bf16.mxu0 %v5769
        %7035 = vmatpush1.bf16.msra.mxu0 %v5768
        %7036 = vmatprep.subr.bf16.mxu0 %v5781
        %7037 = vmatpush1.bf16.msra.mxu0 %v5780
        %7038 = vmatprep.subr.bf16.mxu0 %v5793
        %7039 = vmatpush1.bf16.msra.mxu0 %v5792
        %7040 = vmatprep.mubr.bf16.mxu0 %v2089
        %7041 = vmatmul.mubr.bf16.gmra.mrb[0].mxu0 %v2088
        %v7042 = vpop.f32.mrb[0].mxu0
        %v7043 = vadd.f32 %v7002, %v7042
        %v7044 = vpop.f32.mrb[0].mxu0
        %v7045 = vadd.f32 %v7004, %v7044
        %v7046 = vpop.f32.mrb[0].mxu0
        %v7047 = vpop.f32.mrb[0].mxu0
        %7048 = vdwg.mxu0
        %7049 = vmatprep.subr.bf16.mxu0 %v5805
        %7050 = vmatpush1.bf16.msra.mxu0 %v5804
        %7051 = vmatprep.subr.bf16.mxu0 %v5817
        %7052 = vmatpush1.bf16.msra.mxu0 %v5816
        %7053 = vmatprep.subr.bf16.mxu0 %v5829
        %7054 = vmatpush1.bf16.msra.mxu0 %v5828
        %7055 = vmatprep.subr.bf16.mxu0 %v5841
        %7056 = vmatpush1.bf16.msra.mxu0 %v5840
        %7057 = vmatprep.subr.bf16.mxu0 %v5853
        %7058 = vmatpush1.bf16.msra.mxu0 %v5852
        %7059 = vmatprep.subr.bf16.mxu0 %v5865
        %7060 = vmatpush1.bf16.msra.mxu0 %v5864
        %7061 = vmatprep.subr.bf16.mxu0 %v5877
        %7062 = vmatpush1.bf16.msra.mxu0 %v5876
        %7063 = vmatprep.subr.bf16.mxu0 %v5889
        %7064 = vmatpush1.bf16.msra.mxu0 %v5888
        %7065 = vmatprep.subr.bf16.mxu0 %v5901
        %7066 = vmatpush1.bf16.msra.mxu0 %v5900
        %7067 = vmatprep.subr.bf16.mxu0 %v5913
        %7068 = vmatpush1.bf16.msra.mxu0 %v5912
        %7069 = vmatprep.subr.bf16.mxu0 %v5925
        %7070 = vmatpush1.bf16.msra.mxu0 %v5924
        %7071 = vmatprep.subr.bf16.mxu0 %v5937
        %7072 = vmatpush1.bf16.msra.mxu0 %v5936
        %7073 = vmatprep.subr.bf16.mxu0 %v5949
        %7074 = vmatpush1.bf16.msra.mxu0 %v5948
        %7075 = vmatprep.subr.bf16.mxu0 %v5961
        %7076 = vmatpush1.bf16.msra.mxu0 %v5960
        %7077 = vmatprep.subr.bf16.mxu0 %v5973
        %7078 = vmatpush1.bf16.msra.mxu0 %v5972
        %7079 = vmatprep.subr.bf16.mxu0 %v5985
        %7080 = vmatpush1.bf16.msra.mxu0 %v5984
        %7081 = vmatprep.mubr.bf16.mxu0 %v2091
        %7082 = vmatmul.mubr.bf16.gmra.mrb[0].mxu0 %v2090
        %v7083 = vpop.f32.mrb[0].mxu0
        %v7084 = vadd.f32 %v7043, %v7083
        %v7085 = vpop.f32.mrb[0].mxu0
        %v7086 = vadd.f32 %v7045, %v7085
        %v7087 = vpop.f32.mrb[0].mxu0
        %v7088 = vpop.f32.mrb[0].mxu0
        %7089 = vdwg.mxu0
        %7090 = vmatprep.subr.bf16.mxu0 %v5231
        %7091 = vmatpush1.bf16.msra.mxu0 %v5230
        %7092 = vmatprep.subr.bf16.mxu0 %v5243
        %7093 = vmatpush1.bf16.msra.mxu0 %v5242
        %7094 = vmatprep.subr.bf16.mxu0 %v5255
        %7095 = vmatpush1.bf16.msra.mxu0 %v5254
        %7096 = vmatprep.subr.bf16.mxu0 %v5267
        %7097 = vmatpush1.bf16.msra.mxu0 %v5266
        %7098 = vmatprep.subr.bf16.mxu0 %v5279
        %7099 = vmatpush1.bf16.msra.mxu0 %v5278
        %7100 = vmatprep.subr.bf16.mxu0 %v5291
        %7101 = vmatpush1.bf16.msra.mxu0 %v5290
        %7102 = vmatprep.subr.bf16.mxu0 %v5303
        %7103 = vmatpush1.bf16.msra.mxu0 %v5302
        %7104 = vmatprep.subr.bf16.mxu0 %v5315
        %7105 = vmatpush1.bf16.msra.mxu0 %v5314
        %7106 = vmatprep.subr.bf16.mxu0 %v5327
        %7107 = vmatpush1.bf16.msra.mxu0 %v5326
        %7108 = vmatprep.subr.bf16.mxu0 %v5339
        %7109 = vmatpush1.bf16.msra.mxu0 %v5338
        %7110 = vmatprep.subr.bf16.mxu0 %v5351
        %7111 = vmatpush1.bf16.msra.mxu0 %v5350
        %7112 = vmatprep.subr.bf16.mxu0 %v5363
        %7113 = vmatpush1.bf16.msra.mxu0 %v5362
        %7114 = vmatprep.subr.bf16.mxu0 %v5375
        %7115 = vmatpush1.bf16.msra.mxu0 %v5374
        %7116 = vmatprep.subr.bf16.mxu0 %v5387
        %7117 = vmatpush1.bf16.msra.mxu0 %v5386
        %7118 = vmatprep.subr.bf16.mxu0 %v5399
        %7119 = vmatpush1.bf16.msra.mxu0 %v5398
        %7120 = vmatprep.subr.bf16.mxu0 %v5411
        %7121 = vmatpush1.bf16.msra.mxu0 %v5410
        %7122 = vmatprep.mubr.bf16.mxu0 %v2085
        %7123 = vmatmul.mubr.bf16.gmra.mrb[0].mxu0 %v2084
        %v7124 = vpop.f32.mrb[0].mxu0
        %v7125 = vadd.f32 %v2881, %v7124
        %v7126 = vpop.f32.mrb[0].mxu0
        %v7127 = vadd.f32 %v2885, %v7126
        %v7128 = vpop.f32.mrb[0].mxu0
        %v7129 = vpop.f32.mrb[0].mxu0
        %7130 = vdwg.mxu0
        %7131 = vmatprep.subr.bf16.mxu0 %v5423
        %7132 = vmatpush1.bf16.msra.mxu0 %v5422
        %7133 = vmatprep.subr.bf16.mxu0 %v5435
        %7134 = vmatpush1.bf16.msra.mxu0 %v5434
        %7135 = vmatprep.subr.bf16.mxu0 %v5447
        %7136 = vmatpush1.bf16.msra.mxu0 %v5446
        %7137 = vmatprep.subr.bf16.mxu0 %v5459
        %7138 = vmatpush1.bf16.msra.mxu0 %v5458
        %7139 = vmatprep.subr.bf16.mxu0 %v5471
        %7140 = vmatpush1.bf16.msra.mxu0 %v5470
        %7141 = vmatprep.subr.bf16.mxu0 %v5483
        %7142 = vmatpush1.bf16.msra.mxu0 %v5482
        %7143 = vmatprep.subr.bf16.mxu0 %v5495
        %7144 = vmatpush1.bf16.msra.mxu0 %v5494
        %7145 = vmatprep.subr.bf16.mxu0 %v5507
        %7146 = vmatpush1.bf16.msra.mxu0 %v5506
        %7147 = vmatprep.subr.bf16.mxu0 %v5519
        %7148 = vmatpush1.bf16.msra.mxu0 %v5518
        %7149 = vmatprep.subr.bf16.mxu0 %v5531
        %7150 = vmatpush1.bf16.msra.mxu0 %v5530
        %7151 = vmatprep.subr.bf16.mxu0 %v5543
        %7152 = vmatpush1.bf16.msra.mxu0 %v5542
        %7153 = vmatprep.subr.bf16.mxu0 %v5555
        %7154 = vmatpush1.bf16.msra.mxu0 %v5554
        %7155 = vmatprep.subr.bf16.mxu0 %v5567
        %7156 = vmatpush1.bf16.msra.mxu0 %v5566
        %7157 = vmatprep.subr.bf16.mxu0 %v5579
        %7158 = vmatpush1.bf16.msra.mxu0 %v5578
        %7159 = vmatprep.subr.bf16.mxu0 %v5591
        %7160 = vmatpush1.bf16.msra.mxu0 %v5590
        %7161 = vmatprep.subr.bf16.mxu0 %v5603
        %7162 = vmatpush1.bf16.msra.mxu0 %v5602
        %7163 = vmatprep.mubr.bf16.mxu0 %v2087
        %7164 = vmatmul.mubr.bf16.gmra.mrb[0].mxu0 %v2086
        %v7165 = vpop.f32.mrb[0].mxu0
        %v7166 = vadd.f32 %v7125, %v7165
        %v7167 = vpop.f32.mrb[0].mxu0
        %v7168 = vadd.f32 %v7127, %v7167
        %v7169 = vpop.f32.mrb[0].mxu0
        %v7170 = vpop.f32.mrb[0].mxu0
        %7171 = vdwg.mxu0
        %7172 = vmatprep.subr.bf16.mxu0 %v5615
        %7173 = vmatpush1.bf16.msra.mxu0 %v5614
        %7174 = vmatprep.subr.bf16.mxu0 %v5627
        %7175 = vmatpush1.bf16.msra.mxu0 %v5626
        %7176 = vmatprep.subr.bf16.mxu0 %v5639
        %7177 = vmatpush1.bf16.msra.mxu0 %v5638
        %7178 = vmatprep.subr.bf16.mxu0 %v5651
        %7179 = vmatpush1.bf16.msra.mxu0 %v5650
        %7180 = vmatprep.subr.bf16.mxu0 %v5663
        %7181 = vmatpush1.bf16.msra.mxu0 %v5662
        %7182 = vmatprep.subr.bf16.mxu0 %v5675
        %7183 = vmatpush1.bf16.msra.mxu0 %v5674
        %7184 = vmatprep.subr.bf16.mxu0 %v5687
        %7185 = vmatpush1.bf16.msra.mxu0 %v5686
        %7186 = vmatprep.subr.bf16.mxu0 %v5699
        %7187 = vmatpush1.bf16.msra.mxu0 %v5698
        %7188 = vmatprep.subr.bf16.mxu0 %v5711
        %7189 = vmatpush1.bf16.msra.mxu0 %v5710
        %7190 = vmatprep.subr.bf16.mxu0 %v5723
        %7191 = vmatpush1.bf16.msra.mxu0 %v5722
        %7192 = vmatprep.subr.bf16.mxu0 %v5735
        %7193 = vmatpush1.bf16.msra.mxu0 %v5734
        %7194 = vmatprep.subr.bf16.mxu0 %v5747
        %7195 = vmatpush1.bf16.msra.mxu0 %v5746
        %7196 = vmatprep.subr.bf16.mxu0 %v5759
        %7197 = vmatpush1.bf16.msra.mxu0 %v5758
        %7198 = vmatprep.subr.bf16.mxu0 %v5771
        %7199 = vmatpush1.bf16.msra.mxu0 %v5770
        %7200 = vmatprep.subr.bf16.mxu0 %v5783
        %7201 = vmatpush1.bf16.msra.mxu0 %v5782
        %7202 = vmatprep.subr.bf16.mxu0 %v5795
        %7203 = vmatpush1.bf16.msra.mxu0 %v5794
        %7204 = vmatprep.mubr.bf16.mxu0 %v2089
        %7205 = vmatmul.mubr.bf16.gmra.mrb[0].mxu0 %v2088
        %v7206 = vpop.f32.mrb[0].mxu0
        %v7207 = vadd.f32 %v7166, %v7206
        %v7208 = vpop.f32.mrb[0].mxu0
        %v7209 = vadd.f32 %v7168, %v7208
        %v7210 = vpop.f32.mrb[0].mxu0
        %v7211 = vpop.f32.mrb[0].mxu0
        %7212 = vdwg.mxu0
        %7213 = vmatprep.subr.bf16.mxu0 %v5807
        %7214 = vmatpush1.bf16.msra.mxu0 %v5806
        %7215 = vmatprep.subr.bf16.mxu0 %v5819
        %7216 = vmatpush1.bf16.msra.mxu0 %v5818
        %7217 = vmatprep.subr.bf16.mxu0 %v5831
        %7218 = vmatpush1.bf16.msra.mxu0 %v5830
        %7219 = vmatprep.subr.bf16.mxu0 %v5843
        %7220 = vmatpush1.bf16.msra.mxu0 %v5842
        %7221 = vmatprep.subr.bf16.mxu0 %v5855
        %7222 = vmatpush1.bf16.msra.mxu0 %v5854
        %7223 = vmatprep.subr.bf16.mxu0 %v5867
        %7224 = vmatpush1.bf16.msra.mxu0 %v5866
        %7225 = vmatprep.subr.bf16.mxu0 %v5879
        %7226 = vmatpush1.bf16.msra.mxu0 %v5878
        %7227 = vmatprep.subr.bf16.mxu0 %v5891
        %7228 = vmatpush1.bf16.msra.mxu0 %v5890
        %7229 = vmatprep.subr.bf16.mxu0 %v5903
        %7230 = vmatpush1.bf16.msra.mxu0 %v5902
        %7231 = vmatprep.subr.bf16.mxu0 %v5915
        %7232 = vmatpush1.bf16.msra.mxu0 %v5914
        %7233 = vmatprep.subr.bf16.mxu0 %v5927
        %7234 = vmatpush1.bf16.msra.mxu0 %v5926
        %7235 = vmatprep.subr.bf16.mxu0 %v5939
        %7236 = vmatpush1.bf16.msra.mxu0 %v5938
        %7237 = vmatprep.subr.bf16.mxu0 %v5951
        %7238 = vmatpush1.bf16.msra.mxu0 %v5950
        %7239 = vmatprep.subr.bf16.mxu0 %v5963
        %7240 = vmatpush1.bf16.msra.mxu0 %v5962
        %7241 = vmatprep.subr.bf16.mxu0 %v5975
        %7242 = vmatpush1.bf16.msra.mxu0 %v5974
        %7243 = vmatprep.subr.bf16.mxu0 %v5987
        %7244 = vmatpush1.bf16.msra.mxu0 %v5986
        %7245 = vmatprep.mubr.bf16.mxu0 %v2091
        %7246 = vmatmul.mubr.bf16.gmra.mrb[0].mxu0 %v2090
        %v7247 = vpop.f32.mrb[0].mxu0
        %v7248 = vadd.f32 %v7207, %v7247
        %v7249 = vpop.f32.mrb[0].mxu0
        %v7250 = vadd.f32 %v7209, %v7249
        %v7251 = vpop.f32.mrb[0].mxu0
        %v7252 = vpop.f32.mrb[0].mxu0
        %7253 = vdwg.mxu0
        %7254 = vmatprep.subr.bf16.mxu0 %v5233
        %7255 = vmatpush1.bf16.msra.mxu0 %v5232
        %7256 = vmatprep.subr.bf16.mxu0 %v5245
        %7257 = vmatpush1.bf16.msra.mxu0 %v5244
        %7258 = vmatprep.subr.bf16.mxu0 %v5257
        %7259 = vmatpush1.bf16.msra.mxu0 %v5256
        %7260 = vmatprep.subr.bf16.mxu0 %v5269
        %7261 = vmatpush1.bf16.msra.mxu0 %v5268
        %7262 = vmatprep.subr.bf16.mxu0 %v5281
        %7263 = vmatpush1.bf16.msra.mxu0 %v5280
        %7264 = vmatprep.subr.bf16.mxu0 %v5293
        %7265 = vmatpush1.bf16.msra.mxu0 %v5292
        %7266 = vmatprep.subr.bf16.mxu0 %v5305
        %7267 = vmatpush1.bf16.msra.mxu0 %v5304
        %7268 = vmatprep.subr.bf16.mxu0 %v5317
        %7269 = vmatpush1.bf16.msra.mxu0 %v5316
        %7270 = vmatprep.subr.bf16.mxu0 %v5329
        %7271 = vmatpush1.bf16.msra.mxu0 %v5328
        %7272 = vmatprep.subr.bf16.mxu0 %v5341
        %7273 = vmatpush1.bf16.msra.mxu0 %v5340
        %7274 = vmatprep.subr.bf16.mxu0 %v5353
        %7275 = vmatpush1.bf16.msra.mxu0 %v5352
        %7276 = vmatprep.subr.bf16.mxu0 %v5365
        %7277 = vmatpush1.bf16.msra.mxu0 %v5364
        %7278 = vmatprep.subr.bf16.mxu0 %v5377
        %7279 = vmatpush1.bf16.msra.mxu0 %v5376
        %7280 = vmatprep.subr.bf16.mxu0 %v5389
        %7281 = vmatpush1.bf16.msra.mxu0 %v5388
        %7282 = vmatprep.subr.bf16.mxu0 %v5401
        %7283 = vmatpush1.bf16.msra.mxu0 %v5400
        %7284 = vmatprep.subr.bf16.mxu0 %v5413
        %7285 = vmatpush1.bf16.msra.mxu0 %v5412
        %7286 = vmatprep.mubr.bf16.mxu0 %v2085
        %7287 = vmatmul.mubr.bf16.gmra.mrb[0].mxu0 %v2084
        %v7288 = vpop.f32.mrb[0].mxu0
        %v7289 = vadd.f32 %v2889, %v7288
        %v7290 = vpop.f32.mrb[0].mxu0
        %v7291 = vadd.f32 %v2893, %v7290
        %v7292 = vpop.f32.mrb[0].mxu0
        %v7293 = vpop.f32.mrb[0].mxu0
        %7294 = vdwg.mxu0
        %7295 = vmatprep.subr.bf16.mxu0 %v5425
        %7296 = vmatpush1.bf16.msra.mxu0 %v5424
        %7297 = vmatprep.subr.bf16.mxu0 %v5437
        %7298 = vmatpush1.bf16.msra.mxu0 %v5436
        %7299 = vmatprep.subr.bf16.mxu0 %v5449
        %7300 = vmatpush1.bf16.msra.mxu0 %v5448
        %7301 = vmatprep.subr.bf16.mxu0 %v5461
        %7302 = vmatpush1.bf16.msra.mxu0 %v5460
        %7303 = vmatprep.subr.bf16.mxu0 %v5473
        %7304 = vmatpush1.bf16.msra.mxu0 %v5472
        %7305 = vmatprep.subr.bf16.mxu0 %v5485
        %7306 = vmatpush1.bf16.msra.mxu0 %v5484
        %7307 = vmatprep.subr.bf16.mxu0 %v5497
        %7308 = vmatpush1.bf16.msra.mxu0 %v5496
        %7309 = vmatprep.subr.bf16.mxu0 %v5509
        %7310 = vmatpush1.bf16.msra.mxu0 %v5508
        %7311 = vmatprep.subr.bf16.mxu0 %v5521
        %7312 = vmatpush1.bf16.msra.mxu0 %v5520
        %7313 = vmatprep.subr.bf16.mxu0 %v5533
        %7314 = vmatpush1.bf16.msra.mxu0 %v5532
        %7315 = vmatprep.subr.bf16.mxu0 %v5545
        %7316 = vmatpush1.bf16.msra.mxu0 %v5544
        %7317 = vmatprep.subr.bf16.mxu0 %v5557
        %7318 = vmatpush1.bf16.msra.mxu0 %v5556
        %7319 = vmatprep.subr.bf16.mxu0 %v5569
        %7320 = vmatpush1.bf16.msra.mxu0 %v5568
        %7321 = vmatprep.subr.bf16.mxu0 %v5581
        %7322 = vmatpush1.bf16.msra.mxu0 %v5580
        %7323 = vmatprep.subr.bf16.mxu0 %v5593
        %7324 = vmatpush1.bf16.msra.mxu0 %v5592
        %7325 = vmatprep.subr.bf16.mxu0 %v5605
        %7326 = vmatpush1.bf16.msra.mxu0 %v5604
        %7327 = vmatprep.mubr.bf16.mxu0 %v2087
        %7328 = vmatmul.mubr.bf16.gmra.mrb[0].mxu0 %v2086
        %v7329 = vpop.f32.mrb[0].mxu0
        %v7330 = vadd.f32 %v7289, %v7329
        %v7331 = vpop.f32.mrb[0].mxu0
        %v7332 = vadd.f32 %v7291, %v7331
        %v7333 = vpop.f32.mrb[0].mxu0
        %v7334 = vpop.f32.mrb[0].mxu0
        %7335 = vdwg.mxu0
        %7336 = vmatprep.subr.bf16.mxu0 %v5617
        %7337 = vmatpush1.bf16.msra.mxu0 %v5616
        %7338 = vmatprep.subr.bf16.mxu0 %v5629
        %7339 = vmatpush1.bf16.msra.mxu0 %v5628
        %7340 = vmatprep.subr.bf16.mxu0 %v5641
        %7341 = vmatpush1.bf16.msra.mxu0 %v5640
        %7342 = vmatprep.subr.bf16.mxu0 %v5653
        %7343 = vmatpush1.bf16.msra.mxu0 %v5652
        %7344 = vmatprep.subr.bf16.mxu0 %v5665
        %7345 = vmatpush1.bf16.msra.mxu0 %v5664
        %7346 = vmatprep.subr.bf16.mxu0 %v5677
        %7347 = vmatpush1.bf16.msra.mxu0 %v5676
        %7348 = vmatprep.subr.bf16.mxu0 %v5689
        %7349 = vmatpush1.bf16.msra.mxu0 %v5688
        %7350 = vmatprep.subr.bf16.mxu0 %v5701
        %7351 = vmatpush1.bf16.msra.mxu0 %v5700
        %7352 = vmatprep.subr.bf16.mxu0 %v5713
        %7353 = vmatpush1.bf16.msra.mxu0 %v5712
        %7354 = vmatprep.subr.bf16.mxu0 %v5725
        %7355 = vmatpush1.bf16.msra.mxu0 %v5724
        %7356 = vmatprep.subr.bf16.mxu0 %v5737
        %7357 = vmatpush1.bf16.msra.mxu0 %v5736
        %7358 = vmatprep.subr.bf16.mxu0 %v5749
        %7359 = vmatpush1.bf16.msra.mxu0 %v5748
        %7360 = vmatprep.subr.bf16.mxu0 %v5761
        %7361 = vmatpush1.bf16.msra.mxu0 %v5760
        %7362 = vmatprep.subr.bf16.mxu0 %v5773
        %7363 = vmatpush1.bf16.msra.mxu0 %v5772
        %7364 = vmatprep.subr.bf16.mxu0 %v5785
        %7365 = vmatpush1.bf16.msra.mxu0 %v5784
        %7366 = vmatprep.subr.bf16.mxu0 %v5797
        %7367 = vmatpush1.bf16.msra.mxu0 %v5796
        %7368 = vmatprep.mubr.bf16.mxu0 %v2089
        %7369 = vmatmul.mubr.bf16.gmra.mrb[0].mxu0 %v2088
        %v7370 = vpop.f32.mrb[0].mxu0
        %v7371 = vadd.f32 %v7330, %v7370
        %v7372 = vpop.f32.mrb[0].mxu0
        %v7373 = vadd.f32 %v7332, %v7372
        %v7374 = vpop.f32.mrb[0].mxu0
        %v7375 = vpop.f32.mrb[0].mxu0
        %7376 = vdwg.mxu0
        %7377 = vmatprep.subr.bf16.mxu0 %v5809
        %7378 = vmatpush1.bf16.msra.mxu0 %v5808
        %7379 = vmatprep.subr.bf16.mxu0 %v5821
        %7380 = vmatpush1.bf16.msra.mxu0 %v5820
        %7381 = vmatprep.subr.bf16.mxu0 %v5833
        %7382 = vmatpush1.bf16.msra.mxu0 %v5832
        %7383 = vmatprep.subr.bf16.mxu0 %v5845
        %7384 = vmatpush1.bf16.msra.mxu0 %v5844
        %7385 = vmatprep.subr.bf16.mxu0 %v5857
        %7386 = vmatpush1.bf16.msra.mxu0 %v5856
        %7387 = vmatprep.subr.bf16.mxu0 %v5869
        %7388 = vmatpush1.bf16.msra.mxu0 %v5868
        %7389 = vmatprep.subr.bf16.mxu0 %v5881
        %7390 = vmatpush1.bf16.msra.mxu0 %v5880
        %7391 = vmatprep.subr.bf16.mxu0 %v5893
        %7392 = vmatpush1.bf16.msra.mxu0 %v5892
        %7393 = vmatprep.subr.bf16.mxu0 %v5905
        %7394 = vmatpush1.bf16.msra.mxu0 %v5904
        %7395 = vmatprep.subr.bf16.mxu0 %v5917
        %7396 = vmatpush1.bf16.msra.mxu0 %v5916
        %7397 = vmatprep.subr.bf16.mxu0 %v5929
        %7398 = vmatpush1.bf16.msra.mxu0 %v5928
        %7399 = vmatprep.subr.bf16.mxu0 %v5941
        %7400 = vmatpush1.bf16.msra.mxu0 %v5940
        %7401 = vmatprep.subr.bf16.mxu0 %v5953
        %7402 = vmatpush1.bf16.msra.mxu0 %v5952
        %7403 = vmatprep.subr.bf16.mxu0 %v5965
        %7404 = vmatpush1.bf16.msra.mxu0 %v5964
        %7405 = vmatprep.subr.bf16.mxu0 %v5977
        %7406 = vmatpush1.bf16.msra.mxu0 %v5976
        %7407 = vmatprep.subr.bf16.mxu0 %v5989
        %7408 = vmatpush1.bf16.msra.mxu0 %v5988
        %7409 = vmatprep.mubr.bf16.mxu0 %v2091
        %7410 = vmatmul.mubr.bf16.gmra.mrb[0].mxu0 %v2090
        %v7411 = vpop.f32.mrb[0].mxu0
        %v7412 = vadd.f32 %v7371, %v7411
        %v7413 = vpop.f32.mrb[0].mxu0
        %v7414 = vadd.f32 %v7373, %v7413
        %v7415 = vpop.f32.mrb[0].mxu0
        %v7416 = vpop.f32.mrb[0].mxu0
        %7417 = vdwg.mxu0
        %7418 = vmatprep.subr.bf16.mxu0 %v5235
        %7419 = vmatpush1.bf16.msra.mxu0 %v5234
        %7420 = vmatprep.subr.bf16.mxu0 %v5247
        %7421 = vmatpush1.bf16.msra.mxu0 %v5246
        %7422 = vmatprep.subr.bf16.mxu0 %v5259
        %7423 = vmatpush1.bf16.msra.mxu0 %v5258
        %7424 = vmatprep.subr.bf16.mxu0 %v5271
        %7425 = vmatpush1.bf16.msra.mxu0 %v5270
        %7426 = vmatprep.subr.bf16.mxu0 %v5283
        %7427 = vmatpush1.bf16.msra.mxu0 %v5282
        %7428 = vmatprep.subr.bf16.mxu0 %v5295
        %7429 = vmatpush1.bf16.msra.mxu0 %v5294
        %7430 = vmatprep.subr.bf16.mxu0 %v5307
        %7431 = vmatpush1.bf16.msra.mxu0 %v5306
        %7432 = vmatprep.subr.bf16.mxu0 %v5319
        %7433 = vmatpush1.bf16.msra.mxu0 %v5318
        %7434 = vmatprep.subr.bf16.mxu0 %v5331
        %7435 = vmatpush1.bf16.msra.mxu0 %v5330
        %7436 = vmatprep.subr.bf16.mxu0 %v5343
        %7437 = vmatpush1.bf16.msra.mxu0 %v5342
        %7438 = vmatprep.subr.bf16.mxu0 %v5355
        %7439 = vmatpush1.bf16.msra.mxu0 %v5354
        %7440 = vmatprep.subr.bf16.mxu0 %v5367
        %7441 = vmatpush1.bf16.msra.mxu0 %v5366
        %7442 = vmatprep.subr.bf16.mxu0 %v5379
        %7443 = vmatpush1.bf16.msra.mxu0 %v5378
        %7444 = vmatprep.subr.bf16.mxu0 %v5391
        %7445 = vmatpush1.bf16.msra.mxu0 %v5390
        %7446 = vmatprep.subr.bf16.mxu0 %v5403
        %7447 = vmatpush1.bf16.msra.mxu0 %v5402
        %7448 = vmatprep.subr.bf16.mxu0 %v5415
        %7449 = vmatpush1.bf16.msra.mxu0 %v5414
        %7450 = vmatprep.mubr.bf16.mxu0 %v2085
        %7451 = vmatmul.mubr.bf16.gmra.mrb[0].mxu0 %v2084
        %v7452 = vpop.f32.mrb[0].mxu0
        %v7453 = vadd.f32 %v2897, %v7452
        %v7454 = vpop.f32.mrb[0].mxu0
        %v7455 = vadd.f32 %v2901, %v7454
        %v7456 = vpop.f32.mrb[0].mxu0
        %v7457 = vpop.f32.mrb[0].mxu0
        %7458 = vdwg.mxu0
        %7459 = vmatprep.subr.bf16.mxu0 %v5427
        %7460 = vmatpush1.bf16.msra.mxu0 %v5426
        %7461 = vmatprep.subr.bf16.mxu0 %v5439
        %7462 = vmatpush1.bf16.msra.mxu0 %v5438
        %7463 = vmatprep.subr.bf16.mxu0 %v5451
        %7464 = vmatpush1.bf16.msra.mxu0 %v5450
        %7465 = vmatprep.subr.bf16.mxu0 %v5463
        %7466 = vmatpush1.bf16.msra.mxu0 %v5462
        %7467 = vmatprep.subr.bf16.mxu0 %v5475
        %7468 = vmatpush1.bf16.msra.mxu0 %v5474
        %7469 = vmatprep.subr.bf16.mxu0 %v5487
        %7470 = vmatpush1.bf16.msra.mxu0 %v5486
        %7471 = vmatprep.subr.bf16.mxu0 %v5499
        %7472 = vmatpush1.bf16.msra.mxu0 %v5498
        %7473 = vmatprep.subr.bf16.mxu0 %v5511
        %7474 = vmatpush1.bf16.msra.mxu0 %v5510
        %7475 = vmatprep.subr.bf16.mxu0 %v5523
        %7476 = vmatpush1.bf16.msra.mxu0 %v5522
        %7477 = vmatprep.subr.bf16.mxu0 %v5535
        %7478 = vmatpush1.bf16.msra.mxu0 %v5534
        %7479 = vmatprep.subr.bf16.mxu0 %v5547
        %7480 = vmatpush1.bf16.msra.mxu0 %v5546
        %7481 = vmatprep.subr.bf16.mxu0 %v5559
        %7482 = vmatpush1.bf16.msra.mxu0 %v5558
        %7483 = vmatprep.subr.bf16.mxu0 %v5571
        %7484 = vmatpush1.bf16.msra.mxu0 %v5570
        %7485 = vmatprep.subr.bf16.mxu0 %v5583
        %7486 = vmatpush1.bf16.msra.mxu0 %v5582
        %7487 = vmatprep.subr.bf16.mxu0 %v5595
        %7488 = vmatpush1.bf16.msra.mxu0 %v5594
        %7489 = vmatprep.subr.bf16.mxu0 %v5607
        %7490 = vmatpush1.bf16.msra.mxu0 %v5606
        %7491 = vmatprep.mubr.bf16.mxu0 %v2087
        %7492 = vmatmul.mubr.bf16.gmra.mrb[0].mxu0 %v2086
        %v7493 = vpop.f32.mrb[0].mxu0
        %v7494 = vadd.f32 %v7453, %v7493
        %v7495 = vpop.f32.mrb[0].mxu0
        %v7496 = vadd.f32 %v7455, %v7495
        %v7497 = vpop.f32.mrb[0].mxu0
        %v7498 = vpop.f32.mrb[0].mxu0
        %7499 = vdwg.mxu0
        %7500 = vmatprep.subr.bf16.mxu0 %v5619
        %7501 = vmatpush1.bf16.msra.mxu0 %v5618
        %7502 = vmatprep.subr.bf16.mxu0 %v5631
        %7503 = vmatpush1.bf16.msra.mxu0 %v5630
        %7504 = vmatprep.subr.bf16.mxu0 %v5643
        %7505 = vmatpush1.bf16.msra.mxu0 %v5642
        %7506 = vmatprep.subr.bf16.mxu0 %v5655
        %7507 = vmatpush1.bf16.msra.mxu0 %v5654
        %7508 = vmatprep.subr.bf16.mxu0 %v5667
        %7509 = vmatpush1.bf16.msra.mxu0 %v5666
        %7510 = vmatprep.subr.bf16.mxu0 %v5679
        %7511 = vmatpush1.bf16.msra.mxu0 %v5678
        %7512 = vmatprep.subr.bf16.mxu0 %v5691
        %7513 = vmatpush1.bf16.msra.mxu0 %v5690
        %7514 = vmatprep.subr.bf16.mxu0 %v5703
        %7515 = vmatpush1.bf16.msra.mxu0 %v5702
        %7516 = vmatprep.subr.bf16.mxu0 %v5715
        %7517 = vmatpush1.bf16.msra.mxu0 %v5714
        %7518 = vmatprep.subr.bf16.mxu0 %v5727
        %7519 = vmatpush1.bf16.msra.mxu0 %v5726
        %7520 = vmatprep.subr.bf16.mxu0 %v5739
        %7521 = vmatpush1.bf16.msra.mxu0 %v5738
        %7522 = vmatprep.subr.bf16.mxu0 %v5751
        %7523 = vmatpush1.bf16.msra.mxu0 %v5750
        %7524 = vmatprep.subr.bf16.mxu0 %v5763
        %7525 = vmatpush1.bf16.msra.mxu0 %v5762
        %7526 = vmatprep.subr.bf16.mxu0 %v5775
        %7527 = vmatpush1.bf16.msra.mxu0 %v5774
        %7528 = vmatprep.subr.bf16.mxu0 %v5787
        %7529 = vmatpush1.bf16.msra.mxu0 %v5786
        %7530 = vmatprep.subr.bf16.mxu0 %v5799
        %7531 = vmatpush1.bf16.msra.mxu0 %v5798
        %7532 = vmatprep.mubr.bf16.mxu0 %v2089
        %7533 = vmatmul.mubr.bf16.gmra.mrb[0].mxu0 %v2088
        %v7534 = vpop.f32.mrb[0].mxu0
        %v7535 = vadd.f32 %v7494, %v7534
        %v7536 = vpop.f32.mrb[0].mxu0
        %v7537 = vadd.f32 %v7496, %v7536
        %v7538 = vpop.f32.mrb[0].mxu0
        %v7539 = vpop.f32.mrb[0].mxu0
        %7540 = vdwg.mxu0
        %7541 = vmatprep.subr.bf16.mxu0 %v5811
        %7542 = vmatpush1.bf16.msra.mxu0 %v5810
        %7543 = vmatprep.subr.bf16.mxu0 %v5823
        %7544 = vmatpush1.bf16.msra.mxu0 %v5822
        %7545 = vmatprep.subr.bf16.mxu0 %v5835
        %7546 = vmatpush1.bf16.msra.mxu0 %v5834
        %7547 = vmatprep.subr.bf16.mxu0 %v5847
        %7548 = vmatpush1.bf16.msra.mxu0 %v5846
        %7549 = vmatprep.subr.bf16.mxu0 %v5859
        %7550 = vmatpush1.bf16.msra.mxu0 %v5858
        %7551 = vmatprep.subr.bf16.mxu0 %v5871
        %7552 = vmatpush1.bf16.msra.mxu0 %v5870
        %7553 = vmatprep.subr.bf16.mxu0 %v5883
        %7554 = vmatpush1.bf16.msra.mxu0 %v5882
        %7555 = vmatprep.subr.bf16.mxu0 %v5895
        %7556 = vmatpush1.bf16.msra.mxu0 %v5894
        %7557 = vmatprep.subr.bf16.mxu0 %v5907
        %7558 = vmatpush1.bf16.msra.mxu0 %v5906
        %7559 = vmatprep.subr.bf16.mxu0 %v5919
        %7560 = vmatpush1.bf16.msra.mxu0 %v5918
        %7561 = vmatprep.subr.bf16.mxu0 %v5931
        %7562 = vmatpush1.bf16.msra.mxu0 %v5930
        %7563 = vmatprep.subr.bf16.mxu0 %v5943
        %7564 = vmatpush1.bf16.msra.mxu0 %v5942
        %7565 = vmatprep.subr.bf16.mxu0 %v5955
        %7566 = vmatpush1.bf16.msra.mxu0 %v5954
        %7567 = vmatprep.subr.bf16.mxu0 %v5967
        %7568 = vmatpush1.bf16.msra.mxu0 %v5966
        %7569 = vmatprep.subr.bf16.mxu0 %v5979
        %7570 = vmatpush1.bf16.msra.mxu0 %v5978
        %7571 = vmatprep.subr.bf16.mxu0 %v5991
        %7572 = vmatpush1.bf16.msra.mxu0 %v5990
        %7573 = vmatprep.mubr.bf16.mxu0 %v2091
        %7574 = vmatmul.mubr.bf16.gmra.mrb[0].mxu0 %v2090
        %v7575 = vpop.f32.mrb[0].mxu0
        %v7576 = vadd.f32 %v7535, %v7575
        %v7577 = vpop.f32.mrb[0].mxu0
        %v7578 = vadd.f32 %v7537, %v7577
        %v7579 = vpop.f32.mrb[0].mxu0
        %v7580 = vpop.f32.mrb[0].mxu0
        %7581 = vdwg.mxu0
        %7582 = vmatprep.subr.bf16.mxu0 %v5237
        %7583 = vmatpush1.bf16.msra.mxu0 %v5236
        %7584 = vmatprep.subr.bf16.mxu0 %v5249
        %7585 = vmatpush1.bf16.msra.mxu0 %v5248
        %7586 = vmatprep.subr.bf16.mxu0 %v5261
        %7587 = vmatpush1.bf16.msra.mxu0 %v5260
        %7588 = vmatprep.subr.bf16.mxu0 %v5273
        %7589 = vmatpush1.bf16.msra.mxu0 %v5272
        %7590 = vmatprep.subr.bf16.mxu0 %v5285
        %7591 = vmatpush1.bf16.msra.mxu0 %v5284
        %7592 = vmatprep.subr.bf16.mxu0 %v5297
        %7593 = vmatpush1.bf16.msra.mxu0 %v5296
        %7594 = vmatprep.subr.bf16.mxu0 %v5309
        %7595 = vmatpush1.bf16.msra.mxu0 %v5308
        %7596 = vmatprep.subr.bf16.mxu0 %v5321
        %7597 = vmatpush1.bf16.msra.mxu0 %v5320
        %7598 = vmatprep.subr.bf16.mxu0 %v5333
        %7599 = vmatpush1.bf16.msra.mxu0 %v5332
        %7600 = vmatprep.subr.bf16.mxu0 %v5345
        %7601 = vmatpush1.bf16.msra.mxu0 %v5344
        %7602 = vmatprep.subr.bf16.mxu0 %v5357
        %7603 = vmatpush1.bf16.msra.mxu0 %v5356
        %7604 = vmatprep.subr.bf16.mxu0 %v5369
        %7605 = vmatpush1.bf16.msra.mxu0 %v5368
        %7606 = vmatprep.subr.bf16.mxu0 %v5381
        %7607 = vmatpush1.bf16.msra.mxu0 %v5380
        %7608 = vmatprep.subr.bf16.mxu0 %v5393
        %7609 = vmatpush1.bf16.msra.mxu0 %v5392
        %7610 = vmatprep.subr.bf16.mxu0 %v5405
        %7611 = vmatpush1.bf16.msra.mxu0 %v5404
        %7612 = vmatprep.subr.bf16.mxu0 %v5417
        %7613 = vmatpush1.bf16.msra.mxu0 %v5416
        %7614 = vmatprep.mubr.bf16.mxu0 %v2085
        %7615 = vmatmul.mubr.bf16.gmra.mrb[0].mxu0 %v2084
        %v7616 = vpop.f32.mrb[0].mxu0
        %v7617 = vadd.f32 %v2905, %v7616
        %v7618 = vpop.f32.mrb[0].mxu0
        %v7619 = vadd.f32 %v2909, %v7618
        %v7620 = vpop.f32.mrb[0].mxu0
        %v7621 = vpop.f32.mrb[0].mxu0
        %7622 = vdwg.mxu0
        %7623 = vmatprep.subr.bf16.mxu0 %v5429
        %7624 = vmatpush1.bf16.msra.mxu0 %v5428
        %7625 = vmatprep.subr.bf16.mxu0 %v5441
        %7626 = vmatpush1.bf16.msra.mxu0 %v5440
        %7627 = vmatprep.subr.bf16.mxu0 %v5453
        %7628 = vmatpush1.bf16.msra.mxu0 %v5452
        %7629 = vmatprep.subr.bf16.mxu0 %v5465
        %7630 = vmatpush1.bf16.msra.mxu0 %v5464
        %7631 = vmatprep.subr.bf16.mxu0 %v5477
        %7632 = vmatpush1.bf16.msra.mxu0 %v5476
        %7633 = vmatprep.subr.bf16.mxu0 %v5489
        %7634 = vmatpush1.bf16.msra.mxu0 %v5488
        %7635 = vmatprep.subr.bf16.mxu0 %v5501
        %7636 = vmatpush1.bf16.msra.mxu0 %v5500
        %7637 = vmatprep.subr.bf16.mxu0 %v5513
        %7638 = vmatpush1.bf16.msra.mxu0 %v5512
        %7639 = vmatprep.subr.bf16.mxu0 %v5525
        %7640 = vmatpush1.bf16.msra.mxu0 %v5524
        %7641 = vmatprep.subr.bf16.mxu0 %v5537
        %7642 = vmatpush1.bf16.msra.mxu0 %v5536
        %7643 = vmatprep.subr.bf16.mxu0 %v5549
        %7644 = vmatpush1.bf16.msra.mxu0 %v5548
        %7645 = vmatprep.subr.bf16.mxu0 %v5561
        %7646 = vmatpush1.bf16.msra.mxu0 %v5560
        %7647 = vmatprep.subr.bf16.mxu0 %v5573
        %7648 = vmatpush1.bf16.msra.mxu0 %v5572
        %7649 = vmatprep.subr.bf16.mxu0 %v5585
        %7650 = vmatpush1.bf16.msra.mxu0 %v5584
        %7651 = vmatprep.subr.bf16.mxu0 %v5597
        %7652 = vmatpush1.bf16.msra.mxu0 %v5596
        %7653 = vmatprep.subr.bf16.mxu0 %v5609
        %7654 = vmatpush1.bf16.msra.mxu0 %v5608
        %7655 = vmatprep.mubr.bf16.mxu0 %v2087
        %7656 = vmatmul.mubr.bf16.gmra.mrb[0].mxu0 %v2086
        %v7657 = vpop.f32.mrb[0].mxu0
        %v7658 = vadd.f32 %v7617, %v7657
        %v7659 = vpop.f32.mrb[0].mxu0
        %v7660 = vadd.f32 %v7619, %v7659
        %v7661 = vpop.f32.mrb[0].mxu0
        %v7662 = vpop.f32.mrb[0].mxu0
        %7663 = vdwg.mxu0
        %7664 = vmatprep.subr.bf16.mxu0 %v5621
        %7665 = vmatpush1.bf16.msra.mxu0 %v5620
        %7666 = vmatprep.subr.bf16.mxu0 %v5633
        %7667 = vmatpush1.bf16.msra.mxu0 %v5632
        %7668 = vmatprep.subr.bf16.mxu0 %v5645
        %7669 = vmatpush1.bf16.msra.mxu0 %v5644
        %7670 = vmatprep.subr.bf16.mxu0 %v5657
        %7671 = vmatpush1.bf16.msra.mxu0 %v5656
        %7672 = vmatprep.subr.bf16.mxu0 %v5669
        %7673 = vmatpush1.bf16.msra.mxu0 %v5668
        %7674 = vmatprep.subr.bf16.mxu0 %v5681
        %7675 = vmatpush1.bf16.msra.mxu0 %v5680
        %7676 = vmatprep.subr.bf16.mxu0 %v5693
        %7677 = vmatpush1.bf16.msra.mxu0 %v5692
        %7678 = vmatprep.subr.bf16.mxu0 %v5705
        %7679 = vmatpush1.bf16.msra.mxu0 %v5704
        %7680 = vmatprep.subr.bf16.mxu0 %v5717
        %7681 = vmatpush1.bf16.msra.mxu0 %v5716
        %7682 = vmatprep.subr.bf16.mxu0 %v5729
        %7683 = vmatpush1.bf16.msra.mxu0 %v5728
        %7684 = vmatprep.subr.bf16.mxu0 %v5741
        %7685 = vmatpush1.bf16.msra.mxu0 %v5740
        %7686 = vmatprep.subr.bf16.mxu0 %v5753
        %7687 = vmatpush1.bf16.msra.mxu0 %v5752
        %7688 = vmatprep.subr.bf16.mxu0 %v5765
        %7689 = vmatpush1.bf16.msra.mxu0 %v5764
        %7690 = vmatprep.subr.bf16.mxu0 %v5777
        %7691 = vmatpush1.bf16.msra.mxu0 %v5776
        %7692 = vmatprep.subr.bf16.mxu0 %v5789
        %7693 = vmatpush1.bf16.msra.mxu0 %v5788
        %7694 = vmatprep.subr.bf16.mxu0 %v5801
        %7695 = vmatpush1.bf16.msra.mxu0 %v5800
        %7696 = vmatprep.mubr.bf16.mxu0 %v2089
        %7697 = vmatmul.mubr.bf16.gmra.mrb[0].mxu0 %v2088
        %v7698 = vpop.f32.mrb[0].mxu0
        %v7699 = vadd.f32 %v7658, %v7698
        %v7700 = vpop.f32.mrb[0].mxu0
        %v7701 = vadd.f32 %v7660, %v7700
        %v7702 = vpop.f32.mrb[0].mxu0
        %v7703 = vpop.f32.mrb[0].mxu0
        %7704 = vdwg.mxu0
        %7705 = vmatprep.subr.bf16.mxu0 %v5813
        %7706 = vmatpush1.bf16.msra.mxu0 %v5812
        %7707 = vmatprep.subr.bf16.mxu0 %v5825
        %7708 = vmatpush1.bf16.msra.mxu0 %v5824
        %7709 = vmatprep.subr.bf16.mxu0 %v5837
        %7710 = vmatpush1.bf16.msra.mxu0 %v5836
        %7711 = vmatprep.subr.bf16.mxu0 %v5849
        %7712 = vmatpush1.bf16.msra.mxu0 %v5848
        %7713 = vmatprep.subr.bf16.mxu0 %v5861
        %7714 = vmatpush1.bf16.msra.mxu0 %v5860
        %7715 = vmatprep.subr.bf16.mxu0 %v5873
        %7716 = vmatpush1.bf16.msra.mxu0 %v5872
        %7717 = vmatprep.subr.bf16.mxu0 %v5885
        %7718 = vmatpush1.bf16.msra.mxu0 %v5884
        %7719 = vmatprep.subr.bf16.mxu0 %v5897
        %7720 = vmatpush1.bf16.msra.mxu0 %v5896
        %7721 = vmatprep.subr.bf16.mxu0 %v5909
        %7722 = vmatpush1.bf16.msra.mxu0 %v5908
        %7723 = vmatprep.subr.bf16.mxu0 %v5921
        %7724 = vmatpush1.bf16.msra.mxu0 %v5920
        %7725 = vmatprep.subr.bf16.mxu0 %v5933
        %7726 = vmatpush1.bf16.msra.mxu0 %v5932
        %7727 = vmatprep.subr.bf16.mxu0 %v5945
        %7728 = vmatpush1.bf16.msra.mxu0 %v5944
        %7729 = vmatprep.subr.bf16.mxu0 %v5957
        %7730 = vmatpush1.bf16.msra.mxu0 %v5956
        %7731 = vmatprep.subr.bf16.mxu0 %v5969
        %7732 = vmatpush1.bf16.msra.mxu0 %v5968
        %7733 = vmatprep.subr.bf16.mxu0 %v5981
        %7734 = vmatpush1.bf16.msra.mxu0 %v5980
        %7735 = vmatprep.subr.bf16.mxu0 %v5993
        %7736 = vmatpush1.bf16.msra.mxu0 %v5992
        %7737 = vmatprep.mubr.bf16.mxu0 %v2091
        %7738 = vmatmul.mubr.bf16.gmra.mrb[0].mxu0 %v2090
        %v7739 = vpop.f32.mrb[0].mxu0
        %v7740 = vadd.f32 %v7699, %v7739
        %v7741 = vpop.f32.mrb[0].mxu0
        %v7742 = vadd.f32 %v7701, %v7741
        %v7743 = vpop.f32.mrb[0].mxu0
        %v7744 = vpop.f32.mrb[0].mxu0
        %7745 = vdwg.mxu0
        %7746 = vst [vmem:[%s537] sm:$0xff] %v6920
        %7747 = vst [vmem:[%s537 + $0x8] sm:$0xff] %v6922
        %7748 = vst [vmem:[%s537 + $0x10] sm:$0xff] %v7084
        %7749 = vst [vmem:[%s537 + $0x18] sm:$0xff] %v7086
        %7750 = vst [vmem:[%s537 + $0x20] sm:$0xff] %v7248
        %7751 = vst [vmem:[%s537 + $0x28] sm:$0xff] %v7250
        %7752 = vst [vmem:[%s537 + $0x30] sm:$0xff] %v7412
        %7753 = vst [vmem:[%s537 + $0x38] sm:$0xff] %v7414
        %7754 = vst [vmem:[%s537 + $0x40] sm:$0xff] %v7576
        %7755 = vst [vmem:[%s537 + $0x48] sm:$0xff] %v7578
        %7756 = vst [vmem:[%s537 + $0x50] sm:$0xff] %v7740
        %7757 = vst [vmem:[%s537 + $0x58] sm:$0xff] %v7742
        %s7758 = sand.u32 %s277, 1
        %s7759 = scalar_lea.sflag [#allocation4], %s7758
        %s7760 = sand.u32 %s277, 1
        %s7761 = smul.addr %s7760, 96
        %s7762 = scalar_lea.vmem [#allocation20], %s7761
        // Predicated region
        $region109: #{tpu_custom_call.1} parent=63 // pred_check
          %p7763 = pneg %p287
        $region110: #{tpu_custom_call.1} parent=63 // pred_check_branch
          %7765 = sbr.rel (%p7763) target = $region112
        $region111: #{tpu_custom_call.1} parent=63 // pred_region
          %s7766 = smul.u32 12, %s33
          %s7768 = ssub.s32 1536, 1536
          %7769 = vsyncadd %s7759, %s7768
          %s7770 = smul.addr %s7766, 128
          %s7771 = scalar_lea.hbm %s11, %s7770
          %s7773 = sshll.u32 %s7762, 4
          %s7774 = int_to_ptr.vmem [resolvable:$true] %s7773
          %7776 = dma.vmem_to_hbm [thread:$0]  %s7774, 1536, %s7771, %s7759
        $region112: #{tpu_custom_call.1} parent=63 // pred_fallthru
          _
      $region64: #{tpu_custom_call.1} parent=5 // pred_fallthru
        _
      %p7777 = scmp.le.s32.totalorder 2, %s28
      // Predicated region
      $region113: #{tpu_custom_call.1} parent=5 // pred_check
        %p7778 = pneg %p7777
      $region114: #{tpu_custom_call.1} parent=5 // pred_check_branch
        %7780 = sbr.rel (%p7778) target = $region116
      $region115: #{tpu_custom_call.1} parent=5 // pred_region
        %s7781 = ssub.s32 %s28, 2
        // Predicated region
        $region117: #{tpu_custom_call.1} parent=115 // pred_check
          %p7782 = pneg %p293
        $region118: #{tpu_custom_call.1} parent=115 // pred_check_branch
          %7784 = sbr.rel (%p7782) target = $region120
        $region119: #{tpu_custom_call.1} parent=115 // pred_region
          %s7785 = sand.u32 %s278, 1
          %s7786 = scalar_lea.sflag [#allocation4], %s7785
          %s7787 = sand.u32 %s278, 1
          %s7788 = smul.addr %s7787, 96
          %s7789 = scalar_lea.vmem [#allocation20], %s7788
          %7790 = dma.done %s7786, 1536
        $region120: #{tpu_custom_call.1} parent=115 // pred_fallthru
          _
      $region116: #{tpu_custom_call.1} parent=5 // pred_fallthru
        _
    $region6: #{tpu_custom_call.1} parent=1 // loop_footer
      %s32 = sadd.s32 1, %s28
    $region7: #{tpu_custom_call.1} parent=1 // loop_footer_branch
      %27 = sbr.rel target = $region3
    $region8: #{tpu_custom_call.1} parent=1 // loop_exit
      _
    %7791 = vsyncpa [#allocation3], 1
    %s7792 = scalar_lea.sflag [#allocation3], 1
    %7793 = vsyncpa %s7792, 1
    %7794 = vsyncpa [#allocation6], 1
    %7795 = vsyncpa [#allocation9], 1
    %7796 = vsyncpa [#allocation12], 1
    %7797 = vsyncpa [#allocation15], 1
    %7798 = vsyncpa [#allocation18], 1
    %s7799 = scalar_lea.sflag [#allocation18], 1
    %7800 = vsyncpa %s7799, 1
    %7801 = vsyncpa [#allocation4], 1
    %s7802 = scalar_lea.sflag [#allocation4], 1
    %7803 = vsyncpa %s7802, 1

</llo_original>
